<compile_context>
chip_gen: v5e
topology: v5e:2x2
jax: 0.10.0
libtpu: 0.0.40
codegen_flags: <defaults>
</compile_context>

<pallas_src>
import functools

import jax
import jax.numpy as jnp
from jax.experimental import pallas as pl
from jax.experimental.pallas import tpu as pltpu

EPS = 1e-5
_MXU_DTYPE = jnp.bfloat16                 # MXU operand dtype (f32 accumulate)
_VMEM_BUDGET = 16 * 1024 * 1024           # per-grid-step working-set target
_VMEM_LIMIT = 32 * 1024 * 1024            # scoped VMEM cap, fits v5e/v6e/v7x


# --------------------------------------------------------------------------
# In-kernel helpers
# --------------------------------------------------------------------------
def _fill_padded(pad_ref, interior, *, halo_only):
    """Write `interior` into the center of a 1-px zero-padded VMEM scratch.

    halo_only=True zeroes just the 1-pixel border (interior written once);
    halo_only=False zeroes the whole buffer first (conservative path).
    """
    bn, Hp, Wp, C = pad_ref.shape
    H, W = Hp - 2, Wp - 2
    if halo_only:
        zrow = jnp.zeros((bn, 1, Wp, C), pad_ref.dtype)
        pad_ref[:, 0:1, :, :] = zrow
        pad_ref[:, Hp - 1:Hp, :, :] = zrow
        zcol = jnp.zeros((bn, H, 1, C), pad_ref.dtype)
        pad_ref[:, 1:H + 1, 0:1, :] = zcol
        pad_ref[:, 1:H + 1, Wp - 1:Wp, :] = zcol
    else:
        pad_ref[...] = jnp.zeros_like(pad_ref)
    pad_ref[:, 1:H + 1, 1:W + 1, :] = interior.astype(pad_ref.dtype)


def _conv3x3_mxu(pad_ref, w_ref, stride, Ho, Wo, *, fuse_taps):
    """3x3 conv over a zero-padded NHWC VMEM scratch via im2col MXU matmul.

    Weights are pre-reshaped to (9*Cin, Cout) bf16; accumulation is f32.
    """
    bn, _, _, Cin = pad_ref.shape
    Cout = w_ref.shape[-1]
    M = bn * Ho * Wo
    xpad = pad_ref[...]
    taps = []
    for kh in range(3):
        for kw in range(3):
            taps.append(jax.lax.slice(
                xpad,
                (0, kh, kw, 0),
                (bn, kh + stride * (Ho - 1) + 1, kw + stride * (Wo - 1) + 1, Cin),
                (1, stride, stride, 1)))
    # TODO(synk): for stride==2 the strided slices should be pushed into the
    #             DMA/index_map layer instead of strided VMEM reads.
    if fuse_taps:
        # Single im2col matmul: contraction depth K = 9*Cin (better MXU fill,
        # no 8 extra f32 accumulator adds).
        pm = jnp.concatenate(taps, axis=-1).reshape(M, 9 * Cin)
        return jnp.dot(pm.astype(_MXU_DTYPE), w_ref[...],
                       preferred_element_type=jnp.float32)
    # Conservative fallback: 9 tap matmuls with K = Cin.
    acc = jnp.zeros((M, Cout), jnp.float32)
    for t, tap in enumerate(taps):
        acc = acc + jnp.dot(tap.reshape(M, Cin).astype(_MXU_DTYPE),
                            w_ref[pl.ds(t * Cin, Cin), :],
                            preferred_element_type=jnp.float32)
    return acc


def _partial_stats(acc_2d, sum_ref, sq_ref):
    """Per-channel partial sum / sum-of-squares of a (M, C) f32 tile."""
    sum_ref[...] = jnp.sum(acc_2d, axis=0, keepdims=True)[None]
    sq_ref[...] = jnp.sum(acc_2d * acc_2d, axis=0, keepdims=True)[None]


# --------------------------------------------------------------------------
# Stage kernels
# --------------------------------------------------------------------------
def _stage1_kernel(*refs, stride, has_shortcut, fuse_taps):
    """conv1 (and shortcut 1x1 conv) + partial BN statistics."""
    if has_shortcut:
        (x_ref, w1_ref, ws_ref,
         h1_ref, s1_ref, q1_ref, sc_ref, ss_ref, qs_ref, xpad_ref) = refs
    else:
        (x_ref, w1_ref, h1_ref, s1_ref, q1_ref, xpad_ref) = refs

    bn, H, W, Cin = x_ref.shape
    _, Ho, Wo, P = h1_ref.shape

    x = x_ref[...]
    _fill_padded(xpad_ref, x, halo_only=fuse_taps)

    acc = _conv3x3_mxu(xpad_ref, w1_ref, stride, Ho, Wo, fuse_taps=fuse_taps)
    _partial_stats(acc, s1_ref, q1_ref)
    h1_ref[...] = acc.reshape(bn, Ho, Wo, P)

    if has_shortcut:
        xs = jax.lax.slice(
            x, (0, 0, 0, 0),
            (bn, stride * (Ho - 1) + 1, stride * (Wo - 1) + 1, Cin),
            (1, stride, stride, 1))
        acs = jnp.dot(xs.reshape(bn * Ho * Wo, Cin).astype(_MXU_DTYPE),
                      ws_ref[...], preferred_element_type=jnp.float32)
        _partial_stats(acs, ss_ref, qs_ref)
        sc_ref[...] = acs.reshape(bn, Ho, Wo, P)


def _stage2_kernel(h1_ref, sc1_ref, sh1_ref, w2_ref,
                   h2_ref, s2_ref, q2_ref, hpad_ref, *, fuse_taps):
    """bn1 (precomputed scale/shift) + relu + conv2 + partial BN2 stats."""
    bn, Ho, Wo, P = h1_ref.shape
    a = jnp.maximum(
        h1_ref[...] * sc1_ref[...].reshape(1, 1, 1, P)
        + sh1_ref[...].reshape(1, 1, 1, P), 0.0)
    _fill_padded(hpad_ref, a, halo_only=fuse_taps)
    acc = _conv3x3_mxu(hpad_ref, w2_ref, 1, Ho, Wo, fuse_taps=fuse_taps)
    _partial_stats(acc, s2_ref, q2_ref)
    h2_ref[...] = acc.reshape(bn, Ho, Wo, P)


def _stage3_kernel(*refs, has_shortcut):
    """bn2 + shortcut-bn (or identity) + residual add + relu."""
    if has_shortcut:
        (h2_ref, sc2_ref, sh2_ref, s_ref, scs_ref, shs_ref, out_ref) = refs
    else:
        (h2_ref, sc2_ref, sh2_ref, s_ref, out_ref) = refs
    P = out_ref.shape[-1]
    y = (h2_ref[...] * sc2_ref[...].reshape(1, 1, 1, P)
         + sh2_ref[...].reshape(1, 1, 1, P))
    s = s_ref[...]
    if has_shortcut:
        s = (s * scs_ref[...].reshape(1, 1, 1, P)
             + shs_ref[...].reshape(1, 1, 1, P))
    out_ref[...] = jnp.maximum(y + s, 0.0).astype(out_ref.dtype)


# --------------------------------------------------------------------------
# JAX-side glue
# --------------------------------------------------------------------------
def _bn_scale_shift(sum_arr, sq_arr, gamma, beta, count):
    """Fold per-block partial sums into per-channel BN scale/shift (f32)."""
    s = jnp.sum(sum_arr, axis=(0, 1))
    q = jnp.sum(sq_arr, axis=(0, 1))
    mean = s / count
    var = jnp.maximum(q / count - mean * mean, 0.0)     # biased variance
    scale = gamma * jax.lax.rsqrt(var + EPS)
    shift = beta - mean * scale
    return scale.reshape(1, -1), shift.reshape(1, -1)


def _per_sample_bytes(H, W, Cin, Ho, Wo, P):
    c = max(Cin, P)
    elems = (H * W * Cin                               # input tile
             + (max(H, Ho) + 2) * (max(W, Wo) + 2) * c  # padded scratch
             + Ho * Wo * 9 * c * 2                     # im2col patches
             + Ho * Wo * P * 3)                        # conv / shortcut outputs
    return 4 * elems * 2                               # f32, x2 double-buffer


def _pick_batch_block(N, per_sample_bytes, budget=_VMEM_BUDGET):
    """Largest divisor of N whose per-step working set fits the VMEM budget."""
    # TODO(synk): feature maps whose single-sample footprint exceeds the
    #             budget additionally need spatial (output-row) tiling.
    blk = 1
    for d in range(1, N + 1):
        if N % d == 0 and d * per_sample_bytes <= budget:
            blk = d
    return blk


def _forward_impl(x_nchw, params, stride, fuse_taps):
    x = jnp.transpose(x_nchw, (0, 2, 3, 1)).astype(jnp.float32)     # NHWC
    N, H, W, Cin = x.shape
    P = params["w1"].shape[-1]
    Ho = (H - 1) // stride + 1
    Wo = (W - 1) // stride + 1
    has_shortcut = (stride != 1) or (Cin != P)
    count = float(N * Ho * Wo)

    w1 = params["w1"].reshape(9 * Cin, P).astype(_MXU_DTYPE)
    w2 = params["w2"].reshape(9 * P, P).astype(_MXU_DTYPE)

    bn_blk = _pick_batch_block(N, _per_sample_bytes(H, W, Cin, Ho, Wo, P))
    nb = N // bn_blk
    f32 = jnp.float32

    cparams = pltpu.CompilerParams(
        dimension_semantics=("parallel",),       # megacore-shardable on v7x
        vmem_limit_bytes=_VMEM_LIMIT)

    act_spec = pl.BlockSpec((bn_blk, Ho, Wo, P), lambda i: (i, 0, 0, 0))
    stat_spec = pl.BlockSpec((1, 1, P), lambda i: (i, 0, 0))
    vec_spec = pl.BlockSpec((1, P), lambda i: (0, 0))
    act_shape = jax.ShapeDtypeStruct((N, Ho, Wo, P), f32)
    stat_shape = jax.ShapeDtypeStruct((nb, 1, P), f32)

    # ----------------- stage 1: conv1 (+ shortcut conv) + stats ------------
    in_specs = [pl.BlockSpec((bn_blk, H, W, Cin), lambda i: (i, 0, 0, 0)),
                pl.BlockSpec((9 * Cin, P), lambda i: (0, 0))]
    inputs = [x, w1]
    out_shape = [act_shape, stat_shape, stat_shape]
    out_specs = [act_spec, stat_spec, stat_spec]
    if has_shortcut:
        inputs.append(params["ws"].astype(_MXU_DTYPE))
        in_specs.append(pl.BlockSpec((Cin, P), lambda i: (0, 0)))
        out_shape += [act_shape, stat_shape, stat_shape]
        out_specs += [act_spec, stat_spec, stat_spec]

    flops1 = 2 * N * Ho * Wo * P * (9 * Cin + (Cin if has_shortcut else 0))
    bytes1 = 4 * N * (H * W * Cin + (2 if has_shortcut else 1) * Ho * Wo * P)

    outs1 = pl.pallas_call(
        functools.partial(_stage1_kernel, stride=stride,
                          has_shortcut=has_shortcut, fuse_taps=fuse_taps),
        out_shape=out_shape,
        grid_spec=pltpu.PrefetchScalarGridSpec(
            num_scalar_prefetch=0, grid=(nb,),
            in_specs=in_specs, out_specs=out_specs,
            scratch_shapes=[pltpu.VMEM((bn_blk, H + 2, W + 2, Cin), f32)]),
        compiler_params=cparams,
        cost_estimate=pl.CostEstimate(flops=flops1, transcendentals=0,
                                      bytes_accessed=bytes1),
    )(*inputs)

    if has_shortcut:
        h1_raw, s1, q1, sc_raw, ss, qs = outs1
    else:
        h1_raw, s1, q1 = outs1

    scale1, shift1 = _bn_scale_shift(s1, q1, params["g1"], params["b1"], count)

    # ----------------- stage 2: bn1 + relu + conv2 + stats -----------------
    flops2 = 2 * N * Ho * Wo * P * 9 * P
    bytes2 = 4 * 2 * N * Ho * Wo * P
    h2_raw, s2, q2 = pl.pallas_call(
        functools.partial(_stage2_kernel, fuse_taps=fuse_taps),
        out_shape=[act_shape, stat_shape, stat_shape],
        grid_spec=pltpu.PrefetchScalarGridSpec(
            num_scalar_prefetch=0, grid=(nb,),
            in_specs=[act_spec, vec_spec, vec_spec,
                      pl.BlockSpec((9 * P, P), lambda i: (0, 0))],
            out_specs=[act_spec, stat_spec, stat_spec],
            scratch_shapes=[pltpu.VMEM((bn_blk, Ho + 2, Wo + 2, P), f32)]),
        compiler_params=cparams,
        cost_estimate=pl.CostEstimate(flops=flops2, transcendentals=0,
                                      bytes_accessed=bytes2),
    )(h1_raw, scale1, shift1, w2)

    scale2, shift2 = _bn_scale_shift(s2, q2, params["g2"], params["b2"], count)

    # ----------------- stage 3: bn2 + shortcut + add + relu ----------------
    if has_shortcut:
        scale_s, shift_s = _bn_scale_shift(ss, qs, params["gs"], params["bs"],
                                           count)
        extra_in, extra_specs = [scale_s, shift_s], [vec_spec, vec_spec]
        sc_src = sc_raw
    else:
        extra_in, extra_specs = [], []
        sc_src = x                 # identity shortcut (stride==1, Cin==P)

    out = pl.pallas_call(
        functools.partial(_stage3_kernel, has_shortcut=has_shortcut),
        out_shape=act_shape,
        grid_spec=pltpu.PrefetchScalarGridSpec(
            num_scalar_prefetch=0, grid=(nb,),
            in_specs=[act_spec, vec_spec, vec_spec, act_spec] + extra_specs,
            out_specs=act_spec),
        compiler_params=cparams,
        cost_estimate=pl.CostEstimate(
            flops=6 * N * Ho * Wo * P, transcendentals=0,
            bytes_accessed=4 * 3 * N * Ho * Wo * P),
    )(h2_raw, scale2, shift2, sc_src, *extra_in)

    return jnp.transpose(out, (0, 3, 1, 2))


def basic_block_forward(x_nchw, params, stride):
    """NCHW in / NCHW out. Tries the fused im2col (K=9*Cin) MXU path first."""
    try:
        return jax.block_until_ready(
            _forward_impl(x_nchw, params, stride, fuse_taps=True))
    except Exception:
        # TODO(synk): drop this fallback once minor-dim concat im2col lowering
        #             is available in every deployed Mosaic version.
        return jax.block_until_ready(
            _forward_impl(x_nchw, params, stride, fuse_taps=False))


# --------------------------------------------------------------------------
# Pure-JAX reference (lax.conv), matching the kernel's bf16-operand math
# --------------------------------------------------------------------------
def _bn_apply(v, gamma, beta):
    mean = jnp.mean(v, axis=(0, 1, 2))
    var = jnp.maximum(jnp.mean(v * v, axis=(0, 1, 2)) - mean * mean, 0.0)
    scale = gamma * jax.lax.rsqrt(var + EPS)
    shift = beta - mean * scale
    return v * scale.reshape(1, 1, 1, -1) + shift.reshape(1, 1, 1, -1)


def basic_block_reference(x_nchw, params, stride):
    x = jnp.transpose(x_nchw, (0, 2, 3, 1)).astype(jnp.float32)
    dn = ("NHWC", "HWIO", "NHWC")
    Cin, P = x.shape[-1], params["w1"].shape[-1]

    def conv3(v, w, s):
        return jax.lax.conv_general_dilated(
            v.astype(_MXU_DTYPE), w.astype(_MXU_DTYPE), (s, s), ((1, 1), (1, 1)),
            dimension_numbers=dn, preferred_element_type=jnp.float32)

    def conv1(v, w, s):
        return jax.lax.conv_general_dilated(
            v.astype(_MXU_DTYPE), w.reshape(1, 1, *w.shape).astype(_MXU_DTYPE),
            (s, s), ((0, 0), (0, 0)),
            dimension_numbers=dn, preferred_element_type=jnp.float32)

    h = jax.nn.relu(_bn_apply(conv3(x, params["w1"], stride),
                              params["g1"], params["b1"]))
    h = _bn_apply(conv3(h, params["w2"], 1), params["g2"], params["b2"])
    if stride != 1 or Cin != P:
        s = _bn_apply(conv1(x, params["ws"], stride), params["gs"], params["bs"])
    else:
        s = x
    return jnp.transpose(jax.nn.relu(h + s), (0, 3, 1, 2))


def init_params(key, in_planes, planes):
    ks = jax.random.split(key, 6)

    def he(k, shape, fan_in):
        return jax.random.normal(k, shape, jnp.float32) * (2.0 / fan_in) ** 0.5

    return {
        "w1": he(ks[0], (3, 3, in_planes, planes), 9 * in_planes),
        "g1": 1.0 + 0.1 * jax.random.normal(ks[1], (planes,), jnp.float32),
        "b1": 0.1 * jax.random.normal(ks[2], (planes,), jnp.float32),
        "w2": he(ks[3], (3, 3, planes, planes), 9 * planes),
        "g2": jnp.ones((planes,), jnp.float32),
        "b2": jnp.zeros((planes,), jnp.float32),
        "ws": he(ks[4], (in_planes, planes), in_planes),
        "gs": 1.0 + 0.1 * jax.random.normal(ks[5], (planes,), jnp.float32),
        "bs": jnp.zeros((planes,), jnp.float32),
    }


if __name__ == "__main__":
    key = jax.random.PRNGKey(0)
    kx1, kp1, kx2, kp2 = jax.random.split(key, 4)

    # Config 1: projection shortcut (in_planes != planes), stride 1.
    in_planes, planes, stride = 4, 8, 1
    x1 = jax.random.normal(kx1, (2, in_planes, 16, 16), jnp.float32)  # NCHW
    p1 = init_params(kp1, in_planes, planes)
    out1 = jax.block_until_ready(basic_block_forward(x1, p1, stride))
    ref1 = basic_block_reference(x1, p1, stride)
    assert out1.shape == (2, planes, 16, 16), out1.shape
    err1 = float(jnp.max(jnp.abs(out1 - ref1)))
    assert jnp.allclose(out1, ref1, atol=5e-3, rtol=5e-3), err1

    # Config 2: identity shortcut (in_planes == planes, stride 1).
    x2 = jax.random.normal(kx2, (2, 8, 16, 16), jnp.float32)
    p2 = init_params(kp2, 8, 8)
    out2 = jax.block_until_ready(basic_block_forward(x2, p2, 1))
    ref2 = basic_block_reference(x2, p2, 1)
    err2 = float(jnp.max(jnp.abs(out2 - ref2)))
    assert jnp.allclose(out2, ref2, atol=5e-3, rtol=5e-3), err2

    print("KERNEL_OK")
</pallas_src>

<mosaic_0001>
module attributes {stable_mosaic.version = 11 : i64} {
  func.func @_stage1_kernel(%arg0: i32, %arg1: memref<2x16x16x4xf32, #tpu.memory_space<vmem>>, %arg2: memref<36x8xbf16, #tpu.memory_space<vmem>>, %arg3: memref<4x8xbf16, #tpu.memory_space<vmem>>, %arg4: memref<2x16x16x8xf32, #tpu.memory_space<vmem>>, %arg5: memref<1x1x8xf32, #tpu.memory_space<vmem>>, %arg6: memref<1x1x8xf32, #tpu.memory_space<vmem>>, %arg7: memref<2x16x16x8xf32, #tpu.memory_space<vmem>>, %arg8: memref<1x1x8xf32, #tpu.memory_space<vmem>>, %arg9: memref<1x1x8xf32, #tpu.memory_space<vmem>>, %arg10: memref<2x18x18x4xf32, #tpu.memory_space<vmem>>) attributes {dimension_semantics = [#tpu.dimension_semantics<parallel>], iteration_bounds = array<i64: 1>, scalar_prefetch = 0 : i64, scratch_operands = 1 : i64, tpu.core_type = #tpu.core_type<tc>, window_params = [{transform_indices = @transform_0, window_bounds = array<i64: 2, 16, 16, 4>}, {pipeline_mode = #tpu.pipeline_mode<synchronous>, transform_indices = @transform_1, window_bounds = array<i64: 36, 8>}, {pipeline_mode = #tpu.pipeline_mode<synchronous>, transform_indices = @transform_2, window_bounds = array<i64: 4, 8>}, {transform_indices = @transform_3, window_bounds = array<i64: 2, 16, 16, 8>}, {transform_indices = @transform_4, window_bounds = array<i64: 1, 1, 8>}, {transform_indices = @transform_5, window_bounds = array<i64: 1, 1, 8>}, {transform_indices = @transform_6, window_bounds = array<i64: 2, 16, 16, 8>}, {transform_indices = @transform_7, window_bounds = array<i64: 1, 1, 8>}, {transform_indices = @transform_8, window_bounds = array<i64: 1, 1, 8>}]} {
    %c0 = arith.constant 0 : index
    %c0_0 = arith.constant 0 : index
    %c0_1 = arith.constant 0 : index
    %c0_2 = arith.constant 0 : index
    %0 = vector.load %arg1[%c0, %c0_0, %c0_1, %c0_2] : memref<2x16x16x4xf32, #tpu.memory_space<vmem>>, vector<2x16x16x4xf32>
    %cst = arith.constant 0.000000e+00 : f32
    %1 = vector.broadcast %cst : f32 to vector<2x1x18x4xf32>
    %c0_3 = arith.constant 0 : index
    %c0_4 = arith.constant 0 : index
    %c0_5 = arith.constant 0 : index
    %c0_6 = arith.constant 0 : index
    %2 = vector.load %arg10[%c0_3, %c0_4, %c0_5, %c0_6] : memref<2x18x18x4xf32, #tpu.memory_space<vmem>>, vector<2x1x18x4xf32>
    tpu.vector_store %arg10[%c0_3, %c0_4, %c0_5, %c0_6], %1 {strides = array<i32>} : memref<2x18x18x4xf32, #tpu.memory_space<vmem>>, vector<2x1x18x4xf32>,
    %c0_7 = arith.constant 0 : index
    %c17 = arith.constant 17 : index
    %c0_8 = arith.constant 0 : index
    %c0_9 = arith.constant 0 : index
    %3 = vector.load %arg10[%c0_7, %c17, %c0_8, %c0_9] : memref<2x18x18x4xf32, #tpu.memory_space<vmem>>, vector<2x1x18x4xf32>
    tpu.vector_store %arg10[%c0_7, %c17, %c0_8, %c0_9], %1 {strides = array<i32>} : memref<2x18x18x4xf32, #tpu.memory_space<vmem>>, vector<2x1x18x4xf32>,
    %cst_10 = arith.constant 0.000000e+00 : f32
    %4 = vector.broadcast %cst_10 : f32 to vector<2x16x1x4xf32>
    %c0_11 = arith.constant 0 : index
    %c1 = arith.constant 1 : index
    %c0_12 = arith.constant 0 : index
    %c0_13 = arith.constant 0 : index
    %5 = vector.load %arg10[%c0_11, %c1, %c0_12, %c0_13] : memref<2x18x18x4xf32, #tpu.memory_space<vmem>>, vector<2x16x1x4xf32>
    tpu.vector_store %arg10[%c0_11, %c1, %c0_12, %c0_13], %4 {strides = array<i32>} : memref<2x18x18x4xf32, #tpu.memory_space<vmem>>, vector<2x16x1x4xf32>,
    %c0_14 = arith.constant 0 : index
    %c1_15 = arith.constant 1 : index
    %c17_16 = arith.constant 17 : index
    %c0_17 = arith.constant 0 : index
    %6 = vector.load %arg10[%c0_14, %c1_15, %c17_16, %c0_17] : memref<2x18x18x4xf32, #tpu.memory_space<vmem>>, vector<2x16x1x4xf32>
    tpu.vector_store %arg10[%c0_14, %c1_15, %c17_16, %c0_17], %4 {strides = array<i32>} : memref<2x18x18x4xf32, #tpu.memory_space<vmem>>, vector<2x16x1x4xf32>,
    %c0_18 = arith.constant 0 : index
    %c1_19 = arith.constant 1 : index
    %c1_20 = arith.constant 1 : index
    %c0_21 = arith.constant 0 : index
    %7 = vector.load %arg10[%c0_18, %c1_19, %c1_20, %c0_21] : memref<2x18x18x4xf32, #tpu.memory_space<vmem>>, vector<2x16x16x4xf32>
    tpu.vector_store %arg10[%c0_18, %c1_19, %c1_20, %c0_21], %0 {strides = array<i32>} : memref<2x18x18x4xf32, #tpu.memory_space<vmem>>, vector<2x16x16x4xf32>,
    %c0_22 = arith.constant 0 : index
    %c0_23 = arith.constant 0 : index
    %c0_24 = arith.constant 0 : index
    %c0_25 = arith.constant 0 : index
    %8 = vector.load %arg10[%c0_22, %c0_23, %c0_24, %c0_25] : memref<2x18x18x4xf32, #tpu.memory_space<vmem>>, vector<2x18x18x4xf32>
    %9 = vector.extract_strided_slice %8 {offsets = [0, 0, 0, 0], sizes = [2, 16, 16, 4], strides = [1, 1, 1, 1]} : vector<2x18x18x4xf32> to vector<2x16x16x4xf32>
    %10 = vector.extract_strided_slice %8 {offsets = [0, 0, 1, 0], sizes = [2, 16, 16, 4], strides = [1, 1, 1, 1]} : vector<2x18x18x4xf32> to vector<2x16x16x4xf32>
    %11 = vector.extract_strided_slice %8 {offsets = [0, 0, 2, 0], sizes = [2, 16, 16, 4], strides = [1, 1, 1, 1]} : vector<2x18x18x4xf32> to vector<2x16x16x4xf32>
    %12 = vector.extract_strided_slice %8 {offsets = [0, 1, 0, 0], sizes = [2, 16, 16, 4], strides = [1, 1, 1, 1]} : vector<2x18x18x4xf32> to vector<2x16x16x4xf32>
    %13 = vector.extract_strided_slice %8 {offsets = [0, 1, 1, 0], sizes = [2, 16, 16, 4], strides = [1, 1, 1, 1]} : vector<2x18x18x4xf32> to vector<2x16x16x4xf32>
    %14 = vector.extract_strided_slice %8 {offsets = [0, 1, 2, 0], sizes = [2, 16, 16, 4], strides = [1, 1, 1, 1]} : vector<2x18x18x4xf32> to vector<2x16x16x4xf32>
    %15 = vector.extract_strided_slice %8 {offsets = [0, 2, 0, 0], sizes = [2, 16, 16, 4], strides = [1, 1, 1, 1]} : vector<2x18x18x4xf32> to vector<2x16x16x4xf32>
    %16 = vector.extract_strided_slice %8 {offsets = [0, 2, 1, 0], sizes = [2, 16, 16, 4], strides = [1, 1, 1, 1]} : vector<2x18x18x4xf32> to vector<2x16x16x4xf32>
    %17 = vector.extract_strided_slice %8 {offsets = [0, 2, 2, 0], sizes = [2, 16, 16, 4], strides = [1, 1, 1, 1]} : vector<2x18x18x4xf32> to vector<2x16x16x4xf32>
    %18 = tpu.concatenate %9, %10, %11, %12, %13, %14, %15, %16, %17 in 3 : vector<2x16x16x4xf32>, vector<2x16x16x4xf32>, vector<2x16x16x4xf32>, vector<2x16x16x4xf32>, vector<2x16x16x4xf32>, vector<2x16x16x4xf32>, vector<2x16x16x4xf32>, vector<2x16x16x4xf32>, vector<2x16x16x4xf32> -> vector<2x16x16x36xf32>
    %19 = vector.shape_cast %18 : vector<2x16x16x36xf32> to vector<512x36xf32>
    %20 = arith.truncf %19 : vector<512x36xf32> to vector<512x36xbf16>
    %c0_26 = arith.constant 0 : index
    %c0_27 = arith.constant 0 : index
    %21 = vector.load %arg2[%c0_26, %c0_27] : memref<36x8xbf16, #tpu.memory_space<vmem>>, vector<36x8xbf16>
    %cst_28 = arith.constant dense<0.000000e+00> : vector<512x8xf32>
    %22 = tpu.matmul %20, %21, %cst_28 {dimension_numbers = #tpu.dot_dimension_numbers<[1], [0], [0], [1], [0, 0, 1, 1], [], []>} : vector<512x36xbf16>, vector<36x8xbf16>, vector<512x8xf32> -> vector<512x8xf32>
    %cst_29 = arith.constant dense<0.000000e+00> : vector<8xf32>
    %23 = vector.multi_reduction <add>, %22, %cst_29 [0] : vector<512x8xf32> to vector<8xf32>
    %24 = vector.shape_cast %23 : vector<8xf32> to vector<1x8xf32>
    %25 = vector.shape_cast %24 : vector<1x8xf32> to vector<1x1x8xf32>
    %c0_30 = arith.constant 0 : index
    %c0_31 = arith.constant 0 : index
    %c0_32 = arith.constant 0 : index
    %26 = vector.load %arg5[%c0_30, %c0_31, %c0_32] : memref<1x1x8xf32, #tpu.memory_space<vmem>>, vector<1x1x8xf32>
    tpu.vector_store %arg5[%c0_30, %c0_31, %c0_32], %25 {strides = array<i32>} : memref<1x1x8xf32, #tpu.memory_space<vmem>>, vector<1x1x8xf32>,
    %27 = arith.mulf %22, %22 : vector<512x8xf32>
    %cst_33 = arith.constant dense<0.000000e+00> : vector<8xf32>
    %28 = vector.multi_reduction <add>, %27, %cst_33 [0] : vector<512x8xf32> to vector<8xf32>
    %29 = vector.shape_cast %28 : vector<8xf32> to vector<1x8xf32>
    %30 = vector.shape_cast %29 : vector<1x8xf32> to vector<1x1x8xf32>
    %c0_34 = arith.constant 0 : index
    %c0_35 = arith.constant 0 : index
    %c0_36 = arith.constant 0 : index
    %31 = vector.load %arg6[%c0_34, %c0_35, %c0_36] : memref<1x1x8xf32, #tpu.memory_space<vmem>>, vector<1x1x8xf32>
    tpu.vector_store %arg6[%c0_34, %c0_35, %c0_36], %30 {strides = array<i32>} : memref<1x1x8xf32, #tpu.memory_space<vmem>>, vector<1x1x8xf32>,
    %32 = vector.shape_cast %22 : vector<512x8xf32> to vector<2x16x16x8xf32>
    %c0_37 = arith.constant 0 : index
    %c0_38 = arith.constant 0 : index
    %c0_39 = arith.constant 0 : index
    %c0_40 = arith.constant 0 : index
    %33 = vector.load %arg4[%c0_37, %c0_38, %c0_39, %c0_40] : memref<2x16x16x8xf32, #tpu.memory_space<vmem>>, vector<2x16x16x8xf32>
    tpu.vector_store %arg4[%c0_37, %c0_38, %c0_39, %c0_40], %32 {strides = array<i32>} : memref<2x16x16x8xf32, #tpu.memory_space<vmem>>, vector<2x16x16x8xf32>,
    %34 = vector.extract_strided_slice %0 {offsets = [0, 0, 0, 0], sizes = [2, 16, 16, 4], strides = [1, 1, 1, 1]} : vector<2x16x16x4xf32> to vector<2x16x16x4xf32>
    %35 = vector.shape_cast %34 : vector<2x16x16x4xf32> to vector<512x4xf32>
    %36 = arith.truncf %35 : vector<512x4xf32> to vector<512x4xbf16>
    %c0_41 = arith.constant 0 : index
    %c0_42 = arith.constant 0 : index
    %37 = vector.load %arg3[%c0_41, %c0_42] : memref<4x8xbf16, #tpu.memory_space<vmem>>, vector<4x8xbf16>
    %cst_43 = arith.constant dense<0.000000e+00> : vector<512x8xf32>
    %38 = tpu.matmul %36, %37, %cst_43 {dimension_numbers = #tpu.dot_dimension_numbers<[1], [0], [0], [1], [0, 0, 1, 1], [], []>} : vector<512x4xbf16>, vector<4x8xbf16>, vector<512x8xf32> -> vector<512x8xf32>
    %cst_44 = arith.constant dense<0.000000e+00> : vector<8xf32>
    %39 = vector.multi_reduction <add>, %38, %cst_44 [0] : vector<512x8xf32> to vector<8xf32>
    %40 = vector.shape_cast %39 : vector<8xf32> to vector<1x8xf32>
    %41 = vector.shape_cast %40 : vector<1x8xf32> to vector<1x1x8xf32>
    %c0_45 = arith.constant 0 : index
    %c0_46 = arith.constant 0 : index
    %c0_47 = arith.constant 0 : index
    %42 = vector.load %arg8[%c0_45, %c0_46, %c0_47] : memref<1x1x8xf32, #tpu.memory_space<vmem>>, vector<1x1x8xf32>
    tpu.vector_store %arg8[%c0_45, %c0_46, %c0_47], %41 {strides = array<i32>} : memref<1x1x8xf32, #tpu.memory_space<vmem>>, vector<1x1x8xf32>,
    %43 = arith.mulf %38, %38 : vector<512x8xf32>
    %cst_48 = arith.constant dense<0.000000e+00> : vector<8xf32>
    %44 = vector.multi_reduction <add>, %43, %cst_48 [0] : vector<512x8xf32> to vector<8xf32>
    %45 = vector.shape_cast %44 : vector<8xf32> to vector<1x8xf32>
    %46 = vector.shape_cast %45 : vector<1x8xf32> to vector<1x1x8xf32>
    %c0_49 = arith.constant 0 : index
    %c0_50 = arith.constant 0 : index
    %c0_51 = arith.constant 0 : index
    %47 = vector.load %arg9[%c0_49, %c0_50, %c0_51] : memref<1x1x8xf32, #tpu.memory_space<vmem>>, vector<1x1x8xf32>
    tpu.vector_store %arg9[%c0_49, %c0_50, %c0_51], %46 {strides = array<i32>} : memref<1x1x8xf32, #tpu.memory_space<vmem>>, vector<1x1x8xf32>,
    %48 = vector.shape_cast %38 : vector<512x8xf32> to vector<2x16x16x8xf32>
    %c0_52 = arith.constant 0 : index
    %c0_53 = arith.constant 0 : index
    %c0_54 = arith.constant 0 : index
    %c0_55 = arith.constant 0 : index
    %49 = vector.load %arg7[%c0_52, %c0_53, %c0_54, %c0_55] : memref<2x16x16x8xf32, #tpu.memory_space<vmem>>, vector<2x16x16x8xf32>
    tpu.vector_store %arg7[%c0_52, %c0_53, %c0_54, %c0_55], %48 {strides = array<i32>} : memref<2x16x16x8xf32, #tpu.memory_space<vmem>>, vector<2x16x16x8xf32>,
    return
  }
  func.func @transform_0(%arg0: i32) -> (i32, i32, i32, i32) {
    %c0_i32 = arith.constant 0 : i32
    %c0_i32_0 = arith.constant 0 : i32
    %c0_i32_1 = arith.constant 0 : i32
    %c0_i32_2 = arith.constant 0 : i32
    return %arg0, %c0_i32, %c0_i32_0, %c0_i32_1 : i32, i32, i32, i32
  }
  func.func @transform_1(%arg0: i32) -> (i32, i32) {
    %c0_i32 = arith.constant 0 : i32
    %c0_i32_0 = arith.constant 0 : i32
    %c0_i32_1 = arith.constant 0 : i32
    return %c0_i32, %c0_i32_0 : i32, i32
  }
  func.func @transform_2(%arg0: i32) -> (i32, i32) {
    %c0_i32 = arith.constant 0 : i32
    %c0_i32_0 = arith.constant 0 : i32
    %c0_i32_1 = arith.constant 0 : i32
    return %c0_i32, %c0_i32_0 : i32, i32
  }
  func.func @transform_3(%arg0: i32) -> (i32, i32, i32, i32) {
    %c0_i32 = arith.constant 0 : i32
    %c0_i32_0 = arith.constant 0 : i32
    %c0_i32_1 = arith.constant 0 : i32
    %c0_i32_2 = arith.constant 0 : i32
    return %arg0, %c0_i32, %c0_i32_0, %c0_i32_1 : i32, i32, i32, i32
  }
  func.func @transform_4(%arg0: i32) -> (i32, i32, i32) {
    %c0_i32 = arith.constant 0 : i32
    %c0_i32_0 = arith.constant 0 : i32
    %c0_i32_1 = arith.constant 0 : i32
    return %arg0, %c0_i32, %c0_i32_0 : i32, i32, i32
  }
  func.func @transform_5(%arg0: i32) -> (i32, i32, i32) {
    %c0_i32 = arith.constant 0 : i32
    %c0_i32_0 = arith.constant 0 : i32
    %c0_i32_1 = arith.constant 0 : i32
    return %arg0, %c0_i32, %c0_i32_0 : i32, i32, i32
  }
  func.func @transform_6(%arg0: i32) -> (i32, i32, i32, i32) {
    %c0_i32 = arith.constant 0 : i32
    %c0_i32_0 = arith.constant 0 : i32
    %c0_i32_1 = arith.constant 0 : i32
    %c0_i32_2 = arith.constant 0 : i32
    return %arg0, %c0_i32, %c0_i32_0, %c0_i32_1 : i32, i32, i32, i32
  }
  func.func @transform_7(%arg0: i32) -> (i32, i32, i32) {
    %c0_i32 = arith.constant 0 : i32
    %c0_i32_0 = arith.constant 0 : i32
    %c0_i32_1 = arith.constant 0 : i32
    return %arg0, %c0_i32, %c0_i32_0 : i32, i32, i32
  }
  func.func @transform_8(%arg0: i32) -> (i32, i32, i32) {
    %c0_i32 = arith.constant 0 : i32
    %c0_i32_0 = arith.constant 0 : i32
    %c0_i32_1 = arith.constant 0 : i32
    return %arg0, %c0_i32, %c0_i32_0 : i32, i32, i32
  }
}

module attributes {stable_mosaic.version = 11 : i64} {
  func.func @_stage1_kernel(%arg0: i32, %arg1: memref<2x16x16x4xf32, #tpu.memory_space<vmem>>, %arg2: memref<36x8xbf16, #tpu.memory_space<vmem>>, %arg3: memref<4x8xbf16, #tpu.memory_space<vmem>>, %arg4: memref<2x16x16x8xf32, #tpu.memory_space<vmem>>, %arg5: memref<1x1x8xf32, #tpu.memory_space<vmem>>, %arg6: memref<1x1x8xf32, #tpu.memory_space<vmem>>, %arg7: memref<2x16x16x8xf32, #tpu.memory_space<vmem>>, %arg8: memref<1x1x8xf32, #tpu.memory_space<vmem>>, %arg9: memref<1x1x8xf32, #tpu.memory_space<vmem>>, %arg10: memref<2x18x18x4xf32, #tpu.memory_space<vmem>>) attributes {dimension_semantics = [#tpu.dimension_semantics<parallel>], iteration_bounds = array<i64: 1>, scalar_prefetch = 0 : i64, scratch_operands = 1 : i64, tpu.core_type = #tpu.core_type<tc>, window_params = [{transform_indices = @transform_0, window_bounds = array<i64: 2, 16, 16, 4>}, {pipeline_mode = #tpu.pipeline_mode<synchronous>, transform_indices = @transform_1, window_bounds = array<i64: 36, 8>}, {pipeline_mode = #tpu.pipeline_mode<synchronous>, transform_indices = @transform_2, window_bounds = array<i64: 4, 8>}, {transform_indices = @transform_3, window_bounds = array<i64: 2, 16, 16, 8>}, {transform_indices = @transform_4, window_bounds = array<i64: 1, 1, 8>}, {transform_indices = @transform_5, window_bounds = array<i64: 1, 1, 8>}, {transform_indices = @transform_6, window_bounds = array<i64: 2, 16, 16, 8>}, {transform_indices = @transform_7, window_bounds = array<i64: 1, 1, 8>}, {transform_indices = @transform_8, window_bounds = array<i64: 1, 1, 8>}]} {
    %c0 = arith.constant 0 : index
    %c0_0 = arith.constant 0 : index
    %c0_1 = arith.constant 0 : index
    %c0_2 = arith.constant 0 : index
    %0 = vector.load %arg1[%c0, %c0_0, %c0_1, %c0_2] : memref<2x16x16x4xf32, #tpu.memory_space<vmem>>, vector<2x16x16x4xf32>
    %cst = arith.constant 0.000000e+00 : f32
    %1 = vector.broadcast %cst : f32 to vector<2x18x18x4xf32>
    %c0_3 = arith.constant 0 : index
    %c0_4 = arith.constant 0 : index
    %c0_5 = arith.constant 0 : index
    %c0_6 = arith.constant 0 : index
    %2 = vector.load %arg10[%c0_3, %c0_4, %c0_5, %c0_6] : memref<2x18x18x4xf32, #tpu.memory_space<vmem>>, vector<2x18x18x4xf32>
    tpu.vector_store %arg10[%c0_3, %c0_4, %c0_5, %c0_6], %1 {strides = array<i32>} : memref<2x18x18x4xf32, #tpu.memory_space<vmem>>, vector<2x18x18x4xf32>,
    %c0_7 = arith.constant 0 : index
    %c1 = arith.constant 1 : index
    %c1_8 = arith.constant 1 : index
    %c0_9 = arith.constant 0 : index
    %3 = vector.load %arg10[%c0_7, %c1, %c1_8, %c0_9] : memref<2x18x18x4xf32, #tpu.memory_space<vmem>>, vector<2x16x16x4xf32>
    tpu.vector_store %arg10[%c0_7, %c1, %c1_8, %c0_9], %0 {strides = array<i32>} : memref<2x18x18x4xf32, #tpu.memory_space<vmem>>, vector<2x16x16x4xf32>,
    %c0_10 = arith.constant 0 : index
    %c0_11 = arith.constant 0 : index
    %c0_12 = arith.constant 0 : index
    %c0_13 = arith.constant 0 : index
    %4 = vector.load %arg10[%c0_10, %c0_11, %c0_12, %c0_13] : memref<2x18x18x4xf32, #tpu.memory_space<vmem>>, vector<2x18x18x4xf32>
    %5 = vector.extract_strided_slice %4 {offsets = [0, 0, 0, 0], sizes = [2, 16, 16, 4], strides = [1, 1, 1, 1]} : vector<2x18x18x4xf32> to vector<2x16x16x4xf32>
    %6 = vector.extract_strided_slice %4 {offsets = [0, 0, 1, 0], sizes = [2, 16, 16, 4], strides = [1, 1, 1, 1]} : vector<2x18x18x4xf32> to vector<2x16x16x4xf32>
    %7 = vector.extract_strided_slice %4 {offsets = [0, 0, 2, 0], sizes = [2, 16, 16, 4], strides = [1, 1, 1, 1]} : vector<2x18x18x4xf32> to vector<2x16x16x4xf32>
    %8 = vector.extract_strided_slice %4 {offsets = [0, 1, 0, 0], sizes = [2, 16, 16, 4], strides = [1, 1, 1, 1]} : vector<2x18x18x4xf32> to vector<2x16x16x4xf32>
    %9 = vector.extract_strided_slice %4 {offsets = [0, 1, 1, 0], sizes = [2, 16, 16, 4], strides = [1, 1, 1, 1]} : vector<2x18x18x4xf32> to vector<2x16x16x4xf32>
    %10 = vector.extract_strided_slice %4 {offsets = [0, 1, 2, 0], sizes = [2, 16, 16, 4], strides = [1, 1, 1, 1]} : vector<2x18x18x4xf32> to vector<2x16x16x4xf32>
    %11 = vector.extract_strided_slice %4 {offsets = [0, 2, 0, 0], sizes = [2, 16, 16, 4], strides = [1, 1, 1, 1]} : vector<2x18x18x4xf32> to vector<2x16x16x4xf32>
    %12 = vector.extract_strided_slice %4 {offsets = [0, 2, 1, 0], sizes = [2, 16, 16, 4], strides = [1, 1, 1, 1]} : vector<2x18x18x4xf32> to vector<2x16x16x4xf32>
    %13 = vector.extract_strided_slice %4 {offsets = [0, 2, 2, 0], sizes = [2, 16, 16, 4], strides = [1, 1, 1, 1]} : vector<2x18x18x4xf32> to vector<2x16x16x4xf32>
    %cst_14 = arith.constant 0.000000e+00 : f32
    %14 = vector.broadcast %cst_14 : f32 to vector<512x8xf32>
    %15 = vector.shape_cast %5 : vector<2x16x16x4xf32> to vector<512x4xf32>
    %16 = arith.truncf %15 : vector<512x4xf32> to vector<512x4xbf16>
    %c0_15 = arith.constant 0 : index
    %c0_16 = arith.constant 0 : index
    %17 = vector.load %arg2[%c0_15, %c0_16] : memref<36x8xbf16, #tpu.memory_space<vmem>>, vector<4x8xbf16>
    %cst_17 = arith.constant dense<0.000000e+00> : vector<512x8xf32>
    %18 = tpu.matmul %16, %17, %cst_17 {dimension_numbers = #tpu.dot_dimension_numbers<[1], [0], [0], [1], [0, 0, 1, 1], [], []>} : vector<512x4xbf16>, vector<4x8xbf16>, vector<512x8xf32> -> vector<512x8xf32>
    %19 = arith.addf %14, %18 : vector<512x8xf32>
    %20 = vector.shape_cast %6 : vector<2x16x16x4xf32> to vector<512x4xf32>
    %21 = arith.truncf %20 : vector<512x4xf32> to vector<512x4xbf16>
    %c4 = arith.constant 4 : index
    %c0_18 = arith.constant 0 : index
    %22 = vector.load %arg2[%c4, %c0_18] : memref<36x8xbf16, #tpu.memory_space<vmem>>, vector<4x8xbf16>
    %cst_19 = arith.constant dense<0.000000e+00> : vector<512x8xf32>
    %23 = tpu.matmul %21, %22, %cst_19 {dimension_numbers = #tpu.dot_dimension_numbers<[1], [0], [0], [1], [0, 0, 1, 1], [], []>} : vector<512x4xbf16>, vector<4x8xbf16>, vector<512x8xf32> -> vector<512x8xf32>
    %24 = arith.addf %19, %23 : vector<512x8xf32>
    %25 = vector.shape_cast %7 : vector<2x16x16x4xf32> to vector<512x4xf32>
    %26 = arith.truncf %25 : vector<512x4xf32> to vector<512x4xbf16>
    %c8 = arith.constant 8 : index
    %c0_20 = arith.constant 0 : index
    %27 = vector.load %arg2[%c8, %c0_20] : memref<36x8xbf16, #tpu.memory_space<vmem>>, vector<4x8xbf16>
    %cst_21 = arith.constant dense<0.000000e+00> : vector<512x8xf32>
    %28 = tpu.matmul %26, %27, %cst_21 {dimension_numbers = #tpu.dot_dimension_numbers<[1], [0], [0], [1], [0, 0, 1, 1], [], []>} : vector<512x4xbf16>, vector<4x8xbf16>, vector<512x8xf32> -> vector<512x8xf32>
    %29 = arith.addf %24, %28 : vector<512x8xf32>
    %30 = vector.shape_cast %8 : vector<2x16x16x4xf32> to vector<512x4xf32>
    %31 = arith.truncf %30 : vector<512x4xf32> to vector<512x4xbf16>
    %c12 = arith.constant 12 : index
    %c0_22 = arith.constant 0 : index
    %32 = vector.load %arg2[%c12, %c0_22] : memref<36x8xbf16, #tpu.memory_space<vmem>>, vector<4x8xbf16>
    %cst_23 = arith.constant dense<0.000000e+00> : vector<512x8xf32>
    %33 = tpu.matmul %31, %32, %cst_23 {dimension_numbers = #tpu.dot_dimension_numbers<[1], [0], [0], [1], [0, 0, 1, 1], [], []>} : vector<512x4xbf16>, vector<4x8xbf16>, vector<512x8xf32> -> vector<512x8xf32>
    %34 = arith.addf %29, %33 : vector<512x8xf32>
    %35 = vector.shape_cast %9 : vector<2x16x16x4xf32> to vector<512x4xf32>
    %36 = arith.truncf %35 : vector<512x4xf32> to vector<512x4xbf16>
    %c16 = arith.constant 16 : index
    %c0_24 = arith.constant 0 : index
    %37 = vector.load %arg2[%c16, %c0_24] : memref<36x8xbf16, #tpu.memory_space<vmem>>, vector<4x8xbf16>
    %cst_25 = arith.constant dense<0.000000e+00> : vector<512x8xf32>
    %38 = tpu.matmul %36, %37, %cst_25 {dimension_numbers = #tpu.dot_dimension_numbers<[1], [0], [0], [1], [0, 0, 1, 1], [], []>} : vector<512x4xbf16>, vector<4x8xbf16>, vector<512x8xf32> -> vector<512x8xf32>
    %39 = arith.addf %34, %38 : vector<512x8xf32>
    %40 = vector.shape_cast %10 : vector<2x16x16x4xf32> to vector<512x4xf32>
    %41 = arith.truncf %40 : vector<512x4xf32> to vector<512x4xbf16>
    %c20 = arith.constant 20 : index
    %c0_26 = arith.constant 0 : index
    %42 = vector.load %arg2[%c20, %c0_26] : memref<36x8xbf16, #tpu.memory_space<vmem>>, vector<4x8xbf16>
    %cst_27 = arith.constant dense<0.000000e+00> : vector<512x8xf32>
    %43 = tpu.matmul %41, %42, %cst_27 {dimension_numbers = #tpu.dot_dimension_numbers<[1], [0], [0], [1], [0, 0, 1, 1], [], []>} : vector<512x4xbf16>, vector<4x8xbf16>, vector<512x8xf32> -> vector<512x8xf32>
    %44 = arith.addf %39, %43 : vector<512x8xf32>
    %45 = vector.shape_cast %11 : vector<2x16x16x4xf32> to vector<512x4xf32>
    %46 = arith.truncf %45 : vector<512x4xf32> to vector<512x4xbf16>
    %c24 = arith.constant 24 : index
    %c0_28 = arith.constant 0 : index
    %47 = vector.load %arg2[%c24, %c0_28] : memref<36x8xbf16, #tpu.memory_space<vmem>>, vector<4x8xbf16>
    %cst_29 = arith.constant dense<0.000000e+00> : vector<512x8xf32>
    %48 = tpu.matmul %46, %47, %cst_29 {dimension_numbers = #tpu.dot_dimension_numbers<[1], [0], [0], [1], [0, 0, 1, 1], [], []>} : vector<512x4xbf16>, vector<4x8xbf16>, vector<512x8xf32> -> vector<512x8xf32>
    %49 = arith.addf %44, %48 : vector<512x8xf32>
    %50 = vector.shape_cast %12 : vector<2x16x16x4xf32> to vector<512x4xf32>
    %51 = arith.truncf %50 : vector<512x4xf32> to vector<512x4xbf16>
    %c28 = arith.constant 28 : index
    %c0_30 = arith.constant 0 : index
    %52 = vector.load %arg2[%c28, %c0_30] : memref<36x8xbf16, #tpu.memory_space<vmem>>, vector<4x8xbf16>
    %cst_31 = arith.constant dense<0.000000e+00> : vector<512x8xf32>
    %53 = tpu.matmul %51, %52, %cst_31 {dimension_numbers = #tpu.dot_dimension_numbers<[1], [0], [0], [1], [0, 0, 1, 1], [], []>} : vector<512x4xbf16>, vector<4x8xbf16>, vector<512x8xf32> -> vector<512x8xf32>
    %54 = arith.addf %49, %53 : vector<512x8xf32>
    %55 = vector.shape_cast %13 : vector<2x16x16x4xf32> to vector<512x4xf32>
    %56 = arith.truncf %55 : vector<512x4xf32> to vector<512x4xbf16>
    %c32 = arith.constant 32 : index
    %c0_32 = arith.constant 0 : index
    %57 = vector.load %arg2[%c32, %c0_32] : memref<36x8xbf16, #tpu.memory_space<vmem>>, vector<4x8xbf16>
    %cst_33 = arith.constant dense<0.000000e+00> : vector<512x8xf32>
    %58 = tpu.matmul %56, %57, %cst_33 {dimension_numbers = #tpu.dot_dimension_numbers<[1], [0], [0], [1], [0, 0, 1, 1], [], []>} : vector<512x4xbf16>, vector<4x8xbf16>, vector<512x8xf32> -> vector<512x8xf32>
    %59 = arith.addf %54, %58 : vector<512x8xf32>
    %cst_34 = arith.constant dense<0.000000e+00> : vector<8xf32>
    %60 = vector.multi_reduction <add>, %59, %cst_34 [0] : vector<512x8xf32> to vector<8xf32>
    %61 = vector.shape_cast %60 : vector<8xf32> to vector<1x8xf32>
    %62 = vector.shape_cast %61 : vector<1x8xf32> to vector<1x1x8xf32>
    %c0_35 = arith.constant 0 : index
    %c0_36 = arith.constant 0 : index
    %c0_37 = arith.constant 0 : index
    %63 = vector.load %arg5[%c0_35, %c0_36, %c0_37] : memref<1x1x8xf32, #tpu.memory_space<vmem>>, vector<1x1x8xf32>
    tpu.vector_store %arg5[%c0_35, %c0_36, %c0_37], %62 {strides = array<i32>} : memref<1x1x8xf32, #tpu.memory_space<vmem>>, vector<1x1x8xf32>,
    %64 = arith.mulf %59, %59 : vector<512x8xf32>
    %cst_38 = arith.constant dense<0.000000e+00> : vector<8xf32>
    %65 = vector.multi_reduction <add>, %64, %cst_38 [0] : vector<512x8xf32> to vector<8xf32>
    %66 = vector.shape_cast %65 : vector<8xf32> to vector<1x8xf32>
    %67 = vector.shape_cast %66 : vector<1x8xf32> to vector<1x1x8xf32>
    %c0_39 = arith.constant 0 : index
    %c0_40 = arith.constant 0 : index
    %c0_41 = arith.constant 0 : index
    %68 = vector.load %arg6[%c0_39, %c0_40, %c0_41] : memref<1x1x8xf32, #tpu.memory_space<vmem>>, vector<1x1x8xf32>
    tpu.vector_store %arg6[%c0_39, %c0_40, %c0_41], %67 {strides = array<i32>} : memref<1x1x8xf32, #tpu.memory_space<vmem>>, vector<1x1x8xf32>,
    %69 = vector.shape_cast %59 : vector<512x8xf32> to vector<2x16x16x8xf32>
    %c0_42 = arith.constant 0 : index
    %c0_43 = arith.constant 0 : index
    %c0_44 = arith.constant 0 : index
    %c0_45 = arith.constant 0 : index
    %70 = vector.load %arg4[%c0_42, %c0_43, %c0_44, %c0_45] : memref<2x16x16x8xf32, #tpu.memory_space<vmem>>, vector<2x16x16x8xf32>
    tpu.vector_store %arg4[%c0_42, %c0_43, %c0_44, %c0_45], %69 {strides = array<i32>} : memref<2x16x16x8xf32, #tpu.memory_space<vmem>>, vector<2x16x16x8xf32>,
    %71 = vector.extract_strided_slice %0 {offsets = [0, 0, 0, 0], sizes = [2, 16, 16, 4], strides = [1, 1, 1, 1]} : vector<2x16x16x4xf32> to vector<2x16x16x4xf32>
    %72 = vector.shape_cast %71 : vector<2x16x16x4xf32> to vector<512x4xf32>
    %73 = arith.truncf %72 : vector<512x4xf32> to vector<512x4xbf16>
    %c0_46 = arith.constant 0 : index
    %c0_47 = arith.constant 0 : index
    %74 = vector.load %arg3[%c0_46, %c0_47] : memref<4x8xbf16, #tpu.memory_space<vmem>>, vector<4x8xbf16>
    %cst_48 = arith.constant dense<0.000000e+00> : vector<512x8xf32>
    %75 = tpu.matmul %73, %74, %cst_48 {dimension_numbers = #tpu.dot_dimension_numbers<[1], [0], [0], [1], [0, 0, 1, 1], [], []>} : vector<512x4xbf16>, vector<4x8xbf16>, vector<512x8xf32> -> vector<512x8xf32>
    %cst_49 = arith.constant dense<0.000000e+00> : vector<8xf32>
    %76 = vector.multi_reduction <add>, %75, %cst_49 [0] : vector<512x8xf32> to vector<8xf32>
    %77 = vector.shape_cast %76 : vector<8xf32> to vector<1x8xf32>
    %78 = vector.shape_cast %77 : vector<1x8xf32> to vector<1x1x8xf32>
    %c0_50 = arith.constant 0 : index
    %c0_51 = arith.constant 0 : index
    %c0_52 = arith.constant 0 : index
    %79 = vector.load %arg8[%c0_50, %c0_51, %c0_52] : memref<1x1x8xf32, #tpu.memory_space<vmem>>, vector<1x1x8xf32>
    tpu.vector_store %arg8[%c0_50, %c0_51, %c0_52], %78 {strides = array<i32>} : memref<1x1x8xf32, #tpu.memory_space<vmem>>, vector<1x1x8xf32>,
    %80 = arith.mulf %75, %75 : vector<512x8xf32>
    %cst_53 = arith.constant dense<0.000000e+00> : vector<8xf32>
    %81 = vector.multi_reduction <add>, %80, %cst_53 [0] : vector<512x8xf32> to vector<8xf32>
    %82 = vector.shape_cast %81 : vector<8xf32> to vector<1x8xf32>
    %83 = vector.shape_cast %82 : vector<1x8xf32> to vector<1x1x8xf32>
    %c0_54 = arith.constant 0 : index
    %c0_55 = arith.constant 0 : index
    %c0_56 = arith.constant 0 : index
    %84 = vector.load %arg9[%c0_54, %c0_55, %c0_56] : memref<1x1x8xf32, #tpu.memory_space<vmem>>, vector<1x1x8xf32>
    tpu.vector_store %arg9[%c0_54, %c0_55, %c0_56], %83 {strides = array<i32>} : memref<1x1x8xf32, #tpu.memory_space<vmem>>, vector<1x1x8xf32>,
    %85 = vector.shape_cast %75 : vector<512x8xf32> to vector<2x16x16x8xf32>
    %c0_57 = arith.constant 0 : index
    %c0_58 = arith.constant 0 : index
    %c0_59 = arith.constant 0 : index
    %c0_60 = arith.constant 0 : index
    %86 = vector.load %arg7[%c0_57, %c0_58, %c0_59, %c0_60] : memref<2x16x16x8xf32, #tpu.memory_space<vmem>>, vector<2x16x16x8xf32>
    tpu.vector_store %arg7[%c0_57, %c0_58, %c0_59, %c0_60], %85 {strides = array<i32>} : memref<2x16x16x8xf32, #tpu.memory_space<vmem>>, vector<2x16x16x8xf32>,
    return
  }
  func.func @transform_0(%arg0: i32) -> (i32, i32, i32, i32) {
    %c0_i32 = arith.constant 0 : i32
    %c0_i32_0 = arith.constant 0 : i32
    %c0_i32_1 = arith.constant 0 : i32
    %c0_i32_2 = arith.constant 0 : i32
    return %arg0, %c0_i32, %c0_i32_0, %c0_i32_1 : i32, i32, i32, i32
  }
  func.func @transform_1(%arg0: i32) -> (i32, i32) {
    %c0_i32 = arith.constant 0 : i32
    %c0_i32_0 = arith.constant 0 : i32
    %c0_i32_1 = arith.constant 0 : i32
    return %c0_i32, %c0_i32_0 : i32, i32
  }
  func.func @transform_2(%arg0: i32) -> (i32, i32) {
    %c0_i32 = arith.constant 0 : i32
    %c0_i32_0 = arith.constant 0 : i32
    %c0_i32_1 = arith.constant 0 : i32
    return %c0_i32, %c0_i32_0 : i32, i32
  }
  func.func @transform_3(%arg0: i32) -> (i32, i32, i32, i32) {
    %c0_i32 = arith.constant 0 : i32
    %c0_i32_0 = arith.constant 0 : i32
    %c0_i32_1 = arith.constant 0 : i32
    %c0_i32_2 = arith.constant 0 : i32
    return %arg0, %c0_i32, %c0_i32_0, %c0_i32_1 : i32, i32, i32, i32
  }
  func.func @transform_4(%arg0: i32) -> (i32, i32, i32) {
    %c0_i32 = arith.constant 0 : i32
    %c0_i32_0 = arith.constant 0 : i32
    %c0_i32_1 = arith.constant 0 : i32
    return %arg0, %c0_i32, %c0_i32_0 : i32, i32, i32
  }
  func.func @transform_5(%arg0: i32) -> (i32, i32, i32) {
    %c0_i32 = arith.constant 0 : i32
    %c0_i32_0 = arith.constant 0 : i32
    %c0_i32_1 = arith.constant 0 : i32
    return %arg0, %c0_i32, %c0_i32_0 : i32, i32, i32
  }
  func.func @transform_6(%arg0: i32) -> (i32, i32, i32, i32) {
    %c0_i32 = arith.constant 0 : i32
    %c0_i32_0 = arith.constant 0 : i32
    %c0_i32_1 = arith.constant 0 : i32
    %c0_i32_2 = arith.constant 0 : i32
    return %arg0, %c0_i32, %c0_i32_0, %c0_i32_1 : i32, i32, i32, i32
  }
  func.func @transform_7(%arg0: i32) -> (i32, i32, i32) {
    %c0_i32 = arith.constant 0 : i32
    %c0_i32_0 = arith.constant 0 : i32
    %c0_i32_1 = arith.constant 0 : i32
    return %arg0, %c0_i32, %c0_i32_0 : i32, i32, i32
  }
  func.func @transform_8(%arg0: i32) -> (i32, i32, i32) {
    %c0_i32 = arith.constant 0 : i32
    %c0_i32_0 = arith.constant 0 : i32
    %c0_i32_1 = arith.constant 0 : i32
    return %arg0, %c0_i32, %c0_i32_0 : i32, i32, i32
  }
}

</mosaic_0001>

<llo_original>
// kernel: tpu_custom_call.1
$region0: #{tpu_custom_call.1}
  #allocation0 [shape = 'u32[]', space=smem, size = 0x4, offset = 0x4, fixed_abs, tag = 'smem constant byte address 0x4 - core index']
  #allocation1 [shape = 'u32[72,128]{1,0:T(1,128)}', space=vmem, size = 0x9000, scoped, tag = 'internal scratch']
  #allocation2 [shape = 'f32[2,18,18,4]{3,2,1,0:T(8,128)}', space=vmem, size = 0x6c000, scoped, tag = 'scratch operand']
  %s0 = inlined_call_operand.vmem [shape: f32[2,16,16,4], index: 0, kind: input, shape index: {}]
  %s1 = inlined_call_operand.vmem [shape: bf16[36,8], index: 1, kind: input, shape index: {}]
  %s2 = inlined_call_operand.vmem [shape: bf16[4,8], index: 2, kind: input, shape index: {}]
  %s3 = inlined_call_operand.vmem [shape: f32[2,16,16,8], index: 3, kind: output, shape index: {0}]
  %s4 = inlined_call_operand.hbm [shape: f32[1,1,8], index: 4, kind: output, shape index: {1}]
  %s5 = inlined_call_operand.hbm [shape: f32[1,1,8], index: 5, kind: output, shape index: {2}]
  %s6 = inlined_call_operand.vmem [shape: f32[2,16,16,8], index: 6, kind: output, shape index: {3}]
  %s7 = inlined_call_operand.hbm [shape: f32[1,1,8], index: 7, kind: output, shape index: {4}]
  %s8 = inlined_call_operand.hbm [shape: f32[1,1,8], index: 8, kind: output, shape index: {5}]
  %9 = xla_tuple %s3, %s4, %s5, %s6, %s7, %s8
  %s10 = sld [smem:[#allocation0]]
  $region62: #{tpu_custom_call.1} parent=0
    _
  %s12 = ssub.s32 1, %s10
  %s13 = scalar_select 0, %s12, %s10
  $region1: #{tpu_custom_call.1} parent=0
    #allocation3 [shape = 'u8[512]{0}', space=vmem, size = 0x400, scoped, tag = 'output window, operand 1, single buffered']
    #allocation4 [shape = 's32[1]{0}', space=sflag, size = 0x4, scoped, tag = 'scoped memory for tpu_custom_call.1']
    #allocation5 [shape = 'u8[512]{0}', space=vmem, size = 0x400, scoped, tag = 'output window, operand 2, single buffered']
    #allocation6 [shape = 's32[1]{0}', space=sflag, size = 0x4, scoped, tag = 'scoped memory for tpu_custom_call.1']
    #allocation7 [shape = 'u8[512]{0}', space=vmem, size = 0x400, scoped, tag = 'output window, operand 4, single buffered']
    #allocation8 [shape = 'u8[512]{0}', space=vmem, size = 0x400, scoped, tag = 'output window, operand 5, single buffered']
    #allocation9 [shape = 's32[1]{0}', space=sflag, size = 0x4, scoped, tag = 'scoped memory for tpu_custom_call.1']
    %14 = vsyncpa [#allocation4], 0
    %15 = vsyncpa [#allocation6], 0
    %16 = vsyncpa [#allocation9], 0
    // Predicated region
    $region2: #{tpu_custom_call.1} parent=1 // pred_check
      _
    $region3: #{tpu_custom_call.1} parent=1 // pred_check_branch
      %18 = sbr.rel (0) target = $region5
    $region4: #{tpu_custom_call.1} parent=1 // pred_region
      _
    $region5: #{tpu_custom_call.1} parent=1 // pred_fallthru
      _
    // Predicated region
    $region6: #{tpu_custom_call.1} parent=1 // pred_check
      _
    $region7: #{tpu_custom_call.1} parent=1 // pred_check_branch
      %20 = sbr.rel (0) target = $region9
    $region8: #{tpu_custom_call.1} parent=1 // pred_region
      _
    $region9: #{tpu_custom_call.1} parent=1 // pred_fallthru
      _
    // Predicated region
    $region10: #{tpu_custom_call.1} parent=1 // pred_check
      _
    $region11: #{tpu_custom_call.1} parent=1 // pred_check_branch
      %22 = sbr.rel (0) target = $region13
    $region12: #{tpu_custom_call.1} parent=1 // pred_region
      _
    $region13: #{tpu_custom_call.1} parent=1 // pred_fallthru
      _
    %v24 = vld [vmem:[%s0] sm:$0xff]
    %v25 = vld [vmem:[%s0 + $0x8] sm:$0xff]
    %v26 = vld [vmem:[%s0 + $0x10] sm:$0xff]
    %v27 = vld [vmem:[%s0 + $0x18] sm:$0xff]
    %v28 = vld [vmem:[%s0 + $0x20] sm:$0xff]
    %v29 = vld [vmem:[%s0 + $0x28] sm:$0xff]
    %v30 = vld [vmem:[%s0 + $0x30] sm:$0xff]
    %v31 = vld [vmem:[%s0 + $0x38] sm:$0xff]
    %v32 = vld [vmem:[%s0 + $0x40] sm:$0xff]
    %v33 = vld [vmem:[%s0 + $0x48] sm:$0xff]
    %v34 = vld [vmem:[%s0 + $0x50] sm:$0xff]
    %v35 = vld [vmem:[%s0 + $0x58] sm:$0xff]
    %v36 = vld [vmem:[%s0 + $0x60] sm:$0xff]
    %v37 = vld [vmem:[%s0 + $0x68] sm:$0xff]
    %v38 = vld [vmem:[%s0 + $0x70] sm:$0xff]
    %v39 = vld [vmem:[%s0 + $0x78] sm:$0xff]
    %v40 = vld [vmem:[%s0 + $0x80] sm:$0xff]
    %v41 = vld [vmem:[%s0 + $0x88] sm:$0xff]
    %v42 = vld [vmem:[%s0 + $0x90] sm:$0xff]
    %v43 = vld [vmem:[%s0 + $0x98] sm:$0xff]
    %v44 = vld [vmem:[%s0 + $0xa0] sm:$0xff]
    %v45 = vld [vmem:[%s0 + $0xa8] sm:$0xff]
    %v46 = vld [vmem:[%s0 + $0xb0] sm:$0xff]
    %v47 = vld [vmem:[%s0 + $0xb8] sm:$0xff]
    %v48 = vld [vmem:[%s0 + $0xc0] sm:$0xff]
    %v49 = vld [vmem:[%s0 + $0xc8] sm:$0xff]
    %v50 = vld [vmem:[%s0 + $0xd0] sm:$0xff]
    %v51 = vld [vmem:[%s0 + $0xd8] sm:$0xff]
    %v52 = vld [vmem:[%s0 + $0xe0] sm:$0xff]
    %v53 = vld [vmem:[%s0 + $0xe8] sm:$0xff]
    %v54 = vld [vmem:[%s0 + $0xf0] sm:$0xff]
    %v55 = vld [vmem:[%s0 + $0xf8] sm:$0xff]
    %v56 = vld [vmem:[%s0 + $0x100] sm:$0xff]
    %v57 = vld [vmem:[%s0 + $0x108] sm:$0xff]
    %v58 = vld [vmem:[%s0 + $0x110] sm:$0xff]
    %v59 = vld [vmem:[%s0 + $0x118] sm:$0xff]
    %v60 = vld [vmem:[%s0 + $0x120] sm:$0xff]
    %v61 = vld [vmem:[%s0 + $0x128] sm:$0xff]
    %v62 = vld [vmem:[%s0 + $0x130] sm:$0xff]
    %v63 = vld [vmem:[%s0 + $0x138] sm:$0xff]
    %v64 = vld [vmem:[%s0 + $0x140] sm:$0xff]
    %v65 = vld [vmem:[%s0 + $0x148] sm:$0xff]
    %v66 = vld [vmem:[%s0 + $0x150] sm:$0xff]
    %v67 = vld [vmem:[%s0 + $0x158] sm:$0xff]
    %v68 = vld [vmem:[%s0 + $0x160] sm:$0xff]
    %v69 = vld [vmem:[%s0 + $0x168] sm:$0xff]
    %v70 = vld [vmem:[%s0 + $0x170] sm:$0xff]
    %v71 = vld [vmem:[%s0 + $0x178] sm:$0xff]
    %v72 = vld [vmem:[%s0 + $0x180] sm:$0xff]
    %v73 = vld [vmem:[%s0 + $0x188] sm:$0xff]
    %v74 = vld [vmem:[%s0 + $0x190] sm:$0xff]
    %v75 = vld [vmem:[%s0 + $0x198] sm:$0xff]
    %v76 = vld [vmem:[%s0 + $0x1a0] sm:$0xff]
    %v77 = vld [vmem:[%s0 + $0x1a8] sm:$0xff]
    %v78 = vld [vmem:[%s0 + $0x1b0] sm:$0xff]
    %v79 = vld [vmem:[%s0 + $0x1b8] sm:$0xff]
    %v80 = vld [vmem:[%s0 + $0x1c0] sm:$0xff]
    %v81 = vld [vmem:[%s0 + $0x1c8] sm:$0xff]
    %v82 = vld [vmem:[%s0 + $0x1d0] sm:$0xff]
    %v83 = vld [vmem:[%s0 + $0x1d8] sm:$0xff]
    %v84 = vld [vmem:[%s0 + $0x1e0] sm:$0xff]
    %v85 = vld [vmem:[%s0 + $0x1e8] sm:$0xff]
    %v86 = vld [vmem:[%s0 + $0x1f0] sm:$0xff]
    %v87 = vld [vmem:[%s0 + $0x1f8] sm:$0xff]
    %vm88 = vcmask 31744
    %89 = vst.msk [vmem:[#allocation2] sm:$0xff] %vm88, 0.0
    %90 = vst.msk [vmem:[#allocation2 + $0x8] sm:$0xff] %vm88, 0.0
    %vm91 = vcmask 25600
    %92 = vst.msk [vmem:[#allocation2 + $0x10] sm:$0x3] %vm91, 0.0
    %93 = vst.msk [vmem:[#allocation2 + $0x1b0] sm:$0xff] %vm88, 0.0
    %94 = vst.msk [vmem:[#allocation2 + $0x1b8] sm:$0xff] %vm88, 0.0
    %95 = vst.msk [vmem:[#allocation2 + $0x1c0] sm:$0x3] %vm91, 0.0
    %s96 = scalar_lea.vmem [#allocation2], 408
    %97 = vst.msk [vmem:[%s96] sm:$0xff] %vm88, 0.0
    %98 = vst.msk [vmem:[%s96 + $0x8] sm:$0xff] %vm88, 0.0
    %99 = vst.msk [vmem:[%s96 + $0x10] sm:$0x3] %vm91, 0.0
    %100 = vst.msk [vmem:[%s96 + $0x1b0] sm:$0xff] %vm88, 0.0
    %101 = vst.msk [vmem:[%s96 + $0x1b8] sm:$0xff] %vm88, 0.0
    %102 = vst.msk [vmem:[%s96 + $0x1c0] sm:$0x3] %vm91, 0.0
    %s103 = scalar_lea.vmem [#allocation2], 24
    %vm104 = vcmask 24576
    %105 = vst.msk [vmem:[%s103] sm:$0x1] %vm104, 0.0
    %106 = vst.msk [vmem:[%s103 + $0x18] sm:$0x1] %vm104, 0.0
    %107 = vst.msk [vmem:[%s103 + $0x30] sm:$0x1] %vm104, 0.0
    %108 = vst.msk [vmem:[%s103 + $0x48] sm:$0x1] %vm104, 0.0
    %109 = vst.msk [vmem:[%s103 + $0x60] sm:$0x1] %vm104, 0.0
    %110 = vst.msk [vmem:[%s103 + $0x78] sm:$0x1] %vm104, 0.0
    %111 = vst.msk [vmem:[%s103 + $0x90] sm:$0x1] %vm104, 0.0
    %112 = vst.msk [vmem:[%s103 + $0xa8] sm:$0x1] %vm104, 0.0
    %113 = vst.msk [vmem:[%s103 + $0xc0] sm:$0x1] %vm104, 0.0
    %114 = vst.msk [vmem:[%s103 + $0xd8] sm:$0x1] %vm104, 0.0
    %115 = vst.msk [vmem:[%s103 + $0xf0] sm:$0x1] %vm104, 0.0
    %116 = vst.msk [vmem:[%s103 + $0x108] sm:$0x1] %vm104, 0.0
    %117 = vst.msk [vmem:[%s103 + $0x120] sm:$0x1] %vm104, 0.0
    %118 = vst.msk [vmem:[%s103 + $0x138] sm:$0x1] %vm104, 0.0
    %119 = vst.msk [vmem:[%s103 + $0x150] sm:$0x1] %vm104, 0.0
    %120 = vst.msk [vmem:[%s103 + $0x168] sm:$0x1] %vm104, 0.0
    %121 = vst.msk [vmem:[%s103 + $0x1b0] sm:$0x1] %vm104, 0.0
    %122 = vst.msk [vmem:[%s103 + $0x1c8] sm:$0x1] %vm104, 0.0
    %123 = vst.msk [vmem:[%s103 + $0x1e0] sm:$0x1] %vm104, 0.0
    %124 = vst.msk [vmem:[%s103 + $0x1f8] sm:$0x1] %vm104, 0.0
    %125 = vst.msk [vmem:[%s103 + $0x210] sm:$0x1] %vm104, 0.0
    %126 = vst.msk [vmem:[%s103 + $0x228] sm:$0x1] %vm104, 0.0
    %127 = vst.msk [vmem:[%s103 + $0x240] sm:$0x1] %vm104, 0.0
    %128 = vst.msk [vmem:[%s103 + $0x258] sm:$0x1] %vm104, 0.0
    %129 = vst.msk [vmem:[%s103 + $0x270] sm:$0x1] %vm104, 0.0
    %130 = vst.msk [vmem:[%s103 + $0x288] sm:$0x1] %vm104, 0.0
    %131 = vst.msk [vmem:[%s103 + $0x2a0] sm:$0x1] %vm104, 0.0
    %132 = vst.msk [vmem:[%s103 + $0x2b8] sm:$0x1] %vm104, 0.0
    %133 = vst.msk [vmem:[%s103 + $0x2d0] sm:$0x1] %vm104, 0.0
    %134 = vst.msk [vmem:[%s103 + $0x2e8] sm:$0x1] %vm104, 0.0
    %135 = vst.msk [vmem:[%s103 + $0x300] sm:$0x1] %vm104, 0.0
    %136 = vst.msk [vmem:[%s103 + $0x318] sm:$0x1] %vm104, 0.0
    %137 = vst.msk [vmem:[%s103 + $0x11] sm:$0x1] %vm104, 0.0
    %138 = vst.msk [vmem:[%s103 + $0x29] sm:$0x1] %vm104, 0.0
    %139 = vst.msk [vmem:[%s103 + $0x41] sm:$0x1] %vm104, 0.0
    %140 = vst.msk [vmem:[%s103 + $0x59] sm:$0x1] %vm104, 0.0
    %141 = vst.msk [vmem:[%s103 + $0x71] sm:$0x1] %vm104, 0.0
    %142 = vst.msk [vmem:[%s103 + $0x89] sm:$0x1] %vm104, 0.0
    %143 = vst.msk [vmem:[%s103 + $0xa1] sm:$0x1] %vm104, 0.0
    %144 = vst.msk [vmem:[%s103 + $0xb9] sm:$0x1] %vm104, 0.0
    %145 = vst.msk [vmem:[%s103 + $0xd1] sm:$0x1] %vm104, 0.0
    %146 = vst.msk [vmem:[%s103 + $0xe9] sm:$0x1] %vm104, 0.0
    %147 = vst.msk [vmem:[%s103 + $0x101] sm:$0x1] %vm104, 0.0
    %148 = vst.msk [vmem:[%s103 + $0x119] sm:$0x1] %vm104, 0.0
    %149 = vst.msk [vmem:[%s103 + $0x131] sm:$0x1] %vm104, 0.0
    %150 = vst.msk [vmem:[%s103 + $0x149] sm:$0x1] %vm104, 0.0
    %151 = vst.msk [vmem:[%s103 + $0x161] sm:$0x1] %vm104, 0.0
    %152 = vst.msk [vmem:[%s103 + $0x179] sm:$0x1] %vm104, 0.0
    %153 = vst.msk [vmem:[%s103 + $0x1c1] sm:$0x1] %vm104, 0.0
    %154 = vst.msk [vmem:[%s103 + $0x1d9] sm:$0x1] %vm104, 0.0
    %155 = vst.msk [vmem:[%s103 + $0x1f1] sm:$0x1] %vm104, 0.0
    %156 = vst.msk [vmem:[%s103 + $0x209] sm:$0x1] %vm104, 0.0
    %157 = vst.msk [vmem:[%s103 + $0x221] sm:$0x1] %vm104, 0.0
    %158 = vst.msk [vmem:[%s103 + $0x239] sm:$0x1] %vm104, 0.0
    %159 = vst.msk [vmem:[%s103 + $0x251] sm:$0x1] %vm104, 0.0
    %160 = vst.msk [vmem:[%s103 + $0x269] sm:$0x1] %vm104, 0.0
    %161 = vst.msk [vmem:[%s103 + $0x281] sm:$0x1] %vm104, 0.0
    %162 = vst.msk [vmem:[%s103 + $0x299] sm:$0x1] %vm104, 0.0
    %163 = vst.msk [vmem:[%s103 + $0x2b1] sm:$0x1] %vm104, 0.0
    %164 = vst.msk [vmem:[%s103 + $0x2c9] sm:$0x1] %vm104, 0.0
    %165 = vst.msk [vmem:[%s103 + $0x2e1] sm:$0x1] %vm104, 0.0
    %166 = vst.msk [vmem:[%s103 + $0x2f9] sm:$0x1] %vm104, 0.0
    %167 = vst.msk [vmem:[%s103 + $0x311] sm:$0x1] %vm104, 0.0
    %168 = vst.msk [vmem:[%s103 + $0x329] sm:$0x1] %vm104, 0.0
    %169 = vst.msk [vmem:[%s103 + $0x1] sm:$0xff] %vm88, %v24
    %170 = vst.msk [vmem:[%s103 + $0x9] sm:$0xff] %vm88, %v25
    %171 = vst.msk [vmem:[%s103 + $0x19] sm:$0xff] %vm88, %v26
    %172 = vst.msk [vmem:[%s103 + $0x21] sm:$0xff] %vm88, %v27
    %173 = vst.msk [vmem:[%s103 + $0x31] sm:$0xff] %vm88, %v28
    %174 = vst.msk [vmem:[%s103 + $0x39] sm:$0xff] %vm88, %v29
    %175 = vst.msk [vmem:[%s103 + $0x49] sm:$0xff] %vm88, %v30
    %176 = vst.msk [vmem:[%s103 + $0x51] sm:$0xff] %vm88, %v31
    %177 = vst.msk [vmem:[%s103 + $0x61] sm:$0xff] %vm88, %v32
    %178 = vst.msk [vmem:[%s103 + $0x69] sm:$0xff] %vm88, %v33
    %179 = vst.msk [vmem:[%s103 + $0x79] sm:$0xff] %vm88, %v34
    %180 = vst.msk [vmem:[%s103 + $0x81] sm:$0xff] %vm88, %v35
    %181 = vst.msk [vmem:[%s103 + $0x91] sm:$0xff] %vm88, %v36
    %182 = vst.msk [vmem:[%s103 + $0x99] sm:$0xff] %vm88, %v37
    %183 = vst.msk [vmem:[%s103 + $0xa9] sm:$0xff] %vm88, %v38
    %184 = vst.msk [vmem:[%s103 + $0xb1] sm:$0xff] %vm88, %v39
    %185 = vst.msk [vmem:[%s103 + $0xc1] sm:$0xff] %vm88, %v40
    %186 = vst.msk [vmem:[%s103 + $0xc9] sm:$0xff] %vm88, %v41
    %187 = vst.msk [vmem:[%s103 + $0xd9] sm:$0xff] %vm88, %v42
    %188 = vst.msk [vmem:[%s103 + $0xe1] sm:$0xff] %vm88, %v43
    %189 = vst.msk [vmem:[%s103 + $0xf1] sm:$0xff] %vm88, %v44
    %190 = vst.msk [vmem:[%s103 + $0xf9] sm:$0xff] %vm88, %v45
    %191 = vst.msk [vmem:[%s103 + $0x109] sm:$0xff] %vm88, %v46
    %192 = vst.msk [vmem:[%s103 + $0x111] sm:$0xff] %vm88, %v47
    %193 = vst.msk [vmem:[%s103 + $0x121] sm:$0xff] %vm88, %v48
    %194 = vst.msk [vmem:[%s103 + $0x129] sm:$0xff] %vm88, %v49
    %195 = vst.msk [vmem:[%s103 + $0x139] sm:$0xff] %vm88, %v50
    %196 = vst.msk [vmem:[%s103 + $0x141] sm:$0xff] %vm88, %v51
    %197 = vst.msk [vmem:[%s103 + $0x151] sm:$0xff] %vm88, %v52
    %198 = vst.msk [vmem:[%s103 + $0x159] sm:$0xff] %vm88, %v53
    %199 = vst.msk [vmem:[%s103 + $0x169] sm:$0xff] %vm88, %v54
    %200 = vst.msk [vmem:[%s103 + $0x171] sm:$0xff] %vm88, %v55
    %201 = vst.msk [vmem:[%s103 + $0x1b1] sm:$0xff] %vm88, %v56
    %202 = vst.msk [vmem:[%s103 + $0x1b9] sm:$0xff] %vm88, %v57
    %203 = vst.msk [vmem:[%s103 + $0x1c9] sm:$0xff] %vm88, %v58
    %204 = vst.msk [vmem:[%s103 + $0x1d1] sm:$0xff] %vm88, %v59
    %205 = vst.msk [vmem:[%s103 + $0x1e1] sm:$0xff] %vm88, %v60
    %206 = vst.msk [vmem:[%s103 + $0x1e9] sm:$0xff] %vm88, %v61
    %207 = vst.msk [vmem:[%s103 + $0x1f9] sm:$0xff] %vm88, %v62
    %208 = vst.msk [vmem:[%s103 + $0x201] sm:$0xff] %vm88, %v63
    %209 = vst.msk [vmem:[%s103 + $0x211] sm:$0xff] %vm88, %v64
    %210 = vst.msk [vmem:[%s103 + $0x219] sm:$0xff] %vm88, %v65
    %211 = vst.msk [vmem:[%s103 + $0x229] sm:$0xff] %vm88, %v66
    %212 = vst.msk [vmem:[%s103 + $0x231] sm:$0xff] %vm88, %v67
    %213 = vst.msk [vmem:[%s103 + $0x241] sm:$0xff] %vm88, %v68
    %214 = vst.msk [vmem:[%s103 + $0x249] sm:$0xff] %vm88, %v69
    %215 = vst.msk [vmem:[%s103 + $0x259] sm:$0xff] %vm88, %v70
    %216 = vst.msk [vmem:[%s103 + $0x261] sm:$0xff] %vm88, %v71
    %217 = vst.msk [vmem:[%s103 + $0x271] sm:$0xff] %vm88, %v72
    %218 = vst.msk [vmem:[%s103 + $0x279] sm:$0xff] %vm88, %v73
    %219 = vst.msk [vmem:[%s103 + $0x289] sm:$0xff] %vm88, %v74
    %220 = vst.msk [vmem:[%s103 + $0x291] sm:$0xff] %vm88, %v75
    %221 = vst.msk [vmem:[%s103 + $0x2a1] sm:$0xff] %vm88, %v76
    %222 = vst.msk [vmem:[%s103 + $0x2a9] sm:$0xff] %vm88, %v77
    %223 = vst.msk [vmem:[%s103 + $0x2b9] sm:$0xff] %vm88, %v78
    %224 = vst.msk [vmem:[%s103 + $0x2c1] sm:$0xff] %vm88, %v79
    %225 = vst.msk [vmem:[%s103 + $0x2d1] sm:$0xff] %vm88, %v80
    %226 = vst.msk [vmem:[%s103 + $0x2d9] sm:$0xff] %vm88, %v81
    %227 = vst.msk [vmem:[%s103 + $0x2e9] sm:$0xff] %vm88, %v82
    %228 = vst.msk [vmem:[%s103 + $0x2f1] sm:$0xff] %vm88, %v83
    %229 = vst.msk [vmem:[%s103 + $0x301] sm:$0xff] %vm88, %v84
    %230 = vst.msk [vmem:[%s103 + $0x309] sm:$0xff] %vm88, %v85
    %231 = vst.msk [vmem:[%s103 + $0x319] sm:$0xff] %vm88, %v86
    %232 = vst.msk [vmem:[%s103 + $0x321] sm:$0xff] %vm88, %v87
    %v233 = vld [vmem:[#allocation2] sm:$0xff]
    %v234 = vld [vmem:[#allocation2 + $0x8] sm:$0xff]
    %v235 = vld [vmem:[#allocation2 + $0x10] sm:$0x3]
    %v236 = vld [vmem:[#allocation2 + $0x18] sm:$0xff]
    %v237 = vld [vmem:[#allocation2 + $0x20] sm:$0xff]
    %v238 = vld [vmem:[#allocation2 + $0x28] sm:$0x3]
    %v239 = vld [vmem:[#allocation2 + $0x30] sm:$0xff]
    %v240 = vld [vmem:[#allocation2 + $0x38] sm:$0xff]
    %v241 = vld [vmem:[#allocation2 + $0x40] sm:$0x3]
    %v242 = vld [vmem:[#allocation2 + $0x48] sm:$0xff]
    %v243 = vld [vmem:[#allocation2 + $0x50] sm:$0xff]
    %v244 = vld [vmem:[#allocation2 + $0x58] sm:$0x3]
    %v245 = vld [vmem:[#allocation2 + $0x60] sm:$0xff]
    %v246 = vld [vmem:[#allocation2 + $0x68] sm:$0xff]
    %v247 = vld [vmem:[#allocation2 + $0x70] sm:$0x3]
    %v248 = vld [vmem:[#allocation2 + $0x78] sm:$0xff]
    %v249 = vld [vmem:[#allocation2 + $0x80] sm:$0xff]
    %v250 = vld [vmem:[#allocation2 + $0x88] sm:$0x3]
    %v251 = vld [vmem:[#allocation2 + $0x90] sm:$0xff]
    %v252 = vld [vmem:[#allocation2 + $0x98] sm:$0xff]
    %v253 = vld [vmem:[#allocation2 + $0xa0] sm:$0x3]
    %v254 = vld [vmem:[#allocation2 + $0xa8] sm:$0xff]
    %v255 = vld [vmem:[#allocation2 + $0xb0] sm:$0xff]
    %v256 = vld [vmem:[#allocation2 + $0xb8] sm:$0x3]
    %v257 = vld [vmem:[#allocation2 + $0xc0] sm:$0xff]
    %v258 = vld [vmem:[#allocation2 + $0xc8] sm:$0xff]
    %v259 = vld [vmem:[#allocation2 + $0xd0] sm:$0x3]
    %v260 = vld [vmem:[#allocation2 + $0xd8] sm:$0xff]
    %v261 = vld [vmem:[#allocation2 + $0xe0] sm:$0xff]
    %v262 = vld [vmem:[#allocation2 + $0xe8] sm:$0x3]
    %v263 = vld [vmem:[#allocation2 + $0xf0] sm:$0xff]
    %v264 = vld [vmem:[#allocation2 + $0xf8] sm:$0xff]
    %v265 = vld [vmem:[#allocation2 + $0x100] sm:$0x3]
    %v266 = vld [vmem:[#allocation2 + $0x108] sm:$0xff]
    %v267 = vld [vmem:[#allocation2 + $0x110] sm:$0xff]
    %v268 = vld [vmem:[#allocation2 + $0x118] sm:$0x3]
    %v269 = vld [vmem:[#allocation2 + $0x120] sm:$0xff]
    %v270 = vld [vmem:[#allocation2 + $0x128] sm:$0xff]
    %v271 = vld [vmem:[#allocation2 + $0x130] sm:$0x3]
    %v272 = vld [vmem:[#allocation2 + $0x138] sm:$0xff]
    %v273 = vld [vmem:[#allocation2 + $0x140] sm:$0xff]
    %v274 = vld [vmem:[#allocation2 + $0x148] sm:$0x3]
    %v275 = vld [vmem:[#allocation2 + $0x150] sm:$0xff]
    %v276 = vld [vmem:[#allocation2 + $0x158] sm:$0xff]
    %v277 = vld [vmem:[#allocation2 + $0x160] sm:$0x3]
    %v278 = vld [vmem:[#allocation2 + $0x168] sm:$0xff]
    %v279 = vld [vmem:[#allocation2 + $0x170] sm:$0xff]
    %v280 = vld [vmem:[#allocation2 + $0x178] sm:$0x3]
    %v281 = vld [vmem:[#allocation2 + $0x180] sm:$0xff]
    %v282 = vld [vmem:[#allocation2 + $0x188] sm:$0xff]
    %v283 = vld [vmem:[#allocation2 + $0x190] sm:$0x3]
    %v284 = vld [vmem:[#allocation2 + $0x198] sm:$0xff]
    %v285 = vld [vmem:[#allocation2 + $0x1a0] sm:$0xff]
    %v286 = vld [vmem:[#allocation2 + $0x1a8] sm:$0x3]
    %v287 = vld [vmem:[#allocation2 + $0x1b0] sm:$0xff]
    %v288 = vld [vmem:[#allocation2 + $0x1b8] sm:$0xff]
    %v289 = vld [vmem:[#allocation2 + $0x1c0] sm:$0x3]
    %v290 = vld [vmem:[#allocation2 + $0x1c8] sm:$0xff]
    %v291 = vld [vmem:[#allocation2 + $0x1d0] sm:$0xff]
    %v292 = vld [vmem:[#allocation2 + $0x1d8] sm:$0x3]
    %v293 = vld [vmem:[#allocation2 + $0x1e0] sm:$0xff]
    %v294 = vld [vmem:[#allocation2 + $0x1e8] sm:$0xff]
    %v295 = vld [vmem:[#allocation2 + $0x1f0] sm:$0x3]
    %v296 = vld [vmem:[#allocation2 + $0x1f8] sm:$0xff]
    %v297 = vld [vmem:[#allocation2 + $0x200] sm:$0xff]
    %v298 = vld [vmem:[#allocation2 + $0x208] sm:$0x3]
    %v299 = vld [vmem:[#allocation2 + $0x210] sm:$0xff]
    %v300 = vld [vmem:[#allocation2 + $0x218] sm:$0xff]
    %v301 = vld [vmem:[#allocation2 + $0x220] sm:$0x3]
    %v302 = vld [vmem:[#allocation2 + $0x228] sm:$0xff]
    %v303 = vld [vmem:[#allocation2 + $0x230] sm:$0xff]
    %v304 = vld [vmem:[#allocation2 + $0x238] sm:$0x3]
    %v305 = vld [vmem:[#allocation2 + $0x240] sm:$0xff]
    %v306 = vld [vmem:[#allocation2 + $0x248] sm:$0xff]
    %v307 = vld [vmem:[#allocation2 + $0x250] sm:$0x3]
    %v308 = vld [vmem:[#allocation2 + $0x258] sm:$0xff]
    %v309 = vld [vmem:[#allocation2 + $0x260] sm:$0xff]
    %v310 = vld [vmem:[#allocation2 + $0x268] sm:$0x3]
    %v311 = vld [vmem:[#allocation2 + $0x270] sm:$0xff]
    %v312 = vld [vmem:[#allocation2 + $0x278] sm:$0xff]
    %v313 = vld [vmem:[#allocation2 + $0x280] sm:$0x3]
    %v314 = vld [vmem:[#allocation2 + $0x288] sm:$0xff]
    %v315 = vld [vmem:[#allocation2 + $0x290] sm:$0xff]
    %v316 = vld [vmem:[#allocation2 + $0x298] sm:$0x3]
    %v317 = vld [vmem:[#allocation2 + $0x2a0] sm:$0xff]
    %v318 = vld [vmem:[#allocation2 + $0x2a8] sm:$0xff]
    %v319 = vld [vmem:[#allocation2 + $0x2b0] sm:$0x3]
    %v320 = vld [vmem:[#allocation2 + $0x2b8] sm:$0xff]
    %v321 = vld [vmem:[#allocation2 + $0x2c0] sm:$0xff]
    %v322 = vld [vmem:[#allocation2 + $0x2c8] sm:$0x3]
    %v323 = vld [vmem:[#allocation2 + $0x2d0] sm:$0xff]
    %v324 = vld [vmem:[#allocation2 + $0x2d8] sm:$0xff]
    %v325 = vld [vmem:[#allocation2 + $0x2e0] sm:$0x3]
    %v326 = vld [vmem:[#allocation2 + $0x2e8] sm:$0xff]
    %v327 = vld [vmem:[#allocation2 + $0x2f0] sm:$0xff]
    %v328 = vld [vmem:[#allocation2 + $0x2f8] sm:$0x3]
    %v329 = vld [vmem:[#allocation2 + $0x300] sm:$0xff]
    %v330 = vld [vmem:[#allocation2 + $0x308] sm:$0xff]
    %v331 = vld [vmem:[#allocation2 + $0x310] sm:$0x3]
    %v332 = vld [vmem:[#allocation2 + $0x318] sm:$0xff]
    %v333 = vld [vmem:[#allocation2 + $0x320] sm:$0xff]
    %v334 = vld [vmem:[#allocation2 + $0x328] sm:$0x3]
    %v335 = vld [vmem:[#allocation2 + $0x330] sm:$0xff]
    %v336 = vld [vmem:[#allocation2 + $0x338] sm:$0xff]
    %v337 = vld [vmem:[#allocation2 + $0x340] sm:$0x3]
    %v338 = vld [vmem:[#allocation2 + $0x348] sm:$0xff]
    %v339 = vld [vmem:[#allocation2 + $0x350] sm:$0xff]
    %v340 = vld [vmem:[#allocation2 + $0x358] sm:$0x3]
    %vm437 = vcmask 1046528
    %v438 = vrot.slane %v233, 1
    %v439 = vrot.slane %v234, 1
    %v440 = vsel %vm437, %v438, %v439
    %v441 = vrot.slane %v235, 1
    %v442 = vsel %vm437, %v439, %v441
    %v443 = vrot.slane %v236, 1
    %v444 = vrot.slane %v237, 1
    %v445 = vsel %vm437, %v443, %v444
    %v446 = vrot.slane %v238, 1
    %v447 = vsel %vm437, %v444, %v446
    %v448 = vrot.slane %v239, 1
    %v449 = vrot.slane %v240, 1
    %v450 = vsel %vm437, %v448, %v449
    %v451 = vrot.slane %v241, 1
    %v452 = vsel %vm437, %v449, %v451
    %v453 = vrot.slane %v242, 1
    %v454 = vrot.slane %v243, 1
    %v455 = vsel %vm437, %v453, %v454
    %v456 = vrot.slane %v244, 1
    %v457 = vsel %vm437, %v454, %v456
    %v458 = vrot.slane %v245, 1
    %v459 = vrot.slane %v246, 1
    %v460 = vsel %vm437, %v458, %v459
    %v461 = vrot.slane %v247, 1
    %v462 = vsel %vm437, %v459, %v461
    %v463 = vrot.slane %v248, 1
    %v464 = vrot.slane %v249, 1
    %v465 = vsel %vm437, %v463, %v464
    %v466 = vrot.slane %v250, 1
    %v467 = vsel %vm437, %v464, %v466
    %v468 = vrot.slane %v251, 1
    %v469 = vrot.slane %v252, 1
    %v470 = vsel %vm437, %v468, %v469
    %v471 = vrot.slane %v253, 1
    %v472 = vsel %vm437, %v469, %v471
    %v473 = vrot.slane %v254, 1
    %v474 = vrot.slane %v255, 1
    %v475 = vsel %vm437, %v473, %v474
    %v476 = vrot.slane %v256, 1
    %v477 = vsel %vm437, %v474, %v476
    %v478 = vrot.slane %v257, 1
    %v479 = vrot.slane %v258, 1
    %v480 = vsel %vm437, %v478, %v479
    %v481 = vrot.slane %v259, 1
    %v482 = vsel %vm437, %v479, %v481
    %v483 = vrot.slane %v260, 1
    %v484 = vrot.slane %v261, 1
    %v485 = vsel %vm437, %v483, %v484
    %v486 = vrot.slane %v262, 1
    %v487 = vsel %vm437, %v484, %v486
    %v488 = vrot.slane %v263, 1
    %v489 = vrot.slane %v264, 1
    %v490 = vsel %vm437, %v488, %v489
    %v491 = vrot.slane %v265, 1
    %v492 = vsel %vm437, %v489, %v491
    %v493 = vrot.slane %v266, 1
    %v494 = vrot.slane %v267, 1
    %v495 = vsel %vm437, %v493, %v494
    %v496 = vrot.slane %v268, 1
    %v497 = vsel %vm437, %v494, %v496
    %v498 = vrot.slane %v269, 1
    %v499 = vrot.slane %v270, 1
    %v500 = vsel %vm437, %v498, %v499
    %v501 = vrot.slane %v271, 1
    %v502 = vsel %vm437, %v499, %v501
    %v503 = vrot.slane %v272, 1
    %v504 = vrot.slane %v273, 1
    %v505 = vsel %vm437, %v503, %v504
    %v506 = vrot.slane %v274, 1
    %v507 = vsel %vm437, %v504, %v506
    %v508 = vrot.slane %v275, 1
    %v509 = vrot.slane %v276, 1
    %v510 = vsel %vm437, %v508, %v509
    %v511 = vrot.slane %v277, 1
    %v512 = vsel %vm437, %v509, %v511
    %v513 = vrot.slane %v278, 1
    %v514 = vrot.slane %v279, 1
    %v515 = vsel %vm437, %v513, %v514
    %v516 = vrot.slane %v280, 1
    %v517 = vsel %vm437, %v514, %v516
    %v518 = vrot.slane %v287, 1
    %v519 = vrot.slane %v288, 1
    %v520 = vsel %vm437, %v518, %v519
    %v521 = vrot.slane %v289, 1
    %v522 = vsel %vm437, %v519, %v521
    %v523 = vrot.slane %v290, 1
    %v524 = vrot.slane %v291, 1
    %v525 = vsel %vm437, %v523, %v524
    %v526 = vrot.slane %v292, 1
    %v527 = vsel %vm437, %v524, %v526
    %v528 = vrot.slane %v293, 1
    %v529 = vrot.slane %v294, 1
    %v530 = vsel %vm437, %v528, %v529
    %v531 = vrot.slane %v295, 1
    %v532 = vsel %vm437, %v529, %v531
    %v533 = vrot.slane %v296, 1
    %v534 = vrot.slane %v297, 1
    %v535 = vsel %vm437, %v533, %v534
    %v536 = vrot.slane %v298, 1
    %v537 = vsel %vm437, %v534, %v536
    %v538 = vrot.slane %v299, 1
    %v539 = vrot.slane %v300, 1
    %v540 = vsel %vm437, %v538, %v539
    %v541 = vrot.slane %v301, 1
    %v542 = vsel %vm437, %v539, %v541
    %v543 = vrot.slane %v302, 1
    %v544 = vrot.slane %v303, 1
    %v545 = vsel %vm437, %v543, %v544
    %v546 = vrot.slane %v304, 1
    %v547 = vsel %vm437, %v544, %v546
    %v548 = vrot.slane %v305, 1
    %v549 = vrot.slane %v306, 1
    %v550 = vsel %vm437, %v548, %v549
    %v551 = vrot.slane %v307, 1
    %v552 = vsel %vm437, %v549, %v551
    %v553 = vrot.slane %v308, 1
    %v554 = vrot.slane %v309, 1
    %v555 = vsel %vm437, %v553, %v554
    %v556 = vrot.slane %v310, 1
    %v557 = vsel %vm437, %v554, %v556
    %v558 = vrot.slane %v311, 1
    %v559 = vrot.slane %v312, 1
    %v560 = vsel %vm437, %v558, %v559
    %v561 = vrot.slane %v313, 1
    %v562 = vsel %vm437, %v559, %v561
    %v563 = vrot.slane %v314, 1
    %v564 = vrot.slane %v315, 1
    %v565 = vsel %vm437, %v563, %v564
    %v566 = vrot.slane %v316, 1
    %v567 = vsel %vm437, %v564, %v566
    %v568 = vrot.slane %v317, 1
    %v569 = vrot.slane %v318, 1
    %v570 = vsel %vm437, %v568, %v569
    %v571 = vrot.slane %v319, 1
    %v572 = vsel %vm437, %v569, %v571
    %v573 = vrot.slane %v320, 1
    %v574 = vrot.slane %v321, 1
    %v575 = vsel %vm437, %v573, %v574
    %v576 = vrot.slane %v322, 1
    %v577 = vsel %vm437, %v574, %v576
    %v578 = vrot.slane %v323, 1
    %v579 = vrot.slane %v324, 1
    %v580 = vsel %vm437, %v578, %v579
    %v581 = vrot.slane %v325, 1
    %v582 = vsel %vm437, %v579, %v581
    %v583 = vrot.slane %v326, 1
    %v584 = vrot.slane %v327, 1
    %v585 = vsel %vm437, %v583, %v584
    %v586 = vrot.slane %v328, 1
    %v587 = vsel %vm437, %v584, %v586
    %v588 = vrot.slane %v329, 1
    %v589 = vrot.slane %v330, 1
    %v590 = vsel %vm437, %v588, %v589
    %v591 = vrot.slane %v331, 1
    %v592 = vsel %vm437, %v589, %v591
    %v593 = vrot.slane %v332, 1
    %v594 = vrot.slane %v333, 1
    %v595 = vsel %vm437, %v593, %v594
    %v596 = vrot.slane %v334, 1
    %v597 = vsel %vm437, %v594, %v596
    %598 = vrot.lane.b32.xlu0 %v440, 4
    %v599 = vpop.permute.xlu0 %598
    %600 = vrot.lane.b32.xlu0 %v442, 4
    %v601 = vpop.permute.xlu0 %600
    %602 = vrot.lane.b32.xlu0 %v445, 4
    %v603 = vpop.permute.xlu0 %602
    %604 = vrot.lane.b32.xlu0 %v447, 4
    %v605 = vpop.permute.xlu0 %604
    %606 = vrot.lane.b32.xlu0 %v450, 4
    %v607 = vpop.permute.xlu0 %606
    %608 = vrot.lane.b32.xlu0 %v452, 4
    %v609 = vpop.permute.xlu0 %608
    %610 = vrot.lane.b32.xlu0 %v455, 4
    %v611 = vpop.permute.xlu0 %610
    %612 = vrot.lane.b32.xlu0 %v457, 4
    %v613 = vpop.permute.xlu0 %612
    %614 = vrot.lane.b32.xlu0 %v460, 4
    %v615 = vpop.permute.xlu0 %614
    %616 = vrot.lane.b32.xlu0 %v462, 4
    %v617 = vpop.permute.xlu0 %616
    %618 = vrot.lane.b32.xlu0 %v465, 4
    %v619 = vpop.permute.xlu0 %618
    %620 = vrot.lane.b32.xlu0 %v467, 4
    %v621 = vpop.permute.xlu0 %620
    %622 = vrot.lane.b32.xlu0 %v470, 4
    %v623 = vpop.permute.xlu0 %622
    %624 = vrot.lane.b32.xlu0 %v472, 4
    %v625 = vpop.permute.xlu0 %624
    %626 = vrot.lane.b32.xlu0 %v475, 4
    %v627 = vpop.permute.xlu0 %626
    %628 = vrot.lane.b32.xlu0 %v477, 4
    %v629 = vpop.permute.xlu0 %628
    %630 = vrot.lane.b32.xlu0 %v480, 4
    %v631 = vpop.permute.xlu0 %630
    %632 = vrot.lane.b32.xlu0 %v482, 4
    %v633 = vpop.permute.xlu0 %632
    %634 = vrot.lane.b32.xlu0 %v485, 4
    %v635 = vpop.permute.xlu0 %634
    %636 = vrot.lane.b32.xlu0 %v487, 4
    %v637 = vpop.permute.xlu0 %636
    %638 = vrot.lane.b32.xlu0 %v490, 4
    %v639 = vpop.permute.xlu0 %638
    %640 = vrot.lane.b32.xlu0 %v492, 4
    %v641 = vpop.permute.xlu0 %640
    %642 = vrot.lane.b32.xlu0 %v495, 4
    %v643 = vpop.permute.xlu0 %642
    %644 = vrot.lane.b32.xlu0 %v497, 4
    %v645 = vpop.permute.xlu0 %644
    %646 = vrot.lane.b32.xlu0 %v500, 4
    %v647 = vpop.permute.xlu0 %646
    %648 = vrot.lane.b32.xlu0 %v502, 4
    %v649 = vpop.permute.xlu0 %648
    %650 = vrot.lane.b32.xlu0 %v505, 4
    %v651 = vpop.permute.xlu0 %650
    %652 = vrot.lane.b32.xlu0 %v507, 4
    %v653 = vpop.permute.xlu0 %652
    %654 = vrot.lane.b32.xlu0 %v510, 4
    %v655 = vpop.permute.xlu0 %654
    %656 = vrot.lane.b32.xlu0 %v512, 4
    %v657 = vpop.permute.xlu0 %656
    %658 = vrot.lane.b32.xlu0 %v515, 4
    %v659 = vpop.permute.xlu0 %658
    %660 = vrot.lane.b32.xlu0 %v517, 4
    %v661 = vpop.permute.xlu0 %660
    %662 = vrot.lane.b32.xlu0 %v520, 4
    %v663 = vpop.permute.xlu0 %662
    %664 = vrot.lane.b32.xlu0 %v522, 4
    %v665 = vpop.permute.xlu0 %664
    %666 = vrot.lane.b32.xlu0 %v525, 4
    %v667 = vpop.permute.xlu0 %666
    %668 = vrot.lane.b32.xlu0 %v527, 4
    %v669 = vpop.permute.xlu0 %668
    %670 = vrot.lane.b32.xlu0 %v530, 4
    %v671 = vpop.permute.xlu0 %670
    %672 = vrot.lane.b32.xlu0 %v532, 4
    %v673 = vpop.permute.xlu0 %672
    %674 = vrot.lane.b32.xlu0 %v535, 4
    %v675 = vpop.permute.xlu0 %674
    %676 = vrot.lane.b32.xlu0 %v537, 4
    %v677 = vpop.permute.xlu0 %676
    %678 = vrot.lane.b32.xlu0 %v540, 4
    %v679 = vpop.permute.xlu0 %678
    %680 = vrot.lane.b32.xlu0 %v542, 4
    %v681 = vpop.permute.xlu0 %680
    %682 = vrot.lane.b32.xlu0 %v545, 4
    %v683 = vpop.permute.xlu0 %682
    %684 = vrot.lane.b32.xlu0 %v547, 4
    %v685 = vpop.permute.xlu0 %684
    %686 = vrot.lane.b32.xlu0 %v550, 4
    %v687 = vpop.permute.xlu0 %686
    %688 = vrot.lane.b32.xlu0 %v552, 4
    %v689 = vpop.permute.xlu0 %688
    %690 = vrot.lane.b32.xlu0 %v555, 4
    %v691 = vpop.permute.xlu0 %690
    %692 = vrot.lane.b32.xlu0 %v557, 4
    %v693 = vpop.permute.xlu0 %692
    %694 = vrot.lane.b32.xlu0 %v560, 4
    %v695 = vpop.permute.xlu0 %694
    %696 = vrot.lane.b32.xlu0 %v562, 4
    %v697 = vpop.permute.xlu0 %696
    %698 = vrot.lane.b32.xlu0 %v565, 4
    %v699 = vpop.permute.xlu0 %698
    %700 = vrot.lane.b32.xlu0 %v567, 4
    %v701 = vpop.permute.xlu0 %700
    %702 = vrot.lane.b32.xlu0 %v570, 4
    %v703 = vpop.permute.xlu0 %702
    %704 = vrot.lane.b32.xlu0 %v572, 4
    %v705 = vpop.permute.xlu0 %704
    %706 = vrot.lane.b32.xlu0 %v575, 4
    %v707 = vpop.permute.xlu0 %706
    %708 = vrot.lane.b32.xlu0 %v577, 4
    %v709 = vpop.permute.xlu0 %708
    %710 = vrot.lane.b32.xlu0 %v580, 4
    %v711 = vpop.permute.xlu0 %710
    %712 = vrot.lane.b32.xlu0 %v582, 4
    %v713 = vpop.permute.xlu0 %712
    %714 = vrot.lane.b32.xlu0 %v585, 4
    %v715 = vpop.permute.xlu0 %714
    %716 = vrot.lane.b32.xlu0 %v587, 4
    %v717 = vpop.permute.xlu0 %716
    %718 = vrot.lane.b32.xlu0 %v590, 4
    %v719 = vpop.permute.xlu0 %718
    %720 = vrot.lane.b32.xlu0 %v592, 4
    %v721 = vpop.permute.xlu0 %720
    %722 = vrot.lane.b32.xlu0 %v595, 4
    %v723 = vpop.permute.xlu0 %722
    %724 = vrot.lane.b32.xlu0 %v597, 4
    %v725 = vpop.permute.xlu0 %724
    %vm790 = vcmask 1045504
    %v791 = vrot.slane %v233, 2
    %v792 = vrot.slane %v234, 2
    %v793 = vsel %vm790, %v791, %v792
    %v794 = vrot.slane %v235, 2
    %v795 = vsel %vm790, %v792, %v794
    %v796 = vrot.slane %v236, 2
    %v797 = vrot.slane %v237, 2
    %v798 = vsel %vm790, %v796, %v797
    %v799 = vrot.slane %v238, 2
    %v800 = vsel %vm790, %v797, %v799
    %v801 = vrot.slane %v239, 2
    %v802 = vrot.slane %v240, 2
    %v803 = vsel %vm790, %v801, %v802
    %v804 = vrot.slane %v241, 2
    %v805 = vsel %vm790, %v802, %v804
    %v806 = vrot.slane %v242, 2
    %v807 = vrot.slane %v243, 2
    %v808 = vsel %vm790, %v806, %v807
    %v809 = vrot.slane %v244, 2
    %v810 = vsel %vm790, %v807, %v809
    %v811 = vrot.slane %v245, 2
    %v812 = vrot.slane %v246, 2
    %v813 = vsel %vm790, %v811, %v812
    %v814 = vrot.slane %v247, 2
    %v815 = vsel %vm790, %v812, %v814
    %v816 = vrot.slane %v248, 2
    %v817 = vrot.slane %v249, 2
    %v818 = vsel %vm790, %v816, %v817
    %v819 = vrot.slane %v250, 2
    %v820 = vsel %vm790, %v817, %v819
    %v821 = vrot.slane %v251, 2
    %v822 = vrot.slane %v252, 2
    %v823 = vsel %vm790, %v821, %v822
    %v824 = vrot.slane %v253, 2
    %v825 = vsel %vm790, %v822, %v824
    %v826 = vrot.slane %v254, 2
    %v827 = vrot.slane %v255, 2
    %v828 = vsel %vm790, %v826, %v827
    %v829 = vrot.slane %v256, 2
    %v830 = vsel %vm790, %v827, %v829
    %v831 = vrot.slane %v257, 2
    %v832 = vrot.slane %v258, 2
    %v833 = vsel %vm790, %v831, %v832
    %v834 = vrot.slane %v259, 2
    %v835 = vsel %vm790, %v832, %v834
    %v836 = vrot.slane %v260, 2
    %v837 = vrot.slane %v261, 2
    %v838 = vsel %vm790, %v836, %v837
    %v839 = vrot.slane %v262, 2
    %v840 = vsel %vm790, %v837, %v839
    %v841 = vrot.slane %v263, 2
    %v842 = vrot.slane %v264, 2
    %v843 = vsel %vm790, %v841, %v842
    %v844 = vrot.slane %v265, 2
    %v845 = vsel %vm790, %v842, %v844
    %v846 = vrot.slane %v266, 2
    %v847 = vrot.slane %v267, 2
    %v848 = vsel %vm790, %v846, %v847
    %v849 = vrot.slane %v268, 2
    %v850 = vsel %vm790, %v847, %v849
    %v851 = vrot.slane %v269, 2
    %v852 = vrot.slane %v270, 2
    %v853 = vsel %vm790, %v851, %v852
    %v854 = vrot.slane %v271, 2
    %v855 = vsel %vm790, %v852, %v854
    %v856 = vrot.slane %v272, 2
    %v857 = vrot.slane %v273, 2
    %v858 = vsel %vm790, %v856, %v857
    %v859 = vrot.slane %v274, 2
    %v860 = vsel %vm790, %v857, %v859
    %v861 = vrot.slane %v275, 2
    %v862 = vrot.slane %v276, 2
    %v863 = vsel %vm790, %v861, %v862
    %v864 = vrot.slane %v277, 2
    %v865 = vsel %vm790, %v862, %v864
    %v866 = vrot.slane %v278, 2
    %v867 = vrot.slane %v279, 2
    %v868 = vsel %vm790, %v866, %v867
    %v869 = vrot.slane %v280, 2
    %v870 = vsel %vm790, %v867, %v869
    %v871 = vrot.slane %v287, 2
    %v872 = vrot.slane %v288, 2
    %v873 = vsel %vm790, %v871, %v872
    %v874 = vrot.slane %v289, 2
    %v875 = vsel %vm790, %v872, %v874
    %v876 = vrot.slane %v290, 2
    %v877 = vrot.slane %v291, 2
    %v878 = vsel %vm790, %v876, %v877
    %v879 = vrot.slane %v292, 2
    %v880 = vsel %vm790, %v877, %v879
    %v881 = vrot.slane %v293, 2
    %v882 = vrot.slane %v294, 2
    %v883 = vsel %vm790, %v881, %v882
    %v884 = vrot.slane %v295, 2
    %v885 = vsel %vm790, %v882, %v884
    %v886 = vrot.slane %v296, 2
    %v887 = vrot.slane %v297, 2
    %v888 = vsel %vm790, %v886, %v887
    %v889 = vrot.slane %v298, 2
    %v890 = vsel %vm790, %v887, %v889
    %v891 = vrot.slane %v299, 2
    %v892 = vrot.slane %v300, 2
    %v893 = vsel %vm790, %v891, %v892
    %v894 = vrot.slane %v301, 2
    %v895 = vsel %vm790, %v892, %v894
    %v896 = vrot.slane %v302, 2
    %v897 = vrot.slane %v303, 2
    %v898 = vsel %vm790, %v896, %v897
    %v899 = vrot.slane %v304, 2
    %v900 = vsel %vm790, %v897, %v899
    %v901 = vrot.slane %v305, 2
    %v902 = vrot.slane %v306, 2
    %v903 = vsel %vm790, %v901, %v902
    %v904 = vrot.slane %v307, 2
    %v905 = vsel %vm790, %v902, %v904
    %v906 = vrot.slane %v308, 2
    %v907 = vrot.slane %v309, 2
    %v908 = vsel %vm790, %v906, %v907
    %v909 = vrot.slane %v310, 2
    %v910 = vsel %vm790, %v907, %v909
    %v911 = vrot.slane %v311, 2
    %v912 = vrot.slane %v312, 2
    %v913 = vsel %vm790, %v911, %v912
    %v914 = vrot.slane %v313, 2
    %v915 = vsel %vm790, %v912, %v914
    %v916 = vrot.slane %v314, 2
    %v917 = vrot.slane %v315, 2
    %v918 = vsel %vm790, %v916, %v917
    %v919 = vrot.slane %v316, 2
    %v920 = vsel %vm790, %v917, %v919
    %v921 = vrot.slane %v317, 2
    %v922 = vrot.slane %v318, 2
    %v923 = vsel %vm790, %v921, %v922
    %v924 = vrot.slane %v319, 2
    %v925 = vsel %vm790, %v922, %v924
    %v926 = vrot.slane %v320, 2
    %v927 = vrot.slane %v321, 2
    %v928 = vsel %vm790, %v926, %v927
    %v929 = vrot.slane %v322, 2
    %v930 = vsel %vm790, %v927, %v929
    %v931 = vrot.slane %v323, 2
    %v932 = vrot.slane %v324, 2
    %v933 = vsel %vm790, %v931, %v932
    %v934 = vrot.slane %v325, 2
    %v935 = vsel %vm790, %v932, %v934
    %v936 = vrot.slane %v326, 2
    %v937 = vrot.slane %v327, 2
    %v938 = vsel %vm790, %v936, %v937
    %v939 = vrot.slane %v328, 2
    %v940 = vsel %vm790, %v937, %v939
    %v941 = vrot.slane %v329, 2
    %v942 = vrot.slane %v330, 2
    %v943 = vsel %vm790, %v941, %v942
    %v944 = vrot.slane %v331, 2
    %v945 = vsel %vm790, %v942, %v944
    %v946 = vrot.slane %v332, 2
    %v947 = vrot.slane %v333, 2
    %v948 = vsel %vm790, %v946, %v947
    %v949 = vrot.slane %v334, 2
    %v950 = vsel %vm790, %v947, %v949
    %951 = vrot.lane.b32.xlu0 %v793, 8
    %v952 = vpop.permute.xlu0 %951
    %953 = vrot.lane.b32.xlu0 %v795, 8
    %v954 = vpop.permute.xlu0 %953
    %955 = vrot.lane.b32.xlu0 %v798, 8
    %v956 = vpop.permute.xlu0 %955
    %957 = vrot.lane.b32.xlu0 %v800, 8
    %v958 = vpop.permute.xlu0 %957
    %959 = vrot.lane.b32.xlu0 %v803, 8
    %v960 = vpop.permute.xlu0 %959
    %961 = vrot.lane.b32.xlu0 %v805, 8
    %v962 = vpop.permute.xlu0 %961
    %963 = vrot.lane.b32.xlu0 %v808, 8
    %v964 = vpop.permute.xlu0 %963
    %965 = vrot.lane.b32.xlu0 %v810, 8
    %v966 = vpop.permute.xlu0 %965
    %967 = vrot.lane.b32.xlu0 %v813, 8
    %v968 = vpop.permute.xlu0 %967
    %969 = vrot.lane.b32.xlu0 %v815, 8
    %v970 = vpop.permute.xlu0 %969
    %971 = vrot.lane.b32.xlu0 %v818, 8
    %v972 = vpop.permute.xlu0 %971
    %973 = vrot.lane.b32.xlu0 %v820, 8
    %v974 = vpop.permute.xlu0 %973
    %975 = vrot.lane.b32.xlu0 %v823, 8
    %v976 = vpop.permute.xlu0 %975
    %977 = vrot.lane.b32.xlu0 %v825, 8
    %v978 = vpop.permute.xlu0 %977
    %979 = vrot.lane.b32.xlu0 %v828, 8
    %v980 = vpop.permute.xlu0 %979
    %981 = vrot.lane.b32.xlu0 %v830, 8
    %v982 = vpop.permute.xlu0 %981
    %983 = vrot.lane.b32.xlu0 %v833, 8
    %v984 = vpop.permute.xlu0 %983
    %985 = vrot.lane.b32.xlu0 %v835, 8
    %v986 = vpop.permute.xlu0 %985
    %987 = vrot.lane.b32.xlu0 %v838, 8
    %v988 = vpop.permute.xlu0 %987
    %989 = vrot.lane.b32.xlu0 %v840, 8
    %v990 = vpop.permute.xlu0 %989
    %991 = vrot.lane.b32.xlu0 %v843, 8
    %v992 = vpop.permute.xlu0 %991
    %993 = vrot.lane.b32.xlu0 %v845, 8
    %v994 = vpop.permute.xlu0 %993
    %995 = vrot.lane.b32.xlu0 %v848, 8
    %v996 = vpop.permute.xlu0 %995
    %997 = vrot.lane.b32.xlu0 %v850, 8
    %v998 = vpop.permute.xlu0 %997
    %999 = vrot.lane.b32.xlu0 %v853, 8
    %v1000 = vpop.permute.xlu0 %999
    %1001 = vrot.lane.b32.xlu0 %v855, 8
    %v1002 = vpop.permute.xlu0 %1001
    %1003 = vrot.lane.b32.xlu0 %v858, 8
    %v1004 = vpop.permute.xlu0 %1003
    %1005 = vrot.lane.b32.xlu0 %v860, 8
    %v1006 = vpop.permute.xlu0 %1005
    %1007 = vrot.lane.b32.xlu0 %v863, 8
    %v1008 = vpop.permute.xlu0 %1007
    %1009 = vrot.lane.b32.xlu0 %v865, 8
    %v1010 = vpop.permute.xlu0 %1009
    %1011 = vrot.lane.b32.xlu0 %v868, 8
    %v1012 = vpop.permute.xlu0 %1011
    %1013 = vrot.lane.b32.xlu0 %v870, 8
    %v1014 = vpop.permute.xlu0 %1013
    %1015 = vrot.lane.b32.xlu0 %v873, 8
    %v1016 = vpop.permute.xlu0 %1015
    %1017 = vrot.lane.b32.xlu0 %v875, 8
    %v1018 = vpop.permute.xlu0 %1017
    %1019 = vrot.lane.b32.xlu0 %v878, 8
    %v1020 = vpop.permute.xlu0 %1019
    %1021 = vrot.lane.b32.xlu0 %v880, 8
    %v1022 = vpop.permute.xlu0 %1021
    %1023 = vrot.lane.b32.xlu0 %v883, 8
    %v1024 = vpop.permute.xlu0 %1023
    %1025 = vrot.lane.b32.xlu0 %v885, 8
    %v1026 = vpop.permute.xlu0 %1025
    %1027 = vrot.lane.b32.xlu0 %v888, 8
    %v1028 = vpop.permute.xlu0 %1027
    %1029 = vrot.lane.b32.xlu0 %v890, 8
    %v1030 = vpop.permute.xlu0 %1029
    %1031 = vrot.lane.b32.xlu0 %v893, 8
    %v1032 = vpop.permute.xlu0 %1031
    %1033 = vrot.lane.b32.xlu0 %v895, 8
    %v1034 = vpop.permute.xlu0 %1033
    %1035 = vrot.lane.b32.xlu0 %v898, 8
    %v1036 = vpop.permute.xlu0 %1035
    %1037 = vrot.lane.b32.xlu0 %v900, 8
    %v1038 = vpop.permute.xlu0 %1037
    %1039 = vrot.lane.b32.xlu0 %v903, 8
    %v1040 = vpop.permute.xlu0 %1039
    %1041 = vrot.lane.b32.xlu0 %v905, 8
    %v1042 = vpop.permute.xlu0 %1041
    %1043 = vrot.lane.b32.xlu0 %v908, 8
    %v1044 = vpop.permute.xlu0 %1043
    %1045 = vrot.lane.b32.xlu0 %v910, 8
    %v1046 = vpop.permute.xlu0 %1045
    %1047 = vrot.lane.b32.xlu0 %v913, 8
    %v1048 = vpop.permute.xlu0 %1047
    %1049 = vrot.lane.b32.xlu0 %v915, 8
    %v1050 = vpop.permute.xlu0 %1049
    %1051 = vrot.lane.b32.xlu0 %v918, 8
    %v1052 = vpop.permute.xlu0 %1051
    %1053 = vrot.lane.b32.xlu0 %v920, 8
    %v1054 = vpop.permute.xlu0 %1053
    %1055 = vrot.lane.b32.xlu0 %v923, 8
    %v1056 = vpop.permute.xlu0 %1055
    %1057 = vrot.lane.b32.xlu0 %v925, 8
    %v1058 = vpop.permute.xlu0 %1057
    %1059 = vrot.lane.b32.xlu0 %v928, 8
    %v1060 = vpop.permute.xlu0 %1059
    %1061 = vrot.lane.b32.xlu0 %v930, 8
    %v1062 = vpop.permute.xlu0 %1061
    %1063 = vrot.lane.b32.xlu0 %v933, 8
    %v1064 = vpop.permute.xlu0 %1063
    %1065 = vrot.lane.b32.xlu0 %v935, 8
    %v1066 = vpop.permute.xlu0 %1065
    %1067 = vrot.lane.b32.xlu0 %v938, 8
    %v1068 = vpop.permute.xlu0 %1067
    %1069 = vrot.lane.b32.xlu0 %v940, 8
    %v1070 = vpop.permute.xlu0 %1069
    %1071 = vrot.lane.b32.xlu0 %v943, 8
    %v1072 = vpop.permute.xlu0 %1071
    %1073 = vrot.lane.b32.xlu0 %v945, 8
    %v1074 = vpop.permute.xlu0 %1073
    %1075 = vrot.lane.b32.xlu0 %v948, 8
    %v1076 = vpop.permute.xlu0 %1075
    %1077 = vrot.lane.b32.xlu0 %v950, 8
    %v1078 = vpop.permute.xlu0 %1077
    %1147 = vrot.lane.b32.xlu0 %v236, 12
    %v1148 = vpop.permute.xlu0 %1147
    %1149 = vrot.lane.b32.xlu0 %v237, 12
    %v1150 = vpop.permute.xlu0 %1149
    %1151 = vrot.lane.b32.xlu0 %v239, 12
    %v1152 = vpop.permute.xlu0 %1151
    %1153 = vrot.lane.b32.xlu0 %v240, 12
    %v1154 = vpop.permute.xlu0 %1153
    %1155 = vrot.lane.b32.xlu0 %v242, 12
    %v1156 = vpop.permute.xlu0 %1155
    %1157 = vrot.lane.b32.xlu0 %v243, 12
    %v1158 = vpop.permute.xlu0 %1157
    %1159 = vrot.lane.b32.xlu0 %v245, 12
    %v1160 = vpop.permute.xlu0 %1159
    %1161 = vrot.lane.b32.xlu0 %v246, 12
    %v1162 = vpop.permute.xlu0 %1161
    %1163 = vrot.lane.b32.xlu0 %v248, 12
    %v1164 = vpop.permute.xlu0 %1163
    %1165 = vrot.lane.b32.xlu0 %v249, 12
    %v1166 = vpop.permute.xlu0 %1165
    %1167 = vrot.lane.b32.xlu0 %v251, 12
    %v1168 = vpop.permute.xlu0 %1167
    %1169 = vrot.lane.b32.xlu0 %v252, 12
    %v1170 = vpop.permute.xlu0 %1169
    %1171 = vrot.lane.b32.xlu0 %v254, 12
    %v1172 = vpop.permute.xlu0 %1171
    %1173 = vrot.lane.b32.xlu0 %v255, 12
    %v1174 = vpop.permute.xlu0 %1173
    %1175 = vrot.lane.b32.xlu0 %v257, 12
    %v1176 = vpop.permute.xlu0 %1175
    %1177 = vrot.lane.b32.xlu0 %v258, 12
    %v1178 = vpop.permute.xlu0 %1177
    %1179 = vrot.lane.b32.xlu0 %v260, 12
    %v1180 = vpop.permute.xlu0 %1179
    %1181 = vrot.lane.b32.xlu0 %v261, 12
    %v1182 = vpop.permute.xlu0 %1181
    %1183 = vrot.lane.b32.xlu0 %v263, 12
    %v1184 = vpop.permute.xlu0 %1183
    %1185 = vrot.lane.b32.xlu0 %v264, 12
    %v1186 = vpop.permute.xlu0 %1185
    %1187 = vrot.lane.b32.xlu0 %v266, 12
    %v1188 = vpop.permute.xlu0 %1187
    %1189 = vrot.lane.b32.xlu0 %v267, 12
    %v1190 = vpop.permute.xlu0 %1189
    %1191 = vrot.lane.b32.xlu0 %v269, 12
    %v1192 = vpop.permute.xlu0 %1191
    %1193 = vrot.lane.b32.xlu0 %v270, 12
    %v1194 = vpop.permute.xlu0 %1193
    %1195 = vrot.lane.b32.xlu0 %v272, 12
    %v1196 = vpop.permute.xlu0 %1195
    %1197 = vrot.lane.b32.xlu0 %v273, 12
    %v1198 = vpop.permute.xlu0 %1197
    %1199 = vrot.lane.b32.xlu0 %v275, 12
    %v1200 = vpop.permute.xlu0 %1199
    %1201 = vrot.lane.b32.xlu0 %v276, 12
    %v1202 = vpop.permute.xlu0 %1201
    %1203 = vrot.lane.b32.xlu0 %v278, 12
    %v1204 = vpop.permute.xlu0 %1203
    %1205 = vrot.lane.b32.xlu0 %v279, 12
    %v1206 = vpop.permute.xlu0 %1205
    %1207 = vrot.lane.b32.xlu0 %v281, 12
    %v1208 = vpop.permute.xlu0 %1207
    %1209 = vrot.lane.b32.xlu0 %v282, 12
    %v1210 = vpop.permute.xlu0 %1209
    %1211 = vrot.lane.b32.xlu0 %v290, 12
    %v1212 = vpop.permute.xlu0 %1211
    %1213 = vrot.lane.b32.xlu0 %v291, 12
    %v1214 = vpop.permute.xlu0 %1213
    %1215 = vrot.lane.b32.xlu0 %v293, 12
    %v1216 = vpop.permute.xlu0 %1215
    %1217 = vrot.lane.b32.xlu0 %v294, 12
    %v1218 = vpop.permute.xlu0 %1217
    %1219 = vrot.lane.b32.xlu0 %v296, 12
    %v1220 = vpop.permute.xlu0 %1219
    %1221 = vrot.lane.b32.xlu0 %v297, 12
    %v1222 = vpop.permute.xlu0 %1221
    %1223 = vrot.lane.b32.xlu0 %v299, 12
    %v1224 = vpop.permute.xlu0 %1223
    %1225 = vrot.lane.b32.xlu0 %v300, 12
    %v1226 = vpop.permute.xlu0 %1225
    %1227 = vrot.lane.b32.xlu0 %v302, 12
    %v1228 = vpop.permute.xlu0 %1227
    %1229 = vrot.lane.b32.xlu0 %v303, 12
    %v1230 = vpop.permute.xlu0 %1229
    %1231 = vrot.lane.b32.xlu0 %v305, 12
    %v1232 = vpop.permute.xlu0 %1231
    %1233 = vrot.lane.b32.xlu0 %v306, 12
    %v1234 = vpop.permute.xlu0 %1233
    %1235 = vrot.lane.b32.xlu0 %v308, 12
    %v1236 = vpop.permute.xlu0 %1235
    %1237 = vrot.lane.b32.xlu0 %v309, 12
    %v1238 = vpop.permute.xlu0 %1237
    %1239 = vrot.lane.b32.xlu0 %v311, 12
    %v1240 = vpop.permute.xlu0 %1239
    %1241 = vrot.lane.b32.xlu0 %v312, 12
    %v1242 = vpop.permute.xlu0 %1241
    %1243 = vrot.lane.b32.xlu0 %v314, 12
    %v1244 = vpop.permute.xlu0 %1243
    %1245 = vrot.lane.b32.xlu0 %v315, 12
    %v1246 = vpop.permute.xlu0 %1245
    %1247 = vrot.lane.b32.xlu0 %v317, 12
    %v1248 = vpop.permute.xlu0 %1247
    %1249 = vrot.lane.b32.xlu0 %v318, 12
    %v1250 = vpop.permute.xlu0 %1249
    %1251 = vrot.lane.b32.xlu0 %v320, 12
    %v1252 = vpop.permute.xlu0 %1251
    %1253 = vrot.lane.b32.xlu0 %v321, 12
    %v1254 = vpop.permute.xlu0 %1253
    %1255 = vrot.lane.b32.xlu0 %v323, 12
    %v1256 = vpop.permute.xlu0 %1255
    %1257 = vrot.lane.b32.xlu0 %v324, 12
    %v1258 = vpop.permute.xlu0 %1257
    %1259 = vrot.lane.b32.xlu0 %v326, 12
    %v1260 = vpop.permute.xlu0 %1259
    %1261 = vrot.lane.b32.xlu0 %v327, 12
    %v1262 = vpop.permute.xlu0 %1261
    %1263 = vrot.lane.b32.xlu0 %v329, 12
    %v1264 = vpop.permute.xlu0 %1263
    %1265 = vrot.lane.b32.xlu0 %v330, 12
    %v1266 = vpop.permute.xlu0 %1265
    %1267 = vrot.lane.b32.xlu0 %v332, 12
    %v1268 = vpop.permute.xlu0 %1267
    %1269 = vrot.lane.b32.xlu0 %v333, 12
    %v1270 = vpop.permute.xlu0 %1269
    %1271 = vrot.lane.b32.xlu0 %v335, 12
    %v1272 = vpop.permute.xlu0 %1271
    %1273 = vrot.lane.b32.xlu0 %v336, 12
    %v1274 = vpop.permute.xlu0 %1273
    %v1341 = vrot.slane %v281, 1
    %v1342 = vrot.slane %v282, 1
    %v1343 = vsel %vm437, %v1341, %v1342
    %v1344 = vrot.slane %v283, 1
    %v1345 = vsel %vm437, %v1342, %v1344
    %v1346 = vrot.slane %v335, 1
    %v1347 = vrot.slane %v336, 1
    %v1348 = vsel %vm437, %v1346, %v1347
    %v1349 = vrot.slane %v337, 1
    %v1350 = vsel %vm437, %v1347, %v1349
    %1351 = vrot.lane.b32.xlu0 %v445, 16
    %v1352 = vpop.permute.xlu0 %1351
    %1353 = vrot.lane.b32.xlu0 %v447, 16
    %v1354 = vpop.permute.xlu0 %1353
    %1355 = vrot.lane.b32.xlu0 %v450, 16
    %v1356 = vpop.permute.xlu0 %1355
    %1357 = vrot.lane.b32.xlu0 %v452, 16
    %v1358 = vpop.permute.xlu0 %1357
    %1359 = vrot.lane.b32.xlu0 %v455, 16
    %v1360 = vpop.permute.xlu0 %1359
    %1361 = vrot.lane.b32.xlu0 %v457, 16
    %v1362 = vpop.permute.xlu0 %1361
    %1363 = vrot.lane.b32.xlu0 %v460, 16
    %v1364 = vpop.permute.xlu0 %1363
    %1365 = vrot.lane.b32.xlu0 %v462, 16
    %v1366 = vpop.permute.xlu0 %1365
    %1367 = vrot.lane.b32.xlu0 %v465, 16
    %v1368 = vpop.permute.xlu0 %1367
    %1369 = vrot.lane.b32.xlu0 %v467, 16
    %v1370 = vpop.permute.xlu0 %1369
    %1371 = vrot.lane.b32.xlu0 %v470, 16
    %v1372 = vpop.permute.xlu0 %1371
    %1373 = vrot.lane.b32.xlu0 %v472, 16
    %v1374 = vpop.permute.xlu0 %1373
    %1375 = vrot.lane.b32.xlu0 %v475, 16
    %v1376 = vpop.permute.xlu0 %1375
    %1377 = vrot.lane.b32.xlu0 %v477, 16
    %v1378 = vpop.permute.xlu0 %1377
    %1379 = vrot.lane.b32.xlu0 %v480, 16
    %v1380 = vpop.permute.xlu0 %1379
    %1381 = vrot.lane.b32.xlu0 %v482, 16
    %v1382 = vpop.permute.xlu0 %1381
    %1383 = vrot.lane.b32.xlu0 %v485, 16
    %v1384 = vpop.permute.xlu0 %1383
    %1385 = vrot.lane.b32.xlu0 %v487, 16
    %v1386 = vpop.permute.xlu0 %1385
    %1387 = vrot.lane.b32.xlu0 %v490, 16
    %v1388 = vpop.permute.xlu0 %1387
    %1389 = vrot.lane.b32.xlu0 %v492, 16
    %v1390 = vpop.permute.xlu0 %1389
    %1391 = vrot.lane.b32.xlu0 %v495, 16
    %v1392 = vpop.permute.xlu0 %1391
    %1393 = vrot.lane.b32.xlu0 %v497, 16
    %v1394 = vpop.permute.xlu0 %1393
    %1395 = vrot.lane.b32.xlu0 %v500, 16
    %v1396 = vpop.permute.xlu0 %1395
    %1397 = vrot.lane.b32.xlu0 %v502, 16
    %v1398 = vpop.permute.xlu0 %1397
    %1399 = vrot.lane.b32.xlu0 %v505, 16
    %v1400 = vpop.permute.xlu0 %1399
    %1401 = vrot.lane.b32.xlu0 %v507, 16
    %v1402 = vpop.permute.xlu0 %1401
    %1403 = vrot.lane.b32.xlu0 %v510, 16
    %v1404 = vpop.permute.xlu0 %1403
    %1405 = vrot.lane.b32.xlu0 %v512, 16
    %v1406 = vpop.permute.xlu0 %1405
    %1407 = vrot.lane.b32.xlu0 %v515, 16
    %v1408 = vpop.permute.xlu0 %1407
    %1409 = vrot.lane.b32.xlu0 %v517, 16
    %v1410 = vpop.permute.xlu0 %1409
    %1411 = vrot.lane.b32.xlu0 %v1343, 16
    %v1412 = vpop.permute.xlu0 %1411
    %1413 = vrot.lane.b32.xlu0 %v1345, 16
    %v1414 = vpop.permute.xlu0 %1413
    %1415 = vrot.lane.b32.xlu0 %v525, 16
    %v1416 = vpop.permute.xlu0 %1415
    %1417 = vrot.lane.b32.xlu0 %v527, 16
    %v1418 = vpop.permute.xlu0 %1417
    %1419 = vrot.lane.b32.xlu0 %v530, 16
    %v1420 = vpop.permute.xlu0 %1419
    %1421 = vrot.lane.b32.xlu0 %v532, 16
    %v1422 = vpop.permute.xlu0 %1421
    %1423 = vrot.lane.b32.xlu0 %v535, 16
    %v1424 = vpop.permute.xlu0 %1423
    %1425 = vrot.lane.b32.xlu0 %v537, 16
    %v1426 = vpop.permute.xlu0 %1425
    %1427 = vrot.lane.b32.xlu0 %v540, 16
    %v1428 = vpop.permute.xlu0 %1427
    %1429 = vrot.lane.b32.xlu0 %v542, 16
    %v1430 = vpop.permute.xlu0 %1429
    %1431 = vrot.lane.b32.xlu0 %v545, 16
    %v1432 = vpop.permute.xlu0 %1431
    %1433 = vrot.lane.b32.xlu0 %v547, 16
    %v1434 = vpop.permute.xlu0 %1433
    %1435 = vrot.lane.b32.xlu0 %v550, 16
    %v1436 = vpop.permute.xlu0 %1435
    %1437 = vrot.lane.b32.xlu0 %v552, 16
    %v1438 = vpop.permute.xlu0 %1437
    %1439 = vrot.lane.b32.xlu0 %v555, 16
    %v1440 = vpop.permute.xlu0 %1439
    %1441 = vrot.lane.b32.xlu0 %v557, 16
    %v1442 = vpop.permute.xlu0 %1441
    %1443 = vrot.lane.b32.xlu0 %v560, 16
    %v1444 = vpop.permute.xlu0 %1443
    %1445 = vrot.lane.b32.xlu0 %v562, 16
    %v1446 = vpop.permute.xlu0 %1445
    %1447 = vrot.lane.b32.xlu0 %v565, 16
    %v1448 = vpop.permute.xlu0 %1447
    %1449 = vrot.lane.b32.xlu0 %v567, 16
    %v1450 = vpop.permute.xlu0 %1449
    %1451 = vrot.lane.b32.xlu0 %v570, 16
    %v1452 = vpop.permute.xlu0 %1451
    %1453 = vrot.lane.b32.xlu0 %v572, 16
    %v1454 = vpop.permute.xlu0 %1453
    %1455 = vrot.lane.b32.xlu0 %v575, 16
    %v1456 = vpop.permute.xlu0 %1455
    %1457 = vrot.lane.b32.xlu0 %v577, 16
    %v1458 = vpop.permute.xlu0 %1457
    %1459 = vrot.lane.b32.xlu0 %v580, 16
    %v1460 = vpop.permute.xlu0 %1459
    %1461 = vrot.lane.b32.xlu0 %v582, 16
    %v1462 = vpop.permute.xlu0 %1461
    %1463 = vrot.lane.b32.xlu0 %v585, 16
    %v1464 = vpop.permute.xlu0 %1463
    %1465 = vrot.lane.b32.xlu0 %v587, 16
    %v1466 = vpop.permute.xlu0 %1465
    %1467 = vrot.lane.b32.xlu0 %v590, 16
    %v1468 = vpop.permute.xlu0 %1467
    %1469 = vrot.lane.b32.xlu0 %v592, 16
    %v1470 = vpop.permute.xlu0 %1469
    %1471 = vrot.lane.b32.xlu0 %v595, 16
    %v1472 = vpop.permute.xlu0 %1471
    %1473 = vrot.lane.b32.xlu0 %v597, 16
    %v1474 = vpop.permute.xlu0 %1473
    %1475 = vrot.lane.b32.xlu0 %v1348, 16
    %v1476 = vpop.permute.xlu0 %1475
    %1477 = vrot.lane.b32.xlu0 %v1350, 16
    %v1478 = vpop.permute.xlu0 %1477
    %v1543 = vrot.slane %v281, 2
    %v1544 = vrot.slane %v282, 2
    %v1545 = vsel %vm790, %v1543, %v1544
    %v1546 = vrot.slane %v283, 2
    %v1547 = vsel %vm790, %v1544, %v1546
    %v1548 = vrot.slane %v335, 2
    %v1549 = vrot.slane %v336, 2
    %v1550 = vsel %vm790, %v1548, %v1549
    %v1551 = vrot.slane %v337, 2
    %v1552 = vsel %vm790, %v1549, %v1551
    %1553 = vrot.lane.b32.xlu0 %v798, 20
    %v1554 = vpop.permute.xlu0 %1553
    %1555 = vrot.lane.b32.xlu0 %v800, 20
    %v1556 = vpop.permute.xlu0 %1555
    %1557 = vrot.lane.b32.xlu0 %v803, 20
    %v1558 = vpop.permute.xlu0 %1557
    %1559 = vrot.lane.b32.xlu0 %v805, 20
    %v1560 = vpop.permute.xlu0 %1559
    %1561 = vrot.lane.b32.xlu0 %v808, 20
    %v1562 = vpop.permute.xlu0 %1561
    %1563 = vrot.lane.b32.xlu0 %v810, 20
    %v1564 = vpop.permute.xlu0 %1563
    %1565 = vrot.lane.b32.xlu0 %v813, 20
    %v1566 = vpop.permute.xlu0 %1565
    %1567 = vrot.lane.b32.xlu0 %v815, 20
    %v1568 = vpop.permute.xlu0 %1567
    %1569 = vrot.lane.b32.xlu0 %v818, 20
    %v1570 = vpop.permute.xlu0 %1569
    %1571 = vrot.lane.b32.xlu0 %v820, 20
    %v1572 = vpop.permute.xlu0 %1571
    %1573 = vrot.lane.b32.xlu0 %v823, 20
    %v1574 = vpop.permute.xlu0 %1573
    %1575 = vrot.lane.b32.xlu0 %v825, 20
    %v1576 = vpop.permute.xlu0 %1575
    %1577 = vrot.lane.b32.xlu0 %v828, 20
    %v1578 = vpop.permute.xlu0 %1577
    %1579 = vrot.lane.b32.xlu0 %v830, 20
    %v1580 = vpop.permute.xlu0 %1579
    %1581 = vrot.lane.b32.xlu0 %v833, 20
    %v1582 = vpop.permute.xlu0 %1581
    %1583 = vrot.lane.b32.xlu0 %v835, 20
    %v1584 = vpop.permute.xlu0 %1583
    %1585 = vrot.lane.b32.xlu0 %v838, 20
    %v1586 = vpop.permute.xlu0 %1585
    %1587 = vrot.lane.b32.xlu0 %v840, 20
    %v1588 = vpop.permute.xlu0 %1587
    %1589 = vrot.lane.b32.xlu0 %v843, 20
    %v1590 = vpop.permute.xlu0 %1589
    %1591 = vrot.lane.b32.xlu0 %v845, 20
    %v1592 = vpop.permute.xlu0 %1591
    %1593 = vrot.lane.b32.xlu0 %v848, 20
    %v1594 = vpop.permute.xlu0 %1593
    %1595 = vrot.lane.b32.xlu0 %v850, 20
    %v1596 = vpop.permute.xlu0 %1595
    %1597 = vrot.lane.b32.xlu0 %v853, 20
    %v1598 = vpop.permute.xlu0 %1597
    %1599 = vrot.lane.b32.xlu0 %v855, 20
    %v1600 = vpop.permute.xlu0 %1599
    %1601 = vrot.lane.b32.xlu0 %v858, 20
    %v1602 = vpop.permute.xlu0 %1601
    %1603 = vrot.lane.b32.xlu0 %v860, 20
    %v1604 = vpop.permute.xlu0 %1603
    %1605 = vrot.lane.b32.xlu0 %v863, 20
    %v1606 = vpop.permute.xlu0 %1605
    %1607 = vrot.lane.b32.xlu0 %v865, 20
    %v1608 = vpop.permute.xlu0 %1607
    %1609 = vrot.lane.b32.xlu0 %v868, 20
    %v1610 = vpop.permute.xlu0 %1609
    %1611 = vrot.lane.b32.xlu0 %v870, 20
    %v1612 = vpop.permute.xlu0 %1611
    %1613 = vrot.lane.b32.xlu0 %v1545, 20
    %v1614 = vpop.permute.xlu0 %1613
    %1615 = vrot.lane.b32.xlu0 %v1547, 20
    %v1616 = vpop.permute.xlu0 %1615
    %1617 = vrot.lane.b32.xlu0 %v878, 20
    %v1618 = vpop.permute.xlu0 %1617
    %1619 = vrot.lane.b32.xlu0 %v880, 20
    %v1620 = vpop.permute.xlu0 %1619
    %1621 = vrot.lane.b32.xlu0 %v883, 20
    %v1622 = vpop.permute.xlu0 %1621
    %1623 = vrot.lane.b32.xlu0 %v885, 20
    %v1624 = vpop.permute.xlu0 %1623
    %1625 = vrot.lane.b32.xlu0 %v888, 20
    %v1626 = vpop.permute.xlu0 %1625
    %1627 = vrot.lane.b32.xlu0 %v890, 20
    %v1628 = vpop.permute.xlu0 %1627
    %1629 = vrot.lane.b32.xlu0 %v893, 20
    %v1630 = vpop.permute.xlu0 %1629
    %1631 = vrot.lane.b32.xlu0 %v895, 20
    %v1632 = vpop.permute.xlu0 %1631
    %1633 = vrot.lane.b32.xlu0 %v898, 20
    %v1634 = vpop.permute.xlu0 %1633
    %1635 = vrot.lane.b32.xlu0 %v900, 20
    %v1636 = vpop.permute.xlu0 %1635
    %1637 = vrot.lane.b32.xlu0 %v903, 20
    %v1638 = vpop.permute.xlu0 %1637
    %1639 = vrot.lane.b32.xlu0 %v905, 20
    %v1640 = vpop.permute.xlu0 %1639
    %1641 = vrot.lane.b32.xlu0 %v908, 20
    %v1642 = vpop.permute.xlu0 %1641
    %1643 = vrot.lane.b32.xlu0 %v910, 20
    %v1644 = vpop.permute.xlu0 %1643
    %1645 = vrot.lane.b32.xlu0 %v913, 20
    %v1646 = vpop.permute.xlu0 %1645
    %1647 = vrot.lane.b32.xlu0 %v915, 20
    %v1648 = vpop.permute.xlu0 %1647
    %1649 = vrot.lane.b32.xlu0 %v918, 20
    %v1650 = vpop.permute.xlu0 %1649
    %1651 = vrot.lane.b32.xlu0 %v920, 20
    %v1652 = vpop.permute.xlu0 %1651
    %1653 = vrot.lane.b32.xlu0 %v923, 20
    %v1654 = vpop.permute.xlu0 %1653
    %1655 = vrot.lane.b32.xlu0 %v925, 20
    %v1656 = vpop.permute.xlu0 %1655
    %1657 = vrot.lane.b32.xlu0 %v928, 20
    %v1658 = vpop.permute.xlu0 %1657
    %1659 = vrot.lane.b32.xlu0 %v930, 20
    %v1660 = vpop.permute.xlu0 %1659
    %1661 = vrot.lane.b32.xlu0 %v933, 20
    %v1662 = vpop.permute.xlu0 %1661
    %1663 = vrot.lane.b32.xlu0 %v935, 20
    %v1664 = vpop.permute.xlu0 %1663
    %1665 = vrot.lane.b32.xlu0 %v938, 20
    %v1666 = vpop.permute.xlu0 %1665
    %1667 = vrot.lane.b32.xlu0 %v940, 20
    %v1668 = vpop.permute.xlu0 %1667
    %1669 = vrot.lane.b32.xlu0 %v943, 20
    %v1670 = vpop.permute.xlu0 %1669
    %1671 = vrot.lane.b32.xlu0 %v945, 20
    %v1672 = vpop.permute.xlu0 %1671
    %1673 = vrot.lane.b32.xlu0 %v948, 20
    %v1674 = vpop.permute.xlu0 %1673
    %1675 = vrot.lane.b32.xlu0 %v950, 20
    %v1676 = vpop.permute.xlu0 %1675
    %1677 = vrot.lane.b32.xlu0 %v1550, 20
    %v1678 = vpop.permute.xlu0 %1677
    %1679 = vrot.lane.b32.xlu0 %v1552, 20
    %v1680 = vpop.permute.xlu0 %1679
    %1749 = vrot.lane.b32.xlu0 %v239, 24
    %v1750 = vpop.permute.xlu0 %1749
    %1751 = vrot.lane.b32.xlu0 %v240, 24
    %v1752 = vpop.permute.xlu0 %1751
    %1753 = vrot.lane.b32.xlu0 %v242, 24
    %v1754 = vpop.permute.xlu0 %1753
    %1755 = vrot.lane.b32.xlu0 %v243, 24
    %v1756 = vpop.permute.xlu0 %1755
    %1757 = vrot.lane.b32.xlu0 %v245, 24
    %v1758 = vpop.permute.xlu0 %1757
    %1759 = vrot.lane.b32.xlu0 %v246, 24
    %v1760 = vpop.permute.xlu0 %1759
    %1761 = vrot.lane.b32.xlu0 %v248, 24
    %v1762 = vpop.permute.xlu0 %1761
    %1763 = vrot.lane.b32.xlu0 %v249, 24
    %v1764 = vpop.permute.xlu0 %1763
    %1765 = vrot.lane.b32.xlu0 %v251, 24
    %v1766 = vpop.permute.xlu0 %1765
    %1767 = vrot.lane.b32.xlu0 %v252, 24
    %v1768 = vpop.permute.xlu0 %1767
    %1769 = vrot.lane.b32.xlu0 %v254, 24
    %v1770 = vpop.permute.xlu0 %1769
    %1771 = vrot.lane.b32.xlu0 %v255, 24
    %v1772 = vpop.permute.xlu0 %1771
    %1773 = vrot.lane.b32.xlu0 %v257, 24
    %v1774 = vpop.permute.xlu0 %1773
    %1775 = vrot.lane.b32.xlu0 %v258, 24
    %v1776 = vpop.permute.xlu0 %1775
    %1777 = vrot.lane.b32.xlu0 %v260, 24
    %v1778 = vpop.permute.xlu0 %1777
    %1779 = vrot.lane.b32.xlu0 %v261, 24
    %v1780 = vpop.permute.xlu0 %1779
    %1781 = vrot.lane.b32.xlu0 %v263, 24
    %v1782 = vpop.permute.xlu0 %1781
    %1783 = vrot.lane.b32.xlu0 %v264, 24
    %v1784 = vpop.permute.xlu0 %1783
    %1785 = vrot.lane.b32.xlu0 %v266, 24
    %v1786 = vpop.permute.xlu0 %1785
    %1787 = vrot.lane.b32.xlu0 %v267, 24
    %v1788 = vpop.permute.xlu0 %1787
    %1789 = vrot.lane.b32.xlu0 %v269, 24
    %v1790 = vpop.permute.xlu0 %1789
    %1791 = vrot.lane.b32.xlu0 %v270, 24
    %v1792 = vpop.permute.xlu0 %1791
    %1793 = vrot.lane.b32.xlu0 %v272, 24
    %v1794 = vpop.permute.xlu0 %1793
    %1795 = vrot.lane.b32.xlu0 %v273, 24
    %v1796 = vpop.permute.xlu0 %1795
    %1797 = vrot.lane.b32.xlu0 %v275, 24
    %v1798 = vpop.permute.xlu0 %1797
    %1799 = vrot.lane.b32.xlu0 %v276, 24
    %v1800 = vpop.permute.xlu0 %1799
    %1801 = vrot.lane.b32.xlu0 %v278, 24
    %v1802 = vpop.permute.xlu0 %1801
    %1803 = vrot.lane.b32.xlu0 %v279, 24
    %v1804 = vpop.permute.xlu0 %1803
    %1805 = vrot.lane.b32.xlu0 %v281, 24
    %v1806 = vpop.permute.xlu0 %1805
    %1807 = vrot.lane.b32.xlu0 %v282, 24
    %v1808 = vpop.permute.xlu0 %1807
    %1809 = vrot.lane.b32.xlu0 %v284, 24
    %v1810 = vpop.permute.xlu0 %1809
    %1811 = vrot.lane.b32.xlu0 %v285, 24
    %v1812 = vpop.permute.xlu0 %1811
    %1813 = vrot.lane.b32.xlu0 %v293, 24
    %v1814 = vpop.permute.xlu0 %1813
    %1815 = vrot.lane.b32.xlu0 %v294, 24
    %v1816 = vpop.permute.xlu0 %1815
    %1817 = vrot.lane.b32.xlu0 %v296, 24
    %v1818 = vpop.permute.xlu0 %1817
    %1819 = vrot.lane.b32.xlu0 %v297, 24
    %v1820 = vpop.permute.xlu0 %1819
    %1821 = vrot.lane.b32.xlu0 %v299, 24
    %v1822 = vpop.permute.xlu0 %1821
    %1823 = vrot.lane.b32.xlu0 %v300, 24
    %v1824 = vpop.permute.xlu0 %1823
    %1825 = vrot.lane.b32.xlu0 %v302, 24
    %v1826 = vpop.permute.xlu0 %1825
    %1827 = vrot.lane.b32.xlu0 %v303, 24
    %v1828 = vpop.permute.xlu0 %1827
    %1829 = vrot.lane.b32.xlu0 %v305, 24
    %v1830 = vpop.permute.xlu0 %1829
    %1831 = vrot.lane.b32.xlu0 %v306, 24
    %v1832 = vpop.permute.xlu0 %1831
    %1833 = vrot.lane.b32.xlu0 %v308, 24
    %v1834 = vpop.permute.xlu0 %1833
    %1835 = vrot.lane.b32.xlu0 %v309, 24
    %v1836 = vpop.permute.xlu0 %1835
    %1837 = vrot.lane.b32.xlu0 %v311, 24
    %v1838 = vpop.permute.xlu0 %1837
    %1839 = vrot.lane.b32.xlu0 %v312, 24
    %v1840 = vpop.permute.xlu0 %1839
    %1841 = vrot.lane.b32.xlu0 %v314, 24
    %v1842 = vpop.permute.xlu0 %1841
    %1843 = vrot.lane.b32.xlu0 %v315, 24
    %v1844 = vpop.permute.xlu0 %1843
    %1845 = vrot.lane.b32.xlu0 %v317, 24
    %v1846 = vpop.permute.xlu0 %1845
    %1847 = vrot.lane.b32.xlu0 %v318, 24
    %v1848 = vpop.permute.xlu0 %1847
    %1849 = vrot.lane.b32.xlu0 %v320, 24
    %v1850 = vpop.permute.xlu0 %1849
    %1851 = vrot.lane.b32.xlu0 %v321, 24
    %v1852 = vpop.permute.xlu0 %1851
    %1853 = vrot.lane.b32.xlu0 %v323, 24
    %v1854 = vpop.permute.xlu0 %1853
    %1855 = vrot.lane.b32.xlu0 %v324, 24
    %v1856 = vpop.permute.xlu0 %1855
    %1857 = vrot.lane.b32.xlu0 %v326, 24
    %v1858 = vpop.permute.xlu0 %1857
    %1859 = vrot.lane.b32.xlu0 %v327, 24
    %v1860 = vpop.permute.xlu0 %1859
    %1861 = vrot.lane.b32.xlu0 %v329, 24
    %v1862 = vpop.permute.xlu0 %1861
    %1863 = vrot.lane.b32.xlu0 %v330, 24
    %v1864 = vpop.permute.xlu0 %1863
    %1865 = vrot.lane.b32.xlu0 %v332, 24
    %v1866 = vpop.permute.xlu0 %1865
    %1867 = vrot.lane.b32.xlu0 %v333, 24
    %v1868 = vpop.permute.xlu0 %1867
    %1869 = vrot.lane.b32.xlu0 %v335, 24
    %v1870 = vpop.permute.xlu0 %1869
    %1871 = vrot.lane.b32.xlu0 %v336, 24
    %v1872 = vpop.permute.xlu0 %1871
    %1873 = vrot.lane.b32.xlu0 %v338, 24
    %v1874 = vpop.permute.xlu0 %1873
    %1875 = vrot.lane.b32.xlu0 %v339, 24
    %v1876 = vpop.permute.xlu0 %1875
    %v1943 = vrot.slane %v284, 1
    %v1944 = vrot.slane %v285, 1
    %v1945 = vsel %vm437, %v1943, %v1944
    %v1946 = vrot.slane %v286, 1
    %v1947 = vsel %vm437, %v1944, %v1946
    %v1948 = vrot.slane %v338, 1
    %v1949 = vrot.slane %v339, 1
    %v1950 = vsel %vm437, %v1948, %v1949
    %v1951 = vrot.slane %v340, 1
    %v1952 = vsel %vm437, %v1949, %v1951
    %1953 = vrot.lane.b32.xlu0 %v450, 28
    %v1954 = vpop.permute.xlu0 %1953
    %1955 = vrot.lane.b32.xlu0 %v452, 28
    %v1956 = vpop.permute.xlu0 %1955
    %1957 = vrot.lane.b32.xlu0 %v455, 28
    %v1958 = vpop.permute.xlu0 %1957
    %1959 = vrot.lane.b32.xlu0 %v457, 28
    %v1960 = vpop.permute.xlu0 %1959
    %1961 = vrot.lane.b32.xlu0 %v460, 28
    %v1962 = vpop.permute.xlu0 %1961
    %1963 = vrot.lane.b32.xlu0 %v462, 28
    %v1964 = vpop.permute.xlu0 %1963
    %1965 = vrot.lane.b32.xlu0 %v465, 28
    %v1966 = vpop.permute.xlu0 %1965
    %1967 = vrot.lane.b32.xlu0 %v467, 28
    %v1968 = vpop.permute.xlu0 %1967
    %1969 = vrot.lane.b32.xlu0 %v470, 28
    %v1970 = vpop.permute.xlu0 %1969
    %1971 = vrot.lane.b32.xlu0 %v472, 28
    %v1972 = vpop.permute.xlu0 %1971
    %1973 = vrot.lane.b32.xlu0 %v475, 28
    %v1974 = vpop.permute.xlu0 %1973
    %1975 = vrot.lane.b32.xlu0 %v477, 28
    %v1976 = vpop.permute.xlu0 %1975
    %1977 = vrot.lane.b32.xlu0 %v480, 28
    %v1978 = vpop.permute.xlu0 %1977
    %1979 = vrot.lane.b32.xlu0 %v482, 28
    %v1980 = vpop.permute.xlu0 %1979
    %1981 = vrot.lane.b32.xlu0 %v485, 28
    %v1982 = vpop.permute.xlu0 %1981
    %1983 = vrot.lane.b32.xlu0 %v487, 28
    %v1984 = vpop.permute.xlu0 %1983
    %1985 = vrot.lane.b32.xlu0 %v490, 28
    %v1986 = vpop.permute.xlu0 %1985
    %1987 = vrot.lane.b32.xlu0 %v492, 28
    %v1988 = vpop.permute.xlu0 %1987
    %1989 = vrot.lane.b32.xlu0 %v495, 28
    %v1990 = vpop.permute.xlu0 %1989
    %1991 = vrot.lane.b32.xlu0 %v497, 28
    %v1992 = vpop.permute.xlu0 %1991
    %1993 = vrot.lane.b32.xlu0 %v500, 28
    %v1994 = vpop.permute.xlu0 %1993
    %1995 = vrot.lane.b32.xlu0 %v502, 28
    %v1996 = vpop.permute.xlu0 %1995
    %1997 = vrot.lane.b32.xlu0 %v505, 28
    %v1998 = vpop.permute.xlu0 %1997
    %1999 = vrot.lane.b32.xlu0 %v507, 28
    %v2000 = vpop.permute.xlu0 %1999
    %2001 = vrot.lane.b32.xlu0 %v510, 28
    %v2002 = vpop.permute.xlu0 %2001
    %2003 = vrot.lane.b32.xlu0 %v512, 28
    %v2004 = vpop.permute.xlu0 %2003
    %2005 = vrot.lane.b32.xlu0 %v515, 28
    %v2006 = vpop.permute.xlu0 %2005
    %2007 = vrot.lane.b32.xlu0 %v517, 28
    %v2008 = vpop.permute.xlu0 %2007
    %2009 = vrot.lane.b32.xlu0 %v1343, 28
    %v2010 = vpop.permute.xlu0 %2009
    %2011 = vrot.lane.b32.xlu0 %v1345, 28
    %v2012 = vpop.permute.xlu0 %2011
    %2013 = vrot.lane.b32.xlu0 %v1945, 28
    %v2014 = vpop.permute.xlu0 %2013
    %2015 = vrot.lane.b32.xlu0 %v1947, 28
    %v2016 = vpop.permute.xlu0 %2015
    %2017 = vrot.lane.b32.xlu0 %v530, 28
    %v2018 = vpop.permute.xlu0 %2017
    %2019 = vrot.lane.b32.xlu0 %v532, 28
    %v2020 = vpop.permute.xlu0 %2019
    %2021 = vrot.lane.b32.xlu0 %v535, 28
    %v2022 = vpop.permute.xlu0 %2021
    %2023 = vrot.lane.b32.xlu0 %v537, 28
    %v2024 = vpop.permute.xlu0 %2023
    %2025 = vrot.lane.b32.xlu0 %v540, 28
    %v2026 = vpop.permute.xlu0 %2025
    %2027 = vrot.lane.b32.xlu0 %v542, 28
    %v2028 = vpop.permute.xlu0 %2027
    %2029 = vrot.lane.b32.xlu0 %v545, 28
    %v2030 = vpop.permute.xlu0 %2029
    %2031 = vrot.lane.b32.xlu0 %v547, 28
    %v2032 = vpop.permute.xlu0 %2031
    %2033 = vrot.lane.b32.xlu0 %v550, 28
    %v2034 = vpop.permute.xlu0 %2033
    %2035 = vrot.lane.b32.xlu0 %v552, 28
    %v2036 = vpop.permute.xlu0 %2035
    %2037 = vrot.lane.b32.xlu0 %v555, 28
    %v2038 = vpop.permute.xlu0 %2037
    %2039 = vrot.lane.b32.xlu0 %v557, 28
    %v2040 = vpop.permute.xlu0 %2039
    %2041 = vrot.lane.b32.xlu0 %v560, 28
    %v2042 = vpop.permute.xlu0 %2041
    %2043 = vrot.lane.b32.xlu0 %v562, 28
    %v2044 = vpop.permute.xlu0 %2043
    %2045 = vrot.lane.b32.xlu0 %v565, 28
    %v2046 = vpop.permute.xlu0 %2045
    %2047 = vrot.lane.b32.xlu0 %v567, 28
    %v2048 = vpop.permute.xlu0 %2047
    %2049 = vrot.lane.b32.xlu0 %v570, 28
    %v2050 = vpop.permute.xlu0 %2049
    %2051 = vrot.lane.b32.xlu0 %v572, 28
    %v2052 = vpop.permute.xlu0 %2051
    %2053 = vrot.lane.b32.xlu0 %v575, 28
    %v2054 = vpop.permute.xlu0 %2053
    %2055 = vrot.lane.b32.xlu0 %v577, 28
    %v2056 = vpop.permute.xlu0 %2055
    %2057 = vrot.lane.b32.xlu0 %v580, 28
    %v2058 = vpop.permute.xlu0 %2057
    %2059 = vrot.lane.b32.xlu0 %v582, 28
    %v2060 = vpop.permute.xlu0 %2059
    %2061 = vrot.lane.b32.xlu0 %v585, 28
    %v2062 = vpop.permute.xlu0 %2061
    %2063 = vrot.lane.b32.xlu0 %v587, 28
    %v2064 = vpop.permute.xlu0 %2063
    %2065 = vrot.lane.b32.xlu0 %v590, 28
    %v2066 = vpop.permute.xlu0 %2065
    %2067 = vrot.lane.b32.xlu0 %v592, 28
    %v2068 = vpop.permute.xlu0 %2067
    %2069 = vrot.lane.b32.xlu0 %v595, 28
    %v2070 = vpop.permute.xlu0 %2069
    %2071 = vrot.lane.b32.xlu0 %v597, 28
    %v2072 = vpop.permute.xlu0 %2071
    %2073 = vrot.lane.b32.xlu0 %v1348, 28
    %v2074 = vpop.permute.xlu0 %2073
    %2075 = vrot.lane.b32.xlu0 %v1350, 28
    %v2076 = vpop.permute.xlu0 %2075
    %2077 = vrot.lane.b32.xlu0 %v1950, 28
    %v2078 = vpop.permute.xlu0 %2077
    %2079 = vrot.lane.b32.xlu0 %v1952, 28
    %v2080 = vpop.permute.xlu0 %2079
    %v2145 = vrot.slane %v284, 2
    %v2146 = vrot.slane %v285, 2
    %v2147 = vsel %vm790, %v2145, %v2146
    %v2148 = vrot.slane %v286, 2
    %v2149 = vsel %vm790, %v2146, %v2148
    %v2150 = vrot.slane %v338, 2
    %v2151 = vrot.slane %v339, 2
    %v2152 = vsel %vm790, %v2150, %v2151
    %v2153 = vrot.slane %v340, 2
    %v2154 = vsel %vm790, %v2151, %v2153
    %2155 = vrot.lane.b32.xlu0 %v803, 32
    %v2156 = vpop.permute.xlu0 %2155
    %2157 = vrot.lane.b32.xlu0 %v805, 32
    %v2158 = vpop.permute.xlu0 %2157
    %2159 = vrot.lane.b32.xlu0 %v808, 32
    %v2160 = vpop.permute.xlu0 %2159
    %2161 = vrot.lane.b32.xlu0 %v810, 32
    %v2162 = vpop.permute.xlu0 %2161
    %2163 = vrot.lane.b32.xlu0 %v813, 32
    %v2164 = vpop.permute.xlu0 %2163
    %2165 = vrot.lane.b32.xlu0 %v815, 32
    %v2166 = vpop.permute.xlu0 %2165
    %2167 = vrot.lane.b32.xlu0 %v818, 32
    %v2168 = vpop.permute.xlu0 %2167
    %2169 = vrot.lane.b32.xlu0 %v820, 32
    %v2170 = vpop.permute.xlu0 %2169
    %2171 = vrot.lane.b32.xlu0 %v823, 32
    %v2172 = vpop.permute.xlu0 %2171
    %2173 = vrot.lane.b32.xlu0 %v825, 32
    %v2174 = vpop.permute.xlu0 %2173
    %2175 = vrot.lane.b32.xlu0 %v828, 32
    %v2176 = vpop.permute.xlu0 %2175
    %2177 = vrot.lane.b32.xlu0 %v830, 32
    %v2178 = vpop.permute.xlu0 %2177
    %2179 = vrot.lane.b32.xlu0 %v833, 32
    %v2180 = vpop.permute.xlu0 %2179
    %2181 = vrot.lane.b32.xlu0 %v835, 32
    %v2182 = vpop.permute.xlu0 %2181
    %2183 = vrot.lane.b32.xlu0 %v838, 32
    %v2184 = vpop.permute.xlu0 %2183
    %2185 = vrot.lane.b32.xlu0 %v840, 32
    %v2186 = vpop.permute.xlu0 %2185
    %2187 = vrot.lane.b32.xlu0 %v843, 32
    %v2188 = vpop.permute.xlu0 %2187
    %2189 = vrot.lane.b32.xlu0 %v845, 32
    %v2190 = vpop.permute.xlu0 %2189
    %2191 = vrot.lane.b32.xlu0 %v848, 32
    %v2192 = vpop.permute.xlu0 %2191
    %2193 = vrot.lane.b32.xlu0 %v850, 32
    %v2194 = vpop.permute.xlu0 %2193
    %2195 = vrot.lane.b32.xlu0 %v853, 32
    %v2196 = vpop.permute.xlu0 %2195
    %2197 = vrot.lane.b32.xlu0 %v855, 32
    %v2198 = vpop.permute.xlu0 %2197
    %2199 = vrot.lane.b32.xlu0 %v858, 32
    %v2200 = vpop.permute.xlu0 %2199
    %2201 = vrot.lane.b32.xlu0 %v860, 32
    %v2202 = vpop.permute.xlu0 %2201
    %2203 = vrot.lane.b32.xlu0 %v863, 32
    %v2204 = vpop.permute.xlu0 %2203
    %2205 = vrot.lane.b32.xlu0 %v865, 32
    %v2206 = vpop.permute.xlu0 %2205
    %2207 = vrot.lane.b32.xlu0 %v868, 32
    %v2208 = vpop.permute.xlu0 %2207
    %2209 = vrot.lane.b32.xlu0 %v870, 32
    %v2210 = vpop.permute.xlu0 %2209
    %2211 = vrot.lane.b32.xlu0 %v1545, 32
    %v2212 = vpop.permute.xlu0 %2211
    %2213 = vrot.lane.b32.xlu0 %v1547, 32
    %v2214 = vpop.permute.xlu0 %2213
    %2215 = vrot.lane.b32.xlu0 %v2147, 32
    %v2216 = vpop.permute.xlu0 %2215
    %2217 = vrot.lane.b32.xlu0 %v2149, 32
    %v2218 = vpop.permute.xlu0 %2217
    %2219 = vrot.lane.b32.xlu0 %v883, 32
    %v2220 = vpop.permute.xlu0 %2219
    %2221 = vrot.lane.b32.xlu0 %v885, 32
    %v2222 = vpop.permute.xlu0 %2221
    %2223 = vrot.lane.b32.xlu0 %v888, 32
    %v2224 = vpop.permute.xlu0 %2223
    %2225 = vrot.lane.b32.xlu0 %v890, 32
    %v2226 = vpop.permute.xlu0 %2225
    %2227 = vrot.lane.b32.xlu0 %v893, 32
    %v2228 = vpop.permute.xlu0 %2227
    %2229 = vrot.lane.b32.xlu0 %v895, 32
    %v2230 = vpop.permute.xlu0 %2229
    %2231 = vrot.lane.b32.xlu0 %v898, 32
    %v2232 = vpop.permute.xlu0 %2231
    %2233 = vrot.lane.b32.xlu0 %v900, 32
    %v2234 = vpop.permute.xlu0 %2233
    %2235 = vrot.lane.b32.xlu0 %v903, 32
    %v2236 = vpop.permute.xlu0 %2235
    %2237 = vrot.lane.b32.xlu0 %v905, 32
    %v2238 = vpop.permute.xlu0 %2237
    %2239 = vrot.lane.b32.xlu0 %v908, 32
    %v2240 = vpop.permute.xlu0 %2239
    %2241 = vrot.lane.b32.xlu0 %v910, 32
    %v2242 = vpop.permute.xlu0 %2241
    %2243 = vrot.lane.b32.xlu0 %v913, 32
    %v2244 = vpop.permute.xlu0 %2243
    %2245 = vrot.lane.b32.xlu0 %v915, 32
    %v2246 = vpop.permute.xlu0 %2245
    %2247 = vrot.lane.b32.xlu0 %v918, 32
    %v2248 = vpop.permute.xlu0 %2247
    %2249 = vrot.lane.b32.xlu0 %v920, 32
    %v2250 = vpop.permute.xlu0 %2249
    %2251 = vrot.lane.b32.xlu0 %v923, 32
    %v2252 = vpop.permute.xlu0 %2251
    %2253 = vrot.lane.b32.xlu0 %v925, 32
    %v2254 = vpop.permute.xlu0 %2253
    %2255 = vrot.lane.b32.xlu0 %v928, 32
    %v2256 = vpop.permute.xlu0 %2255
    %2257 = vrot.lane.b32.xlu0 %v930, 32
    %v2258 = vpop.permute.xlu0 %2257
    %2259 = vrot.lane.b32.xlu0 %v933, 32
    %v2260 = vpop.permute.xlu0 %2259
    %2261 = vrot.lane.b32.xlu0 %v935, 32
    %v2262 = vpop.permute.xlu0 %2261
    %2263 = vrot.lane.b32.xlu0 %v938, 32
    %v2264 = vpop.permute.xlu0 %2263
    %2265 = vrot.lane.b32.xlu0 %v940, 32
    %v2266 = vpop.permute.xlu0 %2265
    %2267 = vrot.lane.b32.xlu0 %v943, 32
    %v2268 = vpop.permute.xlu0 %2267
    %2269 = vrot.lane.b32.xlu0 %v945, 32
    %v2270 = vpop.permute.xlu0 %2269
    %2271 = vrot.lane.b32.xlu0 %v948, 32
    %v2272 = vpop.permute.xlu0 %2271
    %2273 = vrot.lane.b32.xlu0 %v950, 32
    %v2274 = vpop.permute.xlu0 %2273
    %2275 = vrot.lane.b32.xlu0 %v1550, 32
    %v2276 = vpop.permute.xlu0 %2275
    %2277 = vrot.lane.b32.xlu0 %v1552, 32
    %v2278 = vpop.permute.xlu0 %2277
    %2279 = vrot.lane.b32.xlu0 %v2152, 32
    %v2280 = vpop.permute.xlu0 %2279
    %2281 = vrot.lane.b32.xlu0 %v2154, 32
    %v2282 = vpop.permute.xlu0 %2281
    %v2347 = vsel %vm88, %v233, %v599
    %v2348 = vsel %vm88, %v234, %v601
    %v2349 = vsel %vm88, %v236, %v603
    %v2350 = vsel %vm88, %v237, %v605
    %v2351 = vsel %vm88, %v239, %v607
    %v2352 = vsel %vm88, %v240, %v609
    %v2353 = vsel %vm88, %v242, %v611
    %v2354 = vsel %vm88, %v243, %v613
    %v2355 = vsel %vm88, %v245, %v615
    %v2356 = vsel %vm88, %v246, %v617
    %v2357 = vsel %vm88, %v248, %v619
    %v2358 = vsel %vm88, %v249, %v621
    %v2359 = vsel %vm88, %v251, %v623
    %v2360 = vsel %vm88, %v252, %v625
    %v2361 = vsel %vm88, %v254, %v627
    %v2362 = vsel %vm88, %v255, %v629
    %v2363 = vsel %vm88, %v257, %v631
    %v2364 = vsel %vm88, %v258, %v633
    %v2365 = vsel %vm88, %v260, %v635
    %v2366 = vsel %vm88, %v261, %v637
    %v2367 = vsel %vm88, %v263, %v639
    %v2368 = vsel %vm88, %v264, %v641
    %v2369 = vsel %vm88, %v266, %v643
    %v2370 = vsel %vm88, %v267, %v645
    %v2371 = vsel %vm88, %v269, %v647
    %v2372 = vsel %vm88, %v270, %v649
    %v2373 = vsel %vm88, %v272, %v651
    %v2374 = vsel %vm88, %v273, %v653
    %v2375 = vsel %vm88, %v275, %v655
    %v2376 = vsel %vm88, %v276, %v657
    %v2377 = vsel %vm88, %v278, %v659
    %v2378 = vsel %vm88, %v279, %v661
    %v2379 = vsel %vm88, %v287, %v663
    %v2380 = vsel %vm88, %v288, %v665
    %v2381 = vsel %vm88, %v290, %v667
    %v2382 = vsel %vm88, %v291, %v669
    %v2383 = vsel %vm88, %v293, %v671
    %v2384 = vsel %vm88, %v294, %v673
    %v2385 = vsel %vm88, %v296, %v675
    %v2386 = vsel %vm88, %v297, %v677
    %v2387 = vsel %vm88, %v299, %v679
    %v2388 = vsel %vm88, %v300, %v681
    %v2389 = vsel %vm88, %v302, %v683
    %v2390 = vsel %vm88, %v303, %v685
    %v2391 = vsel %vm88, %v305, %v687
    %v2392 = vsel %vm88, %v306, %v689
    %v2393 = vsel %vm88, %v308, %v691
    %v2394 = vsel %vm88, %v309, %v693
    %v2395 = vsel %vm88, %v311, %v695
    %v2396 = vsel %vm88, %v312, %v697
    %v2397 = vsel %vm88, %v314, %v699
    %v2398 = vsel %vm88, %v315, %v701
    %v2399 = vsel %vm88, %v317, %v703
    %v2400 = vsel %vm88, %v318, %v705
    %v2401 = vsel %vm88, %v320, %v707
    %v2402 = vsel %vm88, %v321, %v709
    %v2403 = vsel %vm88, %v323, %v711
    %v2404 = vsel %vm88, %v324, %v713
    %v2405 = vsel %vm88, %v326, %v715
    %v2406 = vsel %vm88, %v327, %v717
    %v2407 = vsel %vm88, %v329, %v719
    %v2408 = vsel %vm88, %v330, %v721
    %v2409 = vsel %vm88, %v332, %v723
    %v2410 = vsel %vm88, %v333, %v725
    %vm2411 = vcmask 64512
    %v2412 = vsel %vm2411, %v2347, %v952
    %v2413 = vsel %vm2411, %v2348, %v954
    %v2414 = vsel %vm2411, %v2349, %v956
    %v2415 = vsel %vm2411, %v2350, %v958
    %v2416 = vsel %vm2411, %v2351, %v960
    %v2417 = vsel %vm2411, %v2352, %v962
    %v2418 = vsel %vm2411, %v2353, %v964
    %v2419 = vsel %vm2411, %v2354, %v966
    %v2420 = vsel %vm2411, %v2355, %v968
    %v2421 = vsel %vm2411, %v2356, %v970
    %v2422 = vsel %vm2411, %v2357, %v972
    %v2423 = vsel %vm2411, %v2358, %v974
    %v2424 = vsel %vm2411, %v2359, %v976
    %v2425 = vsel %vm2411, %v2360, %v978
    %v2426 = vsel %vm2411, %v2361, %v980
    %v2427 = vsel %vm2411, %v2362, %v982
    %v2428 = vsel %vm2411, %v2363, %v984
    %v2429 = vsel %vm2411, %v2364, %v986
    %v2430 = vsel %vm2411, %v2365, %v988
    %v2431 = vsel %vm2411, %v2366, %v990
    %v2432 = vsel %vm2411, %v2367, %v992
    %v2433 = vsel %vm2411, %v2368, %v994
    %v2434 = vsel %vm2411, %v2369, %v996
    %v2435 = vsel %vm2411, %v2370, %v998
    %v2436 = vsel %vm2411, %v2371, %v1000
    %v2437 = vsel %vm2411, %v2372, %v1002
    %v2438 = vsel %vm2411, %v2373, %v1004
    %v2439 = vsel %vm2411, %v2374, %v1006
    %v2440 = vsel %vm2411, %v2375, %v1008
    %v2441 = vsel %vm2411, %v2376, %v1010
    %v2442 = vsel %vm2411, %v2377, %v1012
    %v2443 = vsel %vm2411, %v2378, %v1014
    %v2444 = vsel %vm2411, %v2379, %v1016
    %v2445 = vsel %vm2411, %v2380, %v1018
    %v2446 = vsel %vm2411, %v2381, %v1020
    %v2447 = vsel %vm2411, %v2382, %v1022
    %v2448 = vsel %vm2411, %v2383, %v1024
    %v2449 = vsel %vm2411, %v2384, %v1026
    %v2450 = vsel %vm2411, %v2385, %v1028
    %v2451 = vsel %vm2411, %v2386, %v1030
    %v2452 = vsel %vm2411, %v2387, %v1032
    %v2453 = vsel %vm2411, %v2388, %v1034
    %v2454 = vsel %vm2411, %v2389, %v1036
    %v2455 = vsel %vm2411, %v2390, %v1038
    %v2456 = vsel %vm2411, %v2391, %v1040
    %v2457 = vsel %vm2411, %v2392, %v1042
    %v2458 = vsel %vm2411, %v2393, %v1044
    %v2459 = vsel %vm2411, %v2394, %v1046
    %v2460 = vsel %vm2411, %v2395, %v1048
    %v2461 = vsel %vm2411, %v2396, %v1050
    %v2462 = vsel %vm2411, %v2397, %v1052
    %v2463 = vsel %vm2411, %v2398, %v1054
    %v2464 = vsel %vm2411, %v2399, %v1056
    %v2465 = vsel %vm2411, %v2400, %v1058
    %v2466 = vsel %vm2411, %v2401, %v1060
    %v2467 = vsel %vm2411, %v2402, %v1062
    %v2468 = vsel %vm2411, %v2403, %v1064
    %v2469 = vsel %vm2411, %v2404, %v1066
    %v2470 = vsel %vm2411, %v2405, %v1068
    %v2471 = vsel %vm2411, %v2406, %v1070
    %v2472 = vsel %vm2411, %v2407, %v1072
    %v2473 = vsel %vm2411, %v2408, %v1074
    %v2474 = vsel %vm2411, %v2409, %v1076
    %v2475 = vsel %vm2411, %v2410, %v1078
    %vm2476 = vcmask 97280
    %v2477 = vsel %vm2476, %v2412, %v1148
    %v2478 = vsel %vm2476, %v2413, %v1150
    %v2479 = vsel %vm2476, %v2414, %v1152
    %v2480 = vsel %vm2476, %v2415, %v1154
    %v2481 = vsel %vm2476, %v2416, %v1156
    %v2482 = vsel %vm2476, %v2417, %v1158
    %v2483 = vsel %vm2476, %v2418, %v1160
    %v2484 = vsel %vm2476, %v2419, %v1162
    %v2485 = vsel %vm2476, %v2420, %v1164
    %v2486 = vsel %vm2476, %v2421, %v1166
    %v2487 = vsel %vm2476, %v2422, %v1168
    %v2488 = vsel %vm2476, %v2423, %v1170
    %v2489 = vsel %vm2476, %v2424, %v1172
    %v2490 = vsel %vm2476, %v2425, %v1174
    %v2491 = vsel %vm2476, %v2426, %v1176
    %v2492 = vsel %vm2476, %v2427, %v1178
    %v2493 = vsel %vm2476, %v2428, %v1180
    %v2494 = vsel %vm2476, %v2429, %v1182
    %v2495 = vsel %vm2476, %v2430, %v1184
    %v2496 = vsel %vm2476, %v2431, %v1186
    %v2497 = vsel %vm2476, %v2432, %v1188
    %v2498 = vsel %vm2476, %v2433, %v1190
    %v2499 = vsel %vm2476, %v2434, %v1192
    %v2500 = vsel %vm2476, %v2435, %v1194
    %v2501 = vsel %vm2476, %v2436, %v1196
    %v2502 = vsel %vm2476, %v2437, %v1198
    %v2503 = vsel %vm2476, %v2438, %v1200
    %v2504 = vsel %vm2476, %v2439, %v1202
    %v2505 = vsel %vm2476, %v2440, %v1204
    %v2506 = vsel %vm2476, %v2441, %v1206
    %v2507 = vsel %vm2476, %v2442, %v1208
    %v2508 = vsel %vm2476, %v2443, %v1210
    %v2509 = vsel %vm2476, %v2444, %v1212
    %v2510 = vsel %vm2476, %v2445, %v1214
    %v2511 = vsel %vm2476, %v2446, %v1216
    %v2512 = vsel %vm2476, %v2447, %v1218
    %v2513 = vsel %vm2476, %v2448, %v1220
    %v2514 = vsel %vm2476, %v2449, %v1222
    %v2515 = vsel %vm2476, %v2450, %v1224
    %v2516 = vsel %vm2476, %v2451, %v1226
    %v2517 = vsel %vm2476, %v2452, %v1228
    %v2518 = vsel %vm2476, %v2453, %v1230
    %v2519 = vsel %vm2476, %v2454, %v1232
    %v2520 = vsel %vm2476, %v2455, %v1234
    %v2521 = vsel %vm2476, %v2456, %v1236
    %v2522 = vsel %vm2476, %v2457, %v1238
    %v2523 = vsel %vm2476, %v2458, %v1240
    %v2524 = vsel %vm2476, %v2459, %v1242
    %v2525 = vsel %vm2476, %v2460, %v1244
    %v2526 = vsel %vm2476, %v2461, %v1246
    %v2527 = vsel %vm2476, %v2462, %v1248
    %v2528 = vsel %vm2476, %v2463, %v1250
    %v2529 = vsel %vm2476, %v2464, %v1252
    %v2530 = vsel %vm2476, %v2465, %v1254
    %v2531 = vsel %vm2476, %v2466, %v1256
    %v2532 = vsel %vm2476, %v2467, %v1258
    %v2533 = vsel %vm2476, %v2468, %v1260
    %v2534 = vsel %vm2476, %v2469, %v1262
    %v2535 = vsel %vm2476, %v2470, %v1264
    %v2536 = vsel %vm2476, %v2471, %v1266
    %v2537 = vsel %vm2476, %v2472, %v1268
    %v2538 = vsel %vm2476, %v2473, %v1270
    %v2539 = vsel %vm2476, %v2474, %v1272
    %v2540 = vsel %vm2476, %v2475, %v1274
    %vm2541 = vcmask 130048
    %v2542 = vsel %vm2541, %v2477, %v1352
    %v2543 = vsel %vm2541, %v2478, %v1354
    %v2544 = vsel %vm2541, %v2479, %v1356
    %v2545 = vsel %vm2541, %v2480, %v1358
    %v2546 = vsel %vm2541, %v2481, %v1360
    %v2547 = vsel %vm2541, %v2482, %v1362
    %v2548 = vsel %vm2541, %v2483, %v1364
    %v2549 = vsel %vm2541, %v2484, %v1366
    %v2550 = vsel %vm2541, %v2485, %v1368
    %v2551 = vsel %vm2541, %v2486, %v1370
    %v2552 = vsel %vm2541, %v2487, %v1372
    %v2553 = vsel %vm2541, %v2488, %v1374
    %v2554 = vsel %vm2541, %v2489, %v1376
    %v2555 = vsel %vm2541, %v2490, %v1378
    %v2556 = vsel %vm2541, %v2491, %v1380
    %v2557 = vsel %vm2541, %v2492, %v1382
    %v2558 = vsel %vm2541, %v2493, %v1384
    %v2559 = vsel %vm2541, %v2494, %v1386
    %v2560 = vsel %vm2541, %v2495, %v1388
    %v2561 = vsel %vm2541, %v2496, %v1390
    %v2562 = vsel %vm2541, %v2497, %v1392
    %v2563 = vsel %vm2541, %v2498, %v1394
    %v2564 = vsel %vm2541, %v2499, %v1396
    %v2565 = vsel %vm2541, %v2500, %v1398
    %v2566 = vsel %vm2541, %v2501, %v1400
    %v2567 = vsel %vm2541, %v2502, %v1402
    %v2568 = vsel %vm2541, %v2503, %v1404
    %v2569 = vsel %vm2541, %v2504, %v1406
    %v2570 = vsel %vm2541, %v2505, %v1408
    %v2571 = vsel %vm2541, %v2506, %v1410
    %v2572 = vsel %vm2541, %v2507, %v1412
    %v2573 = vsel %vm2541, %v2508, %v1414
    %v2574 = vsel %vm2541, %v2509, %v1416
    %v2575 = vsel %vm2541, %v2510, %v1418
    %v2576 = vsel %vm2541, %v2511, %v1420
    %v2577 = vsel %vm2541, %v2512, %v1422
    %v2578 = vsel %vm2541, %v2513, %v1424
    %v2579 = vsel %vm2541, %v2514, %v1426
    %v2580 = vsel %vm2541, %v2515, %v1428
    %v2581 = vsel %vm2541, %v2516, %v1430
    %v2582 = vsel %vm2541, %v2517, %v1432
    %v2583 = vsel %vm2541, %v2518, %v1434
    %v2584 = vsel %vm2541, %v2519, %v1436
    %v2585 = vsel %vm2541, %v2520, %v1438
    %v2586 = vsel %vm2541, %v2521, %v1440
    %v2587 = vsel %vm2541, %v2522, %v1442
    %v2588 = vsel %vm2541, %v2523, %v1444
    %v2589 = vsel %vm2541, %v2524, %v1446
    %v2590 = vsel %vm2541, %v2525, %v1448
    %v2591 = vsel %vm2541, %v2526, %v1450
    %v2592 = vsel %vm2541, %v2527, %v1452
    %v2593 = vsel %vm2541, %v2528, %v1454
    %v2594 = vsel %vm2541, %v2529, %v1456
    %v2595 = vsel %vm2541, %v2530, %v1458
    %v2596 = vsel %vm2541, %v2531, %v1460
    %v2597 = vsel %vm2541, %v2532, %v1462
    %v2598 = vsel %vm2541, %v2533, %v1464
    %v2599 = vsel %vm2541, %v2534, %v1466
    %v2600 = vsel %vm2541, %v2535, %v1468
    %v2601 = vsel %vm2541, %v2536, %v1470
    %v2602 = vsel %vm2541, %v2537, %v1472
    %v2603 = vsel %vm2541, %v2538, %v1474
    %v2604 = vsel %vm2541, %v2539, %v1476
    %v2605 = vsel %vm2541, %v2540, %v1478
    %vm2606 = vcmask 162816
    %v2607 = vsel %vm2606, %v2542, %v1554
    %v2608 = vsel %vm2606, %v2543, %v1556
    %v2609 = vsel %vm2606, %v2544, %v1558
    %v2610 = vsel %vm2606, %v2545, %v1560
    %v2611 = vsel %vm2606, %v2546, %v1562
    %v2612 = vsel %vm2606, %v2547, %v1564
    %v2613 = vsel %vm2606, %v2548, %v1566
    %v2614 = vsel %vm2606, %v2549, %v1568
    %v2615 = vsel %vm2606, %v2550, %v1570
    %v2616 = vsel %vm2606, %v2551, %v1572
    %v2617 = vsel %vm2606, %v2552, %v1574
    %v2618 = vsel %vm2606, %v2553, %v1576
    %v2619 = vsel %vm2606, %v2554, %v1578
    %v2620 = vsel %vm2606, %v2555, %v1580
    %v2621 = vsel %vm2606, %v2556, %v1582
    %v2622 = vsel %vm2606, %v2557, %v1584
    %v2623 = vsel %vm2606, %v2558, %v1586
    %v2624 = vsel %vm2606, %v2559, %v1588
    %v2625 = vsel %vm2606, %v2560, %v1590
    %v2626 = vsel %vm2606, %v2561, %v1592
    %v2627 = vsel %vm2606, %v2562, %v1594
    %v2628 = vsel %vm2606, %v2563, %v1596
    %v2629 = vsel %vm2606, %v2564, %v1598
    %v2630 = vsel %vm2606, %v2565, %v1600
    %v2631 = vsel %vm2606, %v2566, %v1602
    %v2632 = vsel %vm2606, %v2567, %v1604
    %v2633 = vsel %vm2606, %v2568, %v1606
    %v2634 = vsel %vm2606, %v2569, %v1608
    %v2635 = vsel %vm2606, %v2570, %v1610
    %v2636 = vsel %vm2606, %v2571, %v1612
    %v2637 = vsel %vm2606, %v2572, %v1614
    %v2638 = vsel %vm2606, %v2573, %v1616
    %v2639 = vsel %vm2606, %v2574, %v1618
    %v2640 = vsel %vm2606, %v2575, %v1620
    %v2641 = vsel %vm2606, %v2576, %v1622
    %v2642 = vsel %vm2606, %v2577, %v1624
    %v2643 = vsel %vm2606, %v2578, %v1626
    %v2644 = vsel %vm2606, %v2579, %v1628
    %v2645 = vsel %vm2606, %v2580, %v1630
    %v2646 = vsel %vm2606, %v2581, %v1632
    %v2647 = vsel %vm2606, %v2582, %v1634
    %v2648 = vsel %vm2606, %v2583, %v1636
    %v2649 = vsel %vm2606, %v2584, %v1638
    %v2650 = vsel %vm2606, %v2585, %v1640
    %v2651 = vsel %vm2606, %v2586, %v1642
    %v2652 = vsel %vm2606, %v2587, %v1644
    %v2653 = vsel %vm2606, %v2588, %v1646
    %v2654 = vsel %vm2606, %v2589, %v1648
    %v2655 = vsel %vm2606, %v2590, %v1650
    %v2656 = vsel %vm2606, %v2591, %v1652
    %v2657 = vsel %vm2606, %v2592, %v1654
    %v2658 = vsel %vm2606, %v2593, %v1656
    %v2659 = vsel %vm2606, %v2594, %v1658
    %v2660 = vsel %vm2606, %v2595, %v1660
    %v2661 = vsel %vm2606, %v2596, %v1662
    %v2662 = vsel %vm2606, %v2597, %v1664
    %v2663 = vsel %vm2606, %v2598, %v1666
    %v2664 = vsel %vm2606, %v2599, %v1668
    %v2665 = vsel %vm2606, %v2600, %v1670
    %v2666 = vsel %vm2606, %v2601, %v1672
    %v2667 = vsel %vm2606, %v2602, %v1674
    %v2668 = vsel %vm2606, %v2603, %v1676
    %v2669 = vsel %vm2606, %v2604, %v1678
    %v2670 = vsel %vm2606, %v2605, %v1680
    %vm2671 = vcmask 195584
    %v2672 = vsel %vm2671, %v2607, %v1750
    %v2673 = vsel %vm2671, %v2608, %v1752
    %v2674 = vsel %vm2671, %v2609, %v1754
    %v2675 = vsel %vm2671, %v2610, %v1756
    %v2676 = vsel %vm2671, %v2611, %v1758
    %v2677 = vsel %vm2671, %v2612, %v1760
    %v2678 = vsel %vm2671, %v2613, %v1762
    %v2679 = vsel %vm2671, %v2614, %v1764
    %v2680 = vsel %vm2671, %v2615, %v1766
    %v2681 = vsel %vm2671, %v2616, %v1768
    %v2682 = vsel %vm2671, %v2617, %v1770
    %v2683 = vsel %vm2671, %v2618, %v1772
    %v2684 = vsel %vm2671, %v2619, %v1774
    %v2685 = vsel %vm2671, %v2620, %v1776
    %v2686 = vsel %vm2671, %v2621, %v1778
    %v2687 = vsel %vm2671, %v2622, %v1780
    %v2688 = vsel %vm2671, %v2623, %v1782
    %v2689 = vsel %vm2671, %v2624, %v1784
    %v2690 = vsel %vm2671, %v2625, %v1786
    %v2691 = vsel %vm2671, %v2626, %v1788
    %v2692 = vsel %vm2671, %v2627, %v1790
    %v2693 = vsel %vm2671, %v2628, %v1792
    %v2694 = vsel %vm2671, %v2629, %v1794
    %v2695 = vsel %vm2671, %v2630, %v1796
    %v2696 = vsel %vm2671, %v2631, %v1798
    %v2697 = vsel %vm2671, %v2632, %v1800
    %v2698 = vsel %vm2671, %v2633, %v1802
    %v2699 = vsel %vm2671, %v2634, %v1804
    %v2700 = vsel %vm2671, %v2635, %v1806
    %v2701 = vsel %vm2671, %v2636, %v1808
    %v2702 = vsel %vm2671, %v2637, %v1810
    %v2703 = vsel %vm2671, %v2638, %v1812
    %v2704 = vsel %vm2671, %v2639, %v1814
    %v2705 = vsel %vm2671, %v2640, %v1816
    %v2706 = vsel %vm2671, %v2641, %v1818
    %v2707 = vsel %vm2671, %v2642, %v1820
    %v2708 = vsel %vm2671, %v2643, %v1822
    %v2709 = vsel %vm2671, %v2644, %v1824
    %v2710 = vsel %vm2671, %v2645, %v1826
    %v2711 = vsel %vm2671, %v2646, %v1828
    %v2712 = vsel %vm2671, %v2647, %v1830
    %v2713 = vsel %vm2671, %v2648, %v1832
    %v2714 = vsel %vm2671, %v2649, %v1834
    %v2715 = vsel %vm2671, %v2650, %v1836
    %v2716 = vsel %vm2671, %v2651, %v1838
    %v2717 = vsel %vm2671, %v2652, %v1840
    %v2718 = vsel %vm2671, %v2653, %v1842
    %v2719 = vsel %vm2671, %v2654, %v1844
    %v2720 = vsel %vm2671, %v2655, %v1846
    %v2721 = vsel %vm2671, %v2656, %v1848
    %v2722 = vsel %vm2671, %v2657, %v1850
    %v2723 = vsel %vm2671, %v2658, %v1852
    %v2724 = vsel %vm2671, %v2659, %v1854
    %v2725 = vsel %vm2671, %v2660, %v1856
    %v2726 = vsel %vm2671, %v2661, %v1858
    %v2727 = vsel %vm2671, %v2662, %v1860
    %v2728 = vsel %vm2671, %v2663, %v1862
    %v2729 = vsel %vm2671, %v2664, %v1864
    %v2730 = vsel %vm2671, %v2665, %v1866
    %v2731 = vsel %vm2671, %v2666, %v1868
    %v2732 = vsel %vm2671, %v2667, %v1870
    %v2733 = vsel %vm2671, %v2668, %v1872
    %v2734 = vsel %vm2671, %v2669, %v1874
    %v2735 = vsel %vm2671, %v2670, %v1876
    %vm2736 = vcmask 228352
    %v2737 = vsel %vm2736, %v2672, %v1954
    %v2738 = vsel %vm2736, %v2673, %v1956
    %v2739 = vsel %vm2736, %v2674, %v1958
    %v2740 = vsel %vm2736, %v2675, %v1960
    %v2741 = vsel %vm2736, %v2676, %v1962
    %v2742 = vsel %vm2736, %v2677, %v1964
    %v2743 = vsel %vm2736, %v2678, %v1966
    %v2744 = vsel %vm2736, %v2679, %v1968
    %v2745 = vsel %vm2736, %v2680, %v1970
    %v2746 = vsel %vm2736, %v2681, %v1972
    %v2747 = vsel %vm2736, %v2682, %v1974
    %v2748 = vsel %vm2736, %v2683, %v1976
    %v2749 = vsel %vm2736, %v2684, %v1978
    %v2750 = vsel %vm2736, %v2685, %v1980
    %v2751 = vsel %vm2736, %v2686, %v1982
    %v2752 = vsel %vm2736, %v2687, %v1984
    %v2753 = vsel %vm2736, %v2688, %v1986
    %v2754 = vsel %vm2736, %v2689, %v1988
    %v2755 = vsel %vm2736, %v2690, %v1990
    %v2756 = vsel %vm2736, %v2691, %v1992
    %v2757 = vsel %vm2736, %v2692, %v1994
    %v2758 = vsel %vm2736, %v2693, %v1996
    %v2759 = vsel %vm2736, %v2694, %v1998
    %v2760 = vsel %vm2736, %v2695, %v2000
    %v2761 = vsel %vm2736, %v2696, %v2002
    %v2762 = vsel %vm2736, %v2697, %v2004
    %v2763 = vsel %vm2736, %v2698, %v2006
    %v2764 = vsel %vm2736, %v2699, %v2008
    %v2765 = vsel %vm2736, %v2700, %v2010
    %v2766 = vsel %vm2736, %v2701, %v2012
    %v2767 = vsel %vm2736, %v2702, %v2014
    %v2768 = vsel %vm2736, %v2703, %v2016
    %v2769 = vsel %vm2736, %v2704, %v2018
    %v2770 = vsel %vm2736, %v2705, %v2020
    %v2771 = vsel %vm2736, %v2706, %v2022
    %v2772 = vsel %vm2736, %v2707, %v2024
    %v2773 = vsel %vm2736, %v2708, %v2026
    %v2774 = vsel %vm2736, %v2709, %v2028
    %v2775 = vsel %vm2736, %v2710, %v2030
    %v2776 = vsel %vm2736, %v2711, %v2032
    %v2777 = vsel %vm2736, %v2712, %v2034
    %v2778 = vsel %vm2736, %v2713, %v2036
    %v2779 = vsel %vm2736, %v2714, %v2038
    %v2780 = vsel %vm2736, %v2715, %v2040
    %v2781 = vsel %vm2736, %v2716, %v2042
    %v2782 = vsel %vm2736, %v2717, %v2044
    %v2783 = vsel %vm2736, %v2718, %v2046
    %v2784 = vsel %vm2736, %v2719, %v2048
    %v2785 = vsel %vm2736, %v2720, %v2050
    %v2786 = vsel %vm2736, %v2721, %v2052
    %v2787 = vsel %vm2736, %v2722, %v2054
    %v2788 = vsel %vm2736, %v2723, %v2056
    %v2789 = vsel %vm2736, %v2724, %v2058
    %v2790 = vsel %vm2736, %v2725, %v2060
    %v2791 = vsel %vm2736, %v2726, %v2062
    %v2792 = vsel %vm2736, %v2727, %v2064
    %v2793 = vsel %vm2736, %v2728, %v2066
    %v2794 = vsel %vm2736, %v2729, %v2068
    %v2795 = vsel %vm2736, %v2730, %v2070
    %v2796 = vsel %vm2736, %v2731, %v2072
    %v2797 = vsel %vm2736, %v2732, %v2074
    %v2798 = vsel %vm2736, %v2733, %v2076
    %v2799 = vsel %vm2736, %v2734, %v2078
    %v2800 = vsel %vm2736, %v2735, %v2080
    %vm2801 = vcmask 261120
    %v2802 = vsel %vm2801, %v2737, %v2156
    %v2803 = vsel %vm2801, %v2738, %v2158
    %v2804 = vsel %vm2801, %v2739, %v2160
    %v2805 = vsel %vm2801, %v2740, %v2162
    %v2806 = vsel %vm2801, %v2741, %v2164
    %v2807 = vsel %vm2801, %v2742, %v2166
    %v2808 = vsel %vm2801, %v2743, %v2168
    %v2809 = vsel %vm2801, %v2744, %v2170
    %v2810 = vsel %vm2801, %v2745, %v2172
    %v2811 = vsel %vm2801, %v2746, %v2174
    %v2812 = vsel %vm2801, %v2747, %v2176
    %v2813 = vsel %vm2801, %v2748, %v2178
    %v2814 = vsel %vm2801, %v2749, %v2180
    %v2815 = vsel %vm2801, %v2750, %v2182
    %v2816 = vsel %vm2801, %v2751, %v2184
    %v2817 = vsel %vm2801, %v2752, %v2186
    %v2818 = vsel %vm2801, %v2753, %v2188
    %v2819 = vsel %vm2801, %v2754, %v2190
    %v2820 = vsel %vm2801, %v2755, %v2192
    %v2821 = vsel %vm2801, %v2756, %v2194
    %v2822 = vsel %vm2801, %v2757, %v2196
    %v2823 = vsel %vm2801, %v2758, %v2198
    %v2824 = vsel %vm2801, %v2759, %v2200
    %v2825 = vsel %vm2801, %v2760, %v2202
    %v2826 = vsel %vm2801, %v2761, %v2204
    %v2827 = vsel %vm2801, %v2762, %v2206
    %v2828 = vsel %vm2801, %v2763, %v2208
    %v2829 = vsel %vm2801, %v2764, %v2210
    %v2830 = vsel %vm2801, %v2765, %v2212
    %v2831 = vsel %vm2801, %v2766, %v2214
    %v2832 = vsel %vm2801, %v2767, %v2216
    %v2833 = vsel %vm2801, %v2768, %v2218
    %v2834 = vsel %vm2801, %v2769, %v2220
    %v2835 = vsel %vm2801, %v2770, %v2222
    %v2836 = vsel %vm2801, %v2771, %v2224
    %v2837 = vsel %vm2801, %v2772, %v2226
    %v2838 = vsel %vm2801, %v2773, %v2228
    %v2839 = vsel %vm2801, %v2774, %v2230
    %v2840 = vsel %vm2801, %v2775, %v2232
    %v2841 = vsel %vm2801, %v2776, %v2234
    %v2842 = vsel %vm2801, %v2777, %v2236
    %v2843 = vsel %vm2801, %v2778, %v2238
    %v2844 = vsel %vm2801, %v2779, %v2240
    %v2845 = vsel %vm2801, %v2780, %v2242
    %v2846 = vsel %vm2801, %v2781, %v2244
    %v2847 = vsel %vm2801, %v2782, %v2246
    %v2848 = vsel %vm2801, %v2783, %v2248
    %v2849 = vsel %vm2801, %v2784, %v2250
    %v2850 = vsel %vm2801, %v2785, %v2252
    %v2851 = vsel %vm2801, %v2786, %v2254
    %v2852 = vsel %vm2801, %v2787, %v2256
    %v2853 = vsel %vm2801, %v2788, %v2258
    %v2854 = vsel %vm2801, %v2789, %v2260
    %v2855 = vsel %vm2801, %v2790, %v2262
    %v2856 = vsel %vm2801, %v2791, %v2264
    %v2857 = vsel %vm2801, %v2792, %v2266
    %v2858 = vsel %vm2801, %v2793, %v2268
    %v2859 = vsel %vm2801, %v2794, %v2270
    %v2860 = vsel %vm2801, %v2795, %v2272
    %v2861 = vsel %vm2801, %v2796, %v2274
    %v2862 = vsel %vm2801, %v2797, %v2276
    %v2863 = vsel %vm2801, %v2798, %v2278
    %v2864 = vsel %vm2801, %v2799, %v2280
    %v2865 = vsel %vm2801, %v2800, %v2282
    %v2866 = vpack.c.bf16 %v2803, %v2802
    %v2867 = vpack.c.bf16 %v2805, %v2804
    %v2868 = vpack.c.bf16 %v2807, %v2806
    %v2869 = vpack.c.bf16 %v2809, %v2808
    %v2870 = vpack.c.bf16 %v2811, %v2810
    %v2871 = vpack.c.bf16 %v2813, %v2812
    %v2872 = vpack.c.bf16 %v2815, %v2814
    %v2873 = vpack.c.bf16 %v2817, %v2816
    %v2874 = vpack.c.bf16 %v2819, %v2818
    %v2875 = vpack.c.bf16 %v2821, %v2820
    %v2876 = vpack.c.bf16 %v2823, %v2822
    %v2877 = vpack.c.bf16 %v2825, %v2824
    %v2878 = vpack.c.bf16 %v2827, %v2826
    %v2879 = vpack.c.bf16 %v2829, %v2828
    %v2880 = vpack.c.bf16 %v2831, %v2830
    %v2881 = vpack.c.bf16 %v2833, %v2832
    %v2882 = vpack.c.bf16 %v2835, %v2834
    %v2883 = vpack.c.bf16 %v2837, %v2836
    %v2884 = vpack.c.bf16 %v2839, %v2838
    %v2885 = vpack.c.bf16 %v2841, %v2840
    %v2886 = vpack.c.bf16 %v2843, %v2842
    %v2887 = vpack.c.bf16 %v2845, %v2844
    %v2888 = vpack.c.bf16 %v2847, %v2846
    %v2889 = vpack.c.bf16 %v2849, %v2848
    %v2890 = vpack.c.bf16 %v2851, %v2850
    %v2891 = vpack.c.bf16 %v2853, %v2852
    %v2892 = vpack.c.bf16 %v2855, %v2854
    %v2893 = vpack.c.bf16 %v2857, %v2856
    %v2894 = vpack.c.bf16 %v2859, %v2858
    %v2895 = vpack.c.bf16 %v2861, %v2860
    %v2896 = vpack.c.bf16 %v2863, %v2862
    %v2897 = vpack.c.bf16 %v2865, %v2864
    %v2898 = vld [vmem:[%s1] sm:$0xf]
    %v2899 = vld [vmem:[%s1 + $0x4] sm:$0xf]
    %v2900 = vld [vmem:[%s1 + $0x8] sm:$0xf]
    %v2901 = vld [vmem:[%s1 + $0xc] sm:$0xf]
    %v2902 = vld [vmem:[%s1 + $0x10] sm:$0x3]
    %v2908 = vunpack.c.l.b16 %v2898
    %v2909 = vunpack.c.l.b16 %v2899
    %v2910 = vunpack.c.l.b16 %v2900
    %v2911 = vunpack.c.l.b16 %v2901
    %v2912 = vunpack.c.l.b16 %v2902
    %v2913 = vpack.c.b16 %v2909, %v2908
    %v2914 = vpack.c.b16 %v2911, %v2910
    %v2915 = vpack.c.b16 %v2912, %v2912
    %vm2918 = vcmask 293888
    %v2920 = vsel %vm2918, %v2866, 0
    %v2923 = vsel %vm2918, %v2867, 0
    %v2926 = vsel %vm2918, %v2868, 0
    %v2929 = vsel %vm2918, %v2869, 0
    %v2932 = vsel %vm2918, %v2870, 0
    %v2935 = vsel %vm2918, %v2871, 0
    %v2938 = vsel %vm2918, %v2872, 0
    %v2941 = vsel %vm2918, %v2873, 0
    %v2944 = vsel %vm2918, %v2874, 0
    %v2947 = vsel %vm2918, %v2875, 0
    %v2950 = vsel %vm2918, %v2876, 0
    %v2953 = vsel %vm2918, %v2877, 0
    %v2956 = vsel %vm2918, %v2878, 0
    %v2959 = vsel %vm2918, %v2879, 0
    %v2962 = vsel %vm2918, %v2880, 0
    %v2965 = vsel %vm2918, %v2881, 0
    %v2968 = vsel %vm2918, %v2882, 0
    %v2971 = vsel %vm2918, %v2883, 0
    %v2974 = vsel %vm2918, %v2884, 0
    %v2977 = vsel %vm2918, %v2885, 0
    %v2980 = vsel %vm2918, %v2886, 0
    %v2983 = vsel %vm2918, %v2887, 0
    %v2986 = vsel %vm2918, %v2888, 0
    %v2989 = vsel %vm2918, %v2889, 0
    %v2992 = vsel %vm2918, %v2890, 0
    %v2995 = vsel %vm2918, %v2891, 0
    %v2998 = vsel %vm2918, %v2892, 0
    %v3001 = vsel %vm2918, %v2893, 0
    %v3004 = vsel %vm2918, %v2894, 0
    %v3007 = vsel %vm2918, %v2895, 0
    %v3010 = vsel %vm2918, %v2896, 0
    %v3013 = vsel %vm2918, %v2897, 0
    %vm3015 = vcmask 1041408
    %v3017 = vsel %vm3015, %v2915, 0
    %3019 = vmatpush.bf16.msra.mxu0 0
    %3020 = vmatpush.bf16.msra.mxu0 0
    %3021 = vmatpush.bf16.msra.mxu0 0
    %3022 = vmatpush.bf16.msra.mxu0 0
    %3023 = vmatpush.bf16.msra.mxu0 0
    %3024 = vmatpush.bf16.msra.mxu0 %v3017
    %3025 = vmatpush.bf16.msra.mxu0 %v2914
    %3026 = vmatpush.bf16.msra.mxu0 %v2913
    %3027 = vmatmul.bf16.gmra.mxu0 %v2920
    %v3028 = vpop.f32.mrf.mxu0
    %v3029 = vadd.f32 0.0, %v3028
    %v3030 = vpop.f32.mrf.mxu0
    %v3031 = vadd.f32 0.0, %v3030
    %3032 = vmatmul.bf16.gmra.mxu0 %v2923
    %v3033 = vpop.f32.mrf.mxu0
    %v3034 = vadd.f32 0.0, %v3033
    %v3035 = vpop.f32.mrf.mxu0
    %v3036 = vadd.f32 0.0, %v3035
    %3037 = vmatmul.bf16.gmra.mxu0 %v2926
    %v3038 = vpop.f32.mrf.mxu0
    %v3039 = vadd.f32 0.0, %v3038
    %v3040 = vpop.f32.mrf.mxu0
    %v3041 = vadd.f32 0.0, %v3040
    %3042 = vmatmul.bf16.gmra.mxu0 %v2929
    %v3043 = vpop.f32.mrf.mxu0
    %v3044 = vadd.f32 0.0, %v3043
    %v3045 = vpop.f32.mrf.mxu0
    %v3046 = vadd.f32 0.0, %v3045
    %3047 = vmatmul.bf16.gmra.mxu0 %v2932
    %v3048 = vpop.f32.mrf.mxu0
    %v3049 = vadd.f32 0.0, %v3048
    %v3050 = vpop.f32.mrf.mxu0
    %v3051 = vadd.f32 0.0, %v3050
    %3052 = vmatmul.bf16.gmra.mxu0 %v2935
    %v3053 = vpop.f32.mrf.mxu0
    %v3054 = vadd.f32 0.0, %v3053
    %v3055 = vpop.f32.mrf.mxu0
    %v3056 = vadd.f32 0.0, %v3055
    %3057 = vmatmul.bf16.gmra.mxu0 %v2938
    %v3058 = vpop.f32.mrf.mxu0
    %v3059 = vadd.f32 0.0, %v3058
    %v3060 = vpop.f32.mrf.mxu0
    %v3061 = vadd.f32 0.0, %v3060
    %3062 = vmatmul.bf16.gmra.mxu0 %v2941
    %v3063 = vpop.f32.mrf.mxu0
    %v3064 = vadd.f32 0.0, %v3063
    %v3065 = vpop.f32.mrf.mxu0
    %v3066 = vadd.f32 0.0, %v3065
    %3067 = vmatmul.bf16.gmra.mxu0 %v2944
    %v3068 = vpop.f32.mrf.mxu0
    %v3069 = vadd.f32 0.0, %v3068
    %v3070 = vpop.f32.mrf.mxu0
    %v3071 = vadd.f32 0.0, %v3070
    %3072 = vmatmul.bf16.gmra.mxu0 %v2947
    %v3073 = vpop.f32.mrf.mxu0
    %v3074 = vadd.f32 0.0, %v3073
    %v3075 = vpop.f32.mrf.mxu0
    %v3076 = vadd.f32 0.0, %v3075
    %3077 = vmatmul.bf16.gmra.mxu0 %v2950
    %v3078 = vpop.f32.mrf.mxu0
    %v3079 = vadd.f32 0.0, %v3078
    %v3080 = vpop.f32.mrf.mxu0
    %v3081 = vadd.f32 0.0, %v3080
    %3082 = vmatmul.bf16.gmra.mxu0 %v2953
    %v3083 = vpop.f32.mrf.mxu0
    %v3084 = vadd.f32 0.0, %v3083
    %v3085 = vpop.f32.mrf.mxu0
    %v3086 = vadd.f32 0.0, %v3085
    %3087 = vmatmul.bf16.gmra.mxu0 %v2956
    %v3088 = vpop.f32.mrf.mxu0
    %v3089 = vadd.f32 0.0, %v3088
    %v3090 = vpop.f32.mrf.mxu0
    %v3091 = vadd.f32 0.0, %v3090
    %3092 = vmatmul.bf16.gmra.mxu0 %v2959
    %v3093 = vpop.f32.mrf.mxu0
    %v3094 = vadd.f32 0.0, %v3093
    %v3095 = vpop.f32.mrf.mxu0
    %v3096 = vadd.f32 0.0, %v3095
    %3097 = vmatmul.bf16.gmra.mxu0 %v2962
    %v3098 = vpop.f32.mrf.mxu0
    %v3099 = vadd.f32 0.0, %v3098
    %v3100 = vpop.f32.mrf.mxu0
    %v3101 = vadd.f32 0.0, %v3100
    %3102 = vmatmul.bf16.gmra.mxu0 %v2965
    %v3103 = vpop.f32.mrf.mxu0
    %v3104 = vadd.f32 0.0, %v3103
    %v3105 = vpop.f32.mrf.mxu0
    %v3106 = vadd.f32 0.0, %v3105
    %3107 = vmatmul.bf16.gmra.mxu0 %v2968
    %v3108 = vpop.f32.mrf.mxu0
    %v3109 = vadd.f32 0.0, %v3108
    %v3110 = vpop.f32.mrf.mxu0
    %v3111 = vadd.f32 0.0, %v3110
    %3112 = vmatmul.bf16.gmra.mxu0 %v2971
    %v3113 = vpop.f32.mrf.mxu0
    %v3114 = vadd.f32 0.0, %v3113
    %v3115 = vpop.f32.mrf.mxu0
    %v3116 = vadd.f32 0.0, %v3115
    %3117 = vmatmul.bf16.gmra.mxu0 %v2974
    %v3118 = vpop.f32.mrf.mxu0
    %v3119 = vadd.f32 0.0, %v3118
    %v3120 = vpop.f32.mrf.mxu0
    %v3121 = vadd.f32 0.0, %v3120
    %3122 = vmatmul.bf16.gmra.mxu0 %v2977
    %v3123 = vpop.f32.mrf.mxu0
    %v3124 = vadd.f32 0.0, %v3123
    %v3125 = vpop.f32.mrf.mxu0
    %v3126 = vadd.f32 0.0, %v3125
    %3127 = vmatmul.bf16.gmra.mxu0 %v2980
    %v3128 = vpop.f32.mrf.mxu0
    %v3129 = vadd.f32 0.0, %v3128
    %v3130 = vpop.f32.mrf.mxu0
    %v3131 = vadd.f32 0.0, %v3130
    %3132 = vmatmul.bf16.gmra.mxu0 %v2983
    %v3133 = vpop.f32.mrf.mxu0
    %v3134 = vadd.f32 0.0, %v3133
    %v3135 = vpop.f32.mrf.mxu0
    %v3136 = vadd.f32 0.0, %v3135
    %3137 = vmatmul.bf16.gmra.mxu0 %v2986
    %v3138 = vpop.f32.mrf.mxu0
    %v3139 = vadd.f32 0.0, %v3138
    %v3140 = vpop.f32.mrf.mxu0
    %v3141 = vadd.f32 0.0, %v3140
    %3142 = vmatmul.bf16.gmra.mxu0 %v2989
    %v3143 = vpop.f32.mrf.mxu0
    %v3144 = vadd.f32 0.0, %v3143
    %v3145 = vpop.f32.mrf.mxu0
    %v3146 = vadd.f32 0.0, %v3145
    %3147 = vmatmul.bf16.gmra.mxu0 %v2992
    %v3148 = vpop.f32.mrf.mxu0
    %v3149 = vadd.f32 0.0, %v3148
    %v3150 = vpop.f32.mrf.mxu0
    %v3151 = vadd.f32 0.0, %v3150
    %3152 = vmatmul.bf16.gmra.mxu0 %v2995
    %v3153 = vpop.f32.mrf.mxu0
    %v3154 = vadd.f32 0.0, %v3153
    %v3155 = vpop.f32.mrf.mxu0
    %v3156 = vadd.f32 0.0, %v3155
    %3157 = vmatmul.bf16.gmra.mxu0 %v2998
    %v3158 = vpop.f32.mrf.mxu0
    %v3159 = vadd.f32 0.0, %v3158
    %v3160 = vpop.f32.mrf.mxu0
    %v3161 = vadd.f32 0.0, %v3160
    %3162 = vmatmul.bf16.gmra.mxu0 %v3001
    %v3163 = vpop.f32.mrf.mxu0
    %v3164 = vadd.f32 0.0, %v3163
    %v3165 = vpop.f32.mrf.mxu0
    %v3166 = vadd.f32 0.0, %v3165
    %3167 = vmatmul.bf16.gmra.mxu0 %v3004
    %v3168 = vpop.f32.mrf.mxu0
    %v3169 = vadd.f32 0.0, %v3168
    %v3170 = vpop.f32.mrf.mxu0
    %v3171 = vadd.f32 0.0, %v3170
    %3172 = vmatmul.bf16.gmra.mxu0 %v3007
    %v3173 = vpop.f32.mrf.mxu0
    %v3174 = vadd.f32 0.0, %v3173
    %v3175 = vpop.f32.mrf.mxu0
    %v3176 = vadd.f32 0.0, %v3175
    %3177 = vmatmul.bf16.gmra.mxu0 %v3010
    %v3178 = vpop.f32.mrf.mxu0
    %v3179 = vadd.f32 0.0, %v3178
    %v3180 = vpop.f32.mrf.mxu0
    %v3181 = vadd.f32 0.0, %v3180
    %3182 = vmatmul.bf16.gmra.mxu0 %v3013
    %v3183 = vpop.f32.mrf.mxu0
    %v3184 = vadd.f32 0.0, %v3183
    %v3185 = vpop.f32.mrf.mxu0
    %v3186 = vadd.f32 0.0, %v3185
    %3187 = vdwg.mxu0
    %v3188 = vsel %vm2411, %v3029, 0.0
    %v3189 = vsel %vm2411, %v3031, 0.0
    %v3190 = vadd.f32 %v3188, %v3189
    %v3191 = vsel %vm2411, %v3034, 0.0
    %v3192 = vadd.f32 %v3190, %v3191
    %v3193 = vsel %vm2411, %v3036, 0.0
    %v3194 = vadd.f32 %v3192, %v3193
    %v3195 = vsel %vm2411, %v3039, 0.0
    %v3196 = vadd.f32 %v3194, %v3195
    %v3197 = vsel %vm2411, %v3041, 0.0
    %v3198 = vadd.f32 %v3196, %v3197
    %v3199 = vsel %vm2411, %v3044, 0.0
    %v3200 = vadd.f32 %v3198, %v3199
    %v3201 = vsel %vm2411, %v3046, 0.0
    %v3202 = vadd.f32 %v3200, %v3201
    %v3203 = vsel %vm2411, %v3049, 0.0
    %v3204 = vadd.f32 %v3202, %v3203
    %v3205 = vsel %vm2411, %v3051, 0.0
    %v3206 = vadd.f32 %v3204, %v3205
    %v3207 = vsel %vm2411, %v3054, 0.0
    %v3208 = vadd.f32 %v3206, %v3207
    %v3209 = vsel %vm2411, %v3056, 0.0
    %v3210 = vadd.f32 %v3208, %v3209
    %v3211 = vsel %vm2411, %v3059, 0.0
    %v3212 = vadd.f32 %v3210, %v3211
    %v3213 = vsel %vm2411, %v3061, 0.0
    %v3214 = vadd.f32 %v3212, %v3213
    %v3215 = vsel %vm2411, %v3064, 0.0
    %v3216 = vadd.f32 %v3214, %v3215
    %v3217 = vsel %vm2411, %v3066, 0.0
    %v3218 = vadd.f32 %v3216, %v3217
    %v3219 = vsel %vm2411, %v3069, 0.0
    %v3220 = vadd.f32 %v3218, %v3219
    %v3221 = vsel %vm2411, %v3071, 0.0
    %v3222 = vadd.f32 %v3220, %v3221
    %v3223 = vsel %vm2411, %v3074, 0.0
    %v3224 = vadd.f32 %v3222, %v3223
    %v3225 = vsel %vm2411, %v3076, 0.0
    %v3226 = vadd.f32 %v3224, %v3225
    %v3227 = vsel %vm2411, %v3079, 0.0
    %v3228 = vadd.f32 %v3226, %v3227
    %v3229 = vsel %vm2411, %v3081, 0.0
    %v3230 = vadd.f32 %v3228, %v3229
    %v3231 = vsel %vm2411, %v3084, 0.0
    %v3232 = vadd.f32 %v3230, %v3231
    %v3233 = vsel %vm2411, %v3086, 0.0
    %v3234 = vadd.f32 %v3232, %v3233
    %v3235 = vsel %vm2411, %v3089, 0.0
    %v3236 = vadd.f32 %v3234, %v3235
    %v3237 = vsel %vm2411, %v3091, 0.0
    %v3238 = vadd.f32 %v3236, %v3237
    %v3239 = vsel %vm2411, %v3094, 0.0
    %v3240 = vadd.f32 %v3238, %v3239
    %v3241 = vsel %vm2411, %v3096, 0.0
    %v3242 = vadd.f32 %v3240, %v3241
    %v3243 = vsel %vm2411, %v3099, 0.0
    %v3244 = vadd.f32 %v3242, %v3243
    %v3245 = vsel %vm2411, %v3101, 0.0
    %v3246 = vadd.f32 %v3244, %v3245
    %v3247 = vsel %vm2411, %v3104, 0.0
    %v3248 = vadd.f32 %v3246, %v3247
    %v3249 = vsel %vm2411, %v3106, 0.0
    %v3250 = vadd.f32 %v3248, %v3249
    %v3251 = vsel %vm2411, %v3109, 0.0
    %v3252 = vadd.f32 %v3250, %v3251
    %v3253 = vsel %vm2411, %v3111, 0.0
    %v3254 = vadd.f32 %v3252, %v3253
    %v3255 = vsel %vm2411, %v3114, 0.0
    %v3256 = vadd.f32 %v3254, %v3255
    %v3257 = vsel %vm2411, %v3116, 0.0
    %v3258 = vadd.f32 %v3256, %v3257
    %v3259 = vsel %vm2411, %v3119, 0.0
    %v3260 = vadd.f32 %v3258, %v3259
    %v3261 = vsel %vm2411, %v3121, 0.0
    %v3262 = vadd.f32 %v3260, %v3261
    %v3263 = vsel %vm2411, %v3124, 0.0
    %v3264 = vadd.f32 %v3262, %v3263
    %v3265 = vsel %vm2411, %v3126, 0.0
    %v3266 = vadd.f32 %v3264, %v3265
    %v3267 = vsel %vm2411, %v3129, 0.0
    %v3268 = vadd.f32 %v3266, %v3267
    %v3269 = vsel %vm2411, %v3131, 0.0
    %v3270 = vadd.f32 %v3268, %v3269
    %v3271 = vsel %vm2411, %v3134, 0.0
    %v3272 = vadd.f32 %v3270, %v3271
    %v3273 = vsel %vm2411, %v3136, 0.0
    %v3274 = vadd.f32 %v3272, %v3273
    %v3275 = vsel %vm2411, %v3139, 0.0
    %v3276 = vadd.f32 %v3274, %v3275
    %v3277 = vsel %vm2411, %v3141, 0.0
    %v3278 = vadd.f32 %v3276, %v3277
    %v3279 = vsel %vm2411, %v3144, 0.0
    %v3280 = vadd.f32 %v3278, %v3279
    %v3281 = vsel %vm2411, %v3146, 0.0
    %v3282 = vadd.f32 %v3280, %v3281
    %v3283 = vsel %vm2411, %v3149, 0.0
    %v3284 = vadd.f32 %v3282, %v3283
    %v3285 = vsel %vm2411, %v3151, 0.0
    %v3286 = vadd.f32 %v3284, %v3285
    %v3287 = vsel %vm2411, %v3154, 0.0
    %v3288 = vadd.f32 %v3286, %v3287
    %v3289 = vsel %vm2411, %v3156, 0.0
    %v3290 = vadd.f32 %v3288, %v3289
    %v3291 = vsel %vm2411, %v3159, 0.0
    %v3292 = vadd.f32 %v3290, %v3291
    %v3293 = vsel %vm2411, %v3161, 0.0
    %v3294 = vadd.f32 %v3292, %v3293
    %v3295 = vsel %vm2411, %v3164, 0.0
    %v3296 = vadd.f32 %v3294, %v3295
    %v3297 = vsel %vm2411, %v3166, 0.0
    %v3298 = vadd.f32 %v3296, %v3297
    %v3299 = vsel %vm2411, %v3169, 0.0
    %v3300 = vadd.f32 %v3298, %v3299
    %v3301 = vsel %vm2411, %v3171, 0.0
    %v3302 = vadd.f32 %v3300, %v3301
    %v3303 = vsel %vm2411, %v3174, 0.0
    %v3304 = vadd.f32 %v3302, %v3303
    %v3305 = vsel %vm2411, %v3176, 0.0
    %v3306 = vadd.f32 %v3304, %v3305
    %v3307 = vsel %vm2411, %v3179, 0.0
    %v3308 = vadd.f32 %v3306, %v3307
    %v3309 = vsel %vm2411, %v3181, 0.0
    %v3310 = vadd.f32 %v3308, %v3309
    %v3311 = vsel %vm2411, %v3184, 0.0
    %v3312 = vadd.f32 %v3310, %v3311
    %v3313 = vsel %vm2411, %v3186, 0.0
    %v3314 = vadd.f32 %v3312, %v3313
    %v3315 = vrot.slane %v3314, 4
    %v3316 = vadd.f32 %v3314, %v3315
    %v3317 = vrot.slane %v3316, 2
    %v3318 = vadd.f32 %v3316, %v3317
    %v3319 = vrot.slane %v3318, 1
    %v3320 = vadd.f32 %v3318, %v3319
    %vm3321 = vcmask 57344
    %3322 = vst.msk [vmem:[#allocation3] sm:$0x1] %vm3321, %v3320
    %v3323 = vmul.f32 %v3029, %v3029
    %v3324 = vmul.f32 %v3031, %v3031
    %v3325 = vmul.f32 %v3034, %v3034
    %v3326 = vmul.f32 %v3036, %v3036
    %v3327 = vmul.f32 %v3039, %v3039
    %v3328 = vmul.f32 %v3041, %v3041
    %v3329 = vmul.f32 %v3044, %v3044
    %v3330 = vmul.f32 %v3046, %v3046
    %v3331 = vmul.f32 %v3049, %v3049
    %v3332 = vmul.f32 %v3051, %v3051
    %v3333 = vmul.f32 %v3054, %v3054
    %v3334 = vmul.f32 %v3056, %v3056
    %v3335 = vmul.f32 %v3059, %v3059
    %v3336 = vmul.f32 %v3061, %v3061
    %v3337 = vmul.f32 %v3064, %v3064
    %v3338 = vmul.f32 %v3066, %v3066
    %v3339 = vmul.f32 %v3069, %v3069
    %v3340 = vmul.f32 %v3071, %v3071
    %v3341 = vmul.f32 %v3074, %v3074
    %v3342 = vmul.f32 %v3076, %v3076
    %v3343 = vmul.f32 %v3079, %v3079
    %v3344 = vmul.f32 %v3081, %v3081
    %v3345 = vmul.f32 %v3084, %v3084
    %v3346 = vmul.f32 %v3086, %v3086
    %v3347 = vmul.f32 %v3089, %v3089
    %v3348 = vmul.f32 %v3091, %v3091
    %v3349 = vmul.f32 %v3094, %v3094
    %v3350 = vmul.f32 %v3096, %v3096
    %v3351 = vmul.f32 %v3099, %v3099
    %v3352 = vmul.f32 %v3101, %v3101
    %v3353 = vmul.f32 %v3104, %v3104
    %v3354 = vmul.f32 %v3106, %v3106
    %v3355 = vmul.f32 %v3109, %v3109
    %v3356 = vmul.f32 %v3111, %v3111
    %v3357 = vmul.f32 %v3114, %v3114
    %v3358 = vmul.f32 %v3116, %v3116
    %v3359 = vmul.f32 %v3119, %v3119
    %v3360 = vmul.f32 %v3121, %v3121
    %v3361 = vmul.f32 %v3124, %v3124
    %v3362 = vmul.f32 %v3126, %v3126
    %v3363 = vmul.f32 %v3129, %v3129
    %v3364 = vmul.f32 %v3131, %v3131
    %v3365 = vmul.f32 %v3134, %v3134
    %v3366 = vmul.f32 %v3136, %v3136
    %v3367 = vmul.f32 %v3139, %v3139
    %v3368 = vmul.f32 %v3141, %v3141
    %v3369 = vmul.f32 %v3144, %v3144
    %v3370 = vmul.f32 %v3146, %v3146
    %v3371 = vmul.f32 %v3149, %v3149
    %v3372 = vmul.f32 %v3151, %v3151
    %v3373 = vmul.f32 %v3154, %v3154
    %v3374 = vmul.f32 %v3156, %v3156
    %v3375 = vmul.f32 %v3159, %v3159
    %v3376 = vmul.f32 %v3161, %v3161
    %v3377 = vmul.f32 %v3164, %v3164
    %v3378 = vmul.f32 %v3166, %v3166
    %v3379 = vmul.f32 %v3169, %v3169
    %v3380 = vmul.f32 %v3171, %v3171
    %v3381 = vmul.f32 %v3174, %v3174
    %v3382 = vmul.f32 %v3176, %v3176
    %v3383 = vmul.f32 %v3179, %v3179
    %v3384 = vmul.f32 %v3181, %v3181
    %v3385 = vmul.f32 %v3184, %v3184
    %v3386 = vmul.f32 %v3186, %v3186
    %v3387 = vsel %vm2411, %v3323, 0.0
    %v3388 = vsel %vm2411, %v3324, 0.0
    %v3389 = vadd.f32 %v3387, %v3388
    %v3390 = vsel %vm2411, %v3325, 0.0
    %v3391 = vadd.f32 %v3389, %v3390
    %v3392 = vsel %vm2411, %v3326, 0.0
    %v3393 = vadd.f32 %v3391, %v3392
    %v3394 = vsel %vm2411, %v3327, 0.0
    %v3395 = vadd.f32 %v3393, %v3394
    %v3396 = vsel %vm2411, %v3328, 0.0
    %v3397 = vadd.f32 %v3395, %v3396
    %v3398 = vsel %vm2411, %v3329, 0.0
    %v3399 = vadd.f32 %v3397, %v3398
    %v3400 = vsel %vm2411, %v3330, 0.0
    %v3401 = vadd.f32 %v3399, %v3400
    %v3402 = vsel %vm2411, %v3331, 0.0
    %v3403 = vadd.f32 %v3401, %v3402
    %v3404 = vsel %vm2411, %v3332, 0.0
    %v3405 = vadd.f32 %v3403, %v3404
    %v3406 = vsel %vm2411, %v3333, 0.0
    %v3407 = vadd.f32 %v3405, %v3406
    %v3408 = vsel %vm2411, %v3334, 0.0
    %v3409 = vadd.f32 %v3407, %v3408
    %v3410 = vsel %vm2411, %v3335, 0.0
    %v3411 = vadd.f32 %v3409, %v3410
    %v3412 = vsel %vm2411, %v3336, 0.0
    %v3413 = vadd.f32 %v3411, %v3412
    %v3414 = vsel %vm2411, %v3337, 0.0
    %v3415 = vadd.f32 %v3413, %v3414
    %v3416 = vsel %vm2411, %v3338, 0.0
    %v3417 = vadd.f32 %v3415, %v3416
    %v3418 = vsel %vm2411, %v3339, 0.0
    %v3419 = vadd.f32 %v3417, %v3418
    %v3420 = vsel %vm2411, %v3340, 0.0
    %v3421 = vadd.f32 %v3419, %v3420
    %v3422 = vsel %vm2411, %v3341, 0.0
    %v3423 = vadd.f32 %v3421, %v3422
    %v3424 = vsel %vm2411, %v3342, 0.0
    %v3425 = vadd.f32 %v3423, %v3424
    %v3426 = vsel %vm2411, %v3343, 0.0
    %v3427 = vadd.f32 %v3425, %v3426
    %v3428 = vsel %vm2411, %v3344, 0.0
    %v3429 = vadd.f32 %v3427, %v3428
    %v3430 = vsel %vm2411, %v3345, 0.0
    %v3431 = vadd.f32 %v3429, %v3430
    %v3432 = vsel %vm2411, %v3346, 0.0
    %v3433 = vadd.f32 %v3431, %v3432
    %v3434 = vsel %vm2411, %v3347, 0.0
    %v3435 = vadd.f32 %v3433, %v3434
    %v3436 = vsel %vm2411, %v3348, 0.0
    %v3437 = vadd.f32 %v3435, %v3436
    %v3438 = vsel %vm2411, %v3349, 0.0
    %v3439 = vadd.f32 %v3437, %v3438
    %v3440 = vsel %vm2411, %v3350, 0.0
    %v3441 = vadd.f32 %v3439, %v3440
    %v3442 = vsel %vm2411, %v3351, 0.0
    %v3443 = vadd.f32 %v3441, %v3442
    %v3444 = vsel %vm2411, %v3352, 0.0
    %v3445 = vadd.f32 %v3443, %v3444
    %v3446 = vsel %vm2411, %v3353, 0.0
    %v3447 = vadd.f32 %v3445, %v3446
    %v3448 = vsel %vm2411, %v3354, 0.0
    %v3449 = vadd.f32 %v3447, %v3448
    %v3450 = vsel %vm2411, %v3355, 0.0
    %v3451 = vadd.f32 %v3449, %v3450
    %v3452 = vsel %vm2411, %v3356, 0.0
    %v3453 = vadd.f32 %v3451, %v3452
    %v3454 = vsel %vm2411, %v3357, 0.0
    %v3455 = vadd.f32 %v3453, %v3454
    %v3456 = vsel %vm2411, %v3358, 0.0
    %v3457 = vadd.f32 %v3455, %v3456
    %v3458 = vsel %vm2411, %v3359, 0.0
    %v3459 = vadd.f32 %v3457, %v3458
    %v3460 = vsel %vm2411, %v3360, 0.0
    %v3461 = vadd.f32 %v3459, %v3460
    %v3462 = vsel %vm2411, %v3361, 0.0
    %v3463 = vadd.f32 %v3461, %v3462
    %v3464 = vsel %vm2411, %v3362, 0.0
    %v3465 = vadd.f32 %v3463, %v3464
    %v3466 = vsel %vm2411, %v3363, 0.0
    %v3467 = vadd.f32 %v3465, %v3466
    %v3468 = vsel %vm2411, %v3364, 0.0
    %v3469 = vadd.f32 %v3467, %v3468
    %v3470 = vsel %vm2411, %v3365, 0.0
    %v3471 = vadd.f32 %v3469, %v3470
    %v3472 = vsel %vm2411, %v3366, 0.0
    %v3473 = vadd.f32 %v3471, %v3472
    %v3474 = vsel %vm2411, %v3367, 0.0
    %v3475 = vadd.f32 %v3473, %v3474
    %v3476 = vsel %vm2411, %v3368, 0.0
    %v3477 = vadd.f32 %v3475, %v3476
    %v3478 = vsel %vm2411, %v3369, 0.0
    %v3479 = vadd.f32 %v3477, %v3478
    %v3480 = vsel %vm2411, %v3370, 0.0
    %v3481 = vadd.f32 %v3479, %v3480
    %v3482 = vsel %vm2411, %v3371, 0.0
    %v3483 = vadd.f32 %v3481, %v3482
    %v3484 = vsel %vm2411, %v3372, 0.0
    %v3485 = vadd.f32 %v3483, %v3484
    %v3486 = vsel %vm2411, %v3373, 0.0
    %v3487 = vadd.f32 %v3485, %v3486
    %v3488 = vsel %vm2411, %v3374, 0.0
    %v3489 = vadd.f32 %v3487, %v3488
    %v3490 = vsel %vm2411, %v3375, 0.0
    %v3491 = vadd.f32 %v3489, %v3490
    %v3492 = vsel %vm2411, %v3376, 0.0
    %v3493 = vadd.f32 %v3491, %v3492
    %v3494 = vsel %vm2411, %v3377, 0.0
    %v3495 = vadd.f32 %v3493, %v3494
    %v3496 = vsel %vm2411, %v3378, 0.0
    %v3497 = vadd.f32 %v3495, %v3496
    %v3498 = vsel %vm2411, %v3379, 0.0
    %v3499 = vadd.f32 %v3497, %v3498
    %v3500 = vsel %vm2411, %v3380, 0.0
    %v3501 = vadd.f32 %v3499, %v3500
    %v3502 = vsel %vm2411, %v3381, 0.0
    %v3503 = vadd.f32 %v3501, %v3502
    %v3504 = vsel %vm2411, %v3382, 0.0
    %v3505 = vadd.f32 %v3503, %v3504
    %v3506 = vsel %vm2411, %v3383, 0.0
    %v3507 = vadd.f32 %v3505, %v3506
    %v3508 = vsel %vm2411, %v3384, 0.0
    %v3509 = vadd.f32 %v3507, %v3508
    %v3510 = vsel %vm2411, %v3385, 0.0
    %v3511 = vadd.f32 %v3509, %v3510
    %v3512 = vsel %vm2411, %v3386, 0.0
    %v3513 = vadd.f32 %v3511, %v3512
    %v3514 = vrot.slane %v3513, 4
    %v3515 = vadd.f32 %v3513, %v3514
    %v3516 = vrot.slane %v3515, 2
    %v3517 = vadd.f32 %v3515, %v3516
    %v3518 = vrot.slane %v3517, 1
    %v3519 = vadd.f32 %v3517, %v3518
    %3520 = vst.msk [vmem:[#allocation5] sm:$0x1] %vm3321, %v3519
    %3521 = vst.msk [vmem:[%s3] sm:$0xff] %vm2411, %v3029
    %3522 = vst.msk [vmem:[%s3 + $0x8] sm:$0xff] %vm2411, %v3031
    %3523 = vst.msk [vmem:[%s3 + $0x10] sm:$0xff] %vm2411, %v3034
    %3524 = vst.msk [vmem:[%s3 + $0x18] sm:$0xff] %vm2411, %v3036
    %3525 = vst.msk [vmem:[%s3 + $0x20] sm:$0xff] %vm2411, %v3039
    %3526 = vst.msk [vmem:[%s3 + $0x28] sm:$0xff] %vm2411, %v3041
    %3527 = vst.msk [vmem:[%s3 + $0x30] sm:$0xff] %vm2411, %v3044
    %3528 = vst.msk [vmem:[%s3 + $0x38] sm:$0xff] %vm2411, %v3046
    %3529 = vst.msk [vmem:[%s3 + $0x40] sm:$0xff] %vm2411, %v3049
    %3530 = vst.msk [vmem:[%s3 + $0x48] sm:$0xff] %vm2411, %v3051
    %3531 = vst.msk [vmem:[%s3 + $0x50] sm:$0xff] %vm2411, %v3054
    %3532 = vst.msk [vmem:[%s3 + $0x58] sm:$0xff] %vm2411, %v3056
    %3533 = vst.msk [vmem:[%s3 + $0x60] sm:$0xff] %vm2411, %v3059
    %3534 = vst.msk [vmem:[%s3 + $0x68] sm:$0xff] %vm2411, %v3061
    %3535 = vst.msk [vmem:[%s3 + $0x70] sm:$0xff] %vm2411, %v3064
    %3536 = vst.msk [vmem:[%s3 + $0x78] sm:$0xff] %vm2411, %v3066
    %3537 = vst.msk [vmem:[%s3 + $0x80] sm:$0xff] %vm2411, %v3069
    %3538 = vst.msk [vmem:[%s3 + $0x88] sm:$0xff] %vm2411, %v3071
    %3539 = vst.msk [vmem:[%s3 + $0x90] sm:$0xff] %vm2411, %v3074
    %3540 = vst.msk [vmem:[%s3 + $0x98] sm:$0xff] %vm2411, %v3076
    %3541 = vst.msk [vmem:[%s3 + $0xa0] sm:$0xff] %vm2411, %v3079
    %3542 = vst.msk [vmem:[%s3 + $0xa8] sm:$0xff] %vm2411, %v3081
    %3543 = vst.msk [vmem:[%s3 + $0xb0] sm:$0xff] %vm2411, %v3084
    %3544 = vst.msk [vmem:[%s3 + $0xb8] sm:$0xff] %vm2411, %v3086
    %3545 = vst.msk [vmem:[%s3 + $0xc0] sm:$0xff] %vm2411, %v3089
    %3546 = vst.msk [vmem:[%s3 + $0xc8] sm:$0xff] %vm2411, %v3091
    %3547 = vst.msk [vmem:[%s3 + $0xd0] sm:$0xff] %vm2411, %v3094
    %3548 = vst.msk [vmem:[%s3 + $0xd8] sm:$0xff] %vm2411, %v3096
    %3549 = vst.msk [vmem:[%s3 + $0xe0] sm:$0xff] %vm2411, %v3099
    %3550 = vst.msk [vmem:[%s3 + $0xe8] sm:$0xff] %vm2411, %v3101
    %3551 = vst.msk [vmem:[%s3 + $0xf0] sm:$0xff] %vm2411, %v3104
    %3552 = vst.msk [vmem:[%s3 + $0xf8] sm:$0xff] %vm2411, %v3106
    %3553 = vst.msk [vmem:[%s3 + $0x100] sm:$0xff] %vm2411, %v3109
    %3554 = vst.msk [vmem:[%s3 + $0x108] sm:$0xff] %vm2411, %v3111
    %3555 = vst.msk [vmem:[%s3 + $0x110] sm:$0xff] %vm2411, %v3114
    %3556 = vst.msk [vmem:[%s3 + $0x118] sm:$0xff] %vm2411, %v3116
    %3557 = vst.msk [vmem:[%s3 + $0x120] sm:$0xff] %vm2411, %v3119
    %3558 = vst.msk [vmem:[%s3 + $0x128] sm:$0xff] %vm2411, %v3121
    %3559 = vst.msk [vmem:[%s3 + $0x130] sm:$0xff] %vm2411, %v3124
    %3560 = vst.msk [vmem:[%s3 + $0x138] sm:$0xff] %vm2411, %v3126
    %3561 = vst.msk [vmem:[%s3 + $0x140] sm:$0xff] %vm2411, %v3129
    %3562 = vst.msk [vmem:[%s3 + $0x148] sm:$0xff] %vm2411, %v3131
    %3563 = vst.msk [vmem:[%s3 + $0x150] sm:$0xff] %vm2411, %v3134
    %3564 = vst.msk [vmem:[%s3 + $0x158] sm:$0xff] %vm2411, %v3136
    %3565 = vst.msk [vmem:[%s3 + $0x160] sm:$0xff] %vm2411, %v3139
    %3566 = vst.msk [vmem:[%s3 + $0x168] sm:$0xff] %vm2411, %v3141
    %3567 = vst.msk [vmem:[%s3 + $0x170] sm:$0xff] %vm2411, %v3144
    %3568 = vst.msk [vmem:[%s3 + $0x178] sm:$0xff] %vm2411, %v3146
    %3569 = vst.msk [vmem:[%s3 + $0x180] sm:$0xff] %vm2411, %v3149
    %3570 = vst.msk [vmem:[%s3 + $0x188] sm:$0xff] %vm2411, %v3151
    %3571 = vst.msk [vmem:[%s3 + $0x190] sm:$0xff] %vm2411, %v3154
    %3572 = vst.msk [vmem:[%s3 + $0x198] sm:$0xff] %vm2411, %v3156
    %3573 = vst.msk [vmem:[%s3 + $0x1a0] sm:$0xff] %vm2411, %v3159
    %3574 = vst.msk [vmem:[%s3 + $0x1a8] sm:$0xff] %vm2411, %v3161
    %3575 = vst.msk [vmem:[%s3 + $0x1b0] sm:$0xff] %vm2411, %v3164
    %3576 = vst.msk [vmem:[%s3 + $0x1b8] sm:$0xff] %vm2411, %v3166
    %3577 = vst.msk [vmem:[%s3 + $0x1c0] sm:$0xff] %vm2411, %v3169
    %3578 = vst.msk [vmem:[%s3 + $0x1c8] sm:$0xff] %vm2411, %v3171
    %3579 = vst.msk [vmem:[%s3 + $0x1d0] sm:$0xff] %vm2411, %v3174
    %3580 = vst.msk [vmem:[%s3 + $0x1d8] sm:$0xff] %vm2411, %v3176
    %3581 = vst.msk [vmem:[%s3 + $0x1e0] sm:$0xff] %vm2411, %v3179
    %3582 = vst.msk [vmem:[%s3 + $0x1e8] sm:$0xff] %vm2411, %v3181
    %3583 = vst.msk [vmem:[%s3 + $0x1f0] sm:$0xff] %vm2411, %v3184
    %3584 = vst.msk [vmem:[%s3 + $0x1f8] sm:$0xff] %vm2411, %v3186
    %v3585 = vpack.c.bf16 %v25, %v24
    %v3586 = vpack.c.bf16 %v27, %v26
    %v3587 = vpack.c.bf16 %v29, %v28
    %v3588 = vpack.c.bf16 %v31, %v30
    %v3589 = vpack.c.bf16 %v33, %v32
    %v3590 = vpack.c.bf16 %v35, %v34
    %v3591 = vpack.c.bf16 %v37, %v36
    %v3592 = vpack.c.bf16 %v39, %v38
    %v3593 = vpack.c.bf16 %v41, %v40
    %v3594 = vpack.c.bf16 %v43, %v42
    %v3595 = vpack.c.bf16 %v45, %v44
    %v3596 = vpack.c.bf16 %v47, %v46
    %v3597 = vpack.c.bf16 %v49, %v48
    %v3598 = vpack.c.bf16 %v51, %v50
    %v3599 = vpack.c.bf16 %v53, %v52
    %v3600 = vpack.c.bf16 %v55, %v54
    %v3601 = vpack.c.bf16 %v57, %v56
    %v3602 = vpack.c.bf16 %v59, %v58
    %v3603 = vpack.c.bf16 %v61, %v60
    %v3604 = vpack.c.bf16 %v63, %v62
    %v3605 = vpack.c.bf16 %v65, %v64
    %v3606 = vpack.c.bf16 %v67, %v66
    %v3607 = vpack.c.bf16 %v69, %v68
    %v3608 = vpack.c.bf16 %v71, %v70
    %v3609 = vpack.c.bf16 %v73, %v72
    %v3610 = vpack.c.bf16 %v75, %v74
    %v3611 = vpack.c.bf16 %v77, %v76
    %v3612 = vpack.c.bf16 %v79, %v78
    %v3613 = vpack.c.bf16 %v81, %v80
    %v3614 = vpack.c.bf16 %v83, %v82
    %v3615 = vpack.c.bf16 %v85, %v84
    %v3616 = vpack.c.bf16 %v87, %v86
    %v3617 = vld [vmem:[%s2] sm:$0x3]
    %v3619 = vsel %vm88, %v3585, 0
    %v3622 = vsel %vm88, %v3586, 0
    %v3625 = vsel %vm88, %v3587, 0
    %v3628 = vsel %vm88, %v3588, 0
    %v3631 = vsel %vm88, %v3589, 0
    %v3634 = vsel %vm88, %v3590, 0
    %v3637 = vsel %vm88, %v3591, 0
    %v3640 = vsel %vm88, %v3592, 0
    %v3643 = vsel %vm88, %v3593, 0
    %v3646 = vsel %vm88, %v3594, 0
    %v3649 = vsel %vm88, %v3595, 0
    %v3652 = vsel %vm88, %v3596, 0
    %v3655 = vsel %vm88, %v3597, 0
    %v3658 = vsel %vm88, %v3598, 0
    %v3661 = vsel %vm88, %v3599, 0
    %v3664 = vsel %vm88, %v3600, 0
    %v3667 = vsel %vm88, %v3601, 0
    %v3670 = vsel %vm88, %v3602, 0
    %v3673 = vsel %vm88, %v3603, 0
    %v3676 = vsel %vm88, %v3604, 0
    %v3679 = vsel %vm88, %v3605, 0
    %v3682 = vsel %vm88, %v3606, 0
    %v3685 = vsel %vm88, %v3607, 0
    %v3688 = vsel %vm88, %v3608, 0
    %v3691 = vsel %vm88, %v3609, 0
    %v3694 = vsel %vm88, %v3610, 0
    %v3697 = vsel %vm88, %v3611, 0
    %v3700 = vsel %vm88, %v3612, 0
    %v3703 = vsel %vm88, %v3613, 0
    %v3706 = vsel %vm88, %v3614, 0
    %v3709 = vsel %vm88, %v3615, 0
    %v3712 = vsel %vm88, %v3616, 0
    %v3715 = vsel %vm3015, %v3617, 0
    %3717 = vmatpush.bf16.msra.mxu0 0
    %3718 = vmatpush.bf16.msra.mxu0 0
    %3719 = vmatpush.bf16.msra.mxu0 0
    %3720 = vmatpush.bf16.msra.mxu0 0
    %3721 = vmatpush.bf16.msra.mxu0 0
    %3722 = vmatpush.bf16.msra.mxu0 0
    %3723 = vmatpush.bf16.msra.mxu0 0
    %3724 = vmatpush.bf16.msra.mxu0 %v3715
    %3725 = vmatmul.bf16.gmra.mxu0 %v3619
    %v3726 = vpop.f32.mrf.mxu0
    %v3727 = vadd.f32 0.0, %v3726
    %v3728 = vpop.f32.mrf.mxu0
    %v3729 = vadd.f32 0.0, %v3728
    %3730 = vmatmul.bf16.gmra.mxu0 %v3622
    %v3731 = vpop.f32.mrf.mxu0
    %v3732 = vadd.f32 0.0, %v3731
    %v3733 = vpop.f32.mrf.mxu0
    %v3734 = vadd.f32 0.0, %v3733
    %3735 = vmatmul.bf16.gmra.mxu0 %v3625
    %v3736 = vpop.f32.mrf.mxu0
    %v3737 = vadd.f32 0.0, %v3736
    %v3738 = vpop.f32.mrf.mxu0
    %v3739 = vadd.f32 0.0, %v3738
    %3740 = vmatmul.bf16.gmra.mxu0 %v3628
    %v3741 = vpop.f32.mrf.mxu0
    %v3742 = vadd.f32 0.0, %v3741
    %v3743 = vpop.f32.mrf.mxu0
    %v3744 = vadd.f32 0.0, %v3743
    %3745 = vmatmul.bf16.gmra.mxu0 %v3631
    %v3746 = vpop.f32.mrf.mxu0
    %v3747 = vadd.f32 0.0, %v3746
    %v3748 = vpop.f32.mrf.mxu0
    %v3749 = vadd.f32 0.0, %v3748
    %3750 = vmatmul.bf16.gmra.mxu0 %v3634
    %v3751 = vpop.f32.mrf.mxu0
    %v3752 = vadd.f32 0.0, %v3751
    %v3753 = vpop.f32.mrf.mxu0
    %v3754 = vadd.f32 0.0, %v3753
    %3755 = vmatmul.bf16.gmra.mxu0 %v3637
    %v3756 = vpop.f32.mrf.mxu0
    %v3757 = vadd.f32 0.0, %v3756
    %v3758 = vpop.f32.mrf.mxu0
    %v3759 = vadd.f32 0.0, %v3758
    %3760 = vmatmul.bf16.gmra.mxu0 %v3640
    %v3761 = vpop.f32.mrf.mxu0
    %v3762 = vadd.f32 0.0, %v3761
    %v3763 = vpop.f32.mrf.mxu0
    %v3764 = vadd.f32 0.0, %v3763
    %3765 = vmatmul.bf16.gmra.mxu0 %v3643
    %v3766 = vpop.f32.mrf.mxu0
    %v3767 = vadd.f32 0.0, %v3766
    %v3768 = vpop.f32.mrf.mxu0
    %v3769 = vadd.f32 0.0, %v3768
    %3770 = vmatmul.bf16.gmra.mxu0 %v3646
    %v3771 = vpop.f32.mrf.mxu0
    %v3772 = vadd.f32 0.0, %v3771
    %v3773 = vpop.f32.mrf.mxu0
    %v3774 = vadd.f32 0.0, %v3773
    %3775 = vmatmul.bf16.gmra.mxu0 %v3649
    %v3776 = vpop.f32.mrf.mxu0
    %v3777 = vadd.f32 0.0, %v3776
    %v3778 = vpop.f32.mrf.mxu0
    %v3779 = vadd.f32 0.0, %v3778
    %3780 = vmatmul.bf16.gmra.mxu0 %v3652
    %v3781 = vpop.f32.mrf.mxu0
    %v3782 = vadd.f32 0.0, %v3781
    %v3783 = vpop.f32.mrf.mxu0
    %v3784 = vadd.f32 0.0, %v3783
    %3785 = vmatmul.bf16.gmra.mxu0 %v3655
    %v3786 = vpop.f32.mrf.mxu0
    %v3787 = vadd.f32 0.0, %v3786
    %v3788 = vpop.f32.mrf.mxu0
    %v3789 = vadd.f32 0.0, %v3788
    %3790 = vmatmul.bf16.gmra.mxu0 %v3658
    %v3791 = vpop.f32.mrf.mxu0
    %v3792 = vadd.f32 0.0, %v3791
    %v3793 = vpop.f32.mrf.mxu0
    %v3794 = vadd.f32 0.0, %v3793
    %3795 = vmatmul.bf16.gmra.mxu0 %v3661
    %v3796 = vpop.f32.mrf.mxu0
    %v3797 = vadd.f32 0.0, %v3796
    %v3798 = vpop.f32.mrf.mxu0
    %v3799 = vadd.f32 0.0, %v3798
    %3800 = vmatmul.bf16.gmra.mxu0 %v3664
    %v3801 = vpop.f32.mrf.mxu0
    %v3802 = vadd.f32 0.0, %v3801
    %v3803 = vpop.f32.mrf.mxu0
    %v3804 = vadd.f32 0.0, %v3803
    %3805 = vmatmul.bf16.gmra.mxu0 %v3667
    %v3806 = vpop.f32.mrf.mxu0
    %v3807 = vadd.f32 0.0, %v3806
    %v3808 = vpop.f32.mrf.mxu0
    %v3809 = vadd.f32 0.0, %v3808
    %3810 = vmatmul.bf16.gmra.mxu0 %v3670
    %v3811 = vpop.f32.mrf.mxu0
    %v3812 = vadd.f32 0.0, %v3811
    %v3813 = vpop.f32.mrf.mxu0
    %v3814 = vadd.f32 0.0, %v3813
    %3815 = vmatmul.bf16.gmra.mxu0 %v3673
    %v3816 = vpop.f32.mrf.mxu0
    %v3817 = vadd.f32 0.0, %v3816
    %v3818 = vpop.f32.mrf.mxu0
    %v3819 = vadd.f32 0.0, %v3818
    %3820 = vmatmul.bf16.gmra.mxu0 %v3676
    %v3821 = vpop.f32.mrf.mxu0
    %v3822 = vadd.f32 0.0, %v3821
    %v3823 = vpop.f32.mrf.mxu0
    %v3824 = vadd.f32 0.0, %v3823
    %3825 = vmatmul.bf16.gmra.mxu0 %v3679
    %v3826 = vpop.f32.mrf.mxu0
    %v3827 = vadd.f32 0.0, %v3826
    %v3828 = vpop.f32.mrf.mxu0
    %v3829 = vadd.f32 0.0, %v3828
    %3830 = vmatmul.bf16.gmra.mxu0 %v3682
    %v3831 = vpop.f32.mrf.mxu0
    %v3832 = vadd.f32 0.0, %v3831
    %v3833 = vpop.f32.mrf.mxu0
    %v3834 = vadd.f32 0.0, %v3833
    %3835 = vmatmul.bf16.gmra.mxu0 %v3685
    %v3836 = vpop.f32.mrf.mxu0
    %v3837 = vadd.f32 0.0, %v3836
    %v3838 = vpop.f32.mrf.mxu0
    %v3839 = vadd.f32 0.0, %v3838
    %3840 = vmatmul.bf16.gmra.mxu0 %v3688
    %v3841 = vpop.f32.mrf.mxu0
    %v3842 = vadd.f32 0.0, %v3841
    %v3843 = vpop.f32.mrf.mxu0
    %v3844 = vadd.f32 0.0, %v3843
    %3845 = vmatmul.bf16.gmra.mxu0 %v3691
    %v3846 = vpop.f32.mrf.mxu0
    %v3847 = vadd.f32 0.0, %v3846
    %v3848 = vpop.f32.mrf.mxu0
    %v3849 = vadd.f32 0.0, %v3848
    %3850 = vmatmul.bf16.gmra.mxu0 %v3694
    %v3851 = vpop.f32.mrf.mxu0
    %v3852 = vadd.f32 0.0, %v3851
    %v3853 = vpop.f32.mrf.mxu0
    %v3854 = vadd.f32 0.0, %v3853
    %3855 = vmatmul.bf16.gmra.mxu0 %v3697
    %v3856 = vpop.f32.mrf.mxu0
    %v3857 = vadd.f32 0.0, %v3856
    %v3858 = vpop.f32.mrf.mxu0
    %v3859 = vadd.f32 0.0, %v3858
    %3860 = vmatmul.bf16.gmra.mxu0 %v3700
    %v3861 = vpop.f32.mrf.mxu0
    %v3862 = vadd.f32 0.0, %v3861
    %v3863 = vpop.f32.mrf.mxu0
    %v3864 = vadd.f32 0.0, %v3863
    %3865 = vmatmul.bf16.gmra.mxu0 %v3703
    %v3866 = vpop.f32.mrf.mxu0
    %v3867 = vadd.f32 0.0, %v3866
    %v3868 = vpop.f32.mrf.mxu0
    %v3869 = vadd.f32 0.0, %v3868
    %3870 = vmatmul.bf16.gmra.mxu0 %v3706
    %v3871 = vpop.f32.mrf.mxu0
    %v3872 = vadd.f32 0.0, %v3871
    %v3873 = vpop.f32.mrf.mxu0
    %v3874 = vadd.f32 0.0, %v3873
    %3875 = vmatmul.bf16.gmra.mxu0 %v3709
    %v3876 = vpop.f32.mrf.mxu0
    %v3877 = vadd.f32 0.0, %v3876
    %v3878 = vpop.f32.mrf.mxu0
    %v3879 = vadd.f32 0.0, %v3878
    %3880 = vmatmul.bf16.gmra.mxu0 %v3712
    %v3881 = vpop.f32.mrf.mxu0
    %v3882 = vadd.f32 0.0, %v3881
    %v3883 = vpop.f32.mrf.mxu0
    %v3884 = vadd.f32 0.0, %v3883
    %3885 = vdwg.mxu0
    %v3886 = vsel %vm2411, %v3727, 0.0
    %v3887 = vsel %vm2411, %v3729, 0.0
    %v3888 = vadd.f32 %v3886, %v3887
    %v3889 = vsel %vm2411, %v3732, 0.0
    %v3890 = vadd.f32 %v3888, %v3889
    %v3891 = vsel %vm2411, %v3734, 0.0
    %v3892 = vadd.f32 %v3890, %v3891
    %v3893 = vsel %vm2411, %v3737, 0.0
    %v3894 = vadd.f32 %v3892, %v3893
    %v3895 = vsel %vm2411, %v3739, 0.0
    %v3896 = vadd.f32 %v3894, %v3895
    %v3897 = vsel %vm2411, %v3742, 0.0
    %v3898 = vadd.f32 %v3896, %v3897
    %v3899 = vsel %vm2411, %v3744, 0.0
    %v3900 = vadd.f32 %v3898, %v3899
    %v3901 = vsel %vm2411, %v3747, 0.0
    %v3902 = vadd.f32 %v3900, %v3901
    %v3903 = vsel %vm2411, %v3749, 0.0
    %v3904 = vadd.f32 %v3902, %v3903
    %v3905 = vsel %vm2411, %v3752, 0.0
    %v3906 = vadd.f32 %v3904, %v3905
    %v3907 = vsel %vm2411, %v3754, 0.0
    %v3908 = vadd.f32 %v3906, %v3907
    %v3909 = vsel %vm2411, %v3757, 0.0
    %v3910 = vadd.f32 %v3908, %v3909
    %v3911 = vsel %vm2411, %v3759, 0.0
    %v3912 = vadd.f32 %v3910, %v3911
    %v3913 = vsel %vm2411, %v3762, 0.0
    %v3914 = vadd.f32 %v3912, %v3913
    %v3915 = vsel %vm2411, %v3764, 0.0
    %v3916 = vadd.f32 %v3914, %v3915
    %v3917 = vsel %vm2411, %v3767, 0.0
    %v3918 = vadd.f32 %v3916, %v3917
    %v3919 = vsel %vm2411, %v3769, 0.0
    %v3920 = vadd.f32 %v3918, %v3919
    %v3921 = vsel %vm2411, %v3772, 0.0
    %v3922 = vadd.f32 %v3920, %v3921
    %v3923 = vsel %vm2411, %v3774, 0.0
    %v3924 = vadd.f32 %v3922, %v3923
    %v3925 = vsel %vm2411, %v3777, 0.0
    %v3926 = vadd.f32 %v3924, %v3925
    %v3927 = vsel %vm2411, %v3779, 0.0
    %v3928 = vadd.f32 %v3926, %v3927
    %v3929 = vsel %vm2411, %v3782, 0.0
    %v3930 = vadd.f32 %v3928, %v3929
    %v3931 = vsel %vm2411, %v3784, 0.0
    %v3932 = vadd.f32 %v3930, %v3931
    %v3933 = vsel %vm2411, %v3787, 0.0
    %v3934 = vadd.f32 %v3932, %v3933
    %v3935 = vsel %vm2411, %v3789, 0.0
    %v3936 = vadd.f32 %v3934, %v3935
    %v3937 = vsel %vm2411, %v3792, 0.0
    %v3938 = vadd.f32 %v3936, %v3937
    %v3939 = vsel %vm2411, %v3794, 0.0
    %v3940 = vadd.f32 %v3938, %v3939
    %v3941 = vsel %vm2411, %v3797, 0.0
    %v3942 = vadd.f32 %v3940, %v3941
    %v3943 = vsel %vm2411, %v3799, 0.0
    %v3944 = vadd.f32 %v3942, %v3943
    %v3945 = vsel %vm2411, %v3802, 0.0
    %v3946 = vadd.f32 %v3944, %v3945
    %v3947 = vsel %vm2411, %v3804, 0.0
    %v3948 = vadd.f32 %v3946, %v3947
    %v3949 = vsel %vm2411, %v3807, 0.0
    %v3950 = vadd.f32 %v3948, %v3949
    %v3951 = vsel %vm2411, %v3809, 0.0
    %v3952 = vadd.f32 %v3950, %v3951
    %v3953 = vsel %vm2411, %v3812, 0.0
    %v3954 = vadd.f32 %v3952, %v3953
    %v3955 = vsel %vm2411, %v3814, 0.0
    %v3956 = vadd.f32 %v3954, %v3955
    %v3957 = vsel %vm2411, %v3817, 0.0
    %v3958 = vadd.f32 %v3956, %v3957
    %v3959 = vsel %vm2411, %v3819, 0.0
    %v3960 = vadd.f32 %v3958, %v3959
    %v3961 = vsel %vm2411, %v3822, 0.0
    %v3962 = vadd.f32 %v3960, %v3961
    %v3963 = vsel %vm2411, %v3824, 0.0
    %v3964 = vadd.f32 %v3962, %v3963
    %v3965 = vsel %vm2411, %v3827, 0.0
    %v3966 = vadd.f32 %v3964, %v3965
    %v3967 = vsel %vm2411, %v3829, 0.0
    %v3968 = vadd.f32 %v3966, %v3967
    %v3969 = vsel %vm2411, %v3832, 0.0
    %v3970 = vadd.f32 %v3968, %v3969
    %v3971 = vsel %vm2411, %v3834, 0.0
    %v3972 = vadd.f32 %v3970, %v3971
    %v3973 = vsel %vm2411, %v3837, 0.0
    %v3974 = vadd.f32 %v3972, %v3973
    %v3975 = vsel %vm2411, %v3839, 0.0
    %v3976 = vadd.f32 %v3974, %v3975
    %v3977 = vsel %vm2411, %v3842, 0.0
    %v3978 = vadd.f32 %v3976, %v3977
    %v3979 = vsel %vm2411, %v3844, 0.0
    %v3980 = vadd.f32 %v3978, %v3979
    %v3981 = vsel %vm2411, %v3847, 0.0
    %v3982 = vadd.f32 %v3980, %v3981
    %v3983 = vsel %vm2411, %v3849, 0.0
    %v3984 = vadd.f32 %v3982, %v3983
    %v3985 = vsel %vm2411, %v3852, 0.0
    %v3986 = vadd.f32 %v3984, %v3985
    %v3987 = vsel %vm2411, %v3854, 0.0
    %v3988 = vadd.f32 %v3986, %v3987
    %v3989 = vsel %vm2411, %v3857, 0.0
    %v3990 = vadd.f32 %v3988, %v3989
    %v3991 = vsel %vm2411, %v3859, 0.0
    %v3992 = vadd.f32 %v3990, %v3991
    %v3993 = vsel %vm2411, %v3862, 0.0
    %v3994 = vadd.f32 %v3992, %v3993
    %v3995 = vsel %vm2411, %v3864, 0.0
    %v3996 = vadd.f32 %v3994, %v3995
    %v3997 = vsel %vm2411, %v3867, 0.0
    %v3998 = vadd.f32 %v3996, %v3997
    %v3999 = vsel %vm2411, %v3869, 0.0
    %v4000 = vadd.f32 %v3998, %v3999
    %v4001 = vsel %vm2411, %v3872, 0.0
    %v4002 = vadd.f32 %v4000, %v4001
    %v4003 = vsel %vm2411, %v3874, 0.0
    %v4004 = vadd.f32 %v4002, %v4003
    %v4005 = vsel %vm2411, %v3877, 0.0
    %v4006 = vadd.f32 %v4004, %v4005
    %v4007 = vsel %vm2411, %v3879, 0.0
    %v4008 = vadd.f32 %v4006, %v4007
    %v4009 = vsel %vm2411, %v3882, 0.0
    %v4010 = vadd.f32 %v4008, %v4009
    %v4011 = vsel %vm2411, %v3884, 0.0
    %v4012 = vadd.f32 %v4010, %v4011
    %v4013 = vrot.slane %v4012, 4
    %v4014 = vadd.f32 %v4012, %v4013
    %v4015 = vrot.slane %v4014, 2
    %v4016 = vadd.f32 %v4014, %v4015
    %v4017 = vrot.slane %v4016, 1
    %v4018 = vadd.f32 %v4016, %v4017
    %4019 = vst.msk [vmem:[#allocation7] sm:$0x1] %vm3321, %v4018
    %v4020 = vmul.f32 %v3727, %v3727
    %v4021 = vmul.f32 %v3729, %v3729
    %v4022 = vmul.f32 %v3732, %v3732
    %v4023 = vmul.f32 %v3734, %v3734
    %v4024 = vmul.f32 %v3737, %v3737
    %v4025 = vmul.f32 %v3739, %v3739
    %v4026 = vmul.f32 %v3742, %v3742
    %v4027 = vmul.f32 %v3744, %v3744
    %v4028 = vmul.f32 %v3747, %v3747
    %v4029 = vmul.f32 %v3749, %v3749
    %v4030 = vmul.f32 %v3752, %v3752
    %v4031 = vmul.f32 %v3754, %v3754
    %v4032 = vmul.f32 %v3757, %v3757
    %v4033 = vmul.f32 %v3759, %v3759
    %v4034 = vmul.f32 %v3762, %v3762
    %v4035 = vmul.f32 %v3764, %v3764
    %v4036 = vmul.f32 %v3767, %v3767
    %v4037 = vmul.f32 %v3769, %v3769
    %v4038 = vmul.f32 %v3772, %v3772
    %v4039 = vmul.f32 %v3774, %v3774
    %v4040 = vmul.f32 %v3777, %v3777
    %v4041 = vmul.f32 %v3779, %v3779
    %v4042 = vmul.f32 %v3782, %v3782
    %v4043 = vmul.f32 %v3784, %v3784
    %v4044 = vmul.f32 %v3787, %v3787
    %v4045 = vmul.f32 %v3789, %v3789
    %v4046 = vmul.f32 %v3792, %v3792
    %v4047 = vmul.f32 %v3794, %v3794
    %v4048 = vmul.f32 %v3797, %v3797
    %v4049 = vmul.f32 %v3799, %v3799
    %v4050 = vmul.f32 %v3802, %v3802
    %v4051 = vmul.f32 %v3804, %v3804
    %v4052 = vmul.f32 %v3807, %v3807
    %v4053 = vmul.f32 %v3809, %v3809
    %v4054 = vmul.f32 %v3812, %v3812
    %v4055 = vmul.f32 %v3814, %v3814
    %v4056 = vmul.f32 %v3817, %v3817
    %v4057 = vmul.f32 %v3819, %v3819
    %v4058 = vmul.f32 %v3822, %v3822
    %v4059 = vmul.f32 %v3824, %v3824
    %v4060 = vmul.f32 %v3827, %v3827
    %v4061 = vmul.f32 %v3829, %v3829
    %v4062 = vmul.f32 %v3832, %v3832
    %v4063 = vmul.f32 %v3834, %v3834
    %v4064 = vmul.f32 %v3837, %v3837
    %v4065 = vmul.f32 %v3839, %v3839
    %v4066 = vmul.f32 %v3842, %v3842
    %v4067 = vmul.f32 %v3844, %v3844
    %v4068 = vmul.f32 %v3847, %v3847
    %v4069 = vmul.f32 %v3849, %v3849
    %v4070 = vmul.f32 %v3852, %v3852
    %v4071 = vmul.f32 %v3854, %v3854
    %v4072 = vmul.f32 %v3857, %v3857
    %v4073 = vmul.f32 %v3859, %v3859
    %v4074 = vmul.f32 %v3862, %v3862
    %v4075 = vmul.f32 %v3864, %v3864
    %v4076 = vmul.f32 %v3867, %v3867
    %v4077 = vmul.f32 %v3869, %v3869
    %v4078 = vmul.f32 %v3872, %v3872
    %v4079 = vmul.f32 %v3874, %v3874
    %v4080 = vmul.f32 %v3877, %v3877
    %v4081 = vmul.f32 %v3879, %v3879
    %v4082 = vmul.f32 %v3882, %v3882
    %v4083 = vmul.f32 %v3884, %v3884
    %v4084 = vsel %vm2411, %v4020, 0.0
    %v4085 = vsel %vm2411, %v4021, 0.0
    %v4086 = vadd.f32 %v4084, %v4085
    %v4087 = vsel %vm2411, %v4022, 0.0
    %v4088 = vadd.f32 %v4086, %v4087
    %v4089 = vsel %vm2411, %v4023, 0.0
    %v4090 = vadd.f32 %v4088, %v4089
    %v4091 = vsel %vm2411, %v4024, 0.0
    %v4092 = vadd.f32 %v4090, %v4091
    %v4093 = vsel %vm2411, %v4025, 0.0
    %v4094 = vadd.f32 %v4092, %v4093
    %v4095 = vsel %vm2411, %v4026, 0.0
    %v4096 = vadd.f32 %v4094, %v4095
    %v4097 = vsel %vm2411, %v4027, 0.0
    %v4098 = vadd.f32 %v4096, %v4097
    %v4099 = vsel %vm2411, %v4028, 0.0
    %v4100 = vadd.f32 %v4098, %v4099
    %v4101 = vsel %vm2411, %v4029, 0.0
    %v4102 = vadd.f32 %v4100, %v4101
    %v4103 = vsel %vm2411, %v4030, 0.0
    %v4104 = vadd.f32 %v4102, %v4103
    %v4105 = vsel %vm2411, %v4031, 0.0
    %v4106 = vadd.f32 %v4104, %v4105
    %v4107 = vsel %vm2411, %v4032, 0.0
    %v4108 = vadd.f32 %v4106, %v4107
    %v4109 = vsel %vm2411, %v4033, 0.0
    %v4110 = vadd.f32 %v4108, %v4109
    %v4111 = vsel %vm2411, %v4034, 0.0
    %v4112 = vadd.f32 %v4110, %v4111
    %v4113 = vsel %vm2411, %v4035, 0.0
    %v4114 = vadd.f32 %v4112, %v4113
    %v4115 = vsel %vm2411, %v4036, 0.0
    %v4116 = vadd.f32 %v4114, %v4115
    %v4117 = vsel %vm2411, %v4037, 0.0
    %v4118 = vadd.f32 %v4116, %v4117
    %v4119 = vsel %vm2411, %v4038, 0.0
    %v4120 = vadd.f32 %v4118, %v4119
    %v4121 = vsel %vm2411, %v4039, 0.0
    %v4122 = vadd.f32 %v4120, %v4121
    %v4123 = vsel %vm2411, %v4040, 0.0
    %v4124 = vadd.f32 %v4122, %v4123
    %v4125 = vsel %vm2411, %v4041, 0.0
    %v4126 = vadd.f32 %v4124, %v4125
    %v4127 = vsel %vm2411, %v4042, 0.0
    %v4128 = vadd.f32 %v4126, %v4127
    %v4129 = vsel %vm2411, %v4043, 0.0
    %v4130 = vadd.f32 %v4128, %v4129
    %v4131 = vsel %vm2411, %v4044, 0.0
    %v4132 = vadd.f32 %v4130, %v4131
    %v4133 = vsel %vm2411, %v4045, 0.0
    %v4134 = vadd.f32 %v4132, %v4133
    %v4135 = vsel %vm2411, %v4046, 0.0
    %v4136 = vadd.f32 %v4134, %v4135
    %v4137 = vsel %vm2411, %v4047, 0.0
    %v4138 = vadd.f32 %v4136, %v4137
    %v4139 = vsel %vm2411, %v4048, 0.0
    %v4140 = vadd.f32 %v4138, %v4139
    %v4141 = vsel %vm2411, %v4049, 0.0
    %v4142 = vadd.f32 %v4140, %v4141
    %v4143 = vsel %vm2411, %v4050, 0.0
    %v4144 = vadd.f32 %v4142, %v4143
    %v4145 = vsel %vm2411, %v4051, 0.0
    %v4146 = vadd.f32 %v4144, %v4145
    %v4147 = vsel %vm2411, %v4052, 0.0
    %v4148 = vadd.f32 %v4146, %v4147
    %v4149 = vsel %vm2411, %v4053, 0.0
    %v4150 = vadd.f32 %v4148, %v4149
    %v4151 = vsel %vm2411, %v4054, 0.0
    %v4152 = vadd.f32 %v4150, %v4151
    %v4153 = vsel %vm2411, %v4055, 0.0
    %v4154 = vadd.f32 %v4152, %v4153
    %v4155 = vsel %vm2411, %v4056, 0.0
    %v4156 = vadd.f32 %v4154, %v4155
    %v4157 = vsel %vm2411, %v4057, 0.0
    %v4158 = vadd.f32 %v4156, %v4157
    %v4159 = vsel %vm2411, %v4058, 0.0
    %v4160 = vadd.f32 %v4158, %v4159
    %v4161 = vsel %vm2411, %v4059, 0.0
    %v4162 = vadd.f32 %v4160, %v4161
    %v4163 = vsel %vm2411, %v4060, 0.0
    %v4164 = vadd.f32 %v4162, %v4163
    %v4165 = vsel %vm2411, %v4061, 0.0
    %v4166 = vadd.f32 %v4164, %v4165
    %v4167 = vsel %vm2411, %v4062, 0.0
    %v4168 = vadd.f32 %v4166, %v4167
    %v4169 = vsel %vm2411, %v4063, 0.0
    %v4170 = vadd.f32 %v4168, %v4169
    %v4171 = vsel %vm2411, %v4064, 0.0
    %v4172 = vadd.f32 %v4170, %v4171
    %v4173 = vsel %vm2411, %v4065, 0.0
    %v4174 = vadd.f32 %v4172, %v4173
    %v4175 = vsel %vm2411, %v4066, 0.0
    %v4176 = vadd.f32 %v4174, %v4175
    %v4177 = vsel %vm2411, %v4067, 0.0
    %v4178 = vadd.f32 %v4176, %v4177
    %v4179 = vsel %vm2411, %v4068, 0.0
    %v4180 = vadd.f32 %v4178, %v4179
    %v4181 = vsel %vm2411, %v4069, 0.0
    %v4182 = vadd.f32 %v4180, %v4181
    %v4183 = vsel %vm2411, %v4070, 0.0
    %v4184 = vadd.f32 %v4182, %v4183
    %v4185 = vsel %vm2411, %v4071, 0.0
    %v4186 = vadd.f32 %v4184, %v4185
    %v4187 = vsel %vm2411, %v4072, 0.0
    %v4188 = vadd.f32 %v4186, %v4187
    %v4189 = vsel %vm2411, %v4073, 0.0
    %v4190 = vadd.f32 %v4188, %v4189
    %v4191 = vsel %vm2411, %v4074, 0.0
    %v4192 = vadd.f32 %v4190, %v4191
    %v4193 = vsel %vm2411, %v4075, 0.0
    %v4194 = vadd.f32 %v4192, %v4193
    %v4195 = vsel %vm2411, %v4076, 0.0
    %v4196 = vadd.f32 %v4194, %v4195
    %v4197 = vsel %vm2411, %v4077, 0.0
    %v4198 = vadd.f32 %v4196, %v4197
    %v4199 = vsel %vm2411, %v4078, 0.0
    %v4200 = vadd.f32 %v4198, %v4199
    %v4201 = vsel %vm2411, %v4079, 0.0
    %v4202 = vadd.f32 %v4200, %v4201
    %v4203 = vsel %vm2411, %v4080, 0.0
    %v4204 = vadd.f32 %v4202, %v4203
    %v4205 = vsel %vm2411, %v4081, 0.0
    %v4206 = vadd.f32 %v4204, %v4205
    %v4207 = vsel %vm2411, %v4082, 0.0
    %v4208 = vadd.f32 %v4206, %v4207
    %v4209 = vsel %vm2411, %v4083, 0.0
    %v4210 = vadd.f32 %v4208, %v4209
    %v4211 = vrot.slane %v4210, 4
    %v4212 = vadd.f32 %v4210, %v4211
    %v4213 = vrot.slane %v4212, 2
    %v4214 = vadd.f32 %v4212, %v4213
    %v4215 = vrot.slane %v4214, 1
    %v4216 = vadd.f32 %v4214, %v4215
    %4217 = vst.msk [vmem:[#allocation8] sm:$0x1] %vm3321, %v4216
    %4218 = vst.msk [vmem:[%s6] sm:$0xff] %vm2411, %v3727
    %4219 = vst.msk [vmem:[%s6 + $0x8] sm:$0xff] %vm2411, %v3729
    %4220 = vst.msk [vmem:[%s6 + $0x10] sm:$0xff] %vm2411, %v3732
    %4221 = vst.msk [vmem:[%s6 + $0x18] sm:$0xff] %vm2411, %v3734
    %4222 = vst.msk [vmem:[%s6 + $0x20] sm:$0xff] %vm2411, %v3737
    %4223 = vst.msk [vmem:[%s6 + $0x28] sm:$0xff] %vm2411, %v3739
    %4224 = vst.msk [vmem:[%s6 + $0x30] sm:$0xff] %vm2411, %v3742
    %4225 = vst.msk [vmem:[%s6 + $0x38] sm:$0xff] %vm2411, %v3744
    %4226 = vst.msk [vmem:[%s6 + $0x40] sm:$0xff] %vm2411, %v3747
    %4227 = vst.msk [vmem:[%s6 + $0x48] sm:$0xff] %vm2411, %v3749
    %4228 = vst.msk [vmem:[%s6 + $0x50] sm:$0xff] %vm2411, %v3752
    %4229 = vst.msk [vmem:[%s6 + $0x58] sm:$0xff] %vm2411, %v3754
    %4230 = vst.msk [vmem:[%s6 + $0x60] sm:$0xff] %vm2411, %v3757
    %4231 = vst.msk [vmem:[%s6 + $0x68] sm:$0xff] %vm2411, %v3759
    %4232 = vst.msk [vmem:[%s6 + $0x70] sm:$0xff] %vm2411, %v3762
    %4233 = vst.msk [vmem:[%s6 + $0x78] sm:$0xff] %vm2411, %v3764
    %4234 = vst.msk [vmem:[%s6 + $0x80] sm:$0xff] %vm2411, %v3767
    %4235 = vst.msk [vmem:[%s6 + $0x88] sm:$0xff] %vm2411, %v3769
    %4236 = vst.msk [vmem:[%s6 + $0x90] sm:$0xff] %vm2411, %v3772
    %4237 = vst.msk [vmem:[%s6 + $0x98] sm:$0xff] %vm2411, %v3774
    %4238 = vst.msk [vmem:[%s6 + $0xa0] sm:$0xff] %vm2411, %v3777
    %4239 = vst.msk [vmem:[%s6 + $0xa8] sm:$0xff] %vm2411, %v3779
    %4240 = vst.msk [vmem:[%s6 + $0xb0] sm:$0xff] %vm2411, %v3782
    %4241 = vst.msk [vmem:[%s6 + $0xb8] sm:$0xff] %vm2411, %v3784
    %4242 = vst.msk [vmem:[%s6 + $0xc0] sm:$0xff] %vm2411, %v3787
    %4243 = vst.msk [vmem:[%s6 + $0xc8] sm:$0xff] %vm2411, %v3789
    %4244 = vst.msk [vmem:[%s6 + $0xd0] sm:$0xff] %vm2411, %v3792
    %4245 = vst.msk [vmem:[%s6 + $0xd8] sm:$0xff] %vm2411, %v3794
    %4246 = vst.msk [vmem:[%s6 + $0xe0] sm:$0xff] %vm2411, %v3797
    %4247 = vst.msk [vmem:[%s6 + $0xe8] sm:$0xff] %vm2411, %v3799
    %4248 = vst.msk [vmem:[%s6 + $0xf0] sm:$0xff] %vm2411, %v3802
    %4249 = vst.msk [vmem:[%s6 + $0xf8] sm:$0xff] %vm2411, %v3804
    %4250 = vst.msk [vmem:[%s6 + $0x100] sm:$0xff] %vm2411, %v3807
    %4251 = vst.msk [vmem:[%s6 + $0x108] sm:$0xff] %vm2411, %v3809
    %4252 = vst.msk [vmem:[%s6 + $0x110] sm:$0xff] %vm2411, %v3812
    %4253 = vst.msk [vmem:[%s6 + $0x118] sm:$0xff] %vm2411, %v3814
    %4254 = vst.msk [vmem:[%s6 + $0x120] sm:$0xff] %vm2411, %v3817
    %4255 = vst.msk [vmem:[%s6 + $0x128] sm:$0xff] %vm2411, %v3819
    %4256 = vst.msk [vmem:[%s6 + $0x130] sm:$0xff] %vm2411, %v3822
    %4257 = vst.msk [vmem:[%s6 + $0x138] sm:$0xff] %vm2411, %v3824
    %4258 = vst.msk [vmem:[%s6 + $0x140] sm:$0xff] %vm2411, %v3827
    %4259 = vst.msk [vmem:[%s6 + $0x148] sm:$0xff] %vm2411, %v3829
    %4260 = vst.msk [vmem:[%s6 + $0x150] sm:$0xff] %vm2411, %v3832
    %4261 = vst.msk [vmem:[%s6 + $0x158] sm:$0xff] %vm2411, %v3834
    %4262 = vst.msk [vmem:[%s6 + $0x160] sm:$0xff] %vm2411, %v3837
    %4263 = vst.msk [vmem:[%s6 + $0x168] sm:$0xff] %vm2411, %v3839
    %4264 = vst.msk [vmem:[%s6 + $0x170] sm:$0xff] %vm2411, %v3842
    %4265 = vst.msk [vmem:[%s6 + $0x178] sm:$0xff] %vm2411, %v3844
    %4266 = vst.msk [vmem:[%s6 + $0x180] sm:$0xff] %vm2411, %v3847
    %4267 = vst.msk [vmem:[%s6 + $0x188] sm:$0xff] %vm2411, %v3849
    %4268 = vst.msk [vmem:[%s6 + $0x190] sm:$0xff] %vm2411, %v3852
    %4269 = vst.msk [vmem:[%s6 + $0x198] sm:$0xff] %vm2411, %v3854
    %4270 = vst.msk [vmem:[%s6 + $0x1a0] sm:$0xff] %vm2411, %v3857
    %4271 = vst.msk [vmem:[%s6 + $0x1a8] sm:$0xff] %vm2411, %v3859
    %4272 = vst.msk [vmem:[%s6 + $0x1b0] sm:$0xff] %vm2411, %v3862
    %4273 = vst.msk [vmem:[%s6 + $0x1b8] sm:$0xff] %vm2411, %v3864
    %4274 = vst.msk [vmem:[%s6 + $0x1c0] sm:$0xff] %vm2411, %v3867
    %4275 = vst.msk [vmem:[%s6 + $0x1c8] sm:$0xff] %vm2411, %v3869
    %4276 = vst.msk [vmem:[%s6 + $0x1d0] sm:$0xff] %vm2411, %v3872
    %4277 = vst.msk [vmem:[%s6 + $0x1d8] sm:$0xff] %vm2411, %v3874
    %4278 = vst.msk [vmem:[%s6 + $0x1e0] sm:$0xff] %vm2411, %v3877
    %4279 = vst.msk [vmem:[%s6 + $0x1e8] sm:$0xff] %vm2411, %v3879
    %4280 = vst.msk [vmem:[%s6 + $0x1f0] sm:$0xff] %vm2411, %v3882
    %4281 = vst.msk [vmem:[%s6 + $0x1f8] sm:$0xff] %vm2411, %v3884
    // Predicated region
    $region14: #{tpu_custom_call.1} parent=1 // pred_check
      _
    $region15: #{tpu_custom_call.1} parent=1 // pred_check_branch
      %4283 = sbr.rel (0) target = $region17
    $region16: #{tpu_custom_call.1} parent=1 // pred_region
      _
    $region17: #{tpu_custom_call.1} parent=1 // pred_fallthru
      _
    // Predicated region
    $region18: #{tpu_custom_call.1} parent=1 // pred_check
      _
    $region19: #{tpu_custom_call.1} parent=1 // pred_check_branch
      %4285 = sbr.rel (0) target = $region21
    $region20: #{tpu_custom_call.1} parent=1 // pred_region
      %4287 = vsyncadd [#allocation4], 0
      %s4289 = sshll.u32 [#allocation3], 4
      %s4290 = int_to_ptr.vmem [resolvable:$true] %s4289
      %s4291 = sshll.u32 %s4, 4
      %s4292 = int_to_ptr.hbm [resolvable:$true] %s4291
      %4294 = dma.vmem_to_hbm [thread:$0]  %s4290, 16, %s4292, [#allocation4]
    $region21: #{tpu_custom_call.1} parent=1 // pred_fallthru
      _
    // Predicated region
    $region22: #{tpu_custom_call.1} parent=1 // pred_check
      _
    $region23: #{tpu_custom_call.1} parent=1 // pred_check_branch
      %4296 = sbr.rel (0) target = $region25
    $region24: #{tpu_custom_call.1} parent=1 // pred_region
      %4298 = vsyncadd [#allocation6], 0
      %s4300 = sshll.u32 [#allocation5], 4
      %s4301 = int_to_ptr.vmem [resolvable:$true] %s4300
      %s4302 = sshll.u32 %s5, 4
      %s4303 = int_to_ptr.hbm [resolvable:$true] %s4302
      %4305 = dma.vmem_to_hbm [thread:$0]  %s4301, 16, %s4303, [#allocation6]
    $region25: #{tpu_custom_call.1} parent=1 // pred_fallthru
      _
    // Predicated region
    $region26: #{tpu_custom_call.1} parent=1 // pred_check
      _
    $region27: #{tpu_custom_call.1} parent=1 // pred_check_branch
      %4307 = sbr.rel (0) target = $region29
    $region28: #{tpu_custom_call.1} parent=1 // pred_region
      _
    $region29: #{tpu_custom_call.1} parent=1 // pred_fallthru
      _
    // Predicated region
    $region30: #{tpu_custom_call.1} parent=1 // pred_check
      _
    $region31: #{tpu_custom_call.1} parent=1 // pred_check_branch
      %4309 = sbr.rel (0) target = $region33
    $region32: #{tpu_custom_call.1} parent=1 // pred_region
      %4311 = vsyncadd [#allocation6], 0
      %s4313 = sshll.u32 [#allocation7], 4
      %s4314 = int_to_ptr.vmem [resolvable:$true] %s4313
      %s4315 = sshll.u32 %s7, 4
      %s4316 = int_to_ptr.hbm [resolvable:$true] %s4315
      %4318 = dma.vmem_to_hbm [thread:$0]  %s4314, 16, %s4316, [#allocation6]
    $region33: #{tpu_custom_call.1} parent=1 // pred_fallthru
      _
    // Predicated region
    $region34: #{tpu_custom_call.1} parent=1 // pred_check
      _
    $region35: #{tpu_custom_call.1} parent=1 // pred_check_branch
      %4320 = sbr.rel (0) target = $region37
    $region36: #{tpu_custom_call.1} parent=1 // pred_region
      %4322 = vsyncadd [#allocation9], 0
      %s4324 = sshll.u32 [#allocation8], 4
      %s4325 = int_to_ptr.vmem [resolvable:$true] %s4324
      %s4326 = sshll.u32 %s8, 4
      %s4327 = int_to_ptr.hbm [resolvable:$true] %s4326
      %4329 = dma.vmem_to_hbm [thread:$0]  %s4325, 16, %s4327, [#allocation9]
    $region37: #{tpu_custom_call.1} parent=1 // pred_fallthru
      _
    // Predicated region
    $region38: #{tpu_custom_call.1} parent=1 // pred_check
      _
    $region39: #{tpu_custom_call.1} parent=1 // pred_check_branch
      %4331 = sbr.rel (0) target = $region41
    $region40: #{tpu_custom_call.1} parent=1 // pred_region
      _
    $region41: #{tpu_custom_call.1} parent=1 // pred_fallthru
      _
    // Predicated region
    $region42: #{tpu_custom_call.1} parent=1 // pred_check
      _
    $region43: #{tpu_custom_call.1} parent=1 // pred_check_branch
      %4333 = sbr.rel (0) target = $region45
    $region44: #{tpu_custom_call.1} parent=1 // pred_region
      %4335 = dma.done [#allocation4], 16
    $region45: #{tpu_custom_call.1} parent=1 // pred_fallthru
      _
    // Predicated region
    $region46: #{tpu_custom_call.1} parent=1 // pred_check
      _
    $region47: #{tpu_custom_call.1} parent=1 // pred_check_branch
      %4337 = sbr.rel (0) target = $region49
    $region48: #{tpu_custom_call.1} parent=1 // pred_region
      %4339 = dma.done [#allocation6], 16
    $region49: #{tpu_custom_call.1} parent=1 // pred_fallthru
      _
    // Predicated region
    $region50: #{tpu_custom_call.1} parent=1 // pred_check
      _
    $region51: #{tpu_custom_call.1} parent=1 // pred_check_branch
      %4341 = sbr.rel (0) target = $region53
    $region52: #{tpu_custom_call.1} parent=1 // pred_region
      _
    $region53: #{tpu_custom_call.1} parent=1 // pred_fallthru
      _
    // Predicated region
    $region54: #{tpu_custom_call.1} parent=1 // pred_check
      _
    $region55: #{tpu_custom_call.1} parent=1 // pred_check_branch
      %4343 = sbr.rel (0) target = $region57
    $region56: #{tpu_custom_call.1} parent=1 // pred_region
      %4345 = dma.done [#allocation6], 16
    $region57: #{tpu_custom_call.1} parent=1 // pred_fallthru
      _
    // Predicated region
    $region58: #{tpu_custom_call.1} parent=1 // pred_check
      _
    $region59: #{tpu_custom_call.1} parent=1 // pred_check_branch
      %4347 = sbr.rel (0) target = $region61
    $region60: #{tpu_custom_call.1} parent=1 // pred_region
      %4349 = dma.done [#allocation9], 16
    $region61: #{tpu_custom_call.1} parent=1 // pred_fallthru
      _
    %4350 = vsyncpa [#allocation4], 1
    %4351 = vsyncpa [#allocation6], 1
    %4352 = vsyncpa [#allocation9], 1

// kernel: tpu_custom_call.1
$region0: #{tpu_custom_call.1}
  #allocation0 [shape = 'u32[]', space=smem, size = 0x4, offset = 0x4, fixed_abs, tag = 'smem constant byte address 0x4 - core index']
  #allocation1 [shape = 'u32[72,128]{1,0:T(1,128)}', space=vmem, size = 0x9000, scoped, tag = 'internal scratch']
  #allocation2 [shape = 'f32[2,18,18,4]{3,2,1,0:T(8,128)}', space=vmem, size = 0x6c000, scoped, tag = 'scratch operand']
  %s0 = inlined_call_operand.vmem [shape: f32[2,16,16,4], index: 0, kind: input, shape index: {}]
  %s1 = inlined_call_operand.vmem [shape: bf16[36,8], index: 1, kind: input, shape index: {}]
  %s2 = inlined_call_operand.vmem [shape: bf16[4,8], index: 2, kind: input, shape index: {}]
  %s3 = inlined_call_operand.vmem [shape: f32[2,16,16,8], index: 3, kind: output, shape index: {0}]
  %s4 = inlined_call_operand.hbm [shape: f32[1,1,8], index: 4, kind: output, shape index: {1}]
  %s5 = inlined_call_operand.hbm [shape: f32[1,1,8], index: 5, kind: output, shape index: {2}]
  %s6 = inlined_call_operand.vmem [shape: f32[2,16,16,8], index: 6, kind: output, shape index: {3}]
  %s7 = inlined_call_operand.hbm [shape: f32[1,1,8], index: 7, kind: output, shape index: {4}]
  %s8 = inlined_call_operand.hbm [shape: f32[1,1,8], index: 8, kind: output, shape index: {5}]
  %9 = xla_tuple %s3, %s4, %s5, %s6, %s7, %s8
  %s10 = sld [smem:[#allocation0]]
  $region62: #{tpu_custom_call.1} parent=0
    _
  %s12 = ssub.s32 1, %s10
  %s13 = scalar_select 0, %s12, %s10
  $region1: #{tpu_custom_call.1} parent=0
    #allocation3 [shape = 'u8[512]{0}', space=vmem, size = 0x400, scoped, tag = 'output window, operand 1, single buffered']
    #allocation4 [shape = 's32[1]{0}', space=sflag, size = 0x4, scoped, tag = 'scoped memory for tpu_custom_call.1']
    #allocation5 [shape = 'u8[512]{0}', space=vmem, size = 0x400, scoped, tag = 'output window, operand 2, single buffered']
    #allocation6 [shape = 's32[1]{0}', space=sflag, size = 0x4, scoped, tag = 'scoped memory for tpu_custom_call.1']
    #allocation7 [shape = 'u8[512]{0}', space=vmem, size = 0x400, scoped, tag = 'output window, operand 4, single buffered']
    #allocation8 [shape = 'u8[512]{0}', space=vmem, size = 0x400, scoped, tag = 'output window, operand 5, single buffered']
    #allocation9 [shape = 's32[1]{0}', space=sflag, size = 0x4, scoped, tag = 'scoped memory for tpu_custom_call.1']
    %14 = vsyncpa [#allocation4], 0
    %15 = vsyncpa [#allocation6], 0
    %16 = vsyncpa [#allocation9], 0
    // Predicated region
    $region2: #{tpu_custom_call.1} parent=1 // pred_check
      _
    $region3: #{tpu_custom_call.1} parent=1 // pred_check_branch
      %18 = sbr.rel (0) target = $region5
    $region4: #{tpu_custom_call.1} parent=1 // pred_region
      _
    $region5: #{tpu_custom_call.1} parent=1 // pred_fallthru
      _
    // Predicated region
    $region6: #{tpu_custom_call.1} parent=1 // pred_check
      _
    $region7: #{tpu_custom_call.1} parent=1 // pred_check_branch
      %20 = sbr.rel (0) target = $region9
    $region8: #{tpu_custom_call.1} parent=1 // pred_region
      _
    $region9: #{tpu_custom_call.1} parent=1 // pred_fallthru
      _
    // Predicated region
    $region10: #{tpu_custom_call.1} parent=1 // pred_check
      _
    $region11: #{tpu_custom_call.1} parent=1 // pred_check_branch
      %22 = sbr.rel (0) target = $region13
    $region12: #{tpu_custom_call.1} parent=1 // pred_region
      _
    $region13: #{tpu_custom_call.1} parent=1 // pred_fallthru
      _
    %v24 = vld [vmem:[%s0] sm:$0xff]
    %v25 = vld [vmem:[%s0 + $0x8] sm:$0xff]
    %v26 = vld [vmem:[%s0 + $0x10] sm:$0xff]
    %v27 = vld [vmem:[%s0 + $0x18] sm:$0xff]
    %v28 = vld [vmem:[%s0 + $0x20] sm:$0xff]
    %v29 = vld [vmem:[%s0 + $0x28] sm:$0xff]
    %v30 = vld [vmem:[%s0 + $0x30] sm:$0xff]
    %v31 = vld [vmem:[%s0 + $0x38] sm:$0xff]
    %v32 = vld [vmem:[%s0 + $0x40] sm:$0xff]
    %v33 = vld [vmem:[%s0 + $0x48] sm:$0xff]
    %v34 = vld [vmem:[%s0 + $0x50] sm:$0xff]
    %v35 = vld [vmem:[%s0 + $0x58] sm:$0xff]
    %v36 = vld [vmem:[%s0 + $0x60] sm:$0xff]
    %v37 = vld [vmem:[%s0 + $0x68] sm:$0xff]
    %v38 = vld [vmem:[%s0 + $0x70] sm:$0xff]
    %v39 = vld [vmem:[%s0 + $0x78] sm:$0xff]
    %v40 = vld [vmem:[%s0 + $0x80] sm:$0xff]
    %v41 = vld [vmem:[%s0 + $0x88] sm:$0xff]
    %v42 = vld [vmem:[%s0 + $0x90] sm:$0xff]
    %v43 = vld [vmem:[%s0 + $0x98] sm:$0xff]
    %v44 = vld [vmem:[%s0 + $0xa0] sm:$0xff]
    %v45 = vld [vmem:[%s0 + $0xa8] sm:$0xff]
    %v46 = vld [vmem:[%s0 + $0xb0] sm:$0xff]
    %v47 = vld [vmem:[%s0 + $0xb8] sm:$0xff]
    %v48 = vld [vmem:[%s0 + $0xc0] sm:$0xff]
    %v49 = vld [vmem:[%s0 + $0xc8] sm:$0xff]
    %v50 = vld [vmem:[%s0 + $0xd0] sm:$0xff]
    %v51 = vld [vmem:[%s0 + $0xd8] sm:$0xff]
    %v52 = vld [vmem:[%s0 + $0xe0] sm:$0xff]
    %v53 = vld [vmem:[%s0 + $0xe8] sm:$0xff]
    %v54 = vld [vmem:[%s0 + $0xf0] sm:$0xff]
    %v55 = vld [vmem:[%s0 + $0xf8] sm:$0xff]
    %v56 = vld [vmem:[%s0 + $0x100] sm:$0xff]
    %v57 = vld [vmem:[%s0 + $0x108] sm:$0xff]
    %v58 = vld [vmem:[%s0 + $0x110] sm:$0xff]
    %v59 = vld [vmem:[%s0 + $0x118] sm:$0xff]
    %v60 = vld [vmem:[%s0 + $0x120] sm:$0xff]
    %v61 = vld [vmem:[%s0 + $0x128] sm:$0xff]
    %v62 = vld [vmem:[%s0 + $0x130] sm:$0xff]
    %v63 = vld [vmem:[%s0 + $0x138] sm:$0xff]
    %v64 = vld [vmem:[%s0 + $0x140] sm:$0xff]
    %v65 = vld [vmem:[%s0 + $0x148] sm:$0xff]
    %v66 = vld [vmem:[%s0 + $0x150] sm:$0xff]
    %v67 = vld [vmem:[%s0 + $0x158] sm:$0xff]
    %v68 = vld [vmem:[%s0 + $0x160] sm:$0xff]
    %v69 = vld [vmem:[%s0 + $0x168] sm:$0xff]
    %v70 = vld [vmem:[%s0 + $0x170] sm:$0xff]
    %v71 = vld [vmem:[%s0 + $0x178] sm:$0xff]
    %v72 = vld [vmem:[%s0 + $0x180] sm:$0xff]
    %v73 = vld [vmem:[%s0 + $0x188] sm:$0xff]
    %v74 = vld [vmem:[%s0 + $0x190] sm:$0xff]
    %v75 = vld [vmem:[%s0 + $0x198] sm:$0xff]
    %v76 = vld [vmem:[%s0 + $0x1a0] sm:$0xff]
    %v77 = vld [vmem:[%s0 + $0x1a8] sm:$0xff]
    %v78 = vld [vmem:[%s0 + $0x1b0] sm:$0xff]
    %v79 = vld [vmem:[%s0 + $0x1b8] sm:$0xff]
    %v80 = vld [vmem:[%s0 + $0x1c0] sm:$0xff]
    %v81 = vld [vmem:[%s0 + $0x1c8] sm:$0xff]
    %v82 = vld [vmem:[%s0 + $0x1d0] sm:$0xff]
    %v83 = vld [vmem:[%s0 + $0x1d8] sm:$0xff]
    %v84 = vld [vmem:[%s0 + $0x1e0] sm:$0xff]
    %v85 = vld [vmem:[%s0 + $0x1e8] sm:$0xff]
    %v86 = vld [vmem:[%s0 + $0x1f0] sm:$0xff]
    %v87 = vld [vmem:[%s0 + $0x1f8] sm:$0xff]
    %vm88 = vcmask 31744
    %89 = vst.msk [vmem:[#allocation2] sm:$0xff] %vm88, 0.0
    %90 = vst.msk [vmem:[#allocation2 + $0x8] sm:$0xff] %vm88, 0.0
    %vm91 = vcmask 25600
    %92 = vst.msk [vmem:[#allocation2 + $0x10] sm:$0x3] %vm91, 0.0
    %93 = vst.msk [vmem:[#allocation2 + $0x18] sm:$0xff] %vm88, 0.0
    %94 = vst.msk [vmem:[#allocation2 + $0x20] sm:$0xff] %vm88, 0.0
    %95 = vst.msk [vmem:[#allocation2 + $0x28] sm:$0x3] %vm91, 0.0
    %96 = vst.msk [vmem:[#allocation2 + $0x30] sm:$0xff] %vm88, 0.0
    %97 = vst.msk [vmem:[#allocation2 + $0x38] sm:$0xff] %vm88, 0.0
    %98 = vst.msk [vmem:[#allocation2 + $0x40] sm:$0x3] %vm91, 0.0
    %99 = vst.msk [vmem:[#allocation2 + $0x48] sm:$0xff] %vm88, 0.0
    %100 = vst.msk [vmem:[#allocation2 + $0x50] sm:$0xff] %vm88, 0.0
    %101 = vst.msk [vmem:[#allocation2 + $0x58] sm:$0x3] %vm91, 0.0
    %102 = vst.msk [vmem:[#allocation2 + $0x60] sm:$0xff] %vm88, 0.0
    %103 = vst.msk [vmem:[#allocation2 + $0x68] sm:$0xff] %vm88, 0.0
    %104 = vst.msk [vmem:[#allocation2 + $0x70] sm:$0x3] %vm91, 0.0
    %105 = vst.msk [vmem:[#allocation2 + $0x78] sm:$0xff] %vm88, 0.0
    %106 = vst.msk [vmem:[#allocation2 + $0x80] sm:$0xff] %vm88, 0.0
    %107 = vst.msk [vmem:[#allocation2 + $0x88] sm:$0x3] %vm91, 0.0
    %108 = vst.msk [vmem:[#allocation2 + $0x90] sm:$0xff] %vm88, 0.0
    %109 = vst.msk [vmem:[#allocation2 + $0x98] sm:$0xff] %vm88, 0.0
    %110 = vst.msk [vmem:[#allocation2 + $0xa0] sm:$0x3] %vm91, 0.0
    %111 = vst.msk [vmem:[#allocation2 + $0xa8] sm:$0xff] %vm88, 0.0
    %112 = vst.msk [vmem:[#allocation2 + $0xb0] sm:$0xff] %vm88, 0.0
    %113 = vst.msk [vmem:[#allocation2 + $0xb8] sm:$0x3] %vm91, 0.0
    %114 = vst.msk [vmem:[#allocation2 + $0xc0] sm:$0xff] %vm88, 0.0
    %115 = vst.msk [vmem:[#allocation2 + $0xc8] sm:$0xff] %vm88, 0.0
    %116 = vst.msk [vmem:[#allocation2 + $0xd0] sm:$0x3] %vm91, 0.0
    %117 = vst.msk [vmem:[#allocation2 + $0xd8] sm:$0xff] %vm88, 0.0
    %118 = vst.msk [vmem:[#allocation2 + $0xe0] sm:$0xff] %vm88, 0.0
    %119 = vst.msk [vmem:[#allocation2 + $0xe8] sm:$0x3] %vm91, 0.0
    %120 = vst.msk [vmem:[#allocation2 + $0xf0] sm:$0xff] %vm88, 0.0
    %121 = vst.msk [vmem:[#allocation2 + $0xf8] sm:$0xff] %vm88, 0.0
    %122 = vst.msk [vmem:[#allocation2 + $0x100] sm:$0x3] %vm91, 0.0
    %123 = vst.msk [vmem:[#allocation2 + $0x108] sm:$0xff] %vm88, 0.0
    %124 = vst.msk [vmem:[#allocation2 + $0x110] sm:$0xff] %vm88, 0.0
    %125 = vst.msk [vmem:[#allocation2 + $0x118] sm:$0x3] %vm91, 0.0
    %126 = vst.msk [vmem:[#allocation2 + $0x120] sm:$0xff] %vm88, 0.0
    %127 = vst.msk [vmem:[#allocation2 + $0x128] sm:$0xff] %vm88, 0.0
    %128 = vst.msk [vmem:[#allocation2 + $0x130] sm:$0x3] %vm91, 0.0
    %129 = vst.msk [vmem:[#allocation2 + $0x138] sm:$0xff] %vm88, 0.0
    %130 = vst.msk [vmem:[#allocation2 + $0x140] sm:$0xff] %vm88, 0.0
    %131 = vst.msk [vmem:[#allocation2 + $0x148] sm:$0x3] %vm91, 0.0
    %132 = vst.msk [vmem:[#allocation2 + $0x150] sm:$0xff] %vm88, 0.0
    %133 = vst.msk [vmem:[#allocation2 + $0x158] sm:$0xff] %vm88, 0.0
    %134 = vst.msk [vmem:[#allocation2 + $0x160] sm:$0x3] %vm91, 0.0
    %135 = vst.msk [vmem:[#allocation2 + $0x168] sm:$0xff] %vm88, 0.0
    %136 = vst.msk [vmem:[#allocation2 + $0x170] sm:$0xff] %vm88, 0.0
    %137 = vst.msk [vmem:[#allocation2 + $0x178] sm:$0x3] %vm91, 0.0
    %138 = vst.msk [vmem:[#allocation2 + $0x180] sm:$0xff] %vm88, 0.0
    %139 = vst.msk [vmem:[#allocation2 + $0x188] sm:$0xff] %vm88, 0.0
    %140 = vst.msk [vmem:[#allocation2 + $0x190] sm:$0x3] %vm91, 0.0
    %141 = vst.msk [vmem:[#allocation2 + $0x198] sm:$0xff] %vm88, 0.0
    %142 = vst.msk [vmem:[#allocation2 + $0x1a0] sm:$0xff] %vm88, 0.0
    %143 = vst.msk [vmem:[#allocation2 + $0x1a8] sm:$0x3] %vm91, 0.0
    %144 = vst.msk [vmem:[#allocation2 + $0x1b0] sm:$0xff] %vm88, 0.0
    %145 = vst.msk [vmem:[#allocation2 + $0x1b8] sm:$0xff] %vm88, 0.0
    %146 = vst.msk [vmem:[#allocation2 + $0x1c0] sm:$0x3] %vm91, 0.0
    %147 = vst.msk [vmem:[#allocation2 + $0x1c8] sm:$0xff] %vm88, 0.0
    %148 = vst.msk [vmem:[#allocation2 + $0x1d0] sm:$0xff] %vm88, 0.0
    %149 = vst.msk [vmem:[#allocation2 + $0x1d8] sm:$0x3] %vm91, 0.0
    %150 = vst.msk [vmem:[#allocation2 + $0x1e0] sm:$0xff] %vm88, 0.0
    %151 = vst.msk [vmem:[#allocation2 + $0x1e8] sm:$0xff] %vm88, 0.0
    %152 = vst.msk [vmem:[#allocation2 + $0x1f0] sm:$0x3] %vm91, 0.0
    %153 = vst.msk [vmem:[#allocation2 + $0x1f8] sm:$0xff] %vm88, 0.0
    %154 = vst.msk [vmem:[#allocation2 + $0x200] sm:$0xff] %vm88, 0.0
    %155 = vst.msk [vmem:[#allocation2 + $0x208] sm:$0x3] %vm91, 0.0
    %156 = vst.msk [vmem:[#allocation2 + $0x210] sm:$0xff] %vm88, 0.0
    %157 = vst.msk [vmem:[#allocation2 + $0x218] sm:$0xff] %vm88, 0.0
    %158 = vst.msk [vmem:[#allocation2 + $0x220] sm:$0x3] %vm91, 0.0
    %159 = vst.msk [vmem:[#allocation2 + $0x228] sm:$0xff] %vm88, 0.0
    %160 = vst.msk [vmem:[#allocation2 + $0x230] sm:$0xff] %vm88, 0.0
    %161 = vst.msk [vmem:[#allocation2 + $0x238] sm:$0x3] %vm91, 0.0
    %162 = vst.msk [vmem:[#allocation2 + $0x240] sm:$0xff] %vm88, 0.0
    %163 = vst.msk [vmem:[#allocation2 + $0x248] sm:$0xff] %vm88, 0.0
    %164 = vst.msk [vmem:[#allocation2 + $0x250] sm:$0x3] %vm91, 0.0
    %165 = vst.msk [vmem:[#allocation2 + $0x258] sm:$0xff] %vm88, 0.0
    %166 = vst.msk [vmem:[#allocation2 + $0x260] sm:$0xff] %vm88, 0.0
    %167 = vst.msk [vmem:[#allocation2 + $0x268] sm:$0x3] %vm91, 0.0
    %168 = vst.msk [vmem:[#allocation2 + $0x270] sm:$0xff] %vm88, 0.0
    %169 = vst.msk [vmem:[#allocation2 + $0x278] sm:$0xff] %vm88, 0.0
    %170 = vst.msk [vmem:[#allocation2 + $0x280] sm:$0x3] %vm91, 0.0
    %171 = vst.msk [vmem:[#allocation2 + $0x288] sm:$0xff] %vm88, 0.0
    %172 = vst.msk [vmem:[#allocation2 + $0x290] sm:$0xff] %vm88, 0.0
    %173 = vst.msk [vmem:[#allocation2 + $0x298] sm:$0x3] %vm91, 0.0
    %174 = vst.msk [vmem:[#allocation2 + $0x2a0] sm:$0xff] %vm88, 0.0
    %175 = vst.msk [vmem:[#allocation2 + $0x2a8] sm:$0xff] %vm88, 0.0
    %176 = vst.msk [vmem:[#allocation2 + $0x2b0] sm:$0x3] %vm91, 0.0
    %177 = vst.msk [vmem:[#allocation2 + $0x2b8] sm:$0xff] %vm88, 0.0
    %178 = vst.msk [vmem:[#allocation2 + $0x2c0] sm:$0xff] %vm88, 0.0
    %179 = vst.msk [vmem:[#allocation2 + $0x2c8] sm:$0x3] %vm91, 0.0
    %180 = vst.msk [vmem:[#allocation2 + $0x2d0] sm:$0xff] %vm88, 0.0
    %181 = vst.msk [vmem:[#allocation2 + $0x2d8] sm:$0xff] %vm88, 0.0
    %182 = vst.msk [vmem:[#allocation2 + $0x2e0] sm:$0x3] %vm91, 0.0
    %183 = vst.msk [vmem:[#allocation2 + $0x2e8] sm:$0xff] %vm88, 0.0
    %184 = vst.msk [vmem:[#allocation2 + $0x2f0] sm:$0xff] %vm88, 0.0
    %185 = vst.msk [vmem:[#allocation2 + $0x2f8] sm:$0x3] %vm91, 0.0
    %186 = vst.msk [vmem:[#allocation2 + $0x300] sm:$0xff] %vm88, 0.0
    %187 = vst.msk [vmem:[#allocation2 + $0x308] sm:$0xff] %vm88, 0.0
    %188 = vst.msk [vmem:[#allocation2 + $0x310] sm:$0x3] %vm91, 0.0
    %189 = vst.msk [vmem:[#allocation2 + $0x318] sm:$0xff] %vm88, 0.0
    %190 = vst.msk [vmem:[#allocation2 + $0x320] sm:$0xff] %vm88, 0.0
    %191 = vst.msk [vmem:[#allocation2 + $0x328] sm:$0x3] %vm91, 0.0
    %192 = vst.msk [vmem:[#allocation2 + $0x330] sm:$0xff] %vm88, 0.0
    %193 = vst.msk [vmem:[#allocation2 + $0x338] sm:$0xff] %vm88, 0.0
    %194 = vst.msk [vmem:[#allocation2 + $0x340] sm:$0x3] %vm91, 0.0
    %195 = vst.msk [vmem:[#allocation2 + $0x348] sm:$0xff] %vm88, 0.0
    %196 = vst.msk [vmem:[#allocation2 + $0x350] sm:$0xff] %vm88, 0.0
    %197 = vst.msk [vmem:[#allocation2 + $0x358] sm:$0x3] %vm91, 0.0
    %s198 = scalar_lea.vmem [#allocation2], 24
    %199 = vst.msk [vmem:[%s198 + $0x1] sm:$0xff] %vm88, %v24
    %200 = vst.msk [vmem:[%s198 + $0x9] sm:$0xff] %vm88, %v25
    %201 = vst.msk [vmem:[%s198 + $0x19] sm:$0xff] %vm88, %v26
    %202 = vst.msk [vmem:[%s198 + $0x21] sm:$0xff] %vm88, %v27
    %203 = vst.msk [vmem:[%s198 + $0x31] sm:$0xff] %vm88, %v28
    %204 = vst.msk [vmem:[%s198 + $0x39] sm:$0xff] %vm88, %v29
    %205 = vst.msk [vmem:[%s198 + $0x49] sm:$0xff] %vm88, %v30
    %206 = vst.msk [vmem:[%s198 + $0x51] sm:$0xff] %vm88, %v31
    %207 = vst.msk [vmem:[%s198 + $0x61] sm:$0xff] %vm88, %v32
    %208 = vst.msk [vmem:[%s198 + $0x69] sm:$0xff] %vm88, %v33
    %209 = vst.msk [vmem:[%s198 + $0x79] sm:$0xff] %vm88, %v34
    %210 = vst.msk [vmem:[%s198 + $0x81] sm:$0xff] %vm88, %v35
    %211 = vst.msk [vmem:[%s198 + $0x91] sm:$0xff] %vm88, %v36
    %212 = vst.msk [vmem:[%s198 + $0x99] sm:$0xff] %vm88, %v37
    %213 = vst.msk [vmem:[%s198 + $0xa9] sm:$0xff] %vm88, %v38
    %214 = vst.msk [vmem:[%s198 + $0xb1] sm:$0xff] %vm88, %v39
    %215 = vst.msk [vmem:[%s198 + $0xc1] sm:$0xff] %vm88, %v40
    %216 = vst.msk [vmem:[%s198 + $0xc9] sm:$0xff] %vm88, %v41
    %217 = vst.msk [vmem:[%s198 + $0xd9] sm:$0xff] %vm88, %v42
    %218 = vst.msk [vmem:[%s198 + $0xe1] sm:$0xff] %vm88, %v43
    %219 = vst.msk [vmem:[%s198 + $0xf1] sm:$0xff] %vm88, %v44
    %220 = vst.msk [vmem:[%s198 + $0xf9] sm:$0xff] %vm88, %v45
    %221 = vst.msk [vmem:[%s198 + $0x109] sm:$0xff] %vm88, %v46
    %222 = vst.msk [vmem:[%s198 + $0x111] sm:$0xff] %vm88, %v47
    %223 = vst.msk [vmem:[%s198 + $0x121] sm:$0xff] %vm88, %v48
    %224 = vst.msk [vmem:[%s198 + $0x129] sm:$0xff] %vm88, %v49
    %225 = vst.msk [vmem:[%s198 + $0x139] sm:$0xff] %vm88, %v50
    %226 = vst.msk [vmem:[%s198 + $0x141] sm:$0xff] %vm88, %v51
    %227 = vst.msk [vmem:[%s198 + $0x151] sm:$0xff] %vm88, %v52
    %228 = vst.msk [vmem:[%s198 + $0x159] sm:$0xff] %vm88, %v53
    %229 = vst.msk [vmem:[%s198 + $0x169] sm:$0xff] %vm88, %v54
    %230 = vst.msk [vmem:[%s198 + $0x171] sm:$0xff] %vm88, %v55
    %231 = vst.msk [vmem:[%s198 + $0x1b1] sm:$0xff] %vm88, %v56
    %232 = vst.msk [vmem:[%s198 + $0x1b9] sm:$0xff] %vm88, %v57
    %233 = vst.msk [vmem:[%s198 + $0x1c9] sm:$0xff] %vm88, %v58
    %234 = vst.msk [vmem:[%s198 + $0x1d1] sm:$0xff] %vm88, %v59
    %235 = vst.msk [vmem:[%s198 + $0x1e1] sm:$0xff] %vm88, %v60
    %236 = vst.msk [vmem:[%s198 + $0x1e9] sm:$0xff] %vm88, %v61
    %237 = vst.msk [vmem:[%s198 + $0x1f9] sm:$0xff] %vm88, %v62
    %238 = vst.msk [vmem:[%s198 + $0x201] sm:$0xff] %vm88, %v63
    %239 = vst.msk [vmem:[%s198 + $0x211] sm:$0xff] %vm88, %v64
    %240 = vst.msk [vmem:[%s198 + $0x219] sm:$0xff] %vm88, %v65
    %241 = vst.msk [vmem:[%s198 + $0x229] sm:$0xff] %vm88, %v66
    %242 = vst.msk [vmem:[%s198 + $0x231] sm:$0xff] %vm88, %v67
    %243 = vst.msk [vmem:[%s198 + $0x241] sm:$0xff] %vm88, %v68
    %244 = vst.msk [vmem:[%s198 + $0x249] sm:$0xff] %vm88, %v69
    %245 = vst.msk [vmem:[%s198 + $0x259] sm:$0xff] %vm88, %v70
    %246 = vst.msk [vmem:[%s198 + $0x261] sm:$0xff] %vm88, %v71
    %247 = vst.msk [vmem:[%s198 + $0x271] sm:$0xff] %vm88, %v72
    %248 = vst.msk [vmem:[%s198 + $0x279] sm:$0xff] %vm88, %v73
    %249 = vst.msk [vmem:[%s198 + $0x289] sm:$0xff] %vm88, %v74
    %250 = vst.msk [vmem:[%s198 + $0x291] sm:$0xff] %vm88, %v75
    %251 = vst.msk [vmem:[%s198 + $0x2a1] sm:$0xff] %vm88, %v76
    %252 = vst.msk [vmem:[%s198 + $0x2a9] sm:$0xff] %vm88, %v77
    %253 = vst.msk [vmem:[%s198 + $0x2b9] sm:$0xff] %vm88, %v78
    %254 = vst.msk [vmem:[%s198 + $0x2c1] sm:$0xff] %vm88, %v79
    %255 = vst.msk [vmem:[%s198 + $0x2d1] sm:$0xff] %vm88, %v80
    %256 = vst.msk [vmem:[%s198 + $0x2d9] sm:$0xff] %vm88, %v81
    %257 = vst.msk [vmem:[%s198 + $0x2e9] sm:$0xff] %vm88, %v82
    %258 = vst.msk [vmem:[%s198 + $0x2f1] sm:$0xff] %vm88, %v83
    %259 = vst.msk [vmem:[%s198 + $0x301] sm:$0xff] %vm88, %v84
    %260 = vst.msk [vmem:[%s198 + $0x309] sm:$0xff] %vm88, %v85
    %261 = vst.msk [vmem:[%s198 + $0x319] sm:$0xff] %vm88, %v86
    %262 = vst.msk [vmem:[%s198 + $0x321] sm:$0xff] %vm88, %v87
    %v263 = vld [vmem:[#allocation2] sm:$0xff]
    %v264 = vld [vmem:[#allocation2 + $0x8] sm:$0xff]
    %v265 = vld [vmem:[#allocation2 + $0x10] sm:$0x3]
    %v266 = vld [vmem:[#allocation2 + $0x18] sm:$0xff]
    %v267 = vld [vmem:[#allocation2 + $0x20] sm:$0xff]
    %v268 = vld [vmem:[#allocation2 + $0x28] sm:$0x3]
    %v269 = vld [vmem:[#allocation2 + $0x30] sm:$0xff]
    %v270 = vld [vmem:[#allocation2 + $0x38] sm:$0xff]
    %v271 = vld [vmem:[#allocation2 + $0x40] sm:$0x3]
    %v272 = vld [vmem:[#allocation2 + $0x48] sm:$0xff]
    %v273 = vld [vmem:[#allocation2 + $0x50] sm:$0xff]
    %v274 = vld [vmem:[#allocation2 + $0x58] sm:$0x3]
    %v275 = vld [vmem:[#allocation2 + $0x60] sm:$0xff]
    %v276 = vld [vmem:[#allocation2 + $0x68] sm:$0xff]
    %v277 = vld [vmem:[#allocation2 + $0x70] sm:$0x3]
    %v278 = vld [vmem:[#allocation2 + $0x78] sm:$0xff]
    %v279 = vld [vmem:[#allocation2 + $0x80] sm:$0xff]
    %v280 = vld [vmem:[#allocation2 + $0x88] sm:$0x3]
    %v281 = vld [vmem:[#allocation2 + $0x90] sm:$0xff]
    %v282 = vld [vmem:[#allocation2 + $0x98] sm:$0xff]
    %v283 = vld [vmem:[#allocation2 + $0xa0] sm:$0x3]
    %v284 = vld [vmem:[#allocation2 + $0xa8] sm:$0xff]
    %v285 = vld [vmem:[#allocation2 + $0xb0] sm:$0xff]
    %v286 = vld [vmem:[#allocation2 + $0xb8] sm:$0x3]
    %v287 = vld [vmem:[#allocation2 + $0xc0] sm:$0xff]
    %v288 = vld [vmem:[#allocation2 + $0xc8] sm:$0xff]
    %v289 = vld [vmem:[#allocation2 + $0xd0] sm:$0x3]
    %v290 = vld [vmem:[#allocation2 + $0xd8] sm:$0xff]
    %v291 = vld [vmem:[#allocation2 + $0xe0] sm:$0xff]
    %v292 = vld [vmem:[#allocation2 + $0xe8] sm:$0x3]
    %v293 = vld [vmem:[#allocation2 + $0xf0] sm:$0xff]
    %v294 = vld [vmem:[#allocation2 + $0xf8] sm:$0xff]
    %v295 = vld [vmem:[#allocation2 + $0x100] sm:$0x3]
    %v296 = vld [vmem:[#allocation2 + $0x108] sm:$0xff]
    %v297 = vld [vmem:[#allocation2 + $0x110] sm:$0xff]
    %v298 = vld [vmem:[#allocation2 + $0x118] sm:$0x3]
    %v299 = vld [vmem:[#allocation2 + $0x120] sm:$0xff]
    %v300 = vld [vmem:[#allocation2 + $0x128] sm:$0xff]
    %v301 = vld [vmem:[#allocation2 + $0x130] sm:$0x3]
    %v302 = vld [vmem:[#allocation2 + $0x138] sm:$0xff]
    %v303 = vld [vmem:[#allocation2 + $0x140] sm:$0xff]
    %v304 = vld [vmem:[#allocation2 + $0x148] sm:$0x3]
    %v305 = vld [vmem:[#allocation2 + $0x150] sm:$0xff]
    %v306 = vld [vmem:[#allocation2 + $0x158] sm:$0xff]
    %v307 = vld [vmem:[#allocation2 + $0x160] sm:$0x3]
    %v308 = vld [vmem:[#allocation2 + $0x168] sm:$0xff]
    %v309 = vld [vmem:[#allocation2 + $0x170] sm:$0xff]
    %v310 = vld [vmem:[#allocation2 + $0x178] sm:$0x3]
    %v311 = vld [vmem:[#allocation2 + $0x180] sm:$0xff]
    %v312 = vld [vmem:[#allocation2 + $0x188] sm:$0xff]
    %v313 = vld [vmem:[#allocation2 + $0x190] sm:$0x3]
    %v314 = vld [vmem:[#allocation2 + $0x198] sm:$0xff]
    %v315 = vld [vmem:[#allocation2 + $0x1a0] sm:$0xff]
    %v316 = vld [vmem:[#allocation2 + $0x1a8] sm:$0x3]
    %v317 = vld [vmem:[#allocation2 + $0x1b0] sm:$0xff]
    %v318 = vld [vmem:[#allocation2 + $0x1b8] sm:$0xff]
    %v319 = vld [vmem:[#allocation2 + $0x1c0] sm:$0x3]
    %v320 = vld [vmem:[#allocation2 + $0x1c8] sm:$0xff]
    %v321 = vld [vmem:[#allocation2 + $0x1d0] sm:$0xff]
    %v322 = vld [vmem:[#allocation2 + $0x1d8] sm:$0x3]
    %v323 = vld [vmem:[#allocation2 + $0x1e0] sm:$0xff]
    %v324 = vld [vmem:[#allocation2 + $0x1e8] sm:$0xff]
    %v325 = vld [vmem:[#allocation2 + $0x1f0] sm:$0x3]
    %v326 = vld [vmem:[#allocation2 + $0x1f8] sm:$0xff]
    %v327 = vld [vmem:[#allocation2 + $0x200] sm:$0xff]
    %v328 = vld [vmem:[#allocation2 + $0x208] sm:$0x3]
    %v329 = vld [vmem:[#allocation2 + $0x210] sm:$0xff]
    %v330 = vld [vmem:[#allocation2 + $0x218] sm:$0xff]
    %v331 = vld [vmem:[#allocation2 + $0x220] sm:$0x3]
    %v332 = vld [vmem:[#allocation2 + $0x228] sm:$0xff]
    %v333 = vld [vmem:[#allocation2 + $0x230] sm:$0xff]
    %v334 = vld [vmem:[#allocation2 + $0x238] sm:$0x3]
    %v335 = vld [vmem:[#allocation2 + $0x240] sm:$0xff]
    %v336 = vld [vmem:[#allocation2 + $0x248] sm:$0xff]
    %v337 = vld [vmem:[#allocation2 + $0x250] sm:$0x3]
    %v338 = vld [vmem:[#allocation2 + $0x258] sm:$0xff]
    %v339 = vld [vmem:[#allocation2 + $0x260] sm:$0xff]
    %v340 = vld [vmem:[#allocation2 + $0x268] sm:$0x3]
    %v341 = vld [vmem:[#allocation2 + $0x270] sm:$0xff]
    %v342 = vld [vmem:[#allocation2 + $0x278] sm:$0xff]
    %v343 = vld [vmem:[#allocation2 + $0x280] sm:$0x3]
    %v344 = vld [vmem:[#allocation2 + $0x288] sm:$0xff]
    %v345 = vld [vmem:[#allocation2 + $0x290] sm:$0xff]
    %v346 = vld [vmem:[#allocation2 + $0x298] sm:$0x3]
    %v347 = vld [vmem:[#allocation2 + $0x2a0] sm:$0xff]
    %v348 = vld [vmem:[#allocation2 + $0x2a8] sm:$0xff]
    %v349 = vld [vmem:[#allocation2 + $0x2b0] sm:$0x3]
    %v350 = vld [vmem:[#allocation2 + $0x2b8] sm:$0xff]
    %v351 = vld [vmem:[#allocation2 + $0x2c0] sm:$0xff]
    %v352 = vld [vmem:[#allocation2 + $0x2c8] sm:$0x3]
    %v353 = vld [vmem:[#allocation2 + $0x2d0] sm:$0xff]
    %v354 = vld [vmem:[#allocation2 + $0x2d8] sm:$0xff]
    %v355 = vld [vmem:[#allocation2 + $0x2e0] sm:$0x3]
    %v356 = vld [vmem:[#allocation2 + $0x2e8] sm:$0xff]
    %v357 = vld [vmem:[#allocation2 + $0x2f0] sm:$0xff]
    %v358 = vld [vmem:[#allocation2 + $0x2f8] sm:$0x3]
    %v359 = vld [vmem:[#allocation2 + $0x300] sm:$0xff]
    %v360 = vld [vmem:[#allocation2 + $0x308] sm:$0xff]
    %v361 = vld [vmem:[#allocation2 + $0x310] sm:$0x3]
    %v362 = vld [vmem:[#allocation2 + $0x318] sm:$0xff]
    %v363 = vld [vmem:[#allocation2 + $0x320] sm:$0xff]
    %v364 = vld [vmem:[#allocation2 + $0x328] sm:$0x3]
    %v365 = vld [vmem:[#allocation2 + $0x330] sm:$0xff]
    %v366 = vld [vmem:[#allocation2 + $0x338] sm:$0xff]
    %v367 = vld [vmem:[#allocation2 + $0x340] sm:$0x3]
    %v368 = vld [vmem:[#allocation2 + $0x348] sm:$0xff]
    %v369 = vld [vmem:[#allocation2 + $0x350] sm:$0xff]
    %v370 = vld [vmem:[#allocation2 + $0x358] sm:$0x3]
    %v371 = vpack.c.bf16 %v264, %v263
    %v372 = vpack.c.bf16 %v267, %v266
    %v373 = vpack.c.bf16 %v270, %v269
    %v374 = vpack.c.bf16 %v273, %v272
    %v375 = vpack.c.bf16 %v276, %v275
    %v376 = vpack.c.bf16 %v279, %v278
    %v377 = vpack.c.bf16 %v282, %v281
    %v378 = vpack.c.bf16 %v285, %v284
    %v379 = vpack.c.bf16 %v288, %v287
    %v380 = vpack.c.bf16 %v291, %v290
    %v381 = vpack.c.bf16 %v294, %v293
    %v382 = vpack.c.bf16 %v297, %v296
    %v383 = vpack.c.bf16 %v300, %v299
    %v384 = vpack.c.bf16 %v303, %v302
    %v385 = vpack.c.bf16 %v306, %v305
    %v386 = vpack.c.bf16 %v309, %v308
    %v387 = vpack.c.bf16 %v318, %v317
    %v388 = vpack.c.bf16 %v321, %v320
    %v389 = vpack.c.bf16 %v324, %v323
    %v390 = vpack.c.bf16 %v327, %v326
    %v391 = vpack.c.bf16 %v330, %v329
    %v392 = vpack.c.bf16 %v333, %v332
    %v393 = vpack.c.bf16 %v336, %v335
    %v394 = vpack.c.bf16 %v339, %v338
    %v395 = vpack.c.bf16 %v342, %v341
    %v396 = vpack.c.bf16 %v345, %v344
    %v397 = vpack.c.bf16 %v348, %v347
    %v398 = vpack.c.bf16 %v351, %v350
    %v399 = vpack.c.bf16 %v354, %v353
    %v400 = vpack.c.bf16 %v357, %v356
    %v401 = vpack.c.bf16 %v360, %v359
    %v402 = vpack.c.bf16 %v363, %v362
    %v403 = vld [vmem:[%s1] sm:$0x3]
    %vm500 = vcmask 1046528
    %v501 = vrot.slane %v263, 1
    %v502 = vrot.slane %v264, 1
    %v503 = vsel %vm500, %v501, %v502
    %v504 = vrot.slane %v265, 1
    %v505 = vsel %vm500, %v502, %v504
    %v506 = vrot.slane %v266, 1
    %v507 = vrot.slane %v267, 1
    %v508 = vsel %vm500, %v506, %v507
    %v509 = vrot.slane %v268, 1
    %v510 = vsel %vm500, %v507, %v509
    %v511 = vrot.slane %v269, 1
    %v512 = vrot.slane %v270, 1
    %v513 = vsel %vm500, %v511, %v512
    %v514 = vrot.slane %v271, 1
    %v515 = vsel %vm500, %v512, %v514
    %v516 = vrot.slane %v272, 1
    %v517 = vrot.slane %v273, 1
    %v518 = vsel %vm500, %v516, %v517
    %v519 = vrot.slane %v274, 1
    %v520 = vsel %vm500, %v517, %v519
    %v521 = vrot.slane %v275, 1
    %v522 = vrot.slane %v276, 1
    %v523 = vsel %vm500, %v521, %v522
    %v524 = vrot.slane %v277, 1
    %v525 = vsel %vm500, %v522, %v524
    %v526 = vrot.slane %v278, 1
    %v527 = vrot.slane %v279, 1
    %v528 = vsel %vm500, %v526, %v527
    %v529 = vrot.slane %v280, 1
    %v530 = vsel %vm500, %v527, %v529
    %v531 = vrot.slane %v281, 1
    %v532 = vrot.slane %v282, 1
    %v533 = vsel %vm500, %v531, %v532
    %v534 = vrot.slane %v283, 1
    %v535 = vsel %vm500, %v532, %v534
    %v536 = vrot.slane %v284, 1
    %v537 = vrot.slane %v285, 1
    %v538 = vsel %vm500, %v536, %v537
    %v539 = vrot.slane %v286, 1
    %v540 = vsel %vm500, %v537, %v539
    %v541 = vrot.slane %v287, 1
    %v542 = vrot.slane %v288, 1
    %v543 = vsel %vm500, %v541, %v542
    %v544 = vrot.slane %v289, 1
    %v545 = vsel %vm500, %v542, %v544
    %v546 = vrot.slane %v290, 1
    %v547 = vrot.slane %v291, 1
    %v548 = vsel %vm500, %v546, %v547
    %v549 = vrot.slane %v292, 1
    %v550 = vsel %vm500, %v547, %v549
    %v551 = vrot.slane %v293, 1
    %v552 = vrot.slane %v294, 1
    %v553 = vsel %vm500, %v551, %v552
    %v554 = vrot.slane %v295, 1
    %v555 = vsel %vm500, %v552, %v554
    %v556 = vrot.slane %v296, 1
    %v557 = vrot.slane %v297, 1
    %v558 = vsel %vm500, %v556, %v557
    %v559 = vrot.slane %v298, 1
    %v560 = vsel %vm500, %v557, %v559
    %v561 = vrot.slane %v299, 1
    %v562 = vrot.slane %v300, 1
    %v563 = vsel %vm500, %v561, %v562
    %v564 = vrot.slane %v301, 1
    %v565 = vsel %vm500, %v562, %v564
    %v566 = vrot.slane %v302, 1
    %v567 = vrot.slane %v303, 1
    %v568 = vsel %vm500, %v566, %v567
    %v569 = vrot.slane %v304, 1
    %v570 = vsel %vm500, %v567, %v569
    %v571 = vrot.slane %v305, 1
    %v572 = vrot.slane %v306, 1
    %v573 = vsel %vm500, %v571, %v572
    %v574 = vrot.slane %v307, 1
    %v575 = vsel %vm500, %v572, %v574
    %v576 = vrot.slane %v308, 1
    %v577 = vrot.slane %v309, 1
    %v578 = vsel %vm500, %v576, %v577
    %v579 = vrot.slane %v310, 1
    %v580 = vsel %vm500, %v577, %v579
    %v581 = vrot.slane %v317, 1
    %v582 = vrot.slane %v318, 1
    %v583 = vsel %vm500, %v581, %v582
    %v584 = vrot.slane %v319, 1
    %v585 = vsel %vm500, %v582, %v584
    %v586 = vrot.slane %v320, 1
    %v587 = vrot.slane %v321, 1
    %v588 = vsel %vm500, %v586, %v587
    %v589 = vrot.slane %v322, 1
    %v590 = vsel %vm500, %v587, %v589
    %v591 = vrot.slane %v323, 1
    %v592 = vrot.slane %v324, 1
    %v593 = vsel %vm500, %v591, %v592
    %v594 = vrot.slane %v325, 1
    %v595 = vsel %vm500, %v592, %v594
    %v596 = vrot.slane %v326, 1
    %v597 = vrot.slane %v327, 1
    %v598 = vsel %vm500, %v596, %v597
    %v599 = vrot.slane %v328, 1
    %v600 = vsel %vm500, %v597, %v599
    %v601 = vrot.slane %v329, 1
    %v602 = vrot.slane %v330, 1
    %v603 = vsel %vm500, %v601, %v602
    %v604 = vrot.slane %v331, 1
    %v605 = vsel %vm500, %v602, %v604
    %v606 = vrot.slane %v332, 1
    %v607 = vrot.slane %v333, 1
    %v608 = vsel %vm500, %v606, %v607
    %v609 = vrot.slane %v334, 1
    %v610 = vsel %vm500, %v607, %v609
    %v611 = vrot.slane %v335, 1
    %v612 = vrot.slane %v336, 1
    %v613 = vsel %vm500, %v611, %v612
    %v614 = vrot.slane %v337, 1
    %v615 = vsel %vm500, %v612, %v614
    %v616 = vrot.slane %v338, 1
    %v617 = vrot.slane %v339, 1
    %v618 = vsel %vm500, %v616, %v617
    %v619 = vrot.slane %v340, 1
    %v620 = vsel %vm500, %v617, %v619
    %v621 = vrot.slane %v341, 1
    %v622 = vrot.slane %v342, 1
    %v623 = vsel %vm500, %v621, %v622
    %v624 = vrot.slane %v343, 1
    %v625 = vsel %vm500, %v622, %v624
    %v626 = vrot.slane %v344, 1
    %v627 = vrot.slane %v345, 1
    %v628 = vsel %vm500, %v626, %v627
    %v629 = vrot.slane %v346, 1
    %v630 = vsel %vm500, %v627, %v629
    %v631 = vrot.slane %v347, 1
    %v632 = vrot.slane %v348, 1
    %v633 = vsel %vm500, %v631, %v632
    %v634 = vrot.slane %v349, 1
    %v635 = vsel %vm500, %v632, %v634
    %v636 = vrot.slane %v350, 1
    %v637 = vrot.slane %v351, 1
    %v638 = vsel %vm500, %v636, %v637
    %v639 = vrot.slane %v352, 1
    %v640 = vsel %vm500, %v637, %v639
    %v641 = vrot.slane %v353, 1
    %v642 = vrot.slane %v354, 1
    %v643 = vsel %vm500, %v641, %v642
    %v644 = vrot.slane %v355, 1
    %v645 = vsel %vm500, %v642, %v644
    %v646 = vrot.slane %v356, 1
    %v647 = vrot.slane %v357, 1
    %v648 = vsel %vm500, %v646, %v647
    %v649 = vrot.slane %v358, 1
    %v650 = vsel %vm500, %v647, %v649
    %v651 = vrot.slane %v359, 1
    %v652 = vrot.slane %v360, 1
    %v653 = vsel %vm500, %v651, %v652
    %v654 = vrot.slane %v361, 1
    %v655 = vsel %vm500, %v652, %v654
    %v656 = vrot.slane %v362, 1
    %v657 = vrot.slane %v363, 1
    %v658 = vsel %vm500, %v656, %v657
    %v659 = vrot.slane %v364, 1
    %v660 = vsel %vm500, %v657, %v659
    %v725 = vpack.c.bf16 %v505, %v503
    %v726 = vpack.c.bf16 %v510, %v508
    %v727 = vpack.c.bf16 %v515, %v513
    %v728 = vpack.c.bf16 %v520, %v518
    %v729 = vpack.c.bf16 %v525, %v523
    %v730 = vpack.c.bf16 %v530, %v528
    %v731 = vpack.c.bf16 %v535, %v533
    %v732 = vpack.c.bf16 %v540, %v538
    %v733 = vpack.c.bf16 %v545, %v543
    %v734 = vpack.c.bf16 %v550, %v548
    %v735 = vpack.c.bf16 %v555, %v553
    %v736 = vpack.c.bf16 %v560, %v558
    %v737 = vpack.c.bf16 %v565, %v563
    %v738 = vpack.c.bf16 %v570, %v568
    %v739 = vpack.c.bf16 %v575, %v573
    %v740 = vpack.c.bf16 %v580, %v578
    %v741 = vpack.c.bf16 %v585, %v583
    %v742 = vpack.c.bf16 %v590, %v588
    %v743 = vpack.c.bf16 %v595, %v593
    %v744 = vpack.c.bf16 %v600, %v598
    %v745 = vpack.c.bf16 %v605, %v603
    %v746 = vpack.c.bf16 %v610, %v608
    %v747 = vpack.c.bf16 %v615, %v613
    %v748 = vpack.c.bf16 %v620, %v618
    %v749 = vpack.c.bf16 %v625, %v623
    %v750 = vpack.c.bf16 %v630, %v628
    %v751 = vpack.c.bf16 %v635, %v633
    %v752 = vpack.c.bf16 %v640, %v638
    %v753 = vpack.c.bf16 %v645, %v643
    %v754 = vpack.c.bf16 %v650, %v648
    %v755 = vpack.c.bf16 %v655, %v653
    %v756 = vpack.c.bf16 %v660, %v658
    %v757 = vld [vmem:[%s1] sm:$0xc]
    %v759 = vunpack.c.l.b16 %v757
    %v760 = vpack.c.b16 %v759, %v759
    %v761 = vrot.slane %v760, 2
    %v763 = vsel %vm88, %v725, 0
    %v766 = vsel %vm88, %v726, 0
    %v769 = vsel %vm88, %v727, 0
    %v772 = vsel %vm88, %v728, 0
    %v775 = vsel %vm88, %v729, 0
    %v778 = vsel %vm88, %v730, 0
    %v781 = vsel %vm88, %v731, 0
    %v784 = vsel %vm88, %v732, 0
    %v787 = vsel %vm88, %v733, 0
    %v790 = vsel %vm88, %v734, 0
    %v793 = vsel %vm88, %v735, 0
    %v796 = vsel %vm88, %v736, 0
    %v799 = vsel %vm88, %v737, 0
    %v802 = vsel %vm88, %v738, 0
    %v805 = vsel %vm88, %v739, 0
    %v808 = vsel %vm88, %v740, 0
    %v811 = vsel %vm88, %v741, 0
    %v814 = vsel %vm88, %v742, 0
    %v817 = vsel %vm88, %v743, 0
    %v820 = vsel %vm88, %v744, 0
    %v823 = vsel %vm88, %v745, 0
    %v826 = vsel %vm88, %v746, 0
    %v829 = vsel %vm88, %v747, 0
    %v832 = vsel %vm88, %v748, 0
    %v835 = vsel %vm88, %v749, 0
    %v838 = vsel %vm88, %v750, 0
    %v841 = vsel %vm88, %v751, 0
    %v844 = vsel %vm88, %v752, 0
    %v847 = vsel %vm88, %v753, 0
    %v850 = vsel %vm88, %v754, 0
    %v853 = vsel %vm88, %v755, 0
    %v856 = vsel %vm88, %v756, 0
    %vm858 = vcmask 1041408
    %v860 = vsel %vm858, %v761, 0
    %862 = vmatpush.bf16.msra.mxu0 0
    %863 = vmatpush.bf16.msra.mxu0 0
    %864 = vmatpush.bf16.msra.mxu0 0
    %865 = vmatpush.bf16.msra.mxu0 0
    %866 = vmatpush.bf16.msra.mxu0 0
    %867 = vmatpush.bf16.msra.mxu0 0
    %868 = vmatpush.bf16.msra.mxu0 0
    %869 = vmatpush.bf16.msra.mxu0 %v860
    %870 = vmatmul.bf16.gmra.mxu0 %v763
    %v871 = vpop.f32.mrf.mxu0
    %v872 = vadd.f32 0.0, %v871
    %v873 = vpop.f32.mrf.mxu0
    %v874 = vadd.f32 0.0, %v873
    %875 = vmatmul.bf16.gmra.mxu0 %v766
    %v876 = vpop.f32.mrf.mxu0
    %v877 = vadd.f32 0.0, %v876
    %v878 = vpop.f32.mrf.mxu0
    %v879 = vadd.f32 0.0, %v878
    %880 = vmatmul.bf16.gmra.mxu0 %v769
    %v881 = vpop.f32.mrf.mxu0
    %v882 = vadd.f32 0.0, %v881
    %v883 = vpop.f32.mrf.mxu0
    %v884 = vadd.f32 0.0, %v883
    %885 = vmatmul.bf16.gmra.mxu0 %v772
    %v886 = vpop.f32.mrf.mxu0
    %v887 = vadd.f32 0.0, %v886
    %v888 = vpop.f32.mrf.mxu0
    %v889 = vadd.f32 0.0, %v888
    %890 = vmatmul.bf16.gmra.mxu0 %v775
    %v891 = vpop.f32.mrf.mxu0
    %v892 = vadd.f32 0.0, %v891
    %v893 = vpop.f32.mrf.mxu0
    %v894 = vadd.f32 0.0, %v893
    %895 = vmatmul.bf16.gmra.mxu0 %v778
    %v896 = vpop.f32.mrf.mxu0
    %v897 = vadd.f32 0.0, %v896
    %v898 = vpop.f32.mrf.mxu0
    %v899 = vadd.f32 0.0, %v898
    %900 = vmatmul.bf16.gmra.mxu0 %v781
    %v901 = vpop.f32.mrf.mxu0
    %v902 = vadd.f32 0.0, %v901
    %v903 = vpop.f32.mrf.mxu0
    %v904 = vadd.f32 0.0, %v903
    %905 = vmatmul.bf16.gmra.mxu0 %v784
    %v906 = vpop.f32.mrf.mxu0
    %v907 = vadd.f32 0.0, %v906
    %v908 = vpop.f32.mrf.mxu0
    %v909 = vadd.f32 0.0, %v908
    %910 = vmatmul.bf16.gmra.mxu0 %v787
    %v911 = vpop.f32.mrf.mxu0
    %v912 = vadd.f32 0.0, %v911
    %v913 = vpop.f32.mrf.mxu0
    %v914 = vadd.f32 0.0, %v913
    %915 = vmatmul.bf16.gmra.mxu0 %v790
    %v916 = vpop.f32.mrf.mxu0
    %v917 = vadd.f32 0.0, %v916
    %v918 = vpop.f32.mrf.mxu0
    %v919 = vadd.f32 0.0, %v918
    %920 = vmatmul.bf16.gmra.mxu0 %v793
    %v921 = vpop.f32.mrf.mxu0
    %v922 = vadd.f32 0.0, %v921
    %v923 = vpop.f32.mrf.mxu0
    %v924 = vadd.f32 0.0, %v923
    %925 = vmatmul.bf16.gmra.mxu0 %v796
    %v926 = vpop.f32.mrf.mxu0
    %v927 = vadd.f32 0.0, %v926
    %v928 = vpop.f32.mrf.mxu0
    %v929 = vadd.f32 0.0, %v928
    %930 = vmatmul.bf16.gmra.mxu0 %v799
    %v931 = vpop.f32.mrf.mxu0
    %v932 = vadd.f32 0.0, %v931
    %v933 = vpop.f32.mrf.mxu0
    %v934 = vadd.f32 0.0, %v933
    %935 = vmatmul.bf16.gmra.mxu0 %v802
    %v936 = vpop.f32.mrf.mxu0
    %v937 = vadd.f32 0.0, %v936
    %v938 = vpop.f32.mrf.mxu0
    %v939 = vadd.f32 0.0, %v938
    %940 = vmatmul.bf16.gmra.mxu0 %v805
    %v941 = vpop.f32.mrf.mxu0
    %v942 = vadd.f32 0.0, %v941
    %v943 = vpop.f32.mrf.mxu0
    %v944 = vadd.f32 0.0, %v943
    %945 = vmatmul.bf16.gmra.mxu0 %v808
    %v946 = vpop.f32.mrf.mxu0
    %v947 = vadd.f32 0.0, %v946
    %v948 = vpop.f32.mrf.mxu0
    %v949 = vadd.f32 0.0, %v948
    %950 = vmatmul.bf16.gmra.mxu0 %v811
    %v951 = vpop.f32.mrf.mxu0
    %v952 = vadd.f32 0.0, %v951
    %v953 = vpop.f32.mrf.mxu0
    %v954 = vadd.f32 0.0, %v953
    %955 = vmatmul.bf16.gmra.mxu0 %v814
    %v956 = vpop.f32.mrf.mxu0
    %v957 = vadd.f32 0.0, %v956
    %v958 = vpop.f32.mrf.mxu0
    %v959 = vadd.f32 0.0, %v958
    %960 = vmatmul.bf16.gmra.mxu0 %v817
    %v961 = vpop.f32.mrf.mxu0
    %v962 = vadd.f32 0.0, %v961
    %v963 = vpop.f32.mrf.mxu0
    %v964 = vadd.f32 0.0, %v963
    %965 = vmatmul.bf16.gmra.mxu0 %v820
    %v966 = vpop.f32.mrf.mxu0
    %v967 = vadd.f32 0.0, %v966
    %v968 = vpop.f32.mrf.mxu0
    %v969 = vadd.f32 0.0, %v968
    %970 = vmatmul.bf16.gmra.mxu0 %v823
    %v971 = vpop.f32.mrf.mxu0
    %v972 = vadd.f32 0.0, %v971
    %v973 = vpop.f32.mrf.mxu0
    %v974 = vadd.f32 0.0, %v973
    %975 = vmatmul.bf16.gmra.mxu0 %v826
    %v976 = vpop.f32.mrf.mxu0
    %v977 = vadd.f32 0.0, %v976
    %v978 = vpop.f32.mrf.mxu0
    %v979 = vadd.f32 0.0, %v978
    %980 = vmatmul.bf16.gmra.mxu0 %v829
    %v981 = vpop.f32.mrf.mxu0
    %v982 = vadd.f32 0.0, %v981
    %v983 = vpop.f32.mrf.mxu0
    %v984 = vadd.f32 0.0, %v983
    %985 = vmatmul.bf16.gmra.mxu0 %v832
    %v986 = vpop.f32.mrf.mxu0
    %v987 = vadd.f32 0.0, %v986
    %v988 = vpop.f32.mrf.mxu0
    %v989 = vadd.f32 0.0, %v988
    %990 = vmatmul.bf16.gmra.mxu0 %v835
    %v991 = vpop.f32.mrf.mxu0
    %v992 = vadd.f32 0.0, %v991
    %v993 = vpop.f32.mrf.mxu0
    %v994 = vadd.f32 0.0, %v993
    %995 = vmatmul.bf16.gmra.mxu0 %v838
    %v996 = vpop.f32.mrf.mxu0
    %v997 = vadd.f32 0.0, %v996
    %v998 = vpop.f32.mrf.mxu0
    %v999 = vadd.f32 0.0, %v998
    %1000 = vmatmul.bf16.gmra.mxu0 %v841
    %v1001 = vpop.f32.mrf.mxu0
    %v1002 = vadd.f32 0.0, %v1001
    %v1003 = vpop.f32.mrf.mxu0
    %v1004 = vadd.f32 0.0, %v1003
    %1005 = vmatmul.bf16.gmra.mxu0 %v844
    %v1006 = vpop.f32.mrf.mxu0
    %v1007 = vadd.f32 0.0, %v1006
    %v1008 = vpop.f32.mrf.mxu0
    %v1009 = vadd.f32 0.0, %v1008
    %1010 = vmatmul.bf16.gmra.mxu0 %v847
    %v1011 = vpop.f32.mrf.mxu0
    %v1012 = vadd.f32 0.0, %v1011
    %v1013 = vpop.f32.mrf.mxu0
    %v1014 = vadd.f32 0.0, %v1013
    %1015 = vmatmul.bf16.gmra.mxu0 %v850
    %v1016 = vpop.f32.mrf.mxu0
    %v1017 = vadd.f32 0.0, %v1016
    %v1018 = vpop.f32.mrf.mxu0
    %v1019 = vadd.f32 0.0, %v1018
    %1020 = vmatmul.bf16.gmra.mxu0 %v853
    %v1021 = vpop.f32.mrf.mxu0
    %v1022 = vadd.f32 0.0, %v1021
    %v1023 = vpop.f32.mrf.mxu0
    %v1024 = vadd.f32 0.0, %v1023
    %1025 = vmatmul.bf16.gmra.mxu0 %v856
    %v1026 = vpop.f32.mrf.mxu0
    %v1027 = vadd.f32 0.0, %v1026
    %v1028 = vpop.f32.mrf.mxu0
    %v1029 = vadd.f32 0.0, %v1028
    %1030 = vdwg.mxu0
    %v1032 = vsel %vm88, %v371, 0
    %v1035 = vsel %vm88, %v372, 0
    %v1038 = vsel %vm88, %v373, 0
    %v1041 = vsel %vm88, %v374, 0
    %v1044 = vsel %vm88, %v375, 0
    %v1047 = vsel %vm88, %v376, 0
    %v1050 = vsel %vm88, %v377, 0
    %v1053 = vsel %vm88, %v378, 0
    %v1056 = vsel %vm88, %v379, 0
    %v1059 = vsel %vm88, %v380, 0
    %v1062 = vsel %vm88, %v381, 0
    %v1065 = vsel %vm88, %v382, 0
    %v1068 = vsel %vm88, %v383, 0
    %v1071 = vsel %vm88, %v384, 0
    %v1074 = vsel %vm88, %v385, 0
    %v1077 = vsel %vm88, %v386, 0
    %v1080 = vsel %vm88, %v387, 0
    %v1083 = vsel %vm88, %v388, 0
    %v1086 = vsel %vm88, %v389, 0
    %v1089 = vsel %vm88, %v390, 0
    %v1092 = vsel %vm88, %v391, 0
    %v1095 = vsel %vm88, %v392, 0
    %v1098 = vsel %vm88, %v393, 0
    %v1101 = vsel %vm88, %v394, 0
    %v1104 = vsel %vm88, %v395, 0
    %v1107 = vsel %vm88, %v396, 0
    %v1110 = vsel %vm88, %v397, 0
    %v1113 = vsel %vm88, %v398, 0
    %v1116 = vsel %vm88, %v399, 0
    %v1119 = vsel %vm88, %v400, 0
    %v1122 = vsel %vm88, %v401, 0
    %v1125 = vsel %vm88, %v402, 0
    %v1128 = vsel %vm858, %v403, 0
    %1130 = vmatpush.bf16.msra.mxu0 0
    %1131 = vmatpush.bf16.msra.mxu0 0
    %1132 = vmatpush.bf16.msra.mxu0 0
    %1133 = vmatpush.bf16.msra.mxu0 0
    %1134 = vmatpush.bf16.msra.mxu0 0
    %1135 = vmatpush.bf16.msra.mxu0 0
    %1136 = vmatpush.bf16.msra.mxu0 0
    %1137 = vmatpush.bf16.msra.mxu0 %v1128
    %1138 = vmatmul.bf16.gmra.mxu0 %v1032
    %v1139 = vpop.f32.mrf.mxu0
    %v1140 = vadd.f32 %v872, %v1139
    %v1141 = vpop.f32.mrf.mxu0
    %v1142 = vadd.f32 %v874, %v1141
    %1143 = vmatmul.bf16.gmra.mxu0 %v1035
    %v1144 = vpop.f32.mrf.mxu0
    %v1145 = vadd.f32 %v877, %v1144
    %v1146 = vpop.f32.mrf.mxu0
    %v1147 = vadd.f32 %v879, %v1146
    %1148 = vmatmul.bf16.gmra.mxu0 %v1038
    %v1149 = vpop.f32.mrf.mxu0
    %v1150 = vadd.f32 %v882, %v1149
    %v1151 = vpop.f32.mrf.mxu0
    %v1152 = vadd.f32 %v884, %v1151
    %1153 = vmatmul.bf16.gmra.mxu0 %v1041
    %v1154 = vpop.f32.mrf.mxu0
    %v1155 = vadd.f32 %v887, %v1154
    %v1156 = vpop.f32.mrf.mxu0
    %v1157 = vadd.f32 %v889, %v1156
    %1158 = vmatmul.bf16.gmra.mxu0 %v1044
    %v1159 = vpop.f32.mrf.mxu0
    %v1160 = vadd.f32 %v892, %v1159
    %v1161 = vpop.f32.mrf.mxu0
    %v1162 = vadd.f32 %v894, %v1161
    %1163 = vmatmul.bf16.gmra.mxu0 %v1047
    %v1164 = vpop.f32.mrf.mxu0
    %v1165 = vadd.f32 %v897, %v1164
    %v1166 = vpop.f32.mrf.mxu0
    %v1167 = vadd.f32 %v899, %v1166
    %1168 = vmatmul.bf16.gmra.mxu0 %v1050
    %v1169 = vpop.f32.mrf.mxu0
    %v1170 = vadd.f32 %v902, %v1169
    %v1171 = vpop.f32.mrf.mxu0
    %v1172 = vadd.f32 %v904, %v1171
    %1173 = vmatmul.bf16.gmra.mxu0 %v1053
    %v1174 = vpop.f32.mrf.mxu0
    %v1175 = vadd.f32 %v907, %v1174
    %v1176 = vpop.f32.mrf.mxu0
    %v1177 = vadd.f32 %v909, %v1176
    %1178 = vmatmul.bf16.gmra.mxu0 %v1056
    %v1179 = vpop.f32.mrf.mxu0
    %v1180 = vadd.f32 %v912, %v1179
    %v1181 = vpop.f32.mrf.mxu0
    %v1182 = vadd.f32 %v914, %v1181
    %1183 = vmatmul.bf16.gmra.mxu0 %v1059
    %v1184 = vpop.f32.mrf.mxu0
    %v1185 = vadd.f32 %v917, %v1184
    %v1186 = vpop.f32.mrf.mxu0
    %v1187 = vadd.f32 %v919, %v1186
    %1188 = vmatmul.bf16.gmra.mxu0 %v1062
    %v1189 = vpop.f32.mrf.mxu0
    %v1190 = vadd.f32 %v922, %v1189
    %v1191 = vpop.f32.mrf.mxu0
    %v1192 = vadd.f32 %v924, %v1191
    %1193 = vmatmul.bf16.gmra.mxu0 %v1065
    %v1194 = vpop.f32.mrf.mxu0
    %v1195 = vadd.f32 %v927, %v1194
    %v1196 = vpop.f32.mrf.mxu0
    %v1197 = vadd.f32 %v929, %v1196
    %1198 = vmatmul.bf16.gmra.mxu0 %v1068
    %v1199 = vpop.f32.mrf.mxu0
    %v1200 = vadd.f32 %v932, %v1199
    %v1201 = vpop.f32.mrf.mxu0
    %v1202 = vadd.f32 %v934, %v1201
    %1203 = vmatmul.bf16.gmra.mxu0 %v1071
    %v1204 = vpop.f32.mrf.mxu0
    %v1205 = vadd.f32 %v937, %v1204
    %v1206 = vpop.f32.mrf.mxu0
    %v1207 = vadd.f32 %v939, %v1206
    %1208 = vmatmul.bf16.gmra.mxu0 %v1074
    %v1209 = vpop.f32.mrf.mxu0
    %v1210 = vadd.f32 %v942, %v1209
    %v1211 = vpop.f32.mrf.mxu0
    %v1212 = vadd.f32 %v944, %v1211
    %1213 = vmatmul.bf16.gmra.mxu0 %v1077
    %v1214 = vpop.f32.mrf.mxu0
    %v1215 = vadd.f32 %v947, %v1214
    %v1216 = vpop.f32.mrf.mxu0
    %v1217 = vadd.f32 %v949, %v1216
    %1218 = vmatmul.bf16.gmra.mxu0 %v1080
    %v1219 = vpop.f32.mrf.mxu0
    %v1220 = vadd.f32 %v952, %v1219
    %v1221 = vpop.f32.mrf.mxu0
    %v1222 = vadd.f32 %v954, %v1221
    %1223 = vmatmul.bf16.gmra.mxu0 %v1083
    %v1224 = vpop.f32.mrf.mxu0
    %v1225 = vadd.f32 %v957, %v1224
    %v1226 = vpop.f32.mrf.mxu0
    %v1227 = vadd.f32 %v959, %v1226
    %1228 = vmatmul.bf16.gmra.mxu0 %v1086
    %v1229 = vpop.f32.mrf.mxu0
    %v1230 = vadd.f32 %v962, %v1229
    %v1231 = vpop.f32.mrf.mxu0
    %v1232 = vadd.f32 %v964, %v1231
    %1233 = vmatmul.bf16.gmra.mxu0 %v1089
    %v1234 = vpop.f32.mrf.mxu0
    %v1235 = vadd.f32 %v967, %v1234
    %v1236 = vpop.f32.mrf.mxu0
    %v1237 = vadd.f32 %v969, %v1236
    %1238 = vmatmul.bf16.gmra.mxu0 %v1092
    %v1239 = vpop.f32.mrf.mxu0
    %v1240 = vadd.f32 %v972, %v1239
    %v1241 = vpop.f32.mrf.mxu0
    %v1242 = vadd.f32 %v974, %v1241
    %1243 = vmatmul.bf16.gmra.mxu0 %v1095
    %v1244 = vpop.f32.mrf.mxu0
    %v1245 = vadd.f32 %v977, %v1244
    %v1246 = vpop.f32.mrf.mxu0
    %v1247 = vadd.f32 %v979, %v1246
    %1248 = vmatmul.bf16.gmra.mxu0 %v1098
    %v1249 = vpop.f32.mrf.mxu0
    %v1250 = vadd.f32 %v982, %v1249
    %v1251 = vpop.f32.mrf.mxu0
    %v1252 = vadd.f32 %v984, %v1251
    %1253 = vmatmul.bf16.gmra.mxu0 %v1101
    %v1254 = vpop.f32.mrf.mxu0
    %v1255 = vadd.f32 %v987, %v1254
    %v1256 = vpop.f32.mrf.mxu0
    %v1257 = vadd.f32 %v989, %v1256
    %1258 = vmatmul.bf16.gmra.mxu0 %v1104
    %v1259 = vpop.f32.mrf.mxu0
    %v1260 = vadd.f32 %v992, %v1259
    %v1261 = vpop.f32.mrf.mxu0
    %v1262 = vadd.f32 %v994, %v1261
    %1263 = vmatmul.bf16.gmra.mxu0 %v1107
    %v1264 = vpop.f32.mrf.mxu0
    %v1265 = vadd.f32 %v997, %v1264
    %v1266 = vpop.f32.mrf.mxu0
    %v1267 = vadd.f32 %v999, %v1266
    %1268 = vmatmul.bf16.gmra.mxu0 %v1110
    %v1269 = vpop.f32.mrf.mxu0
    %v1270 = vadd.f32 %v1002, %v1269
    %v1271 = vpop.f32.mrf.mxu0
    %v1272 = vadd.f32 %v1004, %v1271
    %1273 = vmatmul.bf16.gmra.mxu0 %v1113
    %v1274 = vpop.f32.mrf.mxu0
    %v1275 = vadd.f32 %v1007, %v1274
    %v1276 = vpop.f32.mrf.mxu0
    %v1277 = vadd.f32 %v1009, %v1276
    %1278 = vmatmul.bf16.gmra.mxu0 %v1116
    %v1279 = vpop.f32.mrf.mxu0
    %v1280 = vadd.f32 %v1012, %v1279
    %v1281 = vpop.f32.mrf.mxu0
    %v1282 = vadd.f32 %v1014, %v1281
    %1283 = vmatmul.bf16.gmra.mxu0 %v1119
    %v1284 = vpop.f32.mrf.mxu0
    %v1285 = vadd.f32 %v1017, %v1284
    %v1286 = vpop.f32.mrf.mxu0
    %v1287 = vadd.f32 %v1019, %v1286
    %1288 = vmatmul.bf16.gmra.mxu0 %v1122
    %v1289 = vpop.f32.mrf.mxu0
    %v1290 = vadd.f32 %v1022, %v1289
    %v1291 = vpop.f32.mrf.mxu0
    %v1292 = vadd.f32 %v1024, %v1291
    %1293 = vmatmul.bf16.gmra.mxu0 %v1125
    %v1294 = vpop.f32.mrf.mxu0
    %v1295 = vadd.f32 %v1027, %v1294
    %v1296 = vpop.f32.mrf.mxu0
    %v1297 = vadd.f32 %v1029, %v1296
    %1298 = vdwg.mxu0
    %vm1299 = vcmask 1045504
    %v1300 = vrot.slane %v263, 2
    %v1301 = vrot.slane %v264, 2
    %v1302 = vsel %vm1299, %v1300, %v1301
    %v1303 = vrot.slane %v265, 2
    %v1304 = vsel %vm1299, %v1301, %v1303
    %v1305 = vrot.slane %v266, 2
    %v1306 = vrot.slane %v267, 2
    %v1307 = vsel %vm1299, %v1305, %v1306
    %v1308 = vrot.slane %v268, 2
    %v1309 = vsel %vm1299, %v1306, %v1308
    %v1310 = vrot.slane %v269, 2
    %v1311 = vrot.slane %v270, 2
    %v1312 = vsel %vm1299, %v1310, %v1311
    %v1313 = vrot.slane %v271, 2
    %v1314 = vsel %vm1299, %v1311, %v1313
    %v1315 = vrot.slane %v272, 2
    %v1316 = vrot.slane %v273, 2
    %v1317 = vsel %vm1299, %v1315, %v1316
    %v1318 = vrot.slane %v274, 2
    %v1319 = vsel %vm1299, %v1316, %v1318
    %v1320 = vrot.slane %v275, 2
    %v1321 = vrot.slane %v276, 2
    %v1322 = vsel %vm1299, %v1320, %v1321
    %v1323 = vrot.slane %v277, 2
    %v1324 = vsel %vm1299, %v1321, %v1323
    %v1325 = vrot.slane %v278, 2
    %v1326 = vrot.slane %v279, 2
    %v1327 = vsel %vm1299, %v1325, %v1326
    %v1328 = vrot.slane %v280, 2
    %v1329 = vsel %vm1299, %v1326, %v1328
    %v1330 = vrot.slane %v281, 2
    %v1331 = vrot.slane %v282, 2
    %v1332 = vsel %vm1299, %v1330, %v1331
    %v1333 = vrot.slane %v283, 2
    %v1334 = vsel %vm1299, %v1331, %v1333
    %v1335 = vrot.slane %v284, 2
    %v1336 = vrot.slane %v285, 2
    %v1337 = vsel %vm1299, %v1335, %v1336
    %v1338 = vrot.slane %v286, 2
    %v1339 = vsel %vm1299, %v1336, %v1338
    %v1340 = vrot.slane %v287, 2
    %v1341 = vrot.slane %v288, 2
    %v1342 = vsel %vm1299, %v1340, %v1341
    %v1343 = vrot.slane %v289, 2
    %v1344 = vsel %vm1299, %v1341, %v1343
    %v1345 = vrot.slane %v290, 2
    %v1346 = vrot.slane %v291, 2
    %v1347 = vsel %vm1299, %v1345, %v1346
    %v1348 = vrot.slane %v292, 2
    %v1349 = vsel %vm1299, %v1346, %v1348
    %v1350 = vrot.slane %v293, 2
    %v1351 = vrot.slane %v294, 2
    %v1352 = vsel %vm1299, %v1350, %v1351
    %v1353 = vrot.slane %v295, 2
    %v1354 = vsel %vm1299, %v1351, %v1353
    %v1355 = vrot.slane %v296, 2
    %v1356 = vrot.slane %v297, 2
    %v1357 = vsel %vm1299, %v1355, %v1356
    %v1358 = vrot.slane %v298, 2
    %v1359 = vsel %vm1299, %v1356, %v1358
    %v1360 = vrot.slane %v299, 2
    %v1361 = vrot.slane %v300, 2
    %v1362 = vsel %vm1299, %v1360, %v1361
    %v1363 = vrot.slane %v301, 2
    %v1364 = vsel %vm1299, %v1361, %v1363
    %v1365 = vrot.slane %v302, 2
    %v1366 = vrot.slane %v303, 2
    %v1367 = vsel %vm1299, %v1365, %v1366
    %v1368 = vrot.slane %v304, 2
    %v1369 = vsel %vm1299, %v1366, %v1368
    %v1370 = vrot.slane %v305, 2
    %v1371 = vrot.slane %v306, 2
    %v1372 = vsel %vm1299, %v1370, %v1371
    %v1373 = vrot.slane %v307, 2
    %v1374 = vsel %vm1299, %v1371, %v1373
    %v1375 = vrot.slane %v308, 2
    %v1376 = vrot.slane %v309, 2
    %v1377 = vsel %vm1299, %v1375, %v1376
    %v1378 = vrot.slane %v310, 2
    %v1379 = vsel %vm1299, %v1376, %v1378
    %v1380 = vrot.slane %v317, 2
    %v1381 = vrot.slane %v318, 2
    %v1382 = vsel %vm1299, %v1380, %v1381
    %v1383 = vrot.slane %v319, 2
    %v1384 = vsel %vm1299, %v1381, %v1383
    %v1385 = vrot.slane %v320, 2
    %v1386 = vrot.slane %v321, 2
    %v1387 = vsel %vm1299, %v1385, %v1386
    %v1388 = vrot.slane %v322, 2
    %v1389 = vsel %vm1299, %v1386, %v1388
    %v1390 = vrot.slane %v323, 2
    %v1391 = vrot.slane %v324, 2
    %v1392 = vsel %vm1299, %v1390, %v1391
    %v1393 = vrot.slane %v325, 2
    %v1394 = vsel %vm1299, %v1391, %v1393
    %v1395 = vrot.slane %v326, 2
    %v1396 = vrot.slane %v327, 2
    %v1397 = vsel %vm1299, %v1395, %v1396
    %v1398 = vrot.slane %v328, 2
    %v1399 = vsel %vm1299, %v1396, %v1398
    %v1400 = vrot.slane %v329, 2
    %v1401 = vrot.slane %v330, 2
    %v1402 = vsel %vm1299, %v1400, %v1401
    %v1403 = vrot.slane %v331, 2
    %v1404 = vsel %vm1299, %v1401, %v1403
    %v1405 = vrot.slane %v332, 2
    %v1406 = vrot.slane %v333, 2
    %v1407 = vsel %vm1299, %v1405, %v1406
    %v1408 = vrot.slane %v334, 2
    %v1409 = vsel %vm1299, %v1406, %v1408
    %v1410 = vrot.slane %v335, 2
    %v1411 = vrot.slane %v336, 2
    %v1412 = vsel %vm1299, %v1410, %v1411
    %v1413 = vrot.slane %v337, 2
    %v1414 = vsel %vm1299, %v1411, %v1413
    %v1415 = vrot.slane %v338, 2
    %v1416 = vrot.slane %v339, 2
    %v1417 = vsel %vm1299, %v1415, %v1416
    %v1418 = vrot.slane %v340, 2
    %v1419 = vsel %vm1299, %v1416, %v1418
    %v1420 = vrot.slane %v341, 2
    %v1421 = vrot.slane %v342, 2
    %v1422 = vsel %vm1299, %v1420, %v1421
    %v1423 = vrot.slane %v343, 2
    %v1424 = vsel %vm1299, %v1421, %v1423
    %v1425 = vrot.slane %v344, 2
    %v1426 = vrot.slane %v345, 2
    %v1427 = vsel %vm1299, %v1425, %v1426
    %v1428 = vrot.slane %v346, 2
    %v1429 = vsel %vm1299, %v1426, %v1428
    %v1430 = vrot.slane %v347, 2
    %v1431 = vrot.slane %v348, 2
    %v1432 = vsel %vm1299, %v1430, %v1431
    %v1433 = vrot.slane %v349, 2
    %v1434 = vsel %vm1299, %v1431, %v1433
    %v1435 = vrot.slane %v350, 2
    %v1436 = vrot.slane %v351, 2
    %v1437 = vsel %vm1299, %v1435, %v1436
    %v1438 = vrot.slane %v352, 2
    %v1439 = vsel %vm1299, %v1436, %v1438
    %v1440 = vrot.slane %v353, 2
    %v1441 = vrot.slane %v354, 2
    %v1442 = vsel %vm1299, %v1440, %v1441
    %v1443 = vrot.slane %v355, 2
    %v1444 = vsel %vm1299, %v1441, %v1443
    %v1445 = vrot.slane %v356, 2
    %v1446 = vrot.slane %v357, 2
    %v1447 = vsel %vm1299, %v1445, %v1446
    %v1448 = vrot.slane %v358, 2
    %v1449 = vsel %vm1299, %v1446, %v1448
    %v1450 = vrot.slane %v359, 2
    %v1451 = vrot.slane %v360, 2
    %v1452 = vsel %vm1299, %v1450, %v1451
    %v1453 = vrot.slane %v361, 2
    %v1454 = vsel %vm1299, %v1451, %v1453
    %v1455 = vrot.slane %v362, 2
    %v1456 = vrot.slane %v363, 2
    %v1457 = vsel %vm1299, %v1455, %v1456
    %v1458 = vrot.slane %v364, 2
    %v1459 = vsel %vm1299, %v1456, %v1458
    %v1524 = vpack.c.bf16 %v1304, %v1302
    %v1525 = vpack.c.bf16 %v1309, %v1307
    %v1526 = vpack.c.bf16 %v1314, %v1312
    %v1527 = vpack.c.bf16 %v1319, %v1317
    %v1528 = vpack.c.bf16 %v1324, %v1322
    %v1529 = vpack.c.bf16 %v1329, %v1327
    %v1530 = vpack.c.bf16 %v1334, %v1332
    %v1531 = vpack.c.bf16 %v1339, %v1337
    %v1532 = vpack.c.bf16 %v1344, %v1342
    %v1533 = vpack.c.bf16 %v1349, %v1347
    %v1534 = vpack.c.bf16 %v1354, %v1352
    %v1535 = vpack.c.bf16 %v1359, %v1357
    %v1536 = vpack.c.bf16 %v1364, %v1362
    %v1537 = vpack.c.bf16 %v1369, %v1367
    %v1538 = vpack.c.bf16 %v1374, %v1372
    %v1539 = vpack.c.bf16 %v1379, %v1377
    %v1540 = vpack.c.bf16 %v1384, %v1382
    %v1541 = vpack.c.bf16 %v1389, %v1387
    %v1542 = vpack.c.bf16 %v1394, %v1392
    %v1543 = vpack.c.bf16 %v1399, %v1397
    %v1544 = vpack.c.bf16 %v1404, %v1402
    %v1545 = vpack.c.bf16 %v1409, %v1407
    %v1546 = vpack.c.bf16 %v1414, %v1412
    %v1547 = vpack.c.bf16 %v1419, %v1417
    %v1548 = vpack.c.bf16 %v1424, %v1422
    %v1549 = vpack.c.bf16 %v1429, %v1427
    %v1550 = vpack.c.bf16 %v1434, %v1432
    %v1551 = vpack.c.bf16 %v1439, %v1437
    %v1552 = vpack.c.bf16 %v1444, %v1442
    %v1553 = vpack.c.bf16 %v1449, %v1447
    %v1554 = vpack.c.bf16 %v1454, %v1452
    %v1555 = vpack.c.bf16 %v1459, %v1457
    %v1556 = vld [vmem:[%s1 + $0x4] sm:$0x3]
    %v1558 = vsel %vm88, %v1524, 0
    %v1561 = vsel %vm88, %v1525, 0
    %v1564 = vsel %vm88, %v1526, 0
    %v1567 = vsel %vm88, %v1527, 0
    %v1570 = vsel %vm88, %v1528, 0
    %v1573 = vsel %vm88, %v1529, 0
    %v1576 = vsel %vm88, %v1530, 0
    %v1579 = vsel %vm88, %v1531, 0
    %v1582 = vsel %vm88, %v1532, 0
    %v1585 = vsel %vm88, %v1533, 0
    %v1588 = vsel %vm88, %v1534, 0
    %v1591 = vsel %vm88, %v1535, 0
    %v1594 = vsel %vm88, %v1536, 0
    %v1597 = vsel %vm88, %v1537, 0
    %v1600 = vsel %vm88, %v1538, 0
    %v1603 = vsel %vm88, %v1539, 0
    %v1606 = vsel %vm88, %v1540, 0
    %v1609 = vsel %vm88, %v1541, 0
    %v1612 = vsel %vm88, %v1542, 0
    %v1615 = vsel %vm88, %v1543, 0
    %v1618 = vsel %vm88, %v1544, 0
    %v1621 = vsel %vm88, %v1545, 0
    %v1624 = vsel %vm88, %v1546, 0
    %v1627 = vsel %vm88, %v1547, 0
    %v1630 = vsel %vm88, %v1548, 0
    %v1633 = vsel %vm88, %v1549, 0
    %v1636 = vsel %vm88, %v1550, 0
    %v1639 = vsel %vm88, %v1551, 0
    %v1642 = vsel %vm88, %v1552, 0
    %v1645 = vsel %vm88, %v1553, 0
    %v1648 = vsel %vm88, %v1554, 0
    %v1651 = vsel %vm88, %v1555, 0
    %v1654 = vsel %vm858, %v1556, 0
    %1656 = vmatpush.bf16.msra.mxu0 0
    %1657 = vmatpush.bf16.msra.mxu0 0
    %1658 = vmatpush.bf16.msra.mxu0 0
    %1659 = vmatpush.bf16.msra.mxu0 0
    %1660 = vmatpush.bf16.msra.mxu0 0
    %1661 = vmatpush.bf16.msra.mxu0 0
    %1662 = vmatpush.bf16.msra.mxu0 0
    %1663 = vmatpush.bf16.msra.mxu0 %v1654
    %1664 = vmatmul.bf16.gmra.mxu0 %v1558
    %v1665 = vpop.f32.mrf.mxu0
    %v1666 = vadd.f32 0.0, %v1665
    %v1667 = vpop.f32.mrf.mxu0
    %v1668 = vadd.f32 0.0, %v1667
    %1669 = vmatmul.bf16.gmra.mxu0 %v1561
    %v1670 = vpop.f32.mrf.mxu0
    %v1671 = vadd.f32 0.0, %v1670
    %v1672 = vpop.f32.mrf.mxu0
    %v1673 = vadd.f32 0.0, %v1672
    %1674 = vmatmul.bf16.gmra.mxu0 %v1564
    %v1675 = vpop.f32.mrf.mxu0
    %v1676 = vadd.f32 0.0, %v1675
    %v1677 = vpop.f32.mrf.mxu0
    %v1678 = vadd.f32 0.0, %v1677
    %1679 = vmatmul.bf16.gmra.mxu0 %v1567
    %v1680 = vpop.f32.mrf.mxu0
    %v1681 = vadd.f32 0.0, %v1680
    %v1682 = vpop.f32.mrf.mxu0
    %v1683 = vadd.f32 0.0, %v1682
    %1684 = vmatmul.bf16.gmra.mxu0 %v1570
    %v1685 = vpop.f32.mrf.mxu0
    %v1686 = vadd.f32 0.0, %v1685
    %v1687 = vpop.f32.mrf.mxu0
    %v1688 = vadd.f32 0.0, %v1687
    %1689 = vmatmul.bf16.gmra.mxu0 %v1573
    %v1690 = vpop.f32.mrf.mxu0
    %v1691 = vadd.f32 0.0, %v1690
    %v1692 = vpop.f32.mrf.mxu0
    %v1693 = vadd.f32 0.0, %v1692
    %1694 = vmatmul.bf16.gmra.mxu0 %v1576
    %v1695 = vpop.f32.mrf.mxu0
    %v1696 = vadd.f32 0.0, %v1695
    %v1697 = vpop.f32.mrf.mxu0
    %v1698 = vadd.f32 0.0, %v1697
    %1699 = vmatmul.bf16.gmra.mxu0 %v1579
    %v1700 = vpop.f32.mrf.mxu0
    %v1701 = vadd.f32 0.0, %v1700
    %v1702 = vpop.f32.mrf.mxu0
    %v1703 = vadd.f32 0.0, %v1702
    %1704 = vmatmul.bf16.gmra.mxu0 %v1582
    %v1705 = vpop.f32.mrf.mxu0
    %v1706 = vadd.f32 0.0, %v1705
    %v1707 = vpop.f32.mrf.mxu0
    %v1708 = vadd.f32 0.0, %v1707
    %1709 = vmatmul.bf16.gmra.mxu0 %v1585
    %v1710 = vpop.f32.mrf.mxu0
    %v1711 = vadd.f32 0.0, %v1710
    %v1712 = vpop.f32.mrf.mxu0
    %v1713 = vadd.f32 0.0, %v1712
    %1714 = vmatmul.bf16.gmra.mxu0 %v1588
    %v1715 = vpop.f32.mrf.mxu0
    %v1716 = vadd.f32 0.0, %v1715
    %v1717 = vpop.f32.mrf.mxu0
    %v1718 = vadd.f32 0.0, %v1717
    %1719 = vmatmul.bf16.gmra.mxu0 %v1591
    %v1720 = vpop.f32.mrf.mxu0
    %v1721 = vadd.f32 0.0, %v1720
    %v1722 = vpop.f32.mrf.mxu0
    %v1723 = vadd.f32 0.0, %v1722
    %1724 = vmatmul.bf16.gmra.mxu0 %v1594
    %v1725 = vpop.f32.mrf.mxu0
    %v1726 = vadd.f32 0.0, %v1725
    %v1727 = vpop.f32.mrf.mxu0
    %v1728 = vadd.f32 0.0, %v1727
    %1729 = vmatmul.bf16.gmra.mxu0 %v1597
    %v1730 = vpop.f32.mrf.mxu0
    %v1731 = vadd.f32 0.0, %v1730
    %v1732 = vpop.f32.mrf.mxu0
    %v1733 = vadd.f32 0.0, %v1732
    %1734 = vmatmul.bf16.gmra.mxu0 %v1600
    %v1735 = vpop.f32.mrf.mxu0
    %v1736 = vadd.f32 0.0, %v1735
    %v1737 = vpop.f32.mrf.mxu0
    %v1738 = vadd.f32 0.0, %v1737
    %1739 = vmatmul.bf16.gmra.mxu0 %v1603
    %v1740 = vpop.f32.mrf.mxu0
    %v1741 = vadd.f32 0.0, %v1740
    %v1742 = vpop.f32.mrf.mxu0
    %v1743 = vadd.f32 0.0, %v1742
    %1744 = vmatmul.bf16.gmra.mxu0 %v1606
    %v1745 = vpop.f32.mrf.mxu0
    %v1746 = vadd.f32 0.0, %v1745
    %v1747 = vpop.f32.mrf.mxu0
    %v1748 = vadd.f32 0.0, %v1747
    %1749 = vmatmul.bf16.gmra.mxu0 %v1609
    %v1750 = vpop.f32.mrf.mxu0
    %v1751 = vadd.f32 0.0, %v1750
    %v1752 = vpop.f32.mrf.mxu0
    %v1753 = vadd.f32 0.0, %v1752
    %1754 = vmatmul.bf16.gmra.mxu0 %v1612
    %v1755 = vpop.f32.mrf.mxu0
    %v1756 = vadd.f32 0.0, %v1755
    %v1757 = vpop.f32.mrf.mxu0
    %v1758 = vadd.f32 0.0, %v1757
    %1759 = vmatmul.bf16.gmra.mxu0 %v1615
    %v1760 = vpop.f32.mrf.mxu0
    %v1761 = vadd.f32 0.0, %v1760
    %v1762 = vpop.f32.mrf.mxu0
    %v1763 = vadd.f32 0.0, %v1762
    %1764 = vmatmul.bf16.gmra.mxu0 %v1618
    %v1765 = vpop.f32.mrf.mxu0
    %v1766 = vadd.f32 0.0, %v1765
    %v1767 = vpop.f32.mrf.mxu0
    %v1768 = vadd.f32 0.0, %v1767
    %1769 = vmatmul.bf16.gmra.mxu0 %v1621
    %v1770 = vpop.f32.mrf.mxu0
    %v1771 = vadd.f32 0.0, %v1770
    %v1772 = vpop.f32.mrf.mxu0
    %v1773 = vadd.f32 0.0, %v1772
    %1774 = vmatmul.bf16.gmra.mxu0 %v1624
    %v1775 = vpop.f32.mrf.mxu0
    %v1776 = vadd.f32 0.0, %v1775
    %v1777 = vpop.f32.mrf.mxu0
    %v1778 = vadd.f32 0.0, %v1777
    %1779 = vmatmul.bf16.gmra.mxu0 %v1627
    %v1780 = vpop.f32.mrf.mxu0
    %v1781 = vadd.f32 0.0, %v1780
    %v1782 = vpop.f32.mrf.mxu0
    %v1783 = vadd.f32 0.0, %v1782
    %1784 = vmatmul.bf16.gmra.mxu0 %v1630
    %v1785 = vpop.f32.mrf.mxu0
    %v1786 = vadd.f32 0.0, %v1785
    %v1787 = vpop.f32.mrf.mxu0
    %v1788 = vadd.f32 0.0, %v1787
    %1789 = vmatmul.bf16.gmra.mxu0 %v1633
    %v1790 = vpop.f32.mrf.mxu0
    %v1791 = vadd.f32 0.0, %v1790
    %v1792 = vpop.f32.mrf.mxu0
    %v1793 = vadd.f32 0.0, %v1792
    %1794 = vmatmul.bf16.gmra.mxu0 %v1636
    %v1795 = vpop.f32.mrf.mxu0
    %v1796 = vadd.f32 0.0, %v1795
    %v1797 = vpop.f32.mrf.mxu0
    %v1798 = vadd.f32 0.0, %v1797
    %1799 = vmatmul.bf16.gmra.mxu0 %v1639
    %v1800 = vpop.f32.mrf.mxu0
    %v1801 = vadd.f32 0.0, %v1800
    %v1802 = vpop.f32.mrf.mxu0
    %v1803 = vadd.f32 0.0, %v1802
    %1804 = vmatmul.bf16.gmra.mxu0 %v1642
    %v1805 = vpop.f32.mrf.mxu0
    %v1806 = vadd.f32 0.0, %v1805
    %v1807 = vpop.f32.mrf.mxu0
    %v1808 = vadd.f32 0.0, %v1807
    %1809 = vmatmul.bf16.gmra.mxu0 %v1645
    %v1810 = vpop.f32.mrf.mxu0
    %v1811 = vadd.f32 0.0, %v1810
    %v1812 = vpop.f32.mrf.mxu0
    %v1813 = vadd.f32 0.0, %v1812
    %1814 = vmatmul.bf16.gmra.mxu0 %v1648
    %v1815 = vpop.f32.mrf.mxu0
    %v1816 = vadd.f32 0.0, %v1815
    %v1817 = vpop.f32.mrf.mxu0
    %v1818 = vadd.f32 0.0, %v1817
    %1819 = vmatmul.bf16.gmra.mxu0 %v1651
    %v1820 = vpop.f32.mrf.mxu0
    %v1821 = vadd.f32 0.0, %v1820
    %v1822 = vpop.f32.mrf.mxu0
    %v1823 = vadd.f32 0.0, %v1822
    %1824 = vdwg.mxu0
    %v1825 = vadd.f32 %v1140, %v1666
    %v1826 = vadd.f32 %v1142, %v1668
    %v1827 = vadd.f32 %v1145, %v1671
    %v1828 = vadd.f32 %v1147, %v1673
    %v1829 = vadd.f32 %v1150, %v1676
    %v1830 = vadd.f32 %v1152, %v1678
    %v1831 = vadd.f32 %v1155, %v1681
    %v1832 = vadd.f32 %v1157, %v1683
    %v1833 = vadd.f32 %v1160, %v1686
    %v1834 = vadd.f32 %v1162, %v1688
    %v1835 = vadd.f32 %v1165, %v1691
    %v1836 = vadd.f32 %v1167, %v1693
    %v1837 = vadd.f32 %v1170, %v1696
    %v1838 = vadd.f32 %v1172, %v1698
    %v1839 = vadd.f32 %v1175, %v1701
    %v1840 = vadd.f32 %v1177, %v1703
    %v1841 = vadd.f32 %v1180, %v1706
    %v1842 = vadd.f32 %v1182, %v1708
    %v1843 = vadd.f32 %v1185, %v1711
    %v1844 = vadd.f32 %v1187, %v1713
    %v1845 = vadd.f32 %v1190, %v1716
    %v1846 = vadd.f32 %v1192, %v1718
    %v1847 = vadd.f32 %v1195, %v1721
    %v1848 = vadd.f32 %v1197, %v1723
    %v1849 = vadd.f32 %v1200, %v1726
    %v1850 = vadd.f32 %v1202, %v1728
    %v1851 = vadd.f32 %v1205, %v1731
    %v1852 = vadd.f32 %v1207, %v1733
    %v1853 = vadd.f32 %v1210, %v1736
    %v1854 = vadd.f32 %v1212, %v1738
    %v1855 = vadd.f32 %v1215, %v1741
    %v1856 = vadd.f32 %v1217, %v1743
    %v1857 = vadd.f32 %v1220, %v1746
    %v1858 = vadd.f32 %v1222, %v1748
    %v1859 = vadd.f32 %v1225, %v1751
    %v1860 = vadd.f32 %v1227, %v1753
    %v1861 = vadd.f32 %v1230, %v1756
    %v1862 = vadd.f32 %v1232, %v1758
    %v1863 = vadd.f32 %v1235, %v1761
    %v1864 = vadd.f32 %v1237, %v1763
    %v1865 = vadd.f32 %v1240, %v1766
    %v1866 = vadd.f32 %v1242, %v1768
    %v1867 = vadd.f32 %v1245, %v1771
    %v1868 = vadd.f32 %v1247, %v1773
    %v1869 = vadd.f32 %v1250, %v1776
    %v1870 = vadd.f32 %v1252, %v1778
    %v1871 = vadd.f32 %v1255, %v1781
    %v1872 = vadd.f32 %v1257, %v1783
    %v1873 = vadd.f32 %v1260, %v1786
    %v1874 = vadd.f32 %v1262, %v1788
    %v1875 = vadd.f32 %v1265, %v1791
    %v1876 = vadd.f32 %v1267, %v1793
    %v1877 = vadd.f32 %v1270, %v1796
    %v1878 = vadd.f32 %v1272, %v1798
    %v1879 = vadd.f32 %v1275, %v1801
    %v1880 = vadd.f32 %v1277, %v1803
    %v1881 = vadd.f32 %v1280, %v1806
    %v1882 = vadd.f32 %v1282, %v1808
    %v1883 = vadd.f32 %v1285, %v1811
    %v1884 = vadd.f32 %v1287, %v1813
    %v1885 = vadd.f32 %v1290, %v1816
    %v1886 = vadd.f32 %v1292, %v1818
    %v1887 = vadd.f32 %v1295, %v1821
    %v1888 = vadd.f32 %v1297, %v1823
    %v1889 = vpack.c.bf16 %v312, %v311
    %v1890 = vpack.c.bf16 %v366, %v365
    %v1891 = vld [vmem:[%s1 + $0x4] sm:$0xc]
    %v1893 = vunpack.c.l.b16 %v1891
    %v1894 = vpack.c.b16 %v1893, %v1893
    %v1895 = vrot.slane %v1894, 2
    %v1897 = vsel %vm88, %v1889, 0
    %v1900 = vsel %vm88, %v1890, 0
    %v1903 = vsel %vm858, %v1895, 0
    %1905 = vmatpush.bf16.msra.mxu0 0
    %1906 = vmatpush.bf16.msra.mxu0 0
    %1907 = vmatpush.bf16.msra.mxu0 0
    %1908 = vmatpush.bf16.msra.mxu0 0
    %1909 = vmatpush.bf16.msra.mxu0 0
    %1910 = vmatpush.bf16.msra.mxu0 0
    %1911 = vmatpush.bf16.msra.mxu0 0
    %1912 = vmatpush.bf16.msra.mxu0 %v1903
    %1913 = vmatmul.bf16.gmra.mxu0 %v1035
    %v1914 = vpop.f32.mrf.mxu0
    %v1915 = vadd.f32 0.0, %v1914
    %v1916 = vpop.f32.mrf.mxu0
    %v1917 = vadd.f32 0.0, %v1916
    %1918 = vmatmul.bf16.gmra.mxu0 %v1038
    %v1919 = vpop.f32.mrf.mxu0
    %v1920 = vadd.f32 0.0, %v1919
    %v1921 = vpop.f32.mrf.mxu0
    %v1922 = vadd.f32 0.0, %v1921
    %1923 = vmatmul.bf16.gmra.mxu0 %v1041
    %v1924 = vpop.f32.mrf.mxu0
    %v1925 = vadd.f32 0.0, %v1924
    %v1926 = vpop.f32.mrf.mxu0
    %v1927 = vadd.f32 0.0, %v1926
    %1928 = vmatmul.bf16.gmra.mxu0 %v1044
    %v1929 = vpop.f32.mrf.mxu0
    %v1930 = vadd.f32 0.0, %v1929
    %v1931 = vpop.f32.mrf.mxu0
    %v1932 = vadd.f32 0.0, %v1931
    %1933 = vmatmul.bf16.gmra.mxu0 %v1047
    %v1934 = vpop.f32.mrf.mxu0
    %v1935 = vadd.f32 0.0, %v1934
    %v1936 = vpop.f32.mrf.mxu0
    %v1937 = vadd.f32 0.0, %v1936
    %1938 = vmatmul.bf16.gmra.mxu0 %v1050
    %v1939 = vpop.f32.mrf.mxu0
    %v1940 = vadd.f32 0.0, %v1939
    %v1941 = vpop.f32.mrf.mxu0
    %v1942 = vadd.f32 0.0, %v1941
    %1943 = vmatmul.bf16.gmra.mxu0 %v1053
    %v1944 = vpop.f32.mrf.mxu0
    %v1945 = vadd.f32 0.0, %v1944
    %v1946 = vpop.f32.mrf.mxu0
    %v1947 = vadd.f32 0.0, %v1946
    %1948 = vmatmul.bf16.gmra.mxu0 %v1056
    %v1949 = vpop.f32.mrf.mxu0
    %v1950 = vadd.f32 0.0, %v1949
    %v1951 = vpop.f32.mrf.mxu0
    %v1952 = vadd.f32 0.0, %v1951
    %1953 = vmatmul.bf16.gmra.mxu0 %v1059
    %v1954 = vpop.f32.mrf.mxu0
    %v1955 = vadd.f32 0.0, %v1954
    %v1956 = vpop.f32.mrf.mxu0
    %v1957 = vadd.f32 0.0, %v1956
    %1958 = vmatmul.bf16.gmra.mxu0 %v1062
    %v1959 = vpop.f32.mrf.mxu0
    %v1960 = vadd.f32 0.0, %v1959
    %v1961 = vpop.f32.mrf.mxu0
    %v1962 = vadd.f32 0.0, %v1961
    %1963 = vmatmul.bf16.gmra.mxu0 %v1065
    %v1964 = vpop.f32.mrf.mxu0
    %v1965 = vadd.f32 0.0, %v1964
    %v1966 = vpop.f32.mrf.mxu0
    %v1967 = vadd.f32 0.0, %v1966
    %1968 = vmatmul.bf16.gmra.mxu0 %v1068
    %v1969 = vpop.f32.mrf.mxu0
    %v1970 = vadd.f32 0.0, %v1969
    %v1971 = vpop.f32.mrf.mxu0
    %v1972 = vadd.f32 0.0, %v1971
    %1973 = vmatmul.bf16.gmra.mxu0 %v1071
    %v1974 = vpop.f32.mrf.mxu0
    %v1975 = vadd.f32 0.0, %v1974
    %v1976 = vpop.f32.mrf.mxu0
    %v1977 = vadd.f32 0.0, %v1976
    %1978 = vmatmul.bf16.gmra.mxu0 %v1074
    %v1979 = vpop.f32.mrf.mxu0
    %v1980 = vadd.f32 0.0, %v1979
    %v1981 = vpop.f32.mrf.mxu0
    %v1982 = vadd.f32 0.0, %v1981
    %1983 = vmatmul.bf16.gmra.mxu0 %v1077
    %v1984 = vpop.f32.mrf.mxu0
    %v1985 = vadd.f32 0.0, %v1984
    %v1986 = vpop.f32.mrf.mxu0
    %v1987 = vadd.f32 0.0, %v1986
    %1988 = vmatmul.bf16.gmra.mxu0 %v1897
    %v1989 = vpop.f32.mrf.mxu0
    %v1990 = vadd.f32 0.0, %v1989
    %v1991 = vpop.f32.mrf.mxu0
    %v1992 = vadd.f32 0.0, %v1991
    %1993 = vmatmul.bf16.gmra.mxu0 %v1083
    %v1994 = vpop.f32.mrf.mxu0
    %v1995 = vadd.f32 0.0, %v1994
    %v1996 = vpop.f32.mrf.mxu0
    %v1997 = vadd.f32 0.0, %v1996
    %1998 = vmatmul.bf16.gmra.mxu0 %v1086
    %v1999 = vpop.f32.mrf.mxu0
    %v2000 = vadd.f32 0.0, %v1999
    %v2001 = vpop.f32.mrf.mxu0
    %v2002 = vadd.f32 0.0, %v2001
    %2003 = vmatmul.bf16.gmra.mxu0 %v1089
    %v2004 = vpop.f32.mrf.mxu0
    %v2005 = vadd.f32 0.0, %v2004
    %v2006 = vpop.f32.mrf.mxu0
    %v2007 = vadd.f32 0.0, %v2006
    %2008 = vmatmul.bf16.gmra.mxu0 %v1092
    %v2009 = vpop.f32.mrf.mxu0
    %v2010 = vadd.f32 0.0, %v2009
    %v2011 = vpop.f32.mrf.mxu0
    %v2012 = vadd.f32 0.0, %v2011
    %2013 = vmatmul.bf16.gmra.mxu0 %v1095
    %v2014 = vpop.f32.mrf.mxu0
    %v2015 = vadd.f32 0.0, %v2014
    %v2016 = vpop.f32.mrf.mxu0
    %v2017 = vadd.f32 0.0, %v2016
    %2018 = vmatmul.bf16.gmra.mxu0 %v1098
    %v2019 = vpop.f32.mrf.mxu0
    %v2020 = vadd.f32 0.0, %v2019
    %v2021 = vpop.f32.mrf.mxu0
    %v2022 = vadd.f32 0.0, %v2021
    %2023 = vmatmul.bf16.gmra.mxu0 %v1101
    %v2024 = vpop.f32.mrf.mxu0
    %v2025 = vadd.f32 0.0, %v2024
    %v2026 = vpop.f32.mrf.mxu0
    %v2027 = vadd.f32 0.0, %v2026
    %2028 = vmatmul.bf16.gmra.mxu0 %v1104
    %v2029 = vpop.f32.mrf.mxu0
    %v2030 = vadd.f32 0.0, %v2029
    %v2031 = vpop.f32.mrf.mxu0
    %v2032 = vadd.f32 0.0, %v2031
    %2033 = vmatmul.bf16.gmra.mxu0 %v1107
    %v2034 = vpop.f32.mrf.mxu0
    %v2035 = vadd.f32 0.0, %v2034
    %v2036 = vpop.f32.mrf.mxu0
    %v2037 = vadd.f32 0.0, %v2036
    %2038 = vmatmul.bf16.gmra.mxu0 %v1110
    %v2039 = vpop.f32.mrf.mxu0
    %v2040 = vadd.f32 0.0, %v2039
    %v2041 = vpop.f32.mrf.mxu0
    %v2042 = vadd.f32 0.0, %v2041
    %2043 = vmatmul.bf16.gmra.mxu0 %v1113
    %v2044 = vpop.f32.mrf.mxu0
    %v2045 = vadd.f32 0.0, %v2044
    %v2046 = vpop.f32.mrf.mxu0
    %v2047 = vadd.f32 0.0, %v2046
    %2048 = vmatmul.bf16.gmra.mxu0 %v1116
    %v2049 = vpop.f32.mrf.mxu0
    %v2050 = vadd.f32 0.0, %v2049
    %v2051 = vpop.f32.mrf.mxu0
    %v2052 = vadd.f32 0.0, %v2051
    %2053 = vmatmul.bf16.gmra.mxu0 %v1119
    %v2054 = vpop.f32.mrf.mxu0
    %v2055 = vadd.f32 0.0, %v2054
    %v2056 = vpop.f32.mrf.mxu0
    %v2057 = vadd.f32 0.0, %v2056
    %2058 = vmatmul.bf16.gmra.mxu0 %v1122
    %v2059 = vpop.f32.mrf.mxu0
    %v2060 = vadd.f32 0.0, %v2059
    %v2061 = vpop.f32.mrf.mxu0
    %v2062 = vadd.f32 0.0, %v2061
    %2063 = vmatmul.bf16.gmra.mxu0 %v1125
    %v2064 = vpop.f32.mrf.mxu0
    %v2065 = vadd.f32 0.0, %v2064
    %v2066 = vpop.f32.mrf.mxu0
    %v2067 = vadd.f32 0.0, %v2066
    %2068 = vmatmul.bf16.gmra.mxu0 %v1900
    %v2069 = vpop.f32.mrf.mxu0
    %v2070 = vadd.f32 0.0, %v2069
    %v2071 = vpop.f32.mrf.mxu0
    %v2072 = vadd.f32 0.0, %v2071
    %2073 = vdwg.mxu0
    %v2074 = vadd.f32 %v1825, %v1915
    %v2075 = vadd.f32 %v1826, %v1917
    %v2076 = vadd.f32 %v1827, %v1920
    %v2077 = vadd.f32 %v1828, %v1922
    %v2078 = vadd.f32 %v1829, %v1925
    %v2079 = vadd.f32 %v1830, %v1927
    %v2080 = vadd.f32 %v1831, %v1930
    %v2081 = vadd.f32 %v1832, %v1932
    %v2082 = vadd.f32 %v1833, %v1935
    %v2083 = vadd.f32 %v1834, %v1937
    %v2084 = vadd.f32 %v1835, %v1940
    %v2085 = vadd.f32 %v1836, %v1942
    %v2086 = vadd.f32 %v1837, %v1945
    %v2087 = vadd.f32 %v1838, %v1947
    %v2088 = vadd.f32 %v1839, %v1950
    %v2089 = vadd.f32 %v1840, %v1952
    %v2090 = vadd.f32 %v1841, %v1955
    %v2091 = vadd.f32 %v1842, %v1957
    %v2092 = vadd.f32 %v1843, %v1960
    %v2093 = vadd.f32 %v1844, %v1962
    %v2094 = vadd.f32 %v1845, %v1965
    %v2095 = vadd.f32 %v1846, %v1967
    %v2096 = vadd.f32 %v1847, %v1970
    %v2097 = vadd.f32 %v1848, %v1972
    %v2098 = vadd.f32 %v1849, %v1975
    %v2099 = vadd.f32 %v1850, %v1977
    %v2100 = vadd.f32 %v1851, %v1980
    %v2101 = vadd.f32 %v1852, %v1982
    %v2102 = vadd.f32 %v1853, %v1985
    %v2103 = vadd.f32 %v1854, %v1987
    %v2104 = vadd.f32 %v1855, %v1990
    %v2105 = vadd.f32 %v1856, %v1992
    %v2106 = vadd.f32 %v1857, %v1995
    %v2107 = vadd.f32 %v1858, %v1997
    %v2108 = vadd.f32 %v1859, %v2000
    %v2109 = vadd.f32 %v1860, %v2002
    %v2110 = vadd.f32 %v1861, %v2005
    %v2111 = vadd.f32 %v1862, %v2007
    %v2112 = vadd.f32 %v1863, %v2010
    %v2113 = vadd.f32 %v1864, %v2012
    %v2114 = vadd.f32 %v1865, %v2015
    %v2115 = vadd.f32 %v1866, %v2017
    %v2116 = vadd.f32 %v1867, %v2020
    %v2117 = vadd.f32 %v1868, %v2022
    %v2118 = vadd.f32 %v1869, %v2025
    %v2119 = vadd.f32 %v1870, %v2027
    %v2120 = vadd.f32 %v1871, %v2030
    %v2121 = vadd.f32 %v1872, %v2032
    %v2122 = vadd.f32 %v1873, %v2035
    %v2123 = vadd.f32 %v1874, %v2037
    %v2124 = vadd.f32 %v1875, %v2040
    %v2125 = vadd.f32 %v1876, %v2042
    %v2126 = vadd.f32 %v1877, %v2045
    %v2127 = vadd.f32 %v1878, %v2047
    %v2128 = vadd.f32 %v1879, %v2050
    %v2129 = vadd.f32 %v1880, %v2052
    %v2130 = vadd.f32 %v1881, %v2055
    %v2131 = vadd.f32 %v1882, %v2057
    %v2132 = vadd.f32 %v1883, %v2060
    %v2133 = vadd.f32 %v1884, %v2062
    %v2134 = vadd.f32 %v1885, %v2065
    %v2135 = vadd.f32 %v1886, %v2067
    %v2136 = vadd.f32 %v1887, %v2070
    %v2137 = vadd.f32 %v1888, %v2072
    %v2144 = vrot.slane %v311, 1
    %v2145 = vrot.slane %v312, 1
    %v2146 = vsel %vm500, %v2144, %v2145
    %v2147 = vrot.slane %v313, 1
    %v2148 = vsel %vm500, %v2145, %v2147
    %v2149 = vrot.slane %v365, 1
    %v2150 = vrot.slane %v366, 1
    %v2151 = vsel %vm500, %v2149, %v2150
    %v2152 = vrot.slane %v367, 1
    %v2153 = vsel %vm500, %v2150, %v2152
    %v2158 = vpack.c.bf16 %v2148, %v2146
    %v2159 = vpack.c.bf16 %v2153, %v2151
    %v2160 = vld [vmem:[%s1 + $0x8] sm:$0x3]
    %v2162 = vsel %vm88, %v2158, 0
    %v2165 = vsel %vm88, %v2159, 0
    %v2168 = vsel %vm858, %v2160, 0
    %2170 = vmatpush.bf16.msra.mxu0 0
    %2171 = vmatpush.bf16.msra.mxu0 0
    %2172 = vmatpush.bf16.msra.mxu0 0
    %2173 = vmatpush.bf16.msra.mxu0 0
    %2174 = vmatpush.bf16.msra.mxu0 0
    %2175 = vmatpush.bf16.msra.mxu0 0
    %2176 = vmatpush.bf16.msra.mxu0 0
    %2177 = vmatpush.bf16.msra.mxu0 %v2168
    %2178 = vmatmul.bf16.gmra.mxu0 %v766
    %v2179 = vpop.f32.mrf.mxu0
    %v2180 = vadd.f32 0.0, %v2179
    %v2181 = vpop.f32.mrf.mxu0
    %v2182 = vadd.f32 0.0, %v2181
    %2183 = vmatmul.bf16.gmra.mxu0 %v769
    %v2184 = vpop.f32.mrf.mxu0
    %v2185 = vadd.f32 0.0, %v2184
    %v2186 = vpop.f32.mrf.mxu0
    %v2187 = vadd.f32 0.0, %v2186
    %2188 = vmatmul.bf16.gmra.mxu0 %v772
    %v2189 = vpop.f32.mrf.mxu0
    %v2190 = vadd.f32 0.0, %v2189
    %v2191 = vpop.f32.mrf.mxu0
    %v2192 = vadd.f32 0.0, %v2191
    %2193 = vmatmul.bf16.gmra.mxu0 %v775
    %v2194 = vpop.f32.mrf.mxu0
    %v2195 = vadd.f32 0.0, %v2194
    %v2196 = vpop.f32.mrf.mxu0
    %v2197 = vadd.f32 0.0, %v2196
    %2198 = vmatmul.bf16.gmra.mxu0 %v778
    %v2199 = vpop.f32.mrf.mxu0
    %v2200 = vadd.f32 0.0, %v2199
    %v2201 = vpop.f32.mrf.mxu0
    %v2202 = vadd.f32 0.0, %v2201
    %2203 = vmatmul.bf16.gmra.mxu0 %v781
    %v2204 = vpop.f32.mrf.mxu0
    %v2205 = vadd.f32 0.0, %v2204
    %v2206 = vpop.f32.mrf.mxu0
    %v2207 = vadd.f32 0.0, %v2206
    %2208 = vmatmul.bf16.gmra.mxu0 %v784
    %v2209 = vpop.f32.mrf.mxu0
    %v2210 = vadd.f32 0.0, %v2209
    %v2211 = vpop.f32.mrf.mxu0
    %v2212 = vadd.f32 0.0, %v2211
    %2213 = vmatmul.bf16.gmra.mxu0 %v787
    %v2214 = vpop.f32.mrf.mxu0
    %v2215 = vadd.f32 0.0, %v2214
    %v2216 = vpop.f32.mrf.mxu0
    %v2217 = vadd.f32 0.0, %v2216
    %2218 = vmatmul.bf16.gmra.mxu0 %v790
    %v2219 = vpop.f32.mrf.mxu0
    %v2220 = vadd.f32 0.0, %v2219
    %v2221 = vpop.f32.mrf.mxu0
    %v2222 = vadd.f32 0.0, %v2221
    %2223 = vmatmul.bf16.gmra.mxu0 %v793
    %v2224 = vpop.f32.mrf.mxu0
    %v2225 = vadd.f32 0.0, %v2224
    %v2226 = vpop.f32.mrf.mxu0
    %v2227 = vadd.f32 0.0, %v2226
    %2228 = vmatmul.bf16.gmra.mxu0 %v796
    %v2229 = vpop.f32.mrf.mxu0
    %v2230 = vadd.f32 0.0, %v2229
    %v2231 = vpop.f32.mrf.mxu0
    %v2232 = vadd.f32 0.0, %v2231
    %2233 = vmatmul.bf16.gmra.mxu0 %v799
    %v2234 = vpop.f32.mrf.mxu0
    %v2235 = vadd.f32 0.0, %v2234
    %v2236 = vpop.f32.mrf.mxu0
    %v2237 = vadd.f32 0.0, %v2236
    %2238 = vmatmul.bf16.gmra.mxu0 %v802
    %v2239 = vpop.f32.mrf.mxu0
    %v2240 = vadd.f32 0.0, %v2239
    %v2241 = vpop.f32.mrf.mxu0
    %v2242 = vadd.f32 0.0, %v2241
    %2243 = vmatmul.bf16.gmra.mxu0 %v805
    %v2244 = vpop.f32.mrf.mxu0
    %v2245 = vadd.f32 0.0, %v2244
    %v2246 = vpop.f32.mrf.mxu0
    %v2247 = vadd.f32 0.0, %v2246
    %2248 = vmatmul.bf16.gmra.mxu0 %v808
    %v2249 = vpop.f32.mrf.mxu0
    %v2250 = vadd.f32 0.0, %v2249
    %v2251 = vpop.f32.mrf.mxu0
    %v2252 = vadd.f32 0.0, %v2251
    %2253 = vmatmul.bf16.gmra.mxu0 %v2162
    %v2254 = vpop.f32.mrf.mxu0
    %v2255 = vadd.f32 0.0, %v2254
    %v2256 = vpop.f32.mrf.mxu0
    %v2257 = vadd.f32 0.0, %v2256
    %2258 = vmatmul.bf16.gmra.mxu0 %v814
    %v2259 = vpop.f32.mrf.mxu0
    %v2260 = vadd.f32 0.0, %v2259
    %v2261 = vpop.f32.mrf.mxu0
    %v2262 = vadd.f32 0.0, %v2261
    %2263 = vmatmul.bf16.gmra.mxu0 %v817
    %v2264 = vpop.f32.mrf.mxu0
    %v2265 = vadd.f32 0.0, %v2264
    %v2266 = vpop.f32.mrf.mxu0
    %v2267 = vadd.f32 0.0, %v2266
    %2268 = vmatmul.bf16.gmra.mxu0 %v820
    %v2269 = vpop.f32.mrf.mxu0
    %v2270 = vadd.f32 0.0, %v2269
    %v2271 = vpop.f32.mrf.mxu0
    %v2272 = vadd.f32 0.0, %v2271
    %2273 = vmatmul.bf16.gmra.mxu0 %v823
    %v2274 = vpop.f32.mrf.mxu0
    %v2275 = vadd.f32 0.0, %v2274
    %v2276 = vpop.f32.mrf.mxu0
    %v2277 = vadd.f32 0.0, %v2276
    %2278 = vmatmul.bf16.gmra.mxu0 %v826
    %v2279 = vpop.f32.mrf.mxu0
    %v2280 = vadd.f32 0.0, %v2279
    %v2281 = vpop.f32.mrf.mxu0
    %v2282 = vadd.f32 0.0, %v2281
    %2283 = vmatmul.bf16.gmra.mxu0 %v829
    %v2284 = vpop.f32.mrf.mxu0
    %v2285 = vadd.f32 0.0, %v2284
    %v2286 = vpop.f32.mrf.mxu0
    %v2287 = vadd.f32 0.0, %v2286
    %2288 = vmatmul.bf16.gmra.mxu0 %v832
    %v2289 = vpop.f32.mrf.mxu0
    %v2290 = vadd.f32 0.0, %v2289
    %v2291 = vpop.f32.mrf.mxu0
    %v2292 = vadd.f32 0.0, %v2291
    %2293 = vmatmul.bf16.gmra.mxu0 %v835
    %v2294 = vpop.f32.mrf.mxu0
    %v2295 = vadd.f32 0.0, %v2294
    %v2296 = vpop.f32.mrf.mxu0
    %v2297 = vadd.f32 0.0, %v2296
    %2298 = vmatmul.bf16.gmra.mxu0 %v838
    %v2299 = vpop.f32.mrf.mxu0
    %v2300 = vadd.f32 0.0, %v2299
    %v2301 = vpop.f32.mrf.mxu0
    %v2302 = vadd.f32 0.0, %v2301
    %2303 = vmatmul.bf16.gmra.mxu0 %v841
    %v2304 = vpop.f32.mrf.mxu0
    %v2305 = vadd.f32 0.0, %v2304
    %v2306 = vpop.f32.mrf.mxu0
    %v2307 = vadd.f32 0.0, %v2306
    %2308 = vmatmul.bf16.gmra.mxu0 %v844
    %v2309 = vpop.f32.mrf.mxu0
    %v2310 = vadd.f32 0.0, %v2309
    %v2311 = vpop.f32.mrf.mxu0
    %v2312 = vadd.f32 0.0, %v2311
    %2313 = vmatmul.bf16.gmra.mxu0 %v847
    %v2314 = vpop.f32.mrf.mxu0
    %v2315 = vadd.f32 0.0, %v2314
    %v2316 = vpop.f32.mrf.mxu0
    %v2317 = vadd.f32 0.0, %v2316
    %2318 = vmatmul.bf16.gmra.mxu0 %v850
    %v2319 = vpop.f32.mrf.mxu0
    %v2320 = vadd.f32 0.0, %v2319
    %v2321 = vpop.f32.mrf.mxu0
    %v2322 = vadd.f32 0.0, %v2321
    %2323 = vmatmul.bf16.gmra.mxu0 %v853
    %v2324 = vpop.f32.mrf.mxu0
    %v2325 = vadd.f32 0.0, %v2324
    %v2326 = vpop.f32.mrf.mxu0
    %v2327 = vadd.f32 0.0, %v2326
    %2328 = vmatmul.bf16.gmra.mxu0 %v856
    %v2329 = vpop.f32.mrf.mxu0
    %v2330 = vadd.f32 0.0, %v2329
    %v2331 = vpop.f32.mrf.mxu0
    %v2332 = vadd.f32 0.0, %v2331
    %2333 = vmatmul.bf16.gmra.mxu0 %v2165
    %v2334 = vpop.f32.mrf.mxu0
    %v2335 = vadd.f32 0.0, %v2334
    %v2336 = vpop.f32.mrf.mxu0
    %v2337 = vadd.f32 0.0, %v2336
    %2338 = vdwg.mxu0
    %v2339 = vadd.f32 %v2074, %v2180
    %v2340 = vadd.f32 %v2075, %v2182
    %v2341 = vadd.f32 %v2076, %v2185
    %v2342 = vadd.f32 %v2077, %v2187
    %v2343 = vadd.f32 %v2078, %v2190
    %v2344 = vadd.f32 %v2079, %v2192
    %v2345 = vadd.f32 %v2080, %v2195
    %v2346 = vadd.f32 %v2081, %v2197
    %v2347 = vadd.f32 %v2082, %v2200
    %v2348 = vadd.f32 %v2083, %v2202
    %v2349 = vadd.f32 %v2084, %v2205
    %v2350 = vadd.f32 %v2085, %v2207
    %v2351 = vadd.f32 %v2086, %v2210
    %v2352 = vadd.f32 %v2087, %v2212
    %v2353 = vadd.f32 %v2088, %v2215
    %v2354 = vadd.f32 %v2089, %v2217
    %v2355 = vadd.f32 %v2090, %v2220
    %v2356 = vadd.f32 %v2091, %v2222
    %v2357 = vadd.f32 %v2092, %v2225
    %v2358 = vadd.f32 %v2093, %v2227
    %v2359 = vadd.f32 %v2094, %v2230
    %v2360 = vadd.f32 %v2095, %v2232
    %v2361 = vadd.f32 %v2096, %v2235
    %v2362 = vadd.f32 %v2097, %v2237
    %v2363 = vadd.f32 %v2098, %v2240
    %v2364 = vadd.f32 %v2099, %v2242
    %v2365 = vadd.f32 %v2100, %v2245
    %v2366 = vadd.f32 %v2101, %v2247
    %v2367 = vadd.f32 %v2102, %v2250
    %v2368 = vadd.f32 %v2103, %v2252
    %v2369 = vadd.f32 %v2104, %v2255
    %v2370 = vadd.f32 %v2105, %v2257
    %v2371 = vadd.f32 %v2106, %v2260
    %v2372 = vadd.f32 %v2107, %v2262
    %v2373 = vadd.f32 %v2108, %v2265
    %v2374 = vadd.f32 %v2109, %v2267
    %v2375 = vadd.f32 %v2110, %v2270
    %v2376 = vadd.f32 %v2111, %v2272
    %v2377 = vadd.f32 %v2112, %v2275
    %v2378 = vadd.f32 %v2113, %v2277
    %v2379 = vadd.f32 %v2114, %v2280
    %v2380 = vadd.f32 %v2115, %v2282
    %v2381 = vadd.f32 %v2116, %v2285
    %v2382 = vadd.f32 %v2117, %v2287
    %v2383 = vadd.f32 %v2118, %v2290
    %v2384 = vadd.f32 %v2119, %v2292
    %v2385 = vadd.f32 %v2120, %v2295
    %v2386 = vadd.f32 %v2121, %v2297
    %v2387 = vadd.f32 %v2122, %v2300
    %v2388 = vadd.f32 %v2123, %v2302
    %v2389 = vadd.f32 %v2124, %v2305
    %v2390 = vadd.f32 %v2125, %v2307
    %v2391 = vadd.f32 %v2126, %v2310
    %v2392 = vadd.f32 %v2127, %v2312
    %v2393 = vadd.f32 %v2128, %v2315
    %v2394 = vadd.f32 %v2129, %v2317
    %v2395 = vadd.f32 %v2130, %v2320
    %v2396 = vadd.f32 %v2131, %v2322
    %v2397 = vadd.f32 %v2132, %v2325
    %v2398 = vadd.f32 %v2133, %v2327
    %v2399 = vadd.f32 %v2134, %v2330
    %v2400 = vadd.f32 %v2135, %v2332
    %v2401 = vadd.f32 %v2136, %v2335
    %v2402 = vadd.f32 %v2137, %v2337
    %v2403 = vrot.slane %v311, 2
    %v2404 = vrot.slane %v312, 2
    %v2405 = vsel %vm1299, %v2403, %v2404
    %v2406 = vrot.slane %v313, 2
    %v2407 = vsel %vm1299, %v2404, %v2406
    %v2408 = vrot.slane %v365, 2
    %v2409 = vrot.slane %v366, 2
    %v2410 = vsel %vm1299, %v2408, %v2409
    %v2411 = vrot.slane %v367, 2
    %v2412 = vsel %vm1299, %v2409, %v2411
    %v2417 = vpack.c.bf16 %v2407, %v2405
    %v2418 = vpack.c.bf16 %v2412, %v2410
    %v2419 = vld [vmem:[%s1 + $0x8] sm:$0xc]
    %v2421 = vunpack.c.l.b16 %v2419
    %v2422 = vpack.c.b16 %v2421, %v2421
    %v2423 = vrot.slane %v2422, 2
    %v2425 = vsel %vm88, %v2417, 0
    %v2428 = vsel %vm88, %v2418, 0
    %v2431 = vsel %vm858, %v2423, 0
    %2433 = vmatpush.bf16.msra.mxu0 0
    %2434 = vmatpush.bf16.msra.mxu0 0
    %2435 = vmatpush.bf16.msra.mxu0 0
    %2436 = vmatpush.bf16.msra.mxu0 0
    %2437 = vmatpush.bf16.msra.mxu0 0
    %2438 = vmatpush.bf16.msra.mxu0 0
    %2439 = vmatpush.bf16.msra.mxu0 0
    %2440 = vmatpush.bf16.msra.mxu0 %v2431
    %2441 = vmatmul.bf16.gmra.mxu0 %v1561
    %v2442 = vpop.f32.mrf.mxu0
    %v2443 = vadd.f32 0.0, %v2442
    %v2444 = vpop.f32.mrf.mxu0
    %v2445 = vadd.f32 0.0, %v2444
    %2446 = vmatmul.bf16.gmra.mxu0 %v1564
    %v2447 = vpop.f32.mrf.mxu0
    %v2448 = vadd.f32 0.0, %v2447
    %v2449 = vpop.f32.mrf.mxu0
    %v2450 = vadd.f32 0.0, %v2449
    %2451 = vmatmul.bf16.gmra.mxu0 %v1567
    %v2452 = vpop.f32.mrf.mxu0
    %v2453 = vadd.f32 0.0, %v2452
    %v2454 = vpop.f32.mrf.mxu0
    %v2455 = vadd.f32 0.0, %v2454
    %2456 = vmatmul.bf16.gmra.mxu0 %v1570
    %v2457 = vpop.f32.mrf.mxu0
    %v2458 = vadd.f32 0.0, %v2457
    %v2459 = vpop.f32.mrf.mxu0
    %v2460 = vadd.f32 0.0, %v2459
    %2461 = vmatmul.bf16.gmra.mxu0 %v1573
    %v2462 = vpop.f32.mrf.mxu0
    %v2463 = vadd.f32 0.0, %v2462
    %v2464 = vpop.f32.mrf.mxu0
    %v2465 = vadd.f32 0.0, %v2464
    %2466 = vmatmul.bf16.gmra.mxu0 %v1576
    %v2467 = vpop.f32.mrf.mxu0
    %v2468 = vadd.f32 0.0, %v2467
    %v2469 = vpop.f32.mrf.mxu0
    %v2470 = vadd.f32 0.0, %v2469
    %2471 = vmatmul.bf16.gmra.mxu0 %v1579
    %v2472 = vpop.f32.mrf.mxu0
    %v2473 = vadd.f32 0.0, %v2472
    %v2474 = vpop.f32.mrf.mxu0
    %v2475 = vadd.f32 0.0, %v2474
    %2476 = vmatmul.bf16.gmra.mxu0 %v1582
    %v2477 = vpop.f32.mrf.mxu0
    %v2478 = vadd.f32 0.0, %v2477
    %v2479 = vpop.f32.mrf.mxu0
    %v2480 = vadd.f32 0.0, %v2479
    %2481 = vmatmul.bf16.gmra.mxu0 %v1585
    %v2482 = vpop.f32.mrf.mxu0
    %v2483 = vadd.f32 0.0, %v2482
    %v2484 = vpop.f32.mrf.mxu0
    %v2485 = vadd.f32 0.0, %v2484
    %2486 = vmatmul.bf16.gmra.mxu0 %v1588
    %v2487 = vpop.f32.mrf.mxu0
    %v2488 = vadd.f32 0.0, %v2487
    %v2489 = vpop.f32.mrf.mxu0
    %v2490 = vadd.f32 0.0, %v2489
    %2491 = vmatmul.bf16.gmra.mxu0 %v1591
    %v2492 = vpop.f32.mrf.mxu0
    %v2493 = vadd.f32 0.0, %v2492
    %v2494 = vpop.f32.mrf.mxu0
    %v2495 = vadd.f32 0.0, %v2494
    %2496 = vmatmul.bf16.gmra.mxu0 %v1594
    %v2497 = vpop.f32.mrf.mxu0
    %v2498 = vadd.f32 0.0, %v2497
    %v2499 = vpop.f32.mrf.mxu0
    %v2500 = vadd.f32 0.0, %v2499
    %2501 = vmatmul.bf16.gmra.mxu0 %v1597
    %v2502 = vpop.f32.mrf.mxu0
    %v2503 = vadd.f32 0.0, %v2502
    %v2504 = vpop.f32.mrf.mxu0
    %v2505 = vadd.f32 0.0, %v2504
    %2506 = vmatmul.bf16.gmra.mxu0 %v1600
    %v2507 = vpop.f32.mrf.mxu0
    %v2508 = vadd.f32 0.0, %v2507
    %v2509 = vpop.f32.mrf.mxu0
    %v2510 = vadd.f32 0.0, %v2509
    %2511 = vmatmul.bf16.gmra.mxu0 %v1603
    %v2512 = vpop.f32.mrf.mxu0
    %v2513 = vadd.f32 0.0, %v2512
    %v2514 = vpop.f32.mrf.mxu0
    %v2515 = vadd.f32 0.0, %v2514
    %2516 = vmatmul.bf16.gmra.mxu0 %v2425
    %v2517 = vpop.f32.mrf.mxu0
    %v2518 = vadd.f32 0.0, %v2517
    %v2519 = vpop.f32.mrf.mxu0
    %v2520 = vadd.f32 0.0, %v2519
    %2521 = vmatmul.bf16.gmra.mxu0 %v1609
    %v2522 = vpop.f32.mrf.mxu0
    %v2523 = vadd.f32 0.0, %v2522
    %v2524 = vpop.f32.mrf.mxu0
    %v2525 = vadd.f32 0.0, %v2524
    %2526 = vmatmul.bf16.gmra.mxu0 %v1612
    %v2527 = vpop.f32.mrf.mxu0
    %v2528 = vadd.f32 0.0, %v2527
    %v2529 = vpop.f32.mrf.mxu0
    %v2530 = vadd.f32 0.0, %v2529
    %2531 = vmatmul.bf16.gmra.mxu0 %v1615
    %v2532 = vpop.f32.mrf.mxu0
    %v2533 = vadd.f32 0.0, %v2532
    %v2534 = vpop.f32.mrf.mxu0
    %v2535 = vadd.f32 0.0, %v2534
    %2536 = vmatmul.bf16.gmra.mxu0 %v1618
    %v2537 = vpop.f32.mrf.mxu0
    %v2538 = vadd.f32 0.0, %v2537
    %v2539 = vpop.f32.mrf.mxu0
    %v2540 = vadd.f32 0.0, %v2539
    %2541 = vmatmul.bf16.gmra.mxu0 %v1621
    %v2542 = vpop.f32.mrf.mxu0
    %v2543 = vadd.f32 0.0, %v2542
    %v2544 = vpop.f32.mrf.mxu0
    %v2545 = vadd.f32 0.0, %v2544
    %2546 = vmatmul.bf16.gmra.mxu0 %v1624
    %v2547 = vpop.f32.mrf.mxu0
    %v2548 = vadd.f32 0.0, %v2547
    %v2549 = vpop.f32.mrf.mxu0
    %v2550 = vadd.f32 0.0, %v2549
    %2551 = vmatmul.bf16.gmra.mxu0 %v1627
    %v2552 = vpop.f32.mrf.mxu0
    %v2553 = vadd.f32 0.0, %v2552
    %v2554 = vpop.f32.mrf.mxu0
    %v2555 = vadd.f32 0.0, %v2554
    %2556 = vmatmul.bf16.gmra.mxu0 %v1630
    %v2557 = vpop.f32.mrf.mxu0
    %v2558 = vadd.f32 0.0, %v2557
    %v2559 = vpop.f32.mrf.mxu0
    %v2560 = vadd.f32 0.0, %v2559
    %2561 = vmatmul.bf16.gmra.mxu0 %v1633
    %v2562 = vpop.f32.mrf.mxu0
    %v2563 = vadd.f32 0.0, %v2562
    %v2564 = vpop.f32.mrf.mxu0
    %v2565 = vadd.f32 0.0, %v2564
    %2566 = vmatmul.bf16.gmra.mxu0 %v1636
    %v2567 = vpop.f32.mrf.mxu0
    %v2568 = vadd.f32 0.0, %v2567
    %v2569 = vpop.f32.mrf.mxu0
    %v2570 = vadd.f32 0.0, %v2569
    %2571 = vmatmul.bf16.gmra.mxu0 %v1639
    %v2572 = vpop.f32.mrf.mxu0
    %v2573 = vadd.f32 0.0, %v2572
    %v2574 = vpop.f32.mrf.mxu0
    %v2575 = vadd.f32 0.0, %v2574
    %2576 = vmatmul.bf16.gmra.mxu0 %v1642
    %v2577 = vpop.f32.mrf.mxu0
    %v2578 = vadd.f32 0.0, %v2577
    %v2579 = vpop.f32.mrf.mxu0
    %v2580 = vadd.f32 0.0, %v2579
    %2581 = vmatmul.bf16.gmra.mxu0 %v1645
    %v2582 = vpop.f32.mrf.mxu0
    %v2583 = vadd.f32 0.0, %v2582
    %v2584 = vpop.f32.mrf.mxu0
    %v2585 = vadd.f32 0.0, %v2584
    %2586 = vmatmul.bf16.gmra.mxu0 %v1648
    %v2587 = vpop.f32.mrf.mxu0
    %v2588 = vadd.f32 0.0, %v2587
    %v2589 = vpop.f32.mrf.mxu0
    %v2590 = vadd.f32 0.0, %v2589
    %2591 = vmatmul.bf16.gmra.mxu0 %v1651
    %v2592 = vpop.f32.mrf.mxu0
    %v2593 = vadd.f32 0.0, %v2592
    %v2594 = vpop.f32.mrf.mxu0
    %v2595 = vadd.f32 0.0, %v2594
    %2596 = vmatmul.bf16.gmra.mxu0 %v2428
    %v2597 = vpop.f32.mrf.mxu0
    %v2598 = vadd.f32 0.0, %v2597
    %v2599 = vpop.f32.mrf.mxu0
    %v2600 = vadd.f32 0.0, %v2599
    %2601 = vdwg.mxu0
    %v2602 = vadd.f32 %v2339, %v2443
    %v2603 = vadd.f32 %v2340, %v2445
    %v2604 = vadd.f32 %v2341, %v2448
    %v2605 = vadd.f32 %v2342, %v2450
    %v2606 = vadd.f32 %v2343, %v2453
    %v2607 = vadd.f32 %v2344, %v2455
    %v2608 = vadd.f32 %v2345, %v2458
    %v2609 = vadd.f32 %v2346, %v2460
    %v2610 = vadd.f32 %v2347, %v2463
    %v2611 = vadd.f32 %v2348, %v2465
    %v2612 = vadd.f32 %v2349, %v2468
    %v2613 = vadd.f32 %v2350, %v2470
    %v2614 = vadd.f32 %v2351, %v2473
    %v2615 = vadd.f32 %v2352, %v2475
    %v2616 = vadd.f32 %v2353, %v2478
    %v2617 = vadd.f32 %v2354, %v2480
    %v2618 = vadd.f32 %v2355, %v2483
    %v2619 = vadd.f32 %v2356, %v2485
    %v2620 = vadd.f32 %v2357, %v2488
    %v2621 = vadd.f32 %v2358, %v2490
    %v2622 = vadd.f32 %v2359, %v2493
    %v2623 = vadd.f32 %v2360, %v2495
    %v2624 = vadd.f32 %v2361, %v2498
    %v2625 = vadd.f32 %v2362, %v2500
    %v2626 = vadd.f32 %v2363, %v2503
    %v2627 = vadd.f32 %v2364, %v2505
    %v2628 = vadd.f32 %v2365, %v2508
    %v2629 = vadd.f32 %v2366, %v2510
    %v2630 = vadd.f32 %v2367, %v2513
    %v2631 = vadd.f32 %v2368, %v2515
    %v2632 = vadd.f32 %v2369, %v2518
    %v2633 = vadd.f32 %v2370, %v2520
    %v2634 = vadd.f32 %v2371, %v2523
    %v2635 = vadd.f32 %v2372, %v2525
    %v2636 = vadd.f32 %v2373, %v2528
    %v2637 = vadd.f32 %v2374, %v2530
    %v2638 = vadd.f32 %v2375, %v2533
    %v2639 = vadd.f32 %v2376, %v2535
    %v2640 = vadd.f32 %v2377, %v2538
    %v2641 = vadd.f32 %v2378, %v2540
    %v2642 = vadd.f32 %v2379, %v2543
    %v2643 = vadd.f32 %v2380, %v2545
    %v2644 = vadd.f32 %v2381, %v2548
    %v2645 = vadd.f32 %v2382, %v2550
    %v2646 = vadd.f32 %v2383, %v2553
    %v2647 = vadd.f32 %v2384, %v2555
    %v2648 = vadd.f32 %v2385, %v2558
    %v2649 = vadd.f32 %v2386, %v2560
    %v2650 = vadd.f32 %v2387, %v2563
    %v2651 = vadd.f32 %v2388, %v2565
    %v2652 = vadd.f32 %v2389, %v2568
    %v2653 = vadd.f32 %v2390, %v2570
    %v2654 = vadd.f32 %v2391, %v2573
    %v2655 = vadd.f32 %v2392, %v2575
    %v2656 = vadd.f32 %v2393, %v2578
    %v2657 = vadd.f32 %v2394, %v2580
    %v2658 = vadd.f32 %v2395, %v2583
    %v2659 = vadd.f32 %v2396, %v2585
    %v2660 = vadd.f32 %v2397, %v2588
    %v2661 = vadd.f32 %v2398, %v2590
    %v2662 = vadd.f32 %v2399, %v2593
    %v2663 = vadd.f32 %v2400, %v2595
    %v2664 = vadd.f32 %v2401, %v2598
    %v2665 = vadd.f32 %v2402, %v2600
    %v2666 = vpack.c.bf16 %v315, %v314
    %v2667 = vpack.c.bf16 %v369, %v368
    %v2668 = vld [vmem:[%s1 + $0xc] sm:$0x3]
    %v2670 = vsel %vm88, %v2666, 0
    %v2673 = vsel %vm88, %v2667, 0
    %v2676 = vsel %vm858, %v2668, 0
    %2678 = vmatpush.bf16.msra.mxu0 0
    %2679 = vmatpush.bf16.msra.mxu0 0
    %2680 = vmatpush.bf16.msra.mxu0 0
    %2681 = vmatpush.bf16.msra.mxu0 0
    %2682 = vmatpush.bf16.msra.mxu0 0
    %2683 = vmatpush.bf16.msra.mxu0 0
    %2684 = vmatpush.bf16.msra.mxu0 0
    %2685 = vmatpush.bf16.msra.mxu0 %v2676
    %2686 = vmatmul.bf16.gmra.mxu0 %v1038
    %v2687 = vpop.f32.mrf.mxu0
    %v2688 = vadd.f32 0.0, %v2687
    %v2689 = vpop.f32.mrf.mxu0
    %v2690 = vadd.f32 0.0, %v2689
    %2691 = vmatmul.bf16.gmra.mxu0 %v1041
    %v2692 = vpop.f32.mrf.mxu0
    %v2693 = vadd.f32 0.0, %v2692
    %v2694 = vpop.f32.mrf.mxu0
    %v2695 = vadd.f32 0.0, %v2694
    %2696 = vmatmul.bf16.gmra.mxu0 %v1044
    %v2697 = vpop.f32.mrf.mxu0
    %v2698 = vadd.f32 0.0, %v2697
    %v2699 = vpop.f32.mrf.mxu0
    %v2700 = vadd.f32 0.0, %v2699
    %2701 = vmatmul.bf16.gmra.mxu0 %v1047
    %v2702 = vpop.f32.mrf.mxu0
    %v2703 = vadd.f32 0.0, %v2702
    %v2704 = vpop.f32.mrf.mxu0
    %v2705 = vadd.f32 0.0, %v2704
    %2706 = vmatmul.bf16.gmra.mxu0 %v1050
    %v2707 = vpop.f32.mrf.mxu0
    %v2708 = vadd.f32 0.0, %v2707
    %v2709 = vpop.f32.mrf.mxu0
    %v2710 = vadd.f32 0.0, %v2709
    %2711 = vmatmul.bf16.gmra.mxu0 %v1053
    %v2712 = vpop.f32.mrf.mxu0
    %v2713 = vadd.f32 0.0, %v2712
    %v2714 = vpop.f32.mrf.mxu0
    %v2715 = vadd.f32 0.0, %v2714
    %2716 = vmatmul.bf16.gmra.mxu0 %v1056
    %v2717 = vpop.f32.mrf.mxu0
    %v2718 = vadd.f32 0.0, %v2717
    %v2719 = vpop.f32.mrf.mxu0
    %v2720 = vadd.f32 0.0, %v2719
    %2721 = vmatmul.bf16.gmra.mxu0 %v1059
    %v2722 = vpop.f32.mrf.mxu0
    %v2723 = vadd.f32 0.0, %v2722
    %v2724 = vpop.f32.mrf.mxu0
    %v2725 = vadd.f32 0.0, %v2724
    %2726 = vmatmul.bf16.gmra.mxu0 %v1062
    %v2727 = vpop.f32.mrf.mxu0
    %v2728 = vadd.f32 0.0, %v2727
    %v2729 = vpop.f32.mrf.mxu0
    %v2730 = vadd.f32 0.0, %v2729
    %2731 = vmatmul.bf16.gmra.mxu0 %v1065
    %v2732 = vpop.f32.mrf.mxu0
    %v2733 = vadd.f32 0.0, %v2732
    %v2734 = vpop.f32.mrf.mxu0
    %v2735 = vadd.f32 0.0, %v2734
    %2736 = vmatmul.bf16.gmra.mxu0 %v1068
    %v2737 = vpop.f32.mrf.mxu0
    %v2738 = vadd.f32 0.0, %v2737
    %v2739 = vpop.f32.mrf.mxu0
    %v2740 = vadd.f32 0.0, %v2739
    %2741 = vmatmul.bf16.gmra.mxu0 %v1071
    %v2742 = vpop.f32.mrf.mxu0
    %v2743 = vadd.f32 0.0, %v2742
    %v2744 = vpop.f32.mrf.mxu0
    %v2745 = vadd.f32 0.0, %v2744
    %2746 = vmatmul.bf16.gmra.mxu0 %v1074
    %v2747 = vpop.f32.mrf.mxu0
    %v2748 = vadd.f32 0.0, %v2747
    %v2749 = vpop.f32.mrf.mxu0
    %v2750 = vadd.f32 0.0, %v2749
    %2751 = vmatmul.bf16.gmra.mxu0 %v1077
    %v2752 = vpop.f32.mrf.mxu0
    %v2753 = vadd.f32 0.0, %v2752
    %v2754 = vpop.f32.mrf.mxu0
    %v2755 = vadd.f32 0.0, %v2754
    %2756 = vmatmul.bf16.gmra.mxu0 %v1897
    %v2757 = vpop.f32.mrf.mxu0
    %v2758 = vadd.f32 0.0, %v2757
    %v2759 = vpop.f32.mrf.mxu0
    %v2760 = vadd.f32 0.0, %v2759
    %2761 = vmatmul.bf16.gmra.mxu0 %v2670
    %v2762 = vpop.f32.mrf.mxu0
    %v2763 = vadd.f32 0.0, %v2762
    %v2764 = vpop.f32.mrf.mxu0
    %v2765 = vadd.f32 0.0, %v2764
    %2766 = vmatmul.bf16.gmra.mxu0 %v1086
    %v2767 = vpop.f32.mrf.mxu0
    %v2768 = vadd.f32 0.0, %v2767
    %v2769 = vpop.f32.mrf.mxu0
    %v2770 = vadd.f32 0.0, %v2769
    %2771 = vmatmul.bf16.gmra.mxu0 %v1089
    %v2772 = vpop.f32.mrf.mxu0
    %v2773 = vadd.f32 0.0, %v2772
    %v2774 = vpop.f32.mrf.mxu0
    %v2775 = vadd.f32 0.0, %v2774
    %2776 = vmatmul.bf16.gmra.mxu0 %v1092
    %v2777 = vpop.f32.mrf.mxu0
    %v2778 = vadd.f32 0.0, %v2777
    %v2779 = vpop.f32.mrf.mxu0
    %v2780 = vadd.f32 0.0, %v2779
    %2781 = vmatmul.bf16.gmra.mxu0 %v1095
    %v2782 = vpop.f32.mrf.mxu0
    %v2783 = vadd.f32 0.0, %v2782
    %v2784 = vpop.f32.mrf.mxu0
    %v2785 = vadd.f32 0.0, %v2784
    %2786 = vmatmul.bf16.gmra.mxu0 %v1098
    %v2787 = vpop.f32.mrf.mxu0
    %v2788 = vadd.f32 0.0, %v2787
    %v2789 = vpop.f32.mrf.mxu0
    %v2790 = vadd.f32 0.0, %v2789
    %2791 = vmatmul.bf16.gmra.mxu0 %v1101
    %v2792 = vpop.f32.mrf.mxu0
    %v2793 = vadd.f32 0.0, %v2792
    %v2794 = vpop.f32.mrf.mxu0
    %v2795 = vadd.f32 0.0, %v2794
    %2796 = vmatmul.bf16.gmra.mxu0 %v1104
    %v2797 = vpop.f32.mrf.mxu0
    %v2798 = vadd.f32 0.0, %v2797
    %v2799 = vpop.f32.mrf.mxu0
    %v2800 = vadd.f32 0.0, %v2799
    %2801 = vmatmul.bf16.gmra.mxu0 %v1107
    %v2802 = vpop.f32.mrf.mxu0
    %v2803 = vadd.f32 0.0, %v2802
    %v2804 = vpop.f32.mrf.mxu0
    %v2805 = vadd.f32 0.0, %v2804
    %2806 = vmatmul.bf16.gmra.mxu0 %v1110
    %v2807 = vpop.f32.mrf.mxu0
    %v2808 = vadd.f32 0.0, %v2807
    %v2809 = vpop.f32.mrf.mxu0
    %v2810 = vadd.f32 0.0, %v2809
    %2811 = vmatmul.bf16.gmra.mxu0 %v1113
    %v2812 = vpop.f32.mrf.mxu0
    %v2813 = vadd.f32 0.0, %v2812
    %v2814 = vpop.f32.mrf.mxu0
    %v2815 = vadd.f32 0.0, %v2814
    %2816 = vmatmul.bf16.gmra.mxu0 %v1116
    %v2817 = vpop.f32.mrf.mxu0
    %v2818 = vadd.f32 0.0, %v2817
    %v2819 = vpop.f32.mrf.mxu0
    %v2820 = vadd.f32 0.0, %v2819
    %2821 = vmatmul.bf16.gmra.mxu0 %v1119
    %v2822 = vpop.f32.mrf.mxu0
    %v2823 = vadd.f32 0.0, %v2822
    %v2824 = vpop.f32.mrf.mxu0
    %v2825 = vadd.f32 0.0, %v2824
    %2826 = vmatmul.bf16.gmra.mxu0 %v1122
    %v2827 = vpop.f32.mrf.mxu0
    %v2828 = vadd.f32 0.0, %v2827
    %v2829 = vpop.f32.mrf.mxu0
    %v2830 = vadd.f32 0.0, %v2829
    %2831 = vmatmul.bf16.gmra.mxu0 %v1125
    %v2832 = vpop.f32.mrf.mxu0
    %v2833 = vadd.f32 0.0, %v2832
    %v2834 = vpop.f32.mrf.mxu0
    %v2835 = vadd.f32 0.0, %v2834
    %2836 = vmatmul.bf16.gmra.mxu0 %v1900
    %v2837 = vpop.f32.mrf.mxu0
    %v2838 = vadd.f32 0.0, %v2837
    %v2839 = vpop.f32.mrf.mxu0
    %v2840 = vadd.f32 0.0, %v2839
    %2841 = vmatmul.bf16.gmra.mxu0 %v2673
    %v2842 = vpop.f32.mrf.mxu0
    %v2843 = vadd.f32 0.0, %v2842
    %v2844 = vpop.f32.mrf.mxu0
    %v2845 = vadd.f32 0.0, %v2844
    %2846 = vdwg.mxu0
    %v2847 = vadd.f32 %v2602, %v2688
    %v2848 = vadd.f32 %v2603, %v2690
    %v2849 = vadd.f32 %v2604, %v2693
    %v2850 = vadd.f32 %v2605, %v2695
    %v2851 = vadd.f32 %v2606, %v2698
    %v2852 = vadd.f32 %v2607, %v2700
    %v2853 = vadd.f32 %v2608, %v2703
    %v2854 = vadd.f32 %v2609, %v2705
    %v2855 = vadd.f32 %v2610, %v2708
    %v2856 = vadd.f32 %v2611, %v2710
    %v2857 = vadd.f32 %v2612, %v2713
    %v2858 = vadd.f32 %v2613, %v2715
    %v2859 = vadd.f32 %v2614, %v2718
    %v2860 = vadd.f32 %v2615, %v2720
    %v2861 = vadd.f32 %v2616, %v2723
    %v2862 = vadd.f32 %v2617, %v2725
    %v2863 = vadd.f32 %v2618, %v2728
    %v2864 = vadd.f32 %v2619, %v2730
    %v2865 = vadd.f32 %v2620, %v2733
    %v2866 = vadd.f32 %v2621, %v2735
    %v2867 = vadd.f32 %v2622, %v2738
    %v2868 = vadd.f32 %v2623, %v2740
    %v2869 = vadd.f32 %v2624, %v2743
    %v2870 = vadd.f32 %v2625, %v2745
    %v2871 = vadd.f32 %v2626, %v2748
    %v2872 = vadd.f32 %v2627, %v2750
    %v2873 = vadd.f32 %v2628, %v2753
    %v2874 = vadd.f32 %v2629, %v2755
    %v2875 = vadd.f32 %v2630, %v2758
    %v2876 = vadd.f32 %v2631, %v2760
    %v2877 = vadd.f32 %v2632, %v2763
    %v2878 = vadd.f32 %v2633, %v2765
    %v2879 = vadd.f32 %v2634, %v2768
    %v2880 = vadd.f32 %v2635, %v2770
    %v2881 = vadd.f32 %v2636, %v2773
    %v2882 = vadd.f32 %v2637, %v2775
    %v2883 = vadd.f32 %v2638, %v2778
    %v2884 = vadd.f32 %v2639, %v2780
    %v2885 = vadd.f32 %v2640, %v2783
    %v2886 = vadd.f32 %v2641, %v2785
    %v2887 = vadd.f32 %v2642, %v2788
    %v2888 = vadd.f32 %v2643, %v2790
    %v2889 = vadd.f32 %v2644, %v2793
    %v2890 = vadd.f32 %v2645, %v2795
    %v2891 = vadd.f32 %v2646, %v2798
    %v2892 = vadd.f32 %v2647, %v2800
    %v2893 = vadd.f32 %v2648, %v2803
    %v2894 = vadd.f32 %v2649, %v2805
    %v2895 = vadd.f32 %v2650, %v2808
    %v2896 = vadd.f32 %v2651, %v2810
    %v2897 = vadd.f32 %v2652, %v2813
    %v2898 = vadd.f32 %v2653, %v2815
    %v2899 = vadd.f32 %v2654, %v2818
    %v2900 = vadd.f32 %v2655, %v2820
    %v2901 = vadd.f32 %v2656, %v2823
    %v2902 = vadd.f32 %v2657, %v2825
    %v2903 = vadd.f32 %v2658, %v2828
    %v2904 = vadd.f32 %v2659, %v2830
    %v2905 = vadd.f32 %v2660, %v2833
    %v2906 = vadd.f32 %v2661, %v2835
    %v2907 = vadd.f32 %v2662, %v2838
    %v2908 = vadd.f32 %v2663, %v2840
    %v2909 = vadd.f32 %v2664, %v2843
    %v2910 = vadd.f32 %v2665, %v2845
    %v2917 = vrot.slane %v314, 1
    %v2918 = vrot.slane %v315, 1
    %v2919 = vsel %vm500, %v2917, %v2918
    %v2920 = vrot.slane %v316, 1
    %v2921 = vsel %vm500, %v2918, %v2920
    %v2922 = vrot.slane %v368, 1
    %v2923 = vrot.slane %v369, 1
    %v2924 = vsel %vm500, %v2922, %v2923
    %v2925 = vrot.slane %v370, 1
    %v2926 = vsel %vm500, %v2923, %v2925
    %v2931 = vpack.c.bf16 %v2921, %v2919
    %v2932 = vpack.c.bf16 %v2926, %v2924
    %v2933 = vld [vmem:[%s1 + $0xc] sm:$0xc]
    %v2935 = vunpack.c.l.b16 %v2933
    %v2936 = vpack.c.b16 %v2935, %v2935
    %v2937 = vrot.slane %v2936, 2
    %v2939 = vsel %vm88, %v2931, 0
    %v2942 = vsel %vm88, %v2932, 0
    %v2945 = vsel %vm858, %v2937, 0
    %2947 = vmatpush.bf16.msra.mxu0 0
    %2948 = vmatpush.bf16.msra.mxu0 0
    %2949 = vmatpush.bf16.msra.mxu0 0
    %2950 = vmatpush.bf16.msra.mxu0 0
    %2951 = vmatpush.bf16.msra.mxu0 0
    %2952 = vmatpush.bf16.msra.mxu0 0
    %2953 = vmatpush.bf16.msra.mxu0 0
    %2954 = vmatpush.bf16.msra.mxu0 %v2945
    %2955 = vmatmul.bf16.gmra.mxu0 %v769
    %v2956 = vpop.f32.mrf.mxu0
    %v2957 = vadd.f32 0.0, %v2956
    %v2958 = vpop.f32.mrf.mxu0
    %v2959 = vadd.f32 0.0, %v2958
    %2960 = vmatmul.bf16.gmra.mxu0 %v772
    %v2961 = vpop.f32.mrf.mxu0
    %v2962 = vadd.f32 0.0, %v2961
    %v2963 = vpop.f32.mrf.mxu0
    %v2964 = vadd.f32 0.0, %v2963
    %2965 = vmatmul.bf16.gmra.mxu0 %v775
    %v2966 = vpop.f32.mrf.mxu0
    %v2967 = vadd.f32 0.0, %v2966
    %v2968 = vpop.f32.mrf.mxu0
    %v2969 = vadd.f32 0.0, %v2968
    %2970 = vmatmul.bf16.gmra.mxu0 %v778
    %v2971 = vpop.f32.mrf.mxu0
    %v2972 = vadd.f32 0.0, %v2971
    %v2973 = vpop.f32.mrf.mxu0
    %v2974 = vadd.f32 0.0, %v2973
    %2975 = vmatmul.bf16.gmra.mxu0 %v781
    %v2976 = vpop.f32.mrf.mxu0
    %v2977 = vadd.f32 0.0, %v2976
    %v2978 = vpop.f32.mrf.mxu0
    %v2979 = vadd.f32 0.0, %v2978
    %2980 = vmatmul.bf16.gmra.mxu0 %v784
    %v2981 = vpop.f32.mrf.mxu0
    %v2982 = vadd.f32 0.0, %v2981
    %v2983 = vpop.f32.mrf.mxu0
    %v2984 = vadd.f32 0.0, %v2983
    %2985 = vmatmul.bf16.gmra.mxu0 %v787
    %v2986 = vpop.f32.mrf.mxu0
    %v2987 = vadd.f32 0.0, %v2986
    %v2988 = vpop.f32.mrf.mxu0
    %v2989 = vadd.f32 0.0, %v2988
    %2990 = vmatmul.bf16.gmra.mxu0 %v790
    %v2991 = vpop.f32.mrf.mxu0
    %v2992 = vadd.f32 0.0, %v2991
    %v2993 = vpop.f32.mrf.mxu0
    %v2994 = vadd.f32 0.0, %v2993
    %2995 = vmatmul.bf16.gmra.mxu0 %v793
    %v2996 = vpop.f32.mrf.mxu0
    %v2997 = vadd.f32 0.0, %v2996
    %v2998 = vpop.f32.mrf.mxu0
    %v2999 = vadd.f32 0.0, %v2998
    %3000 = vmatmul.bf16.gmra.mxu0 %v796
    %v3001 = vpop.f32.mrf.mxu0
    %v3002 = vadd.f32 0.0, %v3001
    %v3003 = vpop.f32.mrf.mxu0
    %v3004 = vadd.f32 0.0, %v3003
    %3005 = vmatmul.bf16.gmra.mxu0 %v799
    %v3006 = vpop.f32.mrf.mxu0
    %v3007 = vadd.f32 0.0, %v3006
    %v3008 = vpop.f32.mrf.mxu0
    %v3009 = vadd.f32 0.0, %v3008
    %3010 = vmatmul.bf16.gmra.mxu0 %v802
    %v3011 = vpop.f32.mrf.mxu0
    %v3012 = vadd.f32 0.0, %v3011
    %v3013 = vpop.f32.mrf.mxu0
    %v3014 = vadd.f32 0.0, %v3013
    %3015 = vmatmul.bf16.gmra.mxu0 %v805
    %v3016 = vpop.f32.mrf.mxu0
    %v3017 = vadd.f32 0.0, %v3016
    %v3018 = vpop.f32.mrf.mxu0
    %v3019 = vadd.f32 0.0, %v3018
    %3020 = vmatmul.bf16.gmra.mxu0 %v808
    %v3021 = vpop.f32.mrf.mxu0
    %v3022 = vadd.f32 0.0, %v3021
    %v3023 = vpop.f32.mrf.mxu0
    %v3024 = vadd.f32 0.0, %v3023
    %3025 = vmatmul.bf16.gmra.mxu0 %v2162
    %v3026 = vpop.f32.mrf.mxu0
    %v3027 = vadd.f32 0.0, %v3026
    %v3028 = vpop.f32.mrf.mxu0
    %v3029 = vadd.f32 0.0, %v3028
    %3030 = vmatmul.bf16.gmra.mxu0 %v2939
    %v3031 = vpop.f32.mrf.mxu0
    %v3032 = vadd.f32 0.0, %v3031
    %v3033 = vpop.f32.mrf.mxu0
    %v3034 = vadd.f32 0.0, %v3033
    %3035 = vmatmul.bf16.gmra.mxu0 %v817
    %v3036 = vpop.f32.mrf.mxu0
    %v3037 = vadd.f32 0.0, %v3036
    %v3038 = vpop.f32.mrf.mxu0
    %v3039 = vadd.f32 0.0, %v3038
    %3040 = vmatmul.bf16.gmra.mxu0 %v820
    %v3041 = vpop.f32.mrf.mxu0
    %v3042 = vadd.f32 0.0, %v3041
    %v3043 = vpop.f32.mrf.mxu0
    %v3044 = vadd.f32 0.0, %v3043
    %3045 = vmatmul.bf16.gmra.mxu0 %v823
    %v3046 = vpop.f32.mrf.mxu0
    %v3047 = vadd.f32 0.0, %v3046
    %v3048 = vpop.f32.mrf.mxu0
    %v3049 = vadd.f32 0.0, %v3048
    %3050 = vmatmul.bf16.gmra.mxu0 %v826
    %v3051 = vpop.f32.mrf.mxu0
    %v3052 = vadd.f32 0.0, %v3051
    %v3053 = vpop.f32.mrf.mxu0
    %v3054 = vadd.f32 0.0, %v3053
    %3055 = vmatmul.bf16.gmra.mxu0 %v829
    %v3056 = vpop.f32.mrf.mxu0
    %v3057 = vadd.f32 0.0, %v3056
    %v3058 = vpop.f32.mrf.mxu0
    %v3059 = vadd.f32 0.0, %v3058
    %3060 = vmatmul.bf16.gmra.mxu0 %v832
    %v3061 = vpop.f32.mrf.mxu0
    %v3062 = vadd.f32 0.0, %v3061
    %v3063 = vpop.f32.mrf.mxu0
    %v3064 = vadd.f32 0.0, %v3063
    %3065 = vmatmul.bf16.gmra.mxu0 %v835
    %v3066 = vpop.f32.mrf.mxu0
    %v3067 = vadd.f32 0.0, %v3066
    %v3068 = vpop.f32.mrf.mxu0
    %v3069 = vadd.f32 0.0, %v3068
    %3070 = vmatmul.bf16.gmra.mxu0 %v838
    %v3071 = vpop.f32.mrf.mxu0
    %v3072 = vadd.f32 0.0, %v3071
    %v3073 = vpop.f32.mrf.mxu0
    %v3074 = vadd.f32 0.0, %v3073
    %3075 = vmatmul.bf16.gmra.mxu0 %v841
    %v3076 = vpop.f32.mrf.mxu0
    %v3077 = vadd.f32 0.0, %v3076
    %v3078 = vpop.f32.mrf.mxu0
    %v3079 = vadd.f32 0.0, %v3078
    %3080 = vmatmul.bf16.gmra.mxu0 %v844
    %v3081 = vpop.f32.mrf.mxu0
    %v3082 = vadd.f32 0.0, %v3081
    %v3083 = vpop.f32.mrf.mxu0
    %v3084 = vadd.f32 0.0, %v3083
    %3085 = vmatmul.bf16.gmra.mxu0 %v847
    %v3086 = vpop.f32.mrf.mxu0
    %v3087 = vadd.f32 0.0, %v3086
    %v3088 = vpop.f32.mrf.mxu0
    %v3089 = vadd.f32 0.0, %v3088
    %3090 = vmatmul.bf16.gmra.mxu0 %v850
    %v3091 = vpop.f32.mrf.mxu0
    %v3092 = vadd.f32 0.0, %v3091
    %v3093 = vpop.f32.mrf.mxu0
    %v3094 = vadd.f32 0.0, %v3093
    %3095 = vmatmul.bf16.gmra.mxu0 %v853
    %v3096 = vpop.f32.mrf.mxu0
    %v3097 = vadd.f32 0.0, %v3096
    %v3098 = vpop.f32.mrf.mxu0
    %v3099 = vadd.f32 0.0, %v3098
    %3100 = vmatmul.bf16.gmra.mxu0 %v856
    %v3101 = vpop.f32.mrf.mxu0
    %v3102 = vadd.f32 0.0, %v3101
    %v3103 = vpop.f32.mrf.mxu0
    %v3104 = vadd.f32 0.0, %v3103
    %3105 = vmatmul.bf16.gmra.mxu0 %v2165
    %v3106 = vpop.f32.mrf.mxu0
    %v3107 = vadd.f32 0.0, %v3106
    %v3108 = vpop.f32.mrf.mxu0
    %v3109 = vadd.f32 0.0, %v3108
    %3110 = vmatmul.bf16.gmra.mxu0 %v2942
    %v3111 = vpop.f32.mrf.mxu0
    %v3112 = vadd.f32 0.0, %v3111
    %v3113 = vpop.f32.mrf.mxu0
    %v3114 = vadd.f32 0.0, %v3113
    %3115 = vdwg.mxu0
    %v3116 = vadd.f32 %v2847, %v2957
    %v3117 = vadd.f32 %v2848, %v2959
    %v3118 = vadd.f32 %v2849, %v2962
    %v3119 = vadd.f32 %v2850, %v2964
    %v3120 = vadd.f32 %v2851, %v2967
    %v3121 = vadd.f32 %v2852, %v2969
    %v3122 = vadd.f32 %v2853, %v2972
    %v3123 = vadd.f32 %v2854, %v2974
    %v3124 = vadd.f32 %v2855, %v2977
    %v3125 = vadd.f32 %v2856, %v2979
    %v3126 = vadd.f32 %v2857, %v2982
    %v3127 = vadd.f32 %v2858, %v2984
    %v3128 = vadd.f32 %v2859, %v2987
    %v3129 = vadd.f32 %v2860, %v2989
    %v3130 = vadd.f32 %v2861, %v2992
    %v3131 = vadd.f32 %v2862, %v2994
    %v3132 = vadd.f32 %v2863, %v2997
    %v3133 = vadd.f32 %v2864, %v2999
    %v3134 = vadd.f32 %v2865, %v3002
    %v3135 = vadd.f32 %v2866, %v3004
    %v3136 = vadd.f32 %v2867, %v3007
    %v3137 = vadd.f32 %v2868, %v3009
    %v3138 = vadd.f32 %v2869, %v3012
    %v3139 = vadd.f32 %v2870, %v3014
    %v3140 = vadd.f32 %v2871, %v3017
    %v3141 = vadd.f32 %v2872, %v3019
    %v3142 = vadd.f32 %v2873, %v3022
    %v3143 = vadd.f32 %v2874, %v3024
    %v3144 = vadd.f32 %v2875, %v3027
    %v3145 = vadd.f32 %v2876, %v3029
    %v3146 = vadd.f32 %v2877, %v3032
    %v3147 = vadd.f32 %v2878, %v3034
    %v3148 = vadd.f32 %v2879, %v3037
    %v3149 = vadd.f32 %v2880, %v3039
    %v3150 = vadd.f32 %v2881, %v3042
    %v3151 = vadd.f32 %v2882, %v3044
    %v3152 = vadd.f32 %v2883, %v3047
    %v3153 = vadd.f32 %v2884, %v3049
    %v3154 = vadd.f32 %v2885, %v3052
    %v3155 = vadd.f32 %v2886, %v3054
    %v3156 = vadd.f32 %v2887, %v3057
    %v3157 = vadd.f32 %v2888, %v3059
    %v3158 = vadd.f32 %v2889, %v3062
    %v3159 = vadd.f32 %v2890, %v3064
    %v3160 = vadd.f32 %v2891, %v3067
    %v3161 = vadd.f32 %v2892, %v3069
    %v3162 = vadd.f32 %v2893, %v3072
    %v3163 = vadd.f32 %v2894, %v3074
    %v3164 = vadd.f32 %v2895, %v3077
    %v3165 = vadd.f32 %v2896, %v3079
    %v3166 = vadd.f32 %v2897, %v3082
    %v3167 = vadd.f32 %v2898, %v3084
    %v3168 = vadd.f32 %v2899, %v3087
    %v3169 = vadd.f32 %v2900, %v3089
    %v3170 = vadd.f32 %v2901, %v3092
    %v3171 = vadd.f32 %v2902, %v3094
    %v3172 = vadd.f32 %v2903, %v3097
    %v3173 = vadd.f32 %v2904, %v3099
    %v3174 = vadd.f32 %v2905, %v3102
    %v3175 = vadd.f32 %v2906, %v3104
    %v3176 = vadd.f32 %v2907, %v3107
    %v3177 = vadd.f32 %v2908, %v3109
    %v3178 = vadd.f32 %v2909, %v3112
    %v3179 = vadd.f32 %v2910, %v3114
    %v3180 = vrot.slane %v314, 2
    %v3181 = vrot.slane %v315, 2
    %v3182 = vsel %vm1299, %v3180, %v3181
    %v3183 = vrot.slane %v316, 2
    %v3184 = vsel %vm1299, %v3181, %v3183
    %v3185 = vrot.slane %v368, 2
    %v3186 = vrot.slane %v369, 2
    %v3187 = vsel %vm1299, %v3185, %v3186
    %v3188 = vrot.slane %v370, 2
    %v3189 = vsel %vm1299, %v3186, %v3188
    %v3194 = vpack.c.bf16 %v3184, %v3182
    %v3195 = vpack.c.bf16 %v3189, %v3187
    %v3196 = vld [vmem:[%s1 + $0x10] sm:$0x3]
    %v3198 = vsel %vm88, %v3194, 0
    %v3201 = vsel %vm88, %v3195, 0
    %v3204 = vsel %vm858, %v3196, 0
    %3206 = vmatpush.bf16.msra.mxu0 0
    %3207 = vmatpush.bf16.msra.mxu0 0
    %3208 = vmatpush.bf16.msra.mxu0 0
    %3209 = vmatpush.bf16.msra.mxu0 0
    %3210 = vmatpush.bf16.msra.mxu0 0
    %3211 = vmatpush.bf16.msra.mxu0 0
    %3212 = vmatpush.bf16.msra.mxu0 0
    %3213 = vmatpush.bf16.msra.mxu0 %v3204
    %3214 = vmatmul.bf16.gmra.mxu0 %v1564
    %v3215 = vpop.f32.mrf.mxu0
    %v3216 = vadd.f32 0.0, %v3215
    %v3217 = vpop.f32.mrf.mxu0
    %v3218 = vadd.f32 0.0, %v3217
    %3219 = vmatmul.bf16.gmra.mxu0 %v1567
    %v3220 = vpop.f32.mrf.mxu0
    %v3221 = vadd.f32 0.0, %v3220
    %v3222 = vpop.f32.mrf.mxu0
    %v3223 = vadd.f32 0.0, %v3222
    %3224 = vmatmul.bf16.gmra.mxu0 %v1570
    %v3225 = vpop.f32.mrf.mxu0
    %v3226 = vadd.f32 0.0, %v3225
    %v3227 = vpop.f32.mrf.mxu0
    %v3228 = vadd.f32 0.0, %v3227
    %3229 = vmatmul.bf16.gmra.mxu0 %v1573
    %v3230 = vpop.f32.mrf.mxu0
    %v3231 = vadd.f32 0.0, %v3230
    %v3232 = vpop.f32.mrf.mxu0
    %v3233 = vadd.f32 0.0, %v3232
    %3234 = vmatmul.bf16.gmra.mxu0 %v1576
    %v3235 = vpop.f32.mrf.mxu0
    %v3236 = vadd.f32 0.0, %v3235
    %v3237 = vpop.f32.mrf.mxu0
    %v3238 = vadd.f32 0.0, %v3237
    %3239 = vmatmul.bf16.gmra.mxu0 %v1579
    %v3240 = vpop.f32.mrf.mxu0
    %v3241 = vadd.f32 0.0, %v3240
    %v3242 = vpop.f32.mrf.mxu0
    %v3243 = vadd.f32 0.0, %v3242
    %3244 = vmatmul.bf16.gmra.mxu0 %v1582
    %v3245 = vpop.f32.mrf.mxu0
    %v3246 = vadd.f32 0.0, %v3245
    %v3247 = vpop.f32.mrf.mxu0
    %v3248 = vadd.f32 0.0, %v3247
    %3249 = vmatmul.bf16.gmra.mxu0 %v1585
    %v3250 = vpop.f32.mrf.mxu0
    %v3251 = vadd.f32 0.0, %v3250
    %v3252 = vpop.f32.mrf.mxu0
    %v3253 = vadd.f32 0.0, %v3252
    %3254 = vmatmul.bf16.gmra.mxu0 %v1588
    %v3255 = vpop.f32.mrf.mxu0
    %v3256 = vadd.f32 0.0, %v3255
    %v3257 = vpop.f32.mrf.mxu0
    %v3258 = vadd.f32 0.0, %v3257
    %3259 = vmatmul.bf16.gmra.mxu0 %v1591
    %v3260 = vpop.f32.mrf.mxu0
    %v3261 = vadd.f32 0.0, %v3260
    %v3262 = vpop.f32.mrf.mxu0
    %v3263 = vadd.f32 0.0, %v3262
    %3264 = vmatmul.bf16.gmra.mxu0 %v1594
    %v3265 = vpop.f32.mrf.mxu0
    %v3266 = vadd.f32 0.0, %v3265
    %v3267 = vpop.f32.mrf.mxu0
    %v3268 = vadd.f32 0.0, %v3267
    %3269 = vmatmul.bf16.gmra.mxu0 %v1597
    %v3270 = vpop.f32.mrf.mxu0
    %v3271 = vadd.f32 0.0, %v3270
    %v3272 = vpop.f32.mrf.mxu0
    %v3273 = vadd.f32 0.0, %v3272
    %3274 = vmatmul.bf16.gmra.mxu0 %v1600
    %v3275 = vpop.f32.mrf.mxu0
    %v3276 = vadd.f32 0.0, %v3275
    %v3277 = vpop.f32.mrf.mxu0
    %v3278 = vadd.f32 0.0, %v3277
    %3279 = vmatmul.bf16.gmra.mxu0 %v1603
    %v3280 = vpop.f32.mrf.mxu0
    %v3281 = vadd.f32 0.0, %v3280
    %v3282 = vpop.f32.mrf.mxu0
    %v3283 = vadd.f32 0.0, %v3282
    %3284 = vmatmul.bf16.gmra.mxu0 %v2425
    %v3285 = vpop.f32.mrf.mxu0
    %v3286 = vadd.f32 0.0, %v3285
    %v3287 = vpop.f32.mrf.mxu0
    %v3288 = vadd.f32 0.0, %v3287
    %3289 = vmatmul.bf16.gmra.mxu0 %v3198
    %v3290 = vpop.f32.mrf.mxu0
    %v3291 = vadd.f32 0.0, %v3290
    %v3292 = vpop.f32.mrf.mxu0
    %v3293 = vadd.f32 0.0, %v3292
    %3294 = vmatmul.bf16.gmra.mxu0 %v1612
    %v3295 = vpop.f32.mrf.mxu0
    %v3296 = vadd.f32 0.0, %v3295
    %v3297 = vpop.f32.mrf.mxu0
    %v3298 = vadd.f32 0.0, %v3297
    %3299 = vmatmul.bf16.gmra.mxu0 %v1615
    %v3300 = vpop.f32.mrf.mxu0
    %v3301 = vadd.f32 0.0, %v3300
    %v3302 = vpop.f32.mrf.mxu0
    %v3303 = vadd.f32 0.0, %v3302
    %3304 = vmatmul.bf16.gmra.mxu0 %v1618
    %v3305 = vpop.f32.mrf.mxu0
    %v3306 = vadd.f32 0.0, %v3305
    %v3307 = vpop.f32.mrf.mxu0
    %v3308 = vadd.f32 0.0, %v3307
    %3309 = vmatmul.bf16.gmra.mxu0 %v1621
    %v3310 = vpop.f32.mrf.mxu0
    %v3311 = vadd.f32 0.0, %v3310
    %v3312 = vpop.f32.mrf.mxu0
    %v3313 = vadd.f32 0.0, %v3312
    %3314 = vmatmul.bf16.gmra.mxu0 %v1624
    %v3315 = vpop.f32.mrf.mxu0
    %v3316 = vadd.f32 0.0, %v3315
    %v3317 = vpop.f32.mrf.mxu0
    %v3318 = vadd.f32 0.0, %v3317
    %3319 = vmatmul.bf16.gmra.mxu0 %v1627
    %v3320 = vpop.f32.mrf.mxu0
    %v3321 = vadd.f32 0.0, %v3320
    %v3322 = vpop.f32.mrf.mxu0
    %v3323 = vadd.f32 0.0, %v3322
    %3324 = vmatmul.bf16.gmra.mxu0 %v1630
    %v3325 = vpop.f32.mrf.mxu0
    %v3326 = vadd.f32 0.0, %v3325
    %v3327 = vpop.f32.mrf.mxu0
    %v3328 = vadd.f32 0.0, %v3327
    %3329 = vmatmul.bf16.gmra.mxu0 %v1633
    %v3330 = vpop.f32.mrf.mxu0
    %v3331 = vadd.f32 0.0, %v3330
    %v3332 = vpop.f32.mrf.mxu0
    %v3333 = vadd.f32 0.0, %v3332
    %3334 = vmatmul.bf16.gmra.mxu0 %v1636
    %v3335 = vpop.f32.mrf.mxu0
    %v3336 = vadd.f32 0.0, %v3335
    %v3337 = vpop.f32.mrf.mxu0
    %v3338 = vadd.f32 0.0, %v3337
    %3339 = vmatmul.bf16.gmra.mxu0 %v1639
    %v3340 = vpop.f32.mrf.mxu0
    %v3341 = vadd.f32 0.0, %v3340
    %v3342 = vpop.f32.mrf.mxu0
    %v3343 = vadd.f32 0.0, %v3342
    %3344 = vmatmul.bf16.gmra.mxu0 %v1642
    %v3345 = vpop.f32.mrf.mxu0
    %v3346 = vadd.f32 0.0, %v3345
    %v3347 = vpop.f32.mrf.mxu0
    %v3348 = vadd.f32 0.0, %v3347
    %3349 = vmatmul.bf16.gmra.mxu0 %v1645
    %v3350 = vpop.f32.mrf.mxu0
    %v3351 = vadd.f32 0.0, %v3350
    %v3352 = vpop.f32.mrf.mxu0
    %v3353 = vadd.f32 0.0, %v3352
    %3354 = vmatmul.bf16.gmra.mxu0 %v1648
    %v3355 = vpop.f32.mrf.mxu0
    %v3356 = vadd.f32 0.0, %v3355
    %v3357 = vpop.f32.mrf.mxu0
    %v3358 = vadd.f32 0.0, %v3357
    %3359 = vmatmul.bf16.gmra.mxu0 %v1651
    %v3360 = vpop.f32.mrf.mxu0
    %v3361 = vadd.f32 0.0, %v3360
    %v3362 = vpop.f32.mrf.mxu0
    %v3363 = vadd.f32 0.0, %v3362
    %3364 = vmatmul.bf16.gmra.mxu0 %v2428
    %v3365 = vpop.f32.mrf.mxu0
    %v3366 = vadd.f32 0.0, %v3365
    %v3367 = vpop.f32.mrf.mxu0
    %v3368 = vadd.f32 0.0, %v3367
    %3369 = vmatmul.bf16.gmra.mxu0 %v3201
    %v3370 = vpop.f32.mrf.mxu0
    %v3371 = vadd.f32 0.0, %v3370
    %v3372 = vpop.f32.mrf.mxu0
    %v3373 = vadd.f32 0.0, %v3372
    %3374 = vdwg.mxu0
    %v3375 = vadd.f32 %v3116, %v3216
    %v3376 = vadd.f32 %v3117, %v3218
    %v3377 = vadd.f32 %v3118, %v3221
    %v3378 = vadd.f32 %v3119, %v3223
    %v3379 = vadd.f32 %v3120, %v3226
    %v3380 = vadd.f32 %v3121, %v3228
    %v3381 = vadd.f32 %v3122, %v3231
    %v3382 = vadd.f32 %v3123, %v3233
    %v3383 = vadd.f32 %v3124, %v3236
    %v3384 = vadd.f32 %v3125, %v3238
    %v3385 = vadd.f32 %v3126, %v3241
    %v3386 = vadd.f32 %v3127, %v3243
    %v3387 = vadd.f32 %v3128, %v3246
    %v3388 = vadd.f32 %v3129, %v3248
    %v3389 = vadd.f32 %v3130, %v3251
    %v3390 = vadd.f32 %v3131, %v3253
    %v3391 = vadd.f32 %v3132, %v3256
    %v3392 = vadd.f32 %v3133, %v3258
    %v3393 = vadd.f32 %v3134, %v3261
    %v3394 = vadd.f32 %v3135, %v3263
    %v3395 = vadd.f32 %v3136, %v3266
    %v3396 = vadd.f32 %v3137, %v3268
    %v3397 = vadd.f32 %v3138, %v3271
    %v3398 = vadd.f32 %v3139, %v3273
    %v3399 = vadd.f32 %v3140, %v3276
    %v3400 = vadd.f32 %v3141, %v3278
    %v3401 = vadd.f32 %v3142, %v3281
    %v3402 = vadd.f32 %v3143, %v3283
    %v3403 = vadd.f32 %v3144, %v3286
    %v3404 = vadd.f32 %v3145, %v3288
    %v3405 = vadd.f32 %v3146, %v3291
    %v3406 = vadd.f32 %v3147, %v3293
    %v3407 = vadd.f32 %v3148, %v3296
    %v3408 = vadd.f32 %v3149, %v3298
    %v3409 = vadd.f32 %v3150, %v3301
    %v3410 = vadd.f32 %v3151, %v3303
    %v3411 = vadd.f32 %v3152, %v3306
    %v3412 = vadd.f32 %v3153, %v3308
    %v3413 = vadd.f32 %v3154, %v3311
    %v3414 = vadd.f32 %v3155, %v3313
    %v3415 = vadd.f32 %v3156, %v3316
    %v3416 = vadd.f32 %v3157, %v3318
    %v3417 = vadd.f32 %v3158, %v3321
    %v3418 = vadd.f32 %v3159, %v3323
    %v3419 = vadd.f32 %v3160, %v3326
    %v3420 = vadd.f32 %v3161, %v3328
    %v3421 = vadd.f32 %v3162, %v3331
    %v3422 = vadd.f32 %v3163, %v3333
    %v3423 = vadd.f32 %v3164, %v3336
    %v3424 = vadd.f32 %v3165, %v3338
    %v3425 = vadd.f32 %v3166, %v3341
    %v3426 = vadd.f32 %v3167, %v3343
    %v3427 = vadd.f32 %v3168, %v3346
    %v3428 = vadd.f32 %v3169, %v3348
    %v3429 = vadd.f32 %v3170, %v3351
    %v3430 = vadd.f32 %v3171, %v3353
    %v3431 = vadd.f32 %v3172, %v3356
    %v3432 = vadd.f32 %v3173, %v3358
    %v3433 = vadd.f32 %v3174, %v3361
    %v3434 = vadd.f32 %v3175, %v3363
    %v3435 = vadd.f32 %v3176, %v3366
    %v3436 = vadd.f32 %v3177, %v3368
    %v3437 = vadd.f32 %v3178, %v3371
    %v3438 = vadd.f32 %v3179, %v3373
    %vm3439 = vcmask 64512
    %v3440 = vsel %vm3439, %v3375, 0.0
    %v3441 = vsel %vm3439, %v3376, 0.0
    %v3442 = vadd.f32 %v3440, %v3441
    %v3443 = vsel %vm3439, %v3377, 0.0
    %v3444 = vadd.f32 %v3442, %v3443
    %v3445 = vsel %vm3439, %v3378, 0.0
    %v3446 = vadd.f32 %v3444, %v3445
    %v3447 = vsel %vm3439, %v3379, 0.0
    %v3448 = vadd.f32 %v3446, %v3447
    %v3449 = vsel %vm3439, %v3380, 0.0
    %v3450 = vadd.f32 %v3448, %v3449
    %v3451 = vsel %vm3439, %v3381, 0.0
    %v3452 = vadd.f32 %v3450, %v3451
    %v3453 = vsel %vm3439, %v3382, 0.0
    %v3454 = vadd.f32 %v3452, %v3453
    %v3455 = vsel %vm3439, %v3383, 0.0
    %v3456 = vadd.f32 %v3454, %v3455
    %v3457 = vsel %vm3439, %v3384, 0.0
    %v3458 = vadd.f32 %v3456, %v3457
    %v3459 = vsel %vm3439, %v3385, 0.0
    %v3460 = vadd.f32 %v3458, %v3459
    %v3461 = vsel %vm3439, %v3386, 0.0
    %v3462 = vadd.f32 %v3460, %v3461
    %v3463 = vsel %vm3439, %v3387, 0.0
    %v3464 = vadd.f32 %v3462, %v3463
    %v3465 = vsel %vm3439, %v3388, 0.0
    %v3466 = vadd.f32 %v3464, %v3465
    %v3467 = vsel %vm3439, %v3389, 0.0
    %v3468 = vadd.f32 %v3466, %v3467
    %v3469 = vsel %vm3439, %v3390, 0.0
    %v3470 = vadd.f32 %v3468, %v3469
    %v3471 = vsel %vm3439, %v3391, 0.0
    %v3472 = vadd.f32 %v3470, %v3471
    %v3473 = vsel %vm3439, %v3392, 0.0
    %v3474 = vadd.f32 %v3472, %v3473
    %v3475 = vsel %vm3439, %v3393, 0.0
    %v3476 = vadd.f32 %v3474, %v3475
    %v3477 = vsel %vm3439, %v3394, 0.0
    %v3478 = vadd.f32 %v3476, %v3477
    %v3479 = vsel %vm3439, %v3395, 0.0
    %v3480 = vadd.f32 %v3478, %v3479
    %v3481 = vsel %vm3439, %v3396, 0.0
    %v3482 = vadd.f32 %v3480, %v3481
    %v3483 = vsel %vm3439, %v3397, 0.0
    %v3484 = vadd.f32 %v3482, %v3483
    %v3485 = vsel %vm3439, %v3398, 0.0
    %v3486 = vadd.f32 %v3484, %v3485
    %v3487 = vsel %vm3439, %v3399, 0.0
    %v3488 = vadd.f32 %v3486, %v3487
    %v3489 = vsel %vm3439, %v3400, 0.0
    %v3490 = vadd.f32 %v3488, %v3489
    %v3491 = vsel %vm3439, %v3401, 0.0
    %v3492 = vadd.f32 %v3490, %v3491
    %v3493 = vsel %vm3439, %v3402, 0.0
    %v3494 = vadd.f32 %v3492, %v3493
    %v3495 = vsel %vm3439, %v3403, 0.0
    %v3496 = vadd.f32 %v3494, %v3495
    %v3497 = vsel %vm3439, %v3404, 0.0
    %v3498 = vadd.f32 %v3496, %v3497
    %v3499 = vsel %vm3439, %v3405, 0.0
    %v3500 = vadd.f32 %v3498, %v3499
    %v3501 = vsel %vm3439, %v3406, 0.0
    %v3502 = vadd.f32 %v3500, %v3501
    %v3503 = vsel %vm3439, %v3407, 0.0
    %v3504 = vadd.f32 %v3502, %v3503
    %v3505 = vsel %vm3439, %v3408, 0.0
    %v3506 = vadd.f32 %v3504, %v3505
    %v3507 = vsel %vm3439, %v3409, 0.0
    %v3508 = vadd.f32 %v3506, %v3507
    %v3509 = vsel %vm3439, %v3410, 0.0
    %v3510 = vadd.f32 %v3508, %v3509
    %v3511 = vsel %vm3439, %v3411, 0.0
    %v3512 = vadd.f32 %v3510, %v3511
    %v3513 = vsel %vm3439, %v3412, 0.0
    %v3514 = vadd.f32 %v3512, %v3513
    %v3515 = vsel %vm3439, %v3413, 0.0
    %v3516 = vadd.f32 %v3514, %v3515
    %v3517 = vsel %vm3439, %v3414, 0.0
    %v3518 = vadd.f32 %v3516, %v3517
    %v3519 = vsel %vm3439, %v3415, 0.0
    %v3520 = vadd.f32 %v3518, %v3519
    %v3521 = vsel %vm3439, %v3416, 0.0
    %v3522 = vadd.f32 %v3520, %v3521
    %v3523 = vsel %vm3439, %v3417, 0.0
    %v3524 = vadd.f32 %v3522, %v3523
    %v3525 = vsel %vm3439, %v3418, 0.0
    %v3526 = vadd.f32 %v3524, %v3525
    %v3527 = vsel %vm3439, %v3419, 0.0
    %v3528 = vadd.f32 %v3526, %v3527
    %v3529 = vsel %vm3439, %v3420, 0.0
    %v3530 = vadd.f32 %v3528, %v3529
    %v3531 = vsel %vm3439, %v3421, 0.0
    %v3532 = vadd.f32 %v3530, %v3531
    %v3533 = vsel %vm3439, %v3422, 0.0
    %v3534 = vadd.f32 %v3532, %v3533
    %v3535 = vsel %vm3439, %v3423, 0.0
    %v3536 = vadd.f32 %v3534, %v3535
    %v3537 = vsel %vm3439, %v3424, 0.0
    %v3538 = vadd.f32 %v3536, %v3537
    %v3539 = vsel %vm3439, %v3425, 0.0
    %v3540 = vadd.f32 %v3538, %v3539
    %v3541 = vsel %vm3439, %v3426, 0.0
    %v3542 = vadd.f32 %v3540, %v3541
    %v3543 = vsel %vm3439, %v3427, 0.0
    %v3544 = vadd.f32 %v3542, %v3543
    %v3545 = vsel %vm3439, %v3428, 0.0
    %v3546 = vadd.f32 %v3544, %v3545
    %v3547 = vsel %vm3439, %v3429, 0.0
    %v3548 = vadd.f32 %v3546, %v3547
    %v3549 = vsel %vm3439, %v3430, 0.0
    %v3550 = vadd.f32 %v3548, %v3549
    %v3551 = vsel %vm3439, %v3431, 0.0
    %v3552 = vadd.f32 %v3550, %v3551
    %v3553 = vsel %vm3439, %v3432, 0.0
    %v3554 = vadd.f32 %v3552, %v3553
    %v3555 = vsel %vm3439, %v3433, 0.0
    %v3556 = vadd.f32 %v3554, %v3555
    %v3557 = vsel %vm3439, %v3434, 0.0
    %v3558 = vadd.f32 %v3556, %v3557
    %v3559 = vsel %vm3439, %v3435, 0.0
    %v3560 = vadd.f32 %v3558, %v3559
    %v3561 = vsel %vm3439, %v3436, 0.0
    %v3562 = vadd.f32 %v3560, %v3561
    %v3563 = vsel %vm3439, %v3437, 0.0
    %v3564 = vadd.f32 %v3562, %v3563
    %v3565 = vsel %vm3439, %v3438, 0.0
    %v3566 = vadd.f32 %v3564, %v3565
    %v3567 = vrot.slane %v3566, 4
    %v3568 = vadd.f32 %v3566, %v3567
    %v3569 = vrot.slane %v3568, 2
    %v3570 = vadd.f32 %v3568, %v3569
    %v3571 = vrot.slane %v3570, 1
    %v3572 = vadd.f32 %v3570, %v3571
    %vm3573 = vcmask 57344
    %3574 = vst.msk [vmem:[#allocation3] sm:$0x1] %vm3573, %v3572
    %v3575 = vmul.f32 %v3375, %v3375
    %v3576 = vmul.f32 %v3376, %v3376
    %v3577 = vmul.f32 %v3377, %v3377
    %v3578 = vmul.f32 %v3378, %v3378
    %v3579 = vmul.f32 %v3379, %v3379
    %v3580 = vmul.f32 %v3380, %v3380
    %v3581 = vmul.f32 %v3381, %v3381
    %v3582 = vmul.f32 %v3382, %v3382
    %v3583 = vmul.f32 %v3383, %v3383
    %v3584 = vmul.f32 %v3384, %v3384
    %v3585 = vmul.f32 %v3385, %v3385
    %v3586 = vmul.f32 %v3386, %v3386
    %v3587 = vmul.f32 %v3387, %v3387
    %v3588 = vmul.f32 %v3388, %v3388
    %v3589 = vmul.f32 %v3389, %v3389
    %v3590 = vmul.f32 %v3390, %v3390
    %v3591 = vmul.f32 %v3391, %v3391
    %v3592 = vmul.f32 %v3392, %v3392
    %v3593 = vmul.f32 %v3393, %v3393
    %v3594 = vmul.f32 %v3394, %v3394
    %v3595 = vmul.f32 %v3395, %v3395
    %v3596 = vmul.f32 %v3396, %v3396
    %v3597 = vmul.f32 %v3397, %v3397
    %v3598 = vmul.f32 %v3398, %v3398
    %v3599 = vmul.f32 %v3399, %v3399
    %v3600 = vmul.f32 %v3400, %v3400
    %v3601 = vmul.f32 %v3401, %v3401
    %v3602 = vmul.f32 %v3402, %v3402
    %v3603 = vmul.f32 %v3403, %v3403
    %v3604 = vmul.f32 %v3404, %v3404
    %v3605 = vmul.f32 %v3405, %v3405
    %v3606 = vmul.f32 %v3406, %v3406
    %v3607 = vmul.f32 %v3407, %v3407
    %v3608 = vmul.f32 %v3408, %v3408
    %v3609 = vmul.f32 %v3409, %v3409
    %v3610 = vmul.f32 %v3410, %v3410
    %v3611 = vmul.f32 %v3411, %v3411
    %v3612 = vmul.f32 %v3412, %v3412
    %v3613 = vmul.f32 %v3413, %v3413
    %v3614 = vmul.f32 %v3414, %v3414
    %v3615 = vmul.f32 %v3415, %v3415
    %v3616 = vmul.f32 %v3416, %v3416
    %v3617 = vmul.f32 %v3417, %v3417
    %v3618 = vmul.f32 %v3418, %v3418
    %v3619 = vmul.f32 %v3419, %v3419
    %v3620 = vmul.f32 %v3420, %v3420
    %v3621 = vmul.f32 %v3421, %v3421
    %v3622 = vmul.f32 %v3422, %v3422
    %v3623 = vmul.f32 %v3423, %v3423
    %v3624 = vmul.f32 %v3424, %v3424
    %v3625 = vmul.f32 %v3425, %v3425
    %v3626 = vmul.f32 %v3426, %v3426
    %v3627 = vmul.f32 %v3427, %v3427
    %v3628 = vmul.f32 %v3428, %v3428
    %v3629 = vmul.f32 %v3429, %v3429
    %v3630 = vmul.f32 %v3430, %v3430
    %v3631 = vmul.f32 %v3431, %v3431
    %v3632 = vmul.f32 %v3432, %v3432
    %v3633 = vmul.f32 %v3433, %v3433
    %v3634 = vmul.f32 %v3434, %v3434
    %v3635 = vmul.f32 %v3435, %v3435
    %v3636 = vmul.f32 %v3436, %v3436
    %v3637 = vmul.f32 %v3437, %v3437
    %v3638 = vmul.f32 %v3438, %v3438
    %v3639 = vsel %vm3439, %v3575, 0.0
    %v3640 = vsel %vm3439, %v3576, 0.0
    %v3641 = vadd.f32 %v3639, %v3640
    %v3642 = vsel %vm3439, %v3577, 0.0
    %v3643 = vadd.f32 %v3641, %v3642
    %v3644 = vsel %vm3439, %v3578, 0.0
    %v3645 = vadd.f32 %v3643, %v3644
    %v3646 = vsel %vm3439, %v3579, 0.0
    %v3647 = vadd.f32 %v3645, %v3646
    %v3648 = vsel %vm3439, %v3580, 0.0
    %v3649 = vadd.f32 %v3647, %v3648
    %v3650 = vsel %vm3439, %v3581, 0.0
    %v3651 = vadd.f32 %v3649, %v3650
    %v3652 = vsel %vm3439, %v3582, 0.0
    %v3653 = vadd.f32 %v3651, %v3652
    %v3654 = vsel %vm3439, %v3583, 0.0
    %v3655 = vadd.f32 %v3653, %v3654
    %v3656 = vsel %vm3439, %v3584, 0.0
    %v3657 = vadd.f32 %v3655, %v3656
    %v3658 = vsel %vm3439, %v3585, 0.0
    %v3659 = vadd.f32 %v3657, %v3658
    %v3660 = vsel %vm3439, %v3586, 0.0
    %v3661 = vadd.f32 %v3659, %v3660
    %v3662 = vsel %vm3439, %v3587, 0.0
    %v3663 = vadd.f32 %v3661, %v3662
    %v3664 = vsel %vm3439, %v3588, 0.0
    %v3665 = vadd.f32 %v3663, %v3664
    %v3666 = vsel %vm3439, %v3589, 0.0
    %v3667 = vadd.f32 %v3665, %v3666
    %v3668 = vsel %vm3439, %v3590, 0.0
    %v3669 = vadd.f32 %v3667, %v3668
    %v3670 = vsel %vm3439, %v3591, 0.0
    %v3671 = vadd.f32 %v3669, %v3670
    %v3672 = vsel %vm3439, %v3592, 0.0
    %v3673 = vadd.f32 %v3671, %v3672
    %v3674 = vsel %vm3439, %v3593, 0.0
    %v3675 = vadd.f32 %v3673, %v3674
    %v3676 = vsel %vm3439, %v3594, 0.0
    %v3677 = vadd.f32 %v3675, %v3676
    %v3678 = vsel %vm3439, %v3595, 0.0
    %v3679 = vadd.f32 %v3677, %v3678
    %v3680 = vsel %vm3439, %v3596, 0.0
    %v3681 = vadd.f32 %v3679, %v3680
    %v3682 = vsel %vm3439, %v3597, 0.0
    %v3683 = vadd.f32 %v3681, %v3682
    %v3684 = vsel %vm3439, %v3598, 0.0
    %v3685 = vadd.f32 %v3683, %v3684
    %v3686 = vsel %vm3439, %v3599, 0.0
    %v3687 = vadd.f32 %v3685, %v3686
    %v3688 = vsel %vm3439, %v3600, 0.0
    %v3689 = vadd.f32 %v3687, %v3688
    %v3690 = vsel %vm3439, %v3601, 0.0
    %v3691 = vadd.f32 %v3689, %v3690
    %v3692 = vsel %vm3439, %v3602, 0.0
    %v3693 = vadd.f32 %v3691, %v3692
    %v3694 = vsel %vm3439, %v3603, 0.0
    %v3695 = vadd.f32 %v3693, %v3694
    %v3696 = vsel %vm3439, %v3604, 0.0
    %v3697 = vadd.f32 %v3695, %v3696
    %v3698 = vsel %vm3439, %v3605, 0.0
    %v3699 = vadd.f32 %v3697, %v3698
    %v3700 = vsel %vm3439, %v3606, 0.0
    %v3701 = vadd.f32 %v3699, %v3700
    %v3702 = vsel %vm3439, %v3607, 0.0
    %v3703 = vadd.f32 %v3701, %v3702
    %v3704 = vsel %vm3439, %v3608, 0.0
    %v3705 = vadd.f32 %v3703, %v3704
    %v3706 = vsel %vm3439, %v3609, 0.0
    %v3707 = vadd.f32 %v3705, %v3706
    %v3708 = vsel %vm3439, %v3610, 0.0
    %v3709 = vadd.f32 %v3707, %v3708
    %v3710 = vsel %vm3439, %v3611, 0.0
    %v3711 = vadd.f32 %v3709, %v3710
    %v3712 = vsel %vm3439, %v3612, 0.0
    %v3713 = vadd.f32 %v3711, %v3712
    %v3714 = vsel %vm3439, %v3613, 0.0
    %v3715 = vadd.f32 %v3713, %v3714
    %v3716 = vsel %vm3439, %v3614, 0.0
    %v3717 = vadd.f32 %v3715, %v3716
    %v3718 = vsel %vm3439, %v3615, 0.0
    %v3719 = vadd.f32 %v3717, %v3718
    %v3720 = vsel %vm3439, %v3616, 0.0
    %v3721 = vadd.f32 %v3719, %v3720
    %v3722 = vsel %vm3439, %v3617, 0.0
    %v3723 = vadd.f32 %v3721, %v3722
    %v3724 = vsel %vm3439, %v3618, 0.0
    %v3725 = vadd.f32 %v3723, %v3724
    %v3726 = vsel %vm3439, %v3619, 0.0
    %v3727 = vadd.f32 %v3725, %v3726
    %v3728 = vsel %vm3439, %v3620, 0.0
    %v3729 = vadd.f32 %v3727, %v3728
    %v3730 = vsel %vm3439, %v3621, 0.0
    %v3731 = vadd.f32 %v3729, %v3730
    %v3732 = vsel %vm3439, %v3622, 0.0
    %v3733 = vadd.f32 %v3731, %v3732
    %v3734 = vsel %vm3439, %v3623, 0.0
    %v3735 = vadd.f32 %v3733, %v3734
    %v3736 = vsel %vm3439, %v3624, 0.0
    %v3737 = vadd.f32 %v3735, %v3736
    %v3738 = vsel %vm3439, %v3625, 0.0
    %v3739 = vadd.f32 %v3737, %v3738
    %v3740 = vsel %vm3439, %v3626, 0.0
    %v3741 = vadd.f32 %v3739, %v3740
    %v3742 = vsel %vm3439, %v3627, 0.0
    %v3743 = vadd.f32 %v3741, %v3742
    %v3744 = vsel %vm3439, %v3628, 0.0
    %v3745 = vadd.f32 %v3743, %v3744
    %v3746 = vsel %vm3439, %v3629, 0.0
    %v3747 = vadd.f32 %v3745, %v3746
    %v3748 = vsel %vm3439, %v3630, 0.0
    %v3749 = vadd.f32 %v3747, %v3748
    %v3750 = vsel %vm3439, %v3631, 0.0
    %v3751 = vadd.f32 %v3749, %v3750
    %v3752 = vsel %vm3439, %v3632, 0.0
    %v3753 = vadd.f32 %v3751, %v3752
    %v3754 = vsel %vm3439, %v3633, 0.0
    %v3755 = vadd.f32 %v3753, %v3754
    %v3756 = vsel %vm3439, %v3634, 0.0
    %v3757 = vadd.f32 %v3755, %v3756
    %v3758 = vsel %vm3439, %v3635, 0.0
    %v3759 = vadd.f32 %v3757, %v3758
    %v3760 = vsel %vm3439, %v3636, 0.0
    %v3761 = vadd.f32 %v3759, %v3760
    %v3762 = vsel %vm3439, %v3637, 0.0
    %v3763 = vadd.f32 %v3761, %v3762
    %v3764 = vsel %vm3439, %v3638, 0.0
    %v3765 = vadd.f32 %v3763, %v3764
    %v3766 = vrot.slane %v3765, 4
    %v3767 = vadd.f32 %v3765, %v3766
    %v3768 = vrot.slane %v3767, 2
    %v3769 = vadd.f32 %v3767, %v3768
    %v3770 = vrot.slane %v3769, 1
    %v3771 = vadd.f32 %v3769, %v3770
    %3772 = vst.msk [vmem:[#allocation5] sm:$0x1] %vm3573, %v3771
    %3773 = vst.msk [vmem:[%s3] sm:$0xff] %vm3439, %v3375
    %3774 = vst.msk [vmem:[%s3 + $0x8] sm:$0xff] %vm3439, %v3376
    %3775 = vst.msk [vmem:[%s3 + $0x10] sm:$0xff] %vm3439, %v3377
    %3776 = vst.msk [vmem:[%s3 + $0x18] sm:$0xff] %vm3439, %v3378
    %3777 = vst.msk [vmem:[%s3 + $0x20] sm:$0xff] %vm3439, %v3379
    %3778 = vst.msk [vmem:[%s3 + $0x28] sm:$0xff] %vm3439, %v3380
    %3779 = vst.msk [vmem:[%s3 + $0x30] sm:$0xff] %vm3439, %v3381
    %3780 = vst.msk [vmem:[%s3 + $0x38] sm:$0xff] %vm3439, %v3382
    %3781 = vst.msk [vmem:[%s3 + $0x40] sm:$0xff] %vm3439, %v3383
    %3782 = vst.msk [vmem:[%s3 + $0x48] sm:$0xff] %vm3439, %v3384
    %3783 = vst.msk [vmem:[%s3 + $0x50] sm:$0xff] %vm3439, %v3385
    %3784 = vst.msk [vmem:[%s3 + $0x58] sm:$0xff] %vm3439, %v3386
    %3785 = vst.msk [vmem:[%s3 + $0x60] sm:$0xff] %vm3439, %v3387
    %3786 = vst.msk [vmem:[%s3 + $0x68] sm:$0xff] %vm3439, %v3388
    %3787 = vst.msk [vmem:[%s3 + $0x70] sm:$0xff] %vm3439, %v3389
    %3788 = vst.msk [vmem:[%s3 + $0x78] sm:$0xff] %vm3439, %v3390
    %3789 = vst.msk [vmem:[%s3 + $0x80] sm:$0xff] %vm3439, %v3391
    %3790 = vst.msk [vmem:[%s3 + $0x88] sm:$0xff] %vm3439, %v3392
    %3791 = vst.msk [vmem:[%s3 + $0x90] sm:$0xff] %vm3439, %v3393
    %3792 = vst.msk [vmem:[%s3 + $0x98] sm:$0xff] %vm3439, %v3394
    %3793 = vst.msk [vmem:[%s3 + $0xa0] sm:$0xff] %vm3439, %v3395
    %3794 = vst.msk [vmem:[%s3 + $0xa8] sm:$0xff] %vm3439, %v3396
    %3795 = vst.msk [vmem:[%s3 + $0xb0] sm:$0xff] %vm3439, %v3397
    %3796 = vst.msk [vmem:[%s3 + $0xb8] sm:$0xff] %vm3439, %v3398
    %3797 = vst.msk [vmem:[%s3 + $0xc0] sm:$0xff] %vm3439, %v3399
    %3798 = vst.msk [vmem:[%s3 + $0xc8] sm:$0xff] %vm3439, %v3400
    %3799 = vst.msk [vmem:[%s3 + $0xd0] sm:$0xff] %vm3439, %v3401
    %3800 = vst.msk [vmem:[%s3 + $0xd8] sm:$0xff] %vm3439, %v3402
    %3801 = vst.msk [vmem:[%s3 + $0xe0] sm:$0xff] %vm3439, %v3403
    %3802 = vst.msk [vmem:[%s3 + $0xe8] sm:$0xff] %vm3439, %v3404
    %3803 = vst.msk [vmem:[%s3 + $0xf0] sm:$0xff] %vm3439, %v3405
    %3804 = vst.msk [vmem:[%s3 + $0xf8] sm:$0xff] %vm3439, %v3406
    %3805 = vst.msk [vmem:[%s3 + $0x100] sm:$0xff] %vm3439, %v3407
    %3806 = vst.msk [vmem:[%s3 + $0x108] sm:$0xff] %vm3439, %v3408
    %3807 = vst.msk [vmem:[%s3 + $0x110] sm:$0xff] %vm3439, %v3409
    %3808 = vst.msk [vmem:[%s3 + $0x118] sm:$0xff] %vm3439, %v3410
    %3809 = vst.msk [vmem:[%s3 + $0x120] sm:$0xff] %vm3439, %v3411
    %3810 = vst.msk [vmem:[%s3 + $0x128] sm:$0xff] %vm3439, %v3412
    %3811 = vst.msk [vmem:[%s3 + $0x130] sm:$0xff] %vm3439, %v3413
    %3812 = vst.msk [vmem:[%s3 + $0x138] sm:$0xff] %vm3439, %v3414
    %3813 = vst.msk [vmem:[%s3 + $0x140] sm:$0xff] %vm3439, %v3415
    %3814 = vst.msk [vmem:[%s3 + $0x148] sm:$0xff] %vm3439, %v3416
    %3815 = vst.msk [vmem:[%s3 + $0x150] sm:$0xff] %vm3439, %v3417
    %3816 = vst.msk [vmem:[%s3 + $0x158] sm:$0xff] %vm3439, %v3418
    %3817 = vst.msk [vmem:[%s3 + $0x160] sm:$0xff] %vm3439, %v3419
    %3818 = vst.msk [vmem:[%s3 + $0x168] sm:$0xff] %vm3439, %v3420
    %3819 = vst.msk [vmem:[%s3 + $0x170] sm:$0xff] %vm3439, %v3421
    %3820 = vst.msk [vmem:[%s3 + $0x178] sm:$0xff] %vm3439, %v3422
    %3821 = vst.msk [vmem:[%s3 + $0x180] sm:$0xff] %vm3439, %v3423
    %3822 = vst.msk [vmem:[%s3 + $0x188] sm:$0xff] %vm3439, %v3424
    %3823 = vst.msk [vmem:[%s3 + $0x190] sm:$0xff] %vm3439, %v3425
    %3824 = vst.msk [vmem:[%s3 + $0x198] sm:$0xff] %vm3439, %v3426
    %3825 = vst.msk [vmem:[%s3 + $0x1a0] sm:$0xff] %vm3439, %v3427
    %3826 = vst.msk [vmem:[%s3 + $0x1a8] sm:$0xff] %vm3439, %v3428
    %3827 = vst.msk [vmem:[%s3 + $0x1b0] sm:$0xff] %vm3439, %v3429
    %3828 = vst.msk [vmem:[%s3 + $0x1b8] sm:$0xff] %vm3439, %v3430
    %3829 = vst.msk [vmem:[%s3 + $0x1c0] sm:$0xff] %vm3439, %v3431
    %3830 = vst.msk [vmem:[%s3 + $0x1c8] sm:$0xff] %vm3439, %v3432
    %3831 = vst.msk [vmem:[%s3 + $0x1d0] sm:$0xff] %vm3439, %v3433
    %3832 = vst.msk [vmem:[%s3 + $0x1d8] sm:$0xff] %vm3439, %v3434
    %3833 = vst.msk [vmem:[%s3 + $0x1e0] sm:$0xff] %vm3439, %v3435
    %3834 = vst.msk [vmem:[%s3 + $0x1e8] sm:$0xff] %vm3439, %v3436
    %3835 = vst.msk [vmem:[%s3 + $0x1f0] sm:$0xff] %vm3439, %v3437
    %3836 = vst.msk [vmem:[%s3 + $0x1f8] sm:$0xff] %vm3439, %v3438
    %v3837 = vpack.c.bf16 %v25, %v24
    %v3838 = vpack.c.bf16 %v27, %v26
    %v3839 = vpack.c.bf16 %v29, %v28
    %v3840 = vpack.c.bf16 %v31, %v30
    %v3841 = vpack.c.bf16 %v33, %v32
    %v3842 = vpack.c.bf16 %v35, %v34
    %v3843 = vpack.c.bf16 %v37, %v36
    %v3844 = vpack.c.bf16 %v39, %v38
    %v3845 = vpack.c.bf16 %v41, %v40
    %v3846 = vpack.c.bf16 %v43, %v42
    %v3847 = vpack.c.bf16 %v45, %v44
    %v3848 = vpack.c.bf16 %v47, %v46
    %v3849 = vpack.c.bf16 %v49, %v48
    %v3850 = vpack.c.bf16 %v51, %v50
    %v3851 = vpack.c.bf16 %v53, %v52
    %v3852 = vpack.c.bf16 %v55, %v54
    %v3853 = vpack.c.bf16 %v57, %v56
    %v3854 = vpack.c.bf16 %v59, %v58
    %v3855 = vpack.c.bf16 %v61, %v60
    %v3856 = vpack.c.bf16 %v63, %v62
    %v3857 = vpack.c.bf16 %v65, %v64
    %v3858 = vpack.c.bf16 %v67, %v66
    %v3859 = vpack.c.bf16 %v69, %v68
    %v3860 = vpack.c.bf16 %v71, %v70
    %v3861 = vpack.c.bf16 %v73, %v72
    %v3862 = vpack.c.bf16 %v75, %v74
    %v3863 = vpack.c.bf16 %v77, %v76
    %v3864 = vpack.c.bf16 %v79, %v78
    %v3865 = vpack.c.bf16 %v81, %v80
    %v3866 = vpack.c.bf16 %v83, %v82
    %v3867 = vpack.c.bf16 %v85, %v84
    %v3868 = vpack.c.bf16 %v87, %v86
    %v3869 = vld [vmem:[%s2] sm:$0x3]
    %v3871 = vsel %vm88, %v3837, 0
    %v3874 = vsel %vm88, %v3838, 0
    %v3877 = vsel %vm88, %v3839, 0
    %v3880 = vsel %vm88, %v3840, 0
    %v3883 = vsel %vm88, %v3841, 0
    %v3886 = vsel %vm88, %v3842, 0
    %v3889 = vsel %vm88, %v3843, 0
    %v3892 = vsel %vm88, %v3844, 0
    %v3895 = vsel %vm88, %v3845, 0
    %v3898 = vsel %vm88, %v3846, 0
    %v3901 = vsel %vm88, %v3847, 0
    %v3904 = vsel %vm88, %v3848, 0
    %v3907 = vsel %vm88, %v3849, 0
    %v3910 = vsel %vm88, %v3850, 0
    %v3913 = vsel %vm88, %v3851, 0
    %v3916 = vsel %vm88, %v3852, 0
    %v3919 = vsel %vm88, %v3853, 0
    %v3922 = vsel %vm88, %v3854, 0
    %v3925 = vsel %vm88, %v3855, 0
    %v3928 = vsel %vm88, %v3856, 0
    %v3931 = vsel %vm88, %v3857, 0
    %v3934 = vsel %vm88, %v3858, 0
    %v3937 = vsel %vm88, %v3859, 0
    %v3940 = vsel %vm88, %v3860, 0
    %v3943 = vsel %vm88, %v3861, 0
    %v3946 = vsel %vm88, %v3862, 0
    %v3949 = vsel %vm88, %v3863, 0
    %v3952 = vsel %vm88, %v3864, 0
    %v3955 = vsel %vm88, %v3865, 0
    %v3958 = vsel %vm88, %v3866, 0
    %v3961 = vsel %vm88, %v3867, 0
    %v3964 = vsel %vm88, %v3868, 0
    %v3967 = vsel %vm858, %v3869, 0
    %3969 = vmatpush.bf16.msra.mxu0 0
    %3970 = vmatpush.bf16.msra.mxu0 0
    %3971 = vmatpush.bf16.msra.mxu0 0
    %3972 = vmatpush.bf16.msra.mxu0 0
    %3973 = vmatpush.bf16.msra.mxu0 0
    %3974 = vmatpush.bf16.msra.mxu0 0
    %3975 = vmatpush.bf16.msra.mxu0 0
    %3976 = vmatpush.bf16.msra.mxu0 %v3967
    %3977 = vmatmul.bf16.gmra.mxu0 %v3871
    %v3978 = vpop.f32.mrf.mxu0
    %v3979 = vadd.f32 0.0, %v3978
    %v3980 = vpop.f32.mrf.mxu0
    %v3981 = vadd.f32 0.0, %v3980
    %3982 = vmatmul.bf16.gmra.mxu0 %v3874
    %v3983 = vpop.f32.mrf.mxu0
    %v3984 = vadd.f32 0.0, %v3983
    %v3985 = vpop.f32.mrf.mxu0
    %v3986 = vadd.f32 0.0, %v3985
    %3987 = vmatmul.bf16.gmra.mxu0 %v3877
    %v3988 = vpop.f32.mrf.mxu0
    %v3989 = vadd.f32 0.0, %v3988
    %v3990 = vpop.f32.mrf.mxu0
    %v3991 = vadd.f32 0.0, %v3990
    %3992 = vmatmul.bf16.gmra.mxu0 %v3880
    %v3993 = vpop.f32.mrf.mxu0
    %v3994 = vadd.f32 0.0, %v3993
    %v3995 = vpop.f32.mrf.mxu0
    %v3996 = vadd.f32 0.0, %v3995
    %3997 = vmatmul.bf16.gmra.mxu0 %v3883
    %v3998 = vpop.f32.mrf.mxu0
    %v3999 = vadd.f32 0.0, %v3998
    %v4000 = vpop.f32.mrf.mxu0
    %v4001 = vadd.f32 0.0, %v4000
    %4002 = vmatmul.bf16.gmra.mxu0 %v3886
    %v4003 = vpop.f32.mrf.mxu0
    %v4004 = vadd.f32 0.0, %v4003
    %v4005 = vpop.f32.mrf.mxu0
    %v4006 = vadd.f32 0.0, %v4005
    %4007 = vmatmul.bf16.gmra.mxu0 %v3889
    %v4008 = vpop.f32.mrf.mxu0
    %v4009 = vadd.f32 0.0, %v4008
    %v4010 = vpop.f32.mrf.mxu0
    %v4011 = vadd.f32 0.0, %v4010
    %4012 = vmatmul.bf16.gmra.mxu0 %v3892
    %v4013 = vpop.f32.mrf.mxu0
    %v4014 = vadd.f32 0.0, %v4013
    %v4015 = vpop.f32.mrf.mxu0
    %v4016 = vadd.f32 0.0, %v4015
    %4017 = vmatmul.bf16.gmra.mxu0 %v3895
    %v4018 = vpop.f32.mrf.mxu0
    %v4019 = vadd.f32 0.0, %v4018
    %v4020 = vpop.f32.mrf.mxu0
    %v4021 = vadd.f32 0.0, %v4020
    %4022 = vmatmul.bf16.gmra.mxu0 %v3898
    %v4023 = vpop.f32.mrf.mxu0
    %v4024 = vadd.f32 0.0, %v4023
    %v4025 = vpop.f32.mrf.mxu0
    %v4026 = vadd.f32 0.0, %v4025
    %4027 = vmatmul.bf16.gmra.mxu0 %v3901
    %v4028 = vpop.f32.mrf.mxu0
    %v4029 = vadd.f32 0.0, %v4028
    %v4030 = vpop.f32.mrf.mxu0
    %v4031 = vadd.f32 0.0, %v4030
    %4032 = vmatmul.bf16.gmra.mxu0 %v3904
    %v4033 = vpop.f32.mrf.mxu0
    %v4034 = vadd.f32 0.0, %v4033
    %v4035 = vpop.f32.mrf.mxu0
    %v4036 = vadd.f32 0.0, %v4035
    %4037 = vmatmul.bf16.gmra.mxu0 %v3907
    %v4038 = vpop.f32.mrf.mxu0
    %v4039 = vadd.f32 0.0, %v4038
    %v4040 = vpop.f32.mrf.mxu0
    %v4041 = vadd.f32 0.0, %v4040
    %4042 = vmatmul.bf16.gmra.mxu0 %v3910
    %v4043 = vpop.f32.mrf.mxu0
    %v4044 = vadd.f32 0.0, %v4043
    %v4045 = vpop.f32.mrf.mxu0
    %v4046 = vadd.f32 0.0, %v4045
    %4047 = vmatmul.bf16.gmra.mxu0 %v3913
    %v4048 = vpop.f32.mrf.mxu0
    %v4049 = vadd.f32 0.0, %v4048
    %v4050 = vpop.f32.mrf.mxu0
    %v4051 = vadd.f32 0.0, %v4050
    %4052 = vmatmul.bf16.gmra.mxu0 %v3916
    %v4053 = vpop.f32.mrf.mxu0
    %v4054 = vadd.f32 0.0, %v4053
    %v4055 = vpop.f32.mrf.mxu0
    %v4056 = vadd.f32 0.0, %v4055
    %4057 = vmatmul.bf16.gmra.mxu0 %v3919
    %v4058 = vpop.f32.mrf.mxu0
    %v4059 = vadd.f32 0.0, %v4058
    %v4060 = vpop.f32.mrf.mxu0
    %v4061 = vadd.f32 0.0, %v4060
    %4062 = vmatmul.bf16.gmra.mxu0 %v3922
    %v4063 = vpop.f32.mrf.mxu0
    %v4064 = vadd.f32 0.0, %v4063
    %v4065 = vpop.f32.mrf.mxu0
    %v4066 = vadd.f32 0.0, %v4065
    %4067 = vmatmul.bf16.gmra.mxu0 %v3925
    %v4068 = vpop.f32.mrf.mxu0
    %v4069 = vadd.f32 0.0, %v4068
    %v4070 = vpop.f32.mrf.mxu0
    %v4071 = vadd.f32 0.0, %v4070
    %4072 = vmatmul.bf16.gmra.mxu0 %v3928
    %v4073 = vpop.f32.mrf.mxu0
    %v4074 = vadd.f32 0.0, %v4073
    %v4075 = vpop.f32.mrf.mxu0
    %v4076 = vadd.f32 0.0, %v4075
    %4077 = vmatmul.bf16.gmra.mxu0 %v3931
    %v4078 = vpop.f32.mrf.mxu0
    %v4079 = vadd.f32 0.0, %v4078
    %v4080 = vpop.f32.mrf.mxu0
    %v4081 = vadd.f32 0.0, %v4080
    %4082 = vmatmul.bf16.gmra.mxu0 %v3934
    %v4083 = vpop.f32.mrf.mxu0
    %v4084 = vadd.f32 0.0, %v4083
    %v4085 = vpop.f32.mrf.mxu0
    %v4086 = vadd.f32 0.0, %v4085
    %4087 = vmatmul.bf16.gmra.mxu0 %v3937
    %v4088 = vpop.f32.mrf.mxu0
    %v4089 = vadd.f32 0.0, %v4088
    %v4090 = vpop.f32.mrf.mxu0
    %v4091 = vadd.f32 0.0, %v4090
    %4092 = vmatmul.bf16.gmra.mxu0 %v3940
    %v4093 = vpop.f32.mrf.mxu0
    %v4094 = vadd.f32 0.0, %v4093
    %v4095 = vpop.f32.mrf.mxu0
    %v4096 = vadd.f32 0.0, %v4095
    %4097 = vmatmul.bf16.gmra.mxu0 %v3943
    %v4098 = vpop.f32.mrf.mxu0
    %v4099 = vadd.f32 0.0, %v4098
    %v4100 = vpop.f32.mrf.mxu0
    %v4101 = vadd.f32 0.0, %v4100
    %4102 = vmatmul.bf16.gmra.mxu0 %v3946
    %v4103 = vpop.f32.mrf.mxu0
    %v4104 = vadd.f32 0.0, %v4103
    %v4105 = vpop.f32.mrf.mxu0
    %v4106 = vadd.f32 0.0, %v4105
    %4107 = vmatmul.bf16.gmra.mxu0 %v3949
    %v4108 = vpop.f32.mrf.mxu0
    %v4109 = vadd.f32 0.0, %v4108
    %v4110 = vpop.f32.mrf.mxu0
    %v4111 = vadd.f32 0.0, %v4110
    %4112 = vmatmul.bf16.gmra.mxu0 %v3952
    %v4113 = vpop.f32.mrf.mxu0
    %v4114 = vadd.f32 0.0, %v4113
    %v4115 = vpop.f32.mrf.mxu0
    %v4116 = vadd.f32 0.0, %v4115
    %4117 = vmatmul.bf16.gmra.mxu0 %v3955
    %v4118 = vpop.f32.mrf.mxu0
    %v4119 = vadd.f32 0.0, %v4118
    %v4120 = vpop.f32.mrf.mxu0
    %v4121 = vadd.f32 0.0, %v4120
    %4122 = vmatmul.bf16.gmra.mxu0 %v3958
    %v4123 = vpop.f32.mrf.mxu0
    %v4124 = vadd.f32 0.0, %v4123
    %v4125 = vpop.f32.mrf.mxu0
    %v4126 = vadd.f32 0.0, %v4125
    %4127 = vmatmul.bf16.gmra.mxu0 %v3961
    %v4128 = vpop.f32.mrf.mxu0
    %v4129 = vadd.f32 0.0, %v4128
    %v4130 = vpop.f32.mrf.mxu0
    %v4131 = vadd.f32 0.0, %v4130
    %4132 = vmatmul.bf16.gmra.mxu0 %v3964
    %v4133 = vpop.f32.mrf.mxu0
    %v4134 = vadd.f32 0.0, %v4133
    %v4135 = vpop.f32.mrf.mxu0
    %v4136 = vadd.f32 0.0, %v4135
    %4137 = vdwg.mxu0
    %v4138 = vsel %vm3439, %v3979, 0.0
    %v4139 = vsel %vm3439, %v3981, 0.0
    %v4140 = vadd.f32 %v4138, %v4139
    %v4141 = vsel %vm3439, %v3984, 0.0
    %v4142 = vadd.f32 %v4140, %v4141
    %v4143 = vsel %vm3439, %v3986, 0.0
    %v4144 = vadd.f32 %v4142, %v4143
    %v4145 = vsel %vm3439, %v3989, 0.0
    %v4146 = vadd.f32 %v4144, %v4145
    %v4147 = vsel %vm3439, %v3991, 0.0
    %v4148 = vadd.f32 %v4146, %v4147
    %v4149 = vsel %vm3439, %v3994, 0.0
    %v4150 = vadd.f32 %v4148, %v4149
    %v4151 = vsel %vm3439, %v3996, 0.0
    %v4152 = vadd.f32 %v4150, %v4151
    %v4153 = vsel %vm3439, %v3999, 0.0
    %v4154 = vadd.f32 %v4152, %v4153
    %v4155 = vsel %vm3439, %v4001, 0.0
    %v4156 = vadd.f32 %v4154, %v4155
    %v4157 = vsel %vm3439, %v4004, 0.0
    %v4158 = vadd.f32 %v4156, %v4157
    %v4159 = vsel %vm3439, %v4006, 0.0
    %v4160 = vadd.f32 %v4158, %v4159
    %v4161 = vsel %vm3439, %v4009, 0.0
    %v4162 = vadd.f32 %v4160, %v4161
    %v4163 = vsel %vm3439, %v4011, 0.0
    %v4164 = vadd.f32 %v4162, %v4163
    %v4165 = vsel %vm3439, %v4014, 0.0
    %v4166 = vadd.f32 %v4164, %v4165
    %v4167 = vsel %vm3439, %v4016, 0.0
    %v4168 = vadd.f32 %v4166, %v4167
    %v4169 = vsel %vm3439, %v4019, 0.0
    %v4170 = vadd.f32 %v4168, %v4169
    %v4171 = vsel %vm3439, %v4021, 0.0
    %v4172 = vadd.f32 %v4170, %v4171
    %v4173 = vsel %vm3439, %v4024, 0.0
    %v4174 = vadd.f32 %v4172, %v4173
    %v4175 = vsel %vm3439, %v4026, 0.0
    %v4176 = vadd.f32 %v4174, %v4175
    %v4177 = vsel %vm3439, %v4029, 0.0
    %v4178 = vadd.f32 %v4176, %v4177
    %v4179 = vsel %vm3439, %v4031, 0.0
    %v4180 = vadd.f32 %v4178, %v4179
    %v4181 = vsel %vm3439, %v4034, 0.0
    %v4182 = vadd.f32 %v4180, %v4181
    %v4183 = vsel %vm3439, %v4036, 0.0
    %v4184 = vadd.f32 %v4182, %v4183
    %v4185 = vsel %vm3439, %v4039, 0.0
    %v4186 = vadd.f32 %v4184, %v4185
    %v4187 = vsel %vm3439, %v4041, 0.0
    %v4188 = vadd.f32 %v4186, %v4187
    %v4189 = vsel %vm3439, %v4044, 0.0
    %v4190 = vadd.f32 %v4188, %v4189
    %v4191 = vsel %vm3439, %v4046, 0.0
    %v4192 = vadd.f32 %v4190, %v4191
    %v4193 = vsel %vm3439, %v4049, 0.0
    %v4194 = vadd.f32 %v4192, %v4193
    %v4195 = vsel %vm3439, %v4051, 0.0
    %v4196 = vadd.f32 %v4194, %v4195
    %v4197 = vsel %vm3439, %v4054, 0.0
    %v4198 = vadd.f32 %v4196, %v4197
    %v4199 = vsel %vm3439, %v4056, 0.0
    %v4200 = vadd.f32 %v4198, %v4199
    %v4201 = vsel %vm3439, %v4059, 0.0
    %v4202 = vadd.f32 %v4200, %v4201
    %v4203 = vsel %vm3439, %v4061, 0.0
    %v4204 = vadd.f32 %v4202, %v4203
    %v4205 = vsel %vm3439, %v4064, 0.0
    %v4206 = vadd.f32 %v4204, %v4205
    %v4207 = vsel %vm3439, %v4066, 0.0
    %v4208 = vadd.f32 %v4206, %v4207
    %v4209 = vsel %vm3439, %v4069, 0.0
    %v4210 = vadd.f32 %v4208, %v4209
    %v4211 = vsel %vm3439, %v4071, 0.0
    %v4212 = vadd.f32 %v4210, %v4211
    %v4213 = vsel %vm3439, %v4074, 0.0
    %v4214 = vadd.f32 %v4212, %v4213
    %v4215 = vsel %vm3439, %v4076, 0.0
    %v4216 = vadd.f32 %v4214, %v4215
    %v4217 = vsel %vm3439, %v4079, 0.0
    %v4218 = vadd.f32 %v4216, %v4217
    %v4219 = vsel %vm3439, %v4081, 0.0
    %v4220 = vadd.f32 %v4218, %v4219
    %v4221 = vsel %vm3439, %v4084, 0.0
    %v4222 = vadd.f32 %v4220, %v4221
    %v4223 = vsel %vm3439, %v4086, 0.0
    %v4224 = vadd.f32 %v4222, %v4223
    %v4225 = vsel %vm3439, %v4089, 0.0
    %v4226 = vadd.f32 %v4224, %v4225
    %v4227 = vsel %vm3439, %v4091, 0.0
    %v4228 = vadd.f32 %v4226, %v4227
    %v4229 = vsel %vm3439, %v4094, 0.0
    %v4230 = vadd.f32 %v4228, %v4229
    %v4231 = vsel %vm3439, %v4096, 0.0
    %v4232 = vadd.f32 %v4230, %v4231
    %v4233 = vsel %vm3439, %v4099, 0.0
    %v4234 = vadd.f32 %v4232, %v4233
    %v4235 = vsel %vm3439, %v4101, 0.0
    %v4236 = vadd.f32 %v4234, %v4235
    %v4237 = vsel %vm3439, %v4104, 0.0
    %v4238 = vadd.f32 %v4236, %v4237
    %v4239 = vsel %vm3439, %v4106, 0.0
    %v4240 = vadd.f32 %v4238, %v4239
    %v4241 = vsel %vm3439, %v4109, 0.0
    %v4242 = vadd.f32 %v4240, %v4241
    %v4243 = vsel %vm3439, %v4111, 0.0
    %v4244 = vadd.f32 %v4242, %v4243
    %v4245 = vsel %vm3439, %v4114, 0.0
    %v4246 = vadd.f32 %v4244, %v4245
    %v4247 = vsel %vm3439, %v4116, 0.0
    %v4248 = vadd.f32 %v4246, %v4247
    %v4249 = vsel %vm3439, %v4119, 0.0
    %v4250 = vadd.f32 %v4248, %v4249
    %v4251 = vsel %vm3439, %v4121, 0.0
    %v4252 = vadd.f32 %v4250, %v4251
    %v4253 = vsel %vm3439, %v4124, 0.0
    %v4254 = vadd.f32 %v4252, %v4253
    %v4255 = vsel %vm3439, %v4126, 0.0
    %v4256 = vadd.f32 %v4254, %v4255
    %v4257 = vsel %vm3439, %v4129, 0.0
    %v4258 = vadd.f32 %v4256, %v4257
    %v4259 = vsel %vm3439, %v4131, 0.0
    %v4260 = vadd.f32 %v4258, %v4259
    %v4261 = vsel %vm3439, %v4134, 0.0
    %v4262 = vadd.f32 %v4260, %v4261
    %v4263 = vsel %vm3439, %v4136, 0.0
    %v4264 = vadd.f32 %v4262, %v4263
    %v4265 = vrot.slane %v4264, 4
    %v4266 = vadd.f32 %v4264, %v4265
    %v4267 = vrot.slane %v4266, 2
    %v4268 = vadd.f32 %v4266, %v4267
    %v4269 = vrot.slane %v4268, 1
    %v4270 = vadd.f32 %v4268, %v4269
    %4271 = vst.msk [vmem:[#allocation7] sm:$0x1] %vm3573, %v4270
    %v4272 = vmul.f32 %v3979, %v3979
    %v4273 = vmul.f32 %v3981, %v3981
    %v4274 = vmul.f32 %v3984, %v3984
    %v4275 = vmul.f32 %v3986, %v3986
    %v4276 = vmul.f32 %v3989, %v3989
    %v4277 = vmul.f32 %v3991, %v3991
    %v4278 = vmul.f32 %v3994, %v3994
    %v4279 = vmul.f32 %v3996, %v3996
    %v4280 = vmul.f32 %v3999, %v3999
    %v4281 = vmul.f32 %v4001, %v4001
    %v4282 = vmul.f32 %v4004, %v4004
    %v4283 = vmul.f32 %v4006, %v4006
    %v4284 = vmul.f32 %v4009, %v4009
    %v4285 = vmul.f32 %v4011, %v4011
    %v4286 = vmul.f32 %v4014, %v4014
    %v4287 = vmul.f32 %v4016, %v4016
    %v4288 = vmul.f32 %v4019, %v4019
    %v4289 = vmul.f32 %v4021, %v4021
    %v4290 = vmul.f32 %v4024, %v4024
    %v4291 = vmul.f32 %v4026, %v4026
    %v4292 = vmul.f32 %v4029, %v4029
    %v4293 = vmul.f32 %v4031, %v4031
    %v4294 = vmul.f32 %v4034, %v4034
    %v4295 = vmul.f32 %v4036, %v4036
    %v4296 = vmul.f32 %v4039, %v4039
    %v4297 = vmul.f32 %v4041, %v4041
    %v4298 = vmul.f32 %v4044, %v4044
    %v4299 = vmul.f32 %v4046, %v4046
    %v4300 = vmul.f32 %v4049, %v4049
    %v4301 = vmul.f32 %v4051, %v4051
    %v4302 = vmul.f32 %v4054, %v4054
    %v4303 = vmul.f32 %v4056, %v4056
    %v4304 = vmul.f32 %v4059, %v4059
    %v4305 = vmul.f32 %v4061, %v4061
    %v4306 = vmul.f32 %v4064, %v4064
    %v4307 = vmul.f32 %v4066, %v4066
    %v4308 = vmul.f32 %v4069, %v4069
    %v4309 = vmul.f32 %v4071, %v4071
    %v4310 = vmul.f32 %v4074, %v4074
    %v4311 = vmul.f32 %v4076, %v4076
    %v4312 = vmul.f32 %v4079, %v4079
    %v4313 = vmul.f32 %v4081, %v4081
    %v4314 = vmul.f32 %v4084, %v4084
    %v4315 = vmul.f32 %v4086, %v4086
    %v4316 = vmul.f32 %v4089, %v4089
    %v4317 = vmul.f32 %v4091, %v4091
    %v4318 = vmul.f32 %v4094, %v4094
    %v4319 = vmul.f32 %v4096, %v4096
    %v4320 = vmul.f32 %v4099, %v4099
    %v4321 = vmul.f32 %v4101, %v4101
    %v4322 = vmul.f32 %v4104, %v4104
    %v4323 = vmul.f32 %v4106, %v4106
    %v4324 = vmul.f32 %v4109, %v4109
    %v4325 = vmul.f32 %v4111, %v4111
    %v4326 = vmul.f32 %v4114, %v4114
    %v4327 = vmul.f32 %v4116, %v4116
    %v4328 = vmul.f32 %v4119, %v4119
    %v4329 = vmul.f32 %v4121, %v4121
    %v4330 = vmul.f32 %v4124, %v4124
    %v4331 = vmul.f32 %v4126, %v4126
    %v4332 = vmul.f32 %v4129, %v4129
    %v4333 = vmul.f32 %v4131, %v4131
    %v4334 = vmul.f32 %v4134, %v4134
    %v4335 = vmul.f32 %v4136, %v4136
    %v4336 = vsel %vm3439, %v4272, 0.0
    %v4337 = vsel %vm3439, %v4273, 0.0
    %v4338 = vadd.f32 %v4336, %v4337
    %v4339 = vsel %vm3439, %v4274, 0.0
    %v4340 = vadd.f32 %v4338, %v4339
    %v4341 = vsel %vm3439, %v4275, 0.0
    %v4342 = vadd.f32 %v4340, %v4341
    %v4343 = vsel %vm3439, %v4276, 0.0
    %v4344 = vadd.f32 %v4342, %v4343
    %v4345 = vsel %vm3439, %v4277, 0.0
    %v4346 = vadd.f32 %v4344, %v4345
    %v4347 = vsel %vm3439, %v4278, 0.0
    %v4348 = vadd.f32 %v4346, %v4347
    %v4349 = vsel %vm3439, %v4279, 0.0
    %v4350 = vadd.f32 %v4348, %v4349
    %v4351 = vsel %vm3439, %v4280, 0.0
    %v4352 = vadd.f32 %v4350, %v4351
    %v4353 = vsel %vm3439, %v4281, 0.0
    %v4354 = vadd.f32 %v4352, %v4353
    %v4355 = vsel %vm3439, %v4282, 0.0
    %v4356 = vadd.f32 %v4354, %v4355
    %v4357 = vsel %vm3439, %v4283, 0.0
    %v4358 = vadd.f32 %v4356, %v4357
    %v4359 = vsel %vm3439, %v4284, 0.0
    %v4360 = vadd.f32 %v4358, %v4359
    %v4361 = vsel %vm3439, %v4285, 0.0
    %v4362 = vadd.f32 %v4360, %v4361
    %v4363 = vsel %vm3439, %v4286, 0.0
    %v4364 = vadd.f32 %v4362, %v4363
    %v4365 = vsel %vm3439, %v4287, 0.0
    %v4366 = vadd.f32 %v4364, %v4365
    %v4367 = vsel %vm3439, %v4288, 0.0
    %v4368 = vadd.f32 %v4366, %v4367
    %v4369 = vsel %vm3439, %v4289, 0.0
    %v4370 = vadd.f32 %v4368, %v4369
    %v4371 = vsel %vm3439, %v4290, 0.0
    %v4372 = vadd.f32 %v4370, %v4371
    %v4373 = vsel %vm3439, %v4291, 0.0
    %v4374 = vadd.f32 %v4372, %v4373
    %v4375 = vsel %vm3439, %v4292, 0.0
    %v4376 = vadd.f32 %v4374, %v4375
    %v4377 = vsel %vm3439, %v4293, 0.0
    %v4378 = vadd.f32 %v4376, %v4377
    %v4379 = vsel %vm3439, %v4294, 0.0
    %v4380 = vadd.f32 %v4378, %v4379
    %v4381 = vsel %vm3439, %v4295, 0.0
    %v4382 = vadd.f32 %v4380, %v4381
    %v4383 = vsel %vm3439, %v4296, 0.0
    %v4384 = vadd.f32 %v4382, %v4383
    %v4385 = vsel %vm3439, %v4297, 0.0
    %v4386 = vadd.f32 %v4384, %v4385
    %v4387 = vsel %vm3439, %v4298, 0.0
    %v4388 = vadd.f32 %v4386, %v4387
    %v4389 = vsel %vm3439, %v4299, 0.0
    %v4390 = vadd.f32 %v4388, %v4389
    %v4391 = vsel %vm3439, %v4300, 0.0
    %v4392 = vadd.f32 %v4390, %v4391
    %v4393 = vsel %vm3439, %v4301, 0.0
    %v4394 = vadd.f32 %v4392, %v4393
    %v4395 = vsel %vm3439, %v4302, 0.0
    %v4396 = vadd.f32 %v4394, %v4395
    %v4397 = vsel %vm3439, %v4303, 0.0
    %v4398 = vadd.f32 %v4396, %v4397
    %v4399 = vsel %vm3439, %v4304, 0.0
    %v4400 = vadd.f32 %v4398, %v4399
    %v4401 = vsel %vm3439, %v4305, 0.0
    %v4402 = vadd.f32 %v4400, %v4401
    %v4403 = vsel %vm3439, %v4306, 0.0
    %v4404 = vadd.f32 %v4402, %v4403
    %v4405 = vsel %vm3439, %v4307, 0.0
    %v4406 = vadd.f32 %v4404, %v4405
    %v4407 = vsel %vm3439, %v4308, 0.0
    %v4408 = vadd.f32 %v4406, %v4407
    %v4409 = vsel %vm3439, %v4309, 0.0
    %v4410 = vadd.f32 %v4408, %v4409
    %v4411 = vsel %vm3439, %v4310, 0.0
    %v4412 = vadd.f32 %v4410, %v4411
    %v4413 = vsel %vm3439, %v4311, 0.0
    %v4414 = vadd.f32 %v4412, %v4413
    %v4415 = vsel %vm3439, %v4312, 0.0
    %v4416 = vadd.f32 %v4414, %v4415
    %v4417 = vsel %vm3439, %v4313, 0.0
    %v4418 = vadd.f32 %v4416, %v4417
    %v4419 = vsel %vm3439, %v4314, 0.0
    %v4420 = vadd.f32 %v4418, %v4419
    %v4421 = vsel %vm3439, %v4315, 0.0
    %v4422 = vadd.f32 %v4420, %v4421
    %v4423 = vsel %vm3439, %v4316, 0.0
    %v4424 = vadd.f32 %v4422, %v4423
    %v4425 = vsel %vm3439, %v4317, 0.0
    %v4426 = vadd.f32 %v4424, %v4425
    %v4427 = vsel %vm3439, %v4318, 0.0
    %v4428 = vadd.f32 %v4426, %v4427
    %v4429 = vsel %vm3439, %v4319, 0.0
    %v4430 = vadd.f32 %v4428, %v4429
    %v4431 = vsel %vm3439, %v4320, 0.0
    %v4432 = vadd.f32 %v4430, %v4431
    %v4433 = vsel %vm3439, %v4321, 0.0
    %v4434 = vadd.f32 %v4432, %v4433
    %v4435 = vsel %vm3439, %v4322, 0.0
    %v4436 = vadd.f32 %v4434, %v4435
    %v4437 = vsel %vm3439, %v4323, 0.0
    %v4438 = vadd.f32 %v4436, %v4437
    %v4439 = vsel %vm3439, %v4324, 0.0
    %v4440 = vadd.f32 %v4438, %v4439
    %v4441 = vsel %vm3439, %v4325, 0.0
    %v4442 = vadd.f32 %v4440, %v4441
    %v4443 = vsel %vm3439, %v4326, 0.0
    %v4444 = vadd.f32 %v4442, %v4443
    %v4445 = vsel %vm3439, %v4327, 0.0
    %v4446 = vadd.f32 %v4444, %v4445
    %v4447 = vsel %vm3439, %v4328, 0.0
    %v4448 = vadd.f32 %v4446, %v4447
    %v4449 = vsel %vm3439, %v4329, 0.0
    %v4450 = vadd.f32 %v4448, %v4449
    %v4451 = vsel %vm3439, %v4330, 0.0
    %v4452 = vadd.f32 %v4450, %v4451
    %v4453 = vsel %vm3439, %v4331, 0.0
    %v4454 = vadd.f32 %v4452, %v4453
    %v4455 = vsel %vm3439, %v4332, 0.0
    %v4456 = vadd.f32 %v4454, %v4455
    %v4457 = vsel %vm3439, %v4333, 0.0
    %v4458 = vadd.f32 %v4456, %v4457
    %v4459 = vsel %vm3439, %v4334, 0.0
    %v4460 = vadd.f32 %v4458, %v4459
    %v4461 = vsel %vm3439, %v4335, 0.0
    %v4462 = vadd.f32 %v4460, %v4461
    %v4463 = vrot.slane %v4462, 4
    %v4464 = vadd.f32 %v4462, %v4463
    %v4465 = vrot.slane %v4464, 2
    %v4466 = vadd.f32 %v4464, %v4465
    %v4467 = vrot.slane %v4466, 1
    %v4468 = vadd.f32 %v4466, %v4467
    %4469 = vst.msk [vmem:[#allocation8] sm:$0x1] %vm3573, %v4468
    %4470 = vst.msk [vmem:[%s6] sm:$0xff] %vm3439, %v3979
    %4471 = vst.msk [vmem:[%s6 + $0x8] sm:$0xff] %vm3439, %v3981
    %4472 = vst.msk [vmem:[%s6 + $0x10] sm:$0xff] %vm3439, %v3984
    %4473 = vst.msk [vmem:[%s6 + $0x18] sm:$0xff] %vm3439, %v3986
    %4474 = vst.msk [vmem:[%s6 + $0x20] sm:$0xff] %vm3439, %v3989
    %4475 = vst.msk [vmem:[%s6 + $0x28] sm:$0xff] %vm3439, %v3991
    %4476 = vst.msk [vmem:[%s6 + $0x30] sm:$0xff] %vm3439, %v3994
    %4477 = vst.msk [vmem:[%s6 + $0x38] sm:$0xff] %vm3439, %v3996
    %4478 = vst.msk [vmem:[%s6 + $0x40] sm:$0xff] %vm3439, %v3999
    %4479 = vst.msk [vmem:[%s6 + $0x48] sm:$0xff] %vm3439, %v4001
    %4480 = vst.msk [vmem:[%s6 + $0x50] sm:$0xff] %vm3439, %v4004
    %4481 = vst.msk [vmem:[%s6 + $0x58] sm:$0xff] %vm3439, %v4006
    %4482 = vst.msk [vmem:[%s6 + $0x60] sm:$0xff] %vm3439, %v4009
    %4483 = vst.msk [vmem:[%s6 + $0x68] sm:$0xff] %vm3439, %v4011
    %4484 = vst.msk [vmem:[%s6 + $0x70] sm:$0xff] %vm3439, %v4014
    %4485 = vst.msk [vmem:[%s6 + $0x78] sm:$0xff] %vm3439, %v4016
    %4486 = vst.msk [vmem:[%s6 + $0x80] sm:$0xff] %vm3439, %v4019
    %4487 = vst.msk [vmem:[%s6 + $0x88] sm:$0xff] %vm3439, %v4021
    %4488 = vst.msk [vmem:[%s6 + $0x90] sm:$0xff] %vm3439, %v4024
    %4489 = vst.msk [vmem:[%s6 + $0x98] sm:$0xff] %vm3439, %v4026
    %4490 = vst.msk [vmem:[%s6 + $0xa0] sm:$0xff] %vm3439, %v4029
    %4491 = vst.msk [vmem:[%s6 + $0xa8] sm:$0xff] %vm3439, %v4031
    %4492 = vst.msk [vmem:[%s6 + $0xb0] sm:$0xff] %vm3439, %v4034
    %4493 = vst.msk [vmem:[%s6 + $0xb8] sm:$0xff] %vm3439, %v4036
    %4494 = vst.msk [vmem:[%s6 + $0xc0] sm:$0xff] %vm3439, %v4039
    %4495 = vst.msk [vmem:[%s6 + $0xc8] sm:$0xff] %vm3439, %v4041
    %4496 = vst.msk [vmem:[%s6 + $0xd0] sm:$0xff] %vm3439, %v4044
    %4497 = vst.msk [vmem:[%s6 + $0xd8] sm:$0xff] %vm3439, %v4046
    %4498 = vst.msk [vmem:[%s6 + $0xe0] sm:$0xff] %vm3439, %v4049
    %4499 = vst.msk [vmem:[%s6 + $0xe8] sm:$0xff] %vm3439, %v4051
    %4500 = vst.msk [vmem:[%s6 + $0xf0] sm:$0xff] %vm3439, %v4054
    %4501 = vst.msk [vmem:[%s6 + $0xf8] sm:$0xff] %vm3439, %v4056
    %4502 = vst.msk [vmem:[%s6 + $0x100] sm:$0xff] %vm3439, %v4059
    %4503 = vst.msk [vmem:[%s6 + $0x108] sm:$0xff] %vm3439, %v4061
    %4504 = vst.msk [vmem:[%s6 + $0x110] sm:$0xff] %vm3439, %v4064
    %4505 = vst.msk [vmem:[%s6 + $0x118] sm:$0xff] %vm3439, %v4066
    %4506 = vst.msk [vmem:[%s6 + $0x120] sm:$0xff] %vm3439, %v4069
    %4507 = vst.msk [vmem:[%s6 + $0x128] sm:$0xff] %vm3439, %v4071
    %4508 = vst.msk [vmem:[%s6 + $0x130] sm:$0xff] %vm3439, %v4074
    %4509 = vst.msk [vmem:[%s6 + $0x138] sm:$0xff] %vm3439, %v4076
    %4510 = vst.msk [vmem:[%s6 + $0x140] sm:$0xff] %vm3439, %v4079
    %4511 = vst.msk [vmem:[%s6 + $0x148] sm:$0xff] %vm3439, %v4081
    %4512 = vst.msk [vmem:[%s6 + $0x150] sm:$0xff] %vm3439, %v4084
    %4513 = vst.msk [vmem:[%s6 + $0x158] sm:$0xff] %vm3439, %v4086
    %4514 = vst.msk [vmem:[%s6 + $0x160] sm:$0xff] %vm3439, %v4089
    %4515 = vst.msk [vmem:[%s6 + $0x168] sm:$0xff] %vm3439, %v4091
    %4516 = vst.msk [vmem:[%s6 + $0x170] sm:$0xff] %vm3439, %v4094
    %4517 = vst.msk [vmem:[%s6 + $0x178] sm:$0xff] %vm3439, %v4096
    %4518 = vst.msk [vmem:[%s6 + $0x180] sm:$0xff] %vm3439, %v4099
    %4519 = vst.msk [vmem:[%s6 + $0x188] sm:$0xff] %vm3439, %v4101
    %4520 = vst.msk [vmem:[%s6 + $0x190] sm:$0xff] %vm3439, %v4104
    %4521 = vst.msk [vmem:[%s6 + $0x198] sm:$0xff] %vm3439, %v4106
    %4522 = vst.msk [vmem:[%s6 + $0x1a0] sm:$0xff] %vm3439, %v4109
    %4523 = vst.msk [vmem:[%s6 + $0x1a8] sm:$0xff] %vm3439, %v4111
    %4524 = vst.msk [vmem:[%s6 + $0x1b0] sm:$0xff] %vm3439, %v4114
    %4525 = vst.msk [vmem:[%s6 + $0x1b8] sm:$0xff] %vm3439, %v4116
    %4526 = vst.msk [vmem:[%s6 + $0x1c0] sm:$0xff] %vm3439, %v4119
    %4527 = vst.msk [vmem:[%s6 + $0x1c8] sm:$0xff] %vm3439, %v4121
    %4528 = vst.msk [vmem:[%s6 + $0x1d0] sm:$0xff] %vm3439, %v4124
    %4529 = vst.msk [vmem:[%s6 + $0x1d8] sm:$0xff] %vm3439, %v4126
    %4530 = vst.msk [vmem:[%s6 + $0x1e0] sm:$0xff] %vm3439, %v4129
    %4531 = vst.msk [vmem:[%s6 + $0x1e8] sm:$0xff] %vm3439, %v4131
    %4532 = vst.msk [vmem:[%s6 + $0x1f0] sm:$0xff] %vm3439, %v4134
    %4533 = vst.msk [vmem:[%s6 + $0x1f8] sm:$0xff] %vm3439, %v4136
    // Predicated region
    $region14: #{tpu_custom_call.1} parent=1 // pred_check
      _
    $region15: #{tpu_custom_call.1} parent=1 // pred_check_branch
      %4535 = sbr.rel (0) target = $region17
    $region16: #{tpu_custom_call.1} parent=1 // pred_region
      _
    $region17: #{tpu_custom_call.1} parent=1 // pred_fallthru
      _
    // Predicated region
    $region18: #{tpu_custom_call.1} parent=1 // pred_check
      _
    $region19: #{tpu_custom_call.1} parent=1 // pred_check_branch
      %4537 = sbr.rel (0) target = $region21
    $region20: #{tpu_custom_call.1} parent=1 // pred_region
      %4539 = vsyncadd [#allocation4], 0
      %s4541 = sshll.u32 [#allocation3], 4
      %s4542 = int_to_ptr.vmem [resolvable:$true] %s4541
      %s4543 = sshll.u32 %s4, 4
      %s4544 = int_to_ptr.hbm [resolvable:$true] %s4543
      %4546 = dma.vmem_to_hbm [thread:$0]  %s4542, 16, %s4544, [#allocation4]
    $region21: #{tpu_custom_call.1} parent=1 // pred_fallthru
      _
    // Predicated region
    $region22: #{tpu_custom_call.1} parent=1 // pred_check
      _
    $region23: #{tpu_custom_call.1} parent=1 // pred_check_branch
      %4548 = sbr.rel (0) target = $region25
    $region24: #{tpu_custom_call.1} parent=1 // pred_region
      %4550 = vsyncadd [#allocation6], 0
      %s4552 = sshll.u32 [#allocation5], 4
      %s4553 = int_to_ptr.vmem [resolvable:$true] %s4552
      %s4554 = sshll.u32 %s5, 4
      %s4555 = int_to_ptr.hbm [resolvable:$true] %s4554
      %4557 = dma.vmem_to_hbm [thread:$0]  %s4553, 16, %s4555, [#allocation6]
    $region25: #{tpu_custom_call.1} parent=1 // pred_fallthru
      _
    // Predicated region
    $region26: #{tpu_custom_call.1} parent=1 // pred_check
      _
    $region27: #{tpu_custom_call.1} parent=1 // pred_check_branch
      %4559 = sbr.rel (0) target = $region29
    $region28: #{tpu_custom_call.1} parent=1 // pred_region
      _
    $region29: #{tpu_custom_call.1} parent=1 // pred_fallthru
      _
    // Predicated region
    $region30: #{tpu_custom_call.1} parent=1 // pred_check
      _
    $region31: #{tpu_custom_call.1} parent=1 // pred_check_branch
      %4561 = sbr.rel (0) target = $region33
    $region32: #{tpu_custom_call.1} parent=1 // pred_region
      %4563 = vsyncadd [#allocation6], 0
      %s4565 = sshll.u32 [#allocation7], 4
      %s4566 = int_to_ptr.vmem [resolvable:$true] %s4565
      %s4567 = sshll.u32 %s7, 4
      %s4568 = int_to_ptr.hbm [resolvable:$true] %s4567
      %4570 = dma.vmem_to_hbm [thread:$0]  %s4566, 16, %s4568, [#allocation6]
    $region33: #{tpu_custom_call.1} parent=1 // pred_fallthru
      _
    // Predicated region
    $region34: #{tpu_custom_call.1} parent=1 // pred_check
      _
    $region35: #{tpu_custom_call.1} parent=1 // pred_check_branch
      %4572 = sbr.rel (0) target = $region37
    $region36: #{tpu_custom_call.1} parent=1 // pred_region
      %4574 = vsyncadd [#allocation9], 0
      %s4576 = sshll.u32 [#allocation8], 4
      %s4577 = int_to_ptr.vmem [resolvable:$true] %s4576
      %s4578 = sshll.u32 %s8, 4
      %s4579 = int_to_ptr.hbm [resolvable:$true] %s4578
      %4581 = dma.vmem_to_hbm [thread:$0]  %s4577, 16, %s4579, [#allocation9]
    $region37: #{tpu_custom_call.1} parent=1 // pred_fallthru
      _
    // Predicated region
    $region38: #{tpu_custom_call.1} parent=1 // pred_check
      _
    $region39: #{tpu_custom_call.1} parent=1 // pred_check_branch
      %4583 = sbr.rel (0) target = $region41
    $region40: #{tpu_custom_call.1} parent=1 // pred_region
      _
    $region41: #{tpu_custom_call.1} parent=1 // pred_fallthru
      _
    // Predicated region
    $region42: #{tpu_custom_call.1} parent=1 // pred_check
      _
    $region43: #{tpu_custom_call.1} parent=1 // pred_check_branch
      %4585 = sbr.rel (0) target = $region45
    $region44: #{tpu_custom_call.1} parent=1 // pred_region
      %4587 = dma.done [#allocation4], 16
    $region45: #{tpu_custom_call.1} parent=1 // pred_fallthru
      _
    // Predicated region
    $region46: #{tpu_custom_call.1} parent=1 // pred_check
      _
    $region47: #{tpu_custom_call.1} parent=1 // pred_check_branch
      %4589 = sbr.rel (0) target = $region49
    $region48: #{tpu_custom_call.1} parent=1 // pred_region
      %4591 = dma.done [#allocation6], 16
    $region49: #{tpu_custom_call.1} parent=1 // pred_fallthru
      _
    // Predicated region
    $region50: #{tpu_custom_call.1} parent=1 // pred_check
      _
    $region51: #{tpu_custom_call.1} parent=1 // pred_check_branch
      %4593 = sbr.rel (0) target = $region53
    $region52: #{tpu_custom_call.1} parent=1 // pred_region
      _
    $region53: #{tpu_custom_call.1} parent=1 // pred_fallthru
      _
    // Predicated region
    $region54: #{tpu_custom_call.1} parent=1 // pred_check
      _
    $region55: #{tpu_custom_call.1} parent=1 // pred_check_branch
      %4595 = sbr.rel (0) target = $region57
    $region56: #{tpu_custom_call.1} parent=1 // pred_region
      %4597 = dma.done [#allocation6], 16
    $region57: #{tpu_custom_call.1} parent=1 // pred_fallthru
      _
    // Predicated region
    $region58: #{tpu_custom_call.1} parent=1 // pred_check
      _
    $region59: #{tpu_custom_call.1} parent=1 // pred_check_branch
      %4599 = sbr.rel (0) target = $region61
    $region60: #{tpu_custom_call.1} parent=1 // pred_region
      %4601 = dma.done [#allocation9], 16
    $region61: #{tpu_custom_call.1} parent=1 // pred_fallthru
      _
    %4602 = vsyncpa [#allocation4], 1
    %4603 = vsyncpa [#allocation6], 1
    %4604 = vsyncpa [#allocation9], 1

</llo_original>
